<compile_context>
chip_gen: v7x
topology: tpu7x:2x2x1
jax: 0.10.0
libtpu: 0.0.40
codegen_flags: <defaults>
</compile_context>

<pallas_src>
import numpy as np
import jax
import jax.numpy as jnp
from jax import lax
from jax.experimental import pallas as pl
from jax.experimental.pallas import tpu as pltpu


# ----------------------------------------------------------------------------
# bilinear 2x upsample helper (PyTorch align_corners=False), pure jnp: used
# both inside the Pallas kernel (on VMEM values) and in the reference.
# ----------------------------------------------------------------------------
def _sl(v, axis, start, stop):
    idx = [slice(None)] * v.ndim
    idx[axis] = slice(start, stop)
    return v[tuple(idx)]


def _upsample2x_1d(v, axis):
    """2x linear upsample along `axis` (PyTorch bilinear, align_corners=False)."""
    n = v.shape[axis]
    prev = jnp.concatenate([_sl(v, axis, 0, 1), _sl(v, axis, 0, n - 1)], axis=axis)
    nxt = jnp.concatenate([_sl(v, axis, 1, n), _sl(v, axis, n - 1, n)], axis=axis)
    even = 0.25 * prev + 0.75 * v      # out 2j   -> src j - 0.25 (clamped)
    odd = 0.75 * v + 0.25 * nxt        # out 2j+1 -> src j + 0.25 (clamped)
    y = jnp.stack([even, odd], axis=axis + 1)
    return y.reshape(v.shape[:axis] + (2 * n,) + v.shape[axis + 1:])


# ----------------------------------------------------------------------------
# in-kernel helpers
# ----------------------------------------------------------------------------
def _zero_boundary_rows(x, t, last):
    """Zero the first slab row on the first H-tile and the last slab row on the
    last H-tile (conv zero padding at the true image boundary)."""
    rows = x.shape[0]
    r = lax.broadcasted_iota(jnp.int32, (rows, 1, 1), 0)
    keep = jnp.logical_and(jnp.logical_or(t > 0, r > 0),
                           jnp.logical_or(t < last, r < rows - 1))
    return jnp.where(keep, x, 0.0)


def _pad_w1(x):
    """Zero-pad the W (second-minor) axis by 1 on each side (conv padding)."""
    z = jnp.zeros((x.shape[0], 1, x.shape[2]), x.dtype)
    return jnp.concatenate([z, x, z], axis=1)


def _accumulate_conv3x3(xp, w_ref, acc_ref, th, wout):
    """xp: (th+2, wout+2, C) bf16; w_ref: (3, 3*C, Cout) bf16.
    Folds the 3 column taps into K per kernel row: 3 matmuls of
    (th*wout, 3C) @ (3C, Cout), accumulated in the f32 VMEM scratch."""
    c = xp.shape[-1]
    for dy in range(3):
        rows = xp[dy:dy + th]                                       # (th, wout+2, C)
        a = jnp.concatenate([rows[:, dx:dx + wout, :] for dx in range(3)], axis=-1)
        acc_ref[...] += jnp.dot(a.reshape(th * wout, 3 * c), w_ref[dy],
                                preferred_element_type=jnp.float32)


# ----------------------------------------------------------------------------
# Kernel 1: fused [upsample2x(input2) + pad(input1) + concat + Conv3x3 + BN + ReLU]
# ----------------------------------------------------------------------------
def fused_up_concat_conv_kernel(x1c_ref, x1t_ref, x1b_ref,
                                x2c_ref, x2t_ref, x2b_ref,
                                wa_ref, wb_ref, scale_ref, shift_ref,
                                o_ref, acc_ref):
    _, th, wout, cout = o_ref.shape
    t = pl.program_id(1)
    last = pl.num_programs(1) - 1

    # skip connection: (th+2) rows with conv halo; zero halo at true boundaries
    x1 = jnp.concatenate([x1t_ref[0], x1c_ref[0], x1b_ref[0]], axis=0)
    x1 = _zero_boundary_rows(x1, t, last)

    # coarse features: (th//2 + 2) rows with replication halo -> 2x bilinear
    # upsample entirely in VMEM (never written to HBM).
    x2 = jnp.concatenate([x2t_ref[0], x2c_ref[0], x2b_ref[0]], axis=0)
    u = _upsample2x_1d(x2, 0)[1:th + 3]      # fine rows t*th-1 .. t*th+th
    u = _upsample2x_1d(u, 1)                 # fine width == wout
    u = _zero_boundary_rows(u, t, last)

    x1p = _pad_w1(x1).astype(jnp.bfloat16)
    up = _pad_w1(u).astype(jnp.bfloat16)

    acc_ref[...] = jnp.zeros_like(acc_ref)
    _accumulate_conv3x3(x1p, wa_ref, acc_ref, th, wout)   # split-K: x1 channels
    _accumulate_conv3x3(up, wb_ref, acc_ref, th, wout)    # split-K: up2 channels

    y = acc_ref[...] * scale_ref[...] + shift_ref[...]    # fused BN (eval) affine
    o_ref[0] = jnp.maximum(y, 0.0).reshape(th, wout, cout).astype(o_ref.dtype)


def fused_upsample_concat_conv(x1, x2, w_a, w_b, scale, shift, *, tile_h, out_dtype):
    # x1: (N, Hf, Wf, C1) f32 skip (already offset-padded); x2: (N, Hc, Wc, C2) f32
    n, hf, wf, c1 = x1.shape
    _, hc, wc, c2 = x2.shape
    cout = w_a.shape[-1]
    assert hf == 2 * hc and wf == 2 * wc
    assert tile_h % 2 == 0 and hf % tile_h == 0
    t_tiles = hf // tile_h
    thc = tile_h // 2

    return pl.pallas_call(
        fused_up_concat_conv_kernel,
        out_shape=jax.ShapeDtypeStruct((n, hf, wf, cout), out_dtype),
        grid_spec=pltpu.PrefetchScalarGridSpec(
            num_scalar_prefetch=0,
            grid=(n, t_tiles),
            in_specs=[
                # skip connection: center tile + 1-row top/bottom conv halo
                pl.BlockSpec((1, tile_h, wf, c1), lambda b, t: (b, t, 0, 0)),
                pl.BlockSpec((1, 1, wf, c1),
                             lambda b, t: (b, jnp.maximum(t * tile_h - 1, 0), 0, 0)),
                pl.BlockSpec((1, 1, wf, c1),
                             lambda b, t: (b, jnp.minimum(t * tile_h + tile_h, hf - 1), 0, 0)),
                # coarse features: center tile + 1-row replication halo (coarse coords)
                pl.BlockSpec((1, thc, wc, c2), lambda b, t: (b, t, 0, 0)),
                pl.BlockSpec((1, 1, wc, c2),
                             lambda b, t: (b, jnp.maximum(t * thc - 1, 0), 0, 0)),
                pl.BlockSpec((1, 1, wc, c2),
                             lambda b, t: (b, jnp.minimum(t * thc + thc, hc - 1), 0, 0)),
                # resident (constant index_map) bf16 weights, split along the concat
                pl.BlockSpec((3, 3 * c1, cout), lambda b, t: (0, 0, 0)),
                pl.BlockSpec((3, 3 * c2, cout), lambda b, t: (0, 0, 0)),
                pl.BlockSpec((1, cout), lambda b, t: (0, 0)),
                pl.BlockSpec((1, cout), lambda b, t: (0, 0)),
            ],
            out_specs=pl.BlockSpec((1, tile_h, wf, cout), lambda b, t: (b, t, 0, 0)),
            scratch_shapes=[pltpu.VMEM((tile_h * wf, cout), jnp.float32)]),
        compiler_params=pltpu.CompilerParams(
            dimension_semantics=("parallel", "parallel"),
            vmem_limit_bytes=32 * 1024 * 1024),   # raise further for big tiles on v6e
    )(x1, x1, x1, x2, x2, x2, w_a, w_b, scale, shift)


# ----------------------------------------------------------------------------
# Kernel 2: Conv3x3(pad=1) + fused BN(eval) + ReLU   (bf16 input / weights)
# ----------------------------------------------------------------------------
def conv_bn_relu_kernel(xc_ref, xt_ref, xb_ref, w_ref, scale_ref, shift_ref,
                        o_ref, acc_ref):
    _, th, wout, cout = o_ref.shape
    t = pl.program_id(1)
    last = pl.num_programs(1) - 1

    x = jnp.concatenate([xt_ref[0], xc_ref[0], xb_ref[0]], axis=0)
    x = _zero_boundary_rows(x, t, last)
    xp = _pad_w1(x).astype(jnp.bfloat16)

    acc_ref[...] = jnp.zeros_like(acc_ref)
    _accumulate_conv3x3(xp, w_ref, acc_ref, th, wout)

    y = acc_ref[...] * scale_ref[...] + shift_ref[...]
    o_ref[0] = jnp.maximum(y, 0.0).reshape(th, wout, cout).astype(o_ref.dtype)


def conv3x3_bn_relu(x, w_k, scale, shift, *, tile_h, out_dtype):
    n, h, w, c = x.shape
    cout = w_k.shape[-1]
    assert h % tile_h == 0
    t_tiles = h // tile_h

    return pl.pallas_call(
        conv_bn_relu_kernel,
        out_shape=jax.ShapeDtypeStruct((n, h, w, cout), out_dtype),
        grid_spec=pltpu.PrefetchScalarGridSpec(
            num_scalar_prefetch=0,
            grid=(n, t_tiles),
            in_specs=[
                pl.BlockSpec((1, tile_h, w, c), lambda b, t: (b, t, 0, 0)),
                pl.BlockSpec((1, 1, w, c),
                             lambda b, t: (b, jnp.maximum(t * tile_h - 1, 0), 0, 0)),
                pl.BlockSpec((1, 1, w, c),
                             lambda b, t: (b, jnp.minimum(t * tile_h + tile_h, h - 1), 0, 0)),
                pl.BlockSpec((3, 3 * c, cout), lambda b, t: (0, 0, 0)),
                pl.BlockSpec((1, cout), lambda b, t: (0, 0)),
                pl.BlockSpec((1, cout), lambda b, t: (0, 0)),
            ],
            out_specs=pl.BlockSpec((1, tile_h, w, cout), lambda b, t: (b, t, 0, 0)),
            scratch_shapes=[pltpu.VMEM((tile_h * w, cout), jnp.float32)]),
        compiler_params=pltpu.CompilerParams(
            dimension_semantics=("parallel", "parallel"),
            vmem_limit_bytes=32 * 1024 * 1024),
    )(x, x, x, w_k, scale, shift)


# ----------------------------------------------------------------------------
# Parameters (deterministic synthetic init; weights stored bf16 in HBM)
# ----------------------------------------------------------------------------
def init_params(key, in_size, out_size):
    cin1 = out_size + in_size           # concat order: [padded input1, upsampled input2]
    ks = jax.random.split(key, 6)
    eps = 1e-5

    def kaiming(k, cin, cout):
        std = (2.0 / (cin * 9)) ** 0.5
        return std * jax.random.normal(k, (3, 3, cin, cout), jnp.float32)  # HWIO

    def bn_affine(k, cout, bias):
        gamma = 1.0 + 0.02 * jax.random.normal(k, (cout,), jnp.float32)
        beta = jnp.zeros((cout,), jnp.float32)
        mean = jnp.zeros((cout,), jnp.float32)
        var = jnp.ones((cout,), jnp.float32)
        scale = gamma / jnp.sqrt(var + eps)
        shift = beta + (bias - mean) * scale
        return scale.reshape(1, cout), shift.reshape(1, cout)

    w1 = kaiming(ks[0], cin1, out_size)
    b1 = 0.01 * jax.random.normal(ks[1], (out_size,), jnp.float32)
    w2 = kaiming(ks[2], out_size, out_size)
    b2 = 0.01 * jax.random.normal(ks[3], (out_size,), jnp.float32)
    s1, sh1 = bn_affine(ks[4], out_size, b1)
    s2, sh2 = bn_affine(ks[5], out_size, b2)

    w1_bf = w1.astype(jnp.bfloat16)
    w2_bf = w2.astype(jnp.bfloat16)
    c1, c2, cout = out_size, in_size, out_size
    return dict(
        # reference layout (HWIO, bf16 to match MXU operand rounding)
        w1_hwio=w1_bf, w2_hwio=w2_bf,
        # kernel layout: per-dy (3, 3*Cin_part, Cout), split along the concat axis
        w1_a=w1_bf[:, :, :c1, :].reshape(3, 3 * c1, cout),
        w1_b=w1_bf[:, :, c1:, :].reshape(3, 3 * c2, cout),
        w2_k=w2_bf.reshape(3, 3 * cout, cout),
        scale1=s1, shift1=sh1, scale2=s2, shift2=sh2)


# ----------------------------------------------------------------------------
# Module forward (NCHW in / NCHW out, like the PyTorch module)
# ----------------------------------------------------------------------------
def _pick_tile_h(hf):
    # Pick an even H tile that gives >1 grid step; production sizes would size
    # this so (tile + halo + weights) double-buffered stays ~12-16 MiB of VMEM.
    for th in (16, 8, 4, 2):
        if th < hf and hf % th == 0:
            return th
    return hf


@jax.jit
def unet_up_conv2d_ct(input1, input2, params):
    # input1: (N, out_size, H1, W1) skip connection; input2: (N, in_size, H2, W2)
    n, c1, h1, w1 = input1.shape
    _, c2, h2, w2 = input2.shape
    hf, wf = 2 * h2, 2 * w2
    offset = hf - h1
    assert offset >= 0 and offset % 2 == 0, "offset must be non-negative and even"
    assert wf - w1 == offset, "H/W offsets must match (PyTorch pads both by offset//2)"
    o2 = offset // 2

    x1 = jnp.transpose(input1, (0, 2, 3, 1))   # NCHW -> NHWC (channels on lanes)
    x2 = jnp.transpose(input2, (0, 2, 3, 1))
    if o2 > 0:                                  # F.pad(input1, 2*[o2, o2])
        x1 = jnp.pad(x1, ((0, 0), (o2, o2), (o2, o2), (0, 0)))

    tile_h = _pick_tile_h(hf)
    # fused: upsample(input2) + pad(input1) + concat + conv1 + BN + ReLU
    h = fused_upsample_concat_conv(
        x1, x2, params["w1_a"], params["w1_b"], params["scale1"], params["shift1"],
        tile_h=tile_h, out_dtype=jnp.bfloat16)      # bf16 intermediate halves HBM
    y = conv3x3_bn_relu(
        h, params["w2_k"], params["scale2"], params["shift2"],
        tile_h=tile_h, out_dtype=jnp.float32)
    return jnp.transpose(y, (0, 3, 1, 2))           # back to NCHW


# ----------------------------------------------------------------------------
# Pure-JAX reference (XLA conv) for correctness checking
# ----------------------------------------------------------------------------
def reference_forward(input1, input2, params):
    up2 = _upsample2x_1d(_upsample2x_1d(input2, 2), 3)
    offset = up2.shape[2] - input1.shape[2]
    o2 = offset // 2
    x1p = jnp.pad(input1, ((0, 0), (0, 0), (o2, o2), (o2, o2)))
    cat = jnp.concatenate([x1p, up2], axis=1)

    def conv_bn_relu(x, w_hwio, scale, shift, out_dtype):
        y = lax.conv_general_dilated(
            x.astype(jnp.bfloat16), w_hwio.astype(jnp.bfloat16),
            window_strides=(1, 1), padding=((1, 1), (1, 1)),
            dimension_numbers=("NCHW", "HWIO", "NCHW"),
            preferred_element_type=jnp.float32)
        co = w_hwio.shape[-1]
        y = y * scale.reshape(1, co, 1, 1) + shift.reshape(1, co, 1, 1)
        return jnp.maximum(y, 0.0).astype(out_dtype)

    h = conv_bn_relu(cat, params["w1_hwio"], params["scale1"], params["shift1"],
                     jnp.bfloat16)
    return conv_bn_relu(h, params["w2_hwio"], params["scale2"], params["shift2"],
                        jnp.float32)


if __name__ == "__main__":
    # Independent check of the bilinear-2x formula against PyTorch's known output
    # for F.interpolate(arange(4), scale_factor=2, mode='linear', align_corners=False).
    v = jnp.arange(4.0).reshape(1, 1, 4)
    torch_expected = np.array([0.0, 0.25, 0.75, 1.25, 1.75, 2.25, 2.75, 3.0], np.float32)
    np.testing.assert_allclose(np.asarray(_upsample2x_1d(v, 2))[0, 0],
                               torch_expected, atol=1e-6)

    key = jax.random.PRNGKey(0)
    k1, k2, kp = jax.random.split(key, 3)

    N = 2
    in_size = 128     # channels of the coarse feature map (input2)
    out_size = 128    # channels of the skip connection (input1) and of the output
    H2 = W2 = 8       # coarse spatial size
    H1 = W1 = 16      # skip-connection spatial size (= 2x coarse -> offset = 0)

    input2 = jax.random.normal(k1, (N, in_size, H2, W2), jnp.float32)
    input1 = jax.random.normal(k2, (N, out_size, H1, W1), jnp.float32)
    params = init_params(kp, in_size, out_size)

    out = unet_up_conv2d_ct(input1, input2, params)
    out = jax.block_until_ready(out)
    assert out.shape == (N, out_size, 2 * H2, 2 * W2), out.shape

    ref = reference_forward(input1, input2, params)
    np.testing.assert_allclose(np.asarray(out), np.asarray(ref),
                               rtol=1e-2, atol=1e-2)
    print("KERNEL_OK")
</pallas_src>

<mosaic_0001>
module attributes {stable_mosaic.version = 11 : i64} {
  func.func @conv_bn_relu_kernel(%arg0: i32, %arg1: i32, %arg2: memref<1x8x16x128xbf16, #tpu.memory_space<vmem>>, %arg3: memref<1x1x16x128xbf16, #tpu.memory_space<vmem>>, %arg4: memref<1x1x16x128xbf16, #tpu.memory_space<vmem>>, %arg5: memref<3x384x128xbf16, #tpu.memory_space<vmem>>, %arg6: memref<1x128xf32, #tpu.memory_space<vmem>>, %arg7: memref<1x128xf32, #tpu.memory_space<vmem>>, %arg8: memref<1x8x16x128xf32, #tpu.memory_space<vmem>>, %arg9: memref<128x128xf32, #tpu.memory_space<vmem>>) attributes {dimension_semantics = [#tpu.dimension_semantics<parallel>, #tpu.dimension_semantics<parallel>], iteration_bounds = array<i64: 2, 2>, scalar_prefetch = 0 : i64, scratch_operands = 1 : i64, tpu.core_type = #tpu.core_type<tc>, window_params = [{transform_indices = @transform_0, window_bounds = array<i64: 1, 8, 16, 128>}, {transform_indices = @transform_1, window_bounds = array<i64: 1, 1, 16, 128>}, {transform_indices = @transform_2, window_bounds = array<i64: 1, 1, 16, 128>}, {pipeline_mode = #tpu.pipeline_mode<synchronous>, transform_indices = @transform_3, window_bounds = array<i64: 3, 384, 128>}, {pipeline_mode = #tpu.pipeline_mode<synchronous>, transform_indices = @transform_4, window_bounds = array<i64: 1, 128>}, {pipeline_mode = #tpu.pipeline_mode<synchronous>, transform_indices = @transform_5, window_bounds = array<i64: 1, 128>}, {transform_indices = @transform_6, window_bounds = array<i64: 1, 8, 16, 128>}]} {
    %c0 = arith.constant 0 : index
    %c0_0 = arith.constant 0 : index
    %c0_1 = arith.constant 0 : index
    %c0_2 = arith.constant 0 : index
    %0 = vector.load %arg3[%c0, %c0_0, %c0_1, %c0_2] : memref<1x1x16x128xbf16, #tpu.memory_space<vmem>>, vector<1x1x16x128xbf16>
    %1 = vector.shape_cast %0 : vector<1x1x16x128xbf16> to vector<1x16x128xbf16>
    %c0_3 = arith.constant 0 : index
    %c0_4 = arith.constant 0 : index
    %c0_5 = arith.constant 0 : index
    %c0_6 = arith.constant 0 : index
    %2 = vector.load %arg2[%c0_3, %c0_4, %c0_5, %c0_6] : memref<1x8x16x128xbf16, #tpu.memory_space<vmem>>, vector<1x8x16x128xbf16>
    %3 = vector.shape_cast %2 : vector<1x8x16x128xbf16> to vector<8x16x128xbf16>
    %c0_7 = arith.constant 0 : index
    %c0_8 = arith.constant 0 : index
    %c0_9 = arith.constant 0 : index
    %c0_10 = arith.constant 0 : index
    %4 = vector.load %arg4[%c0_7, %c0_8, %c0_9, %c0_10] : memref<1x1x16x128xbf16, #tpu.memory_space<vmem>>, vector<1x1x16x128xbf16>
    %5 = vector.shape_cast %4 : vector<1x1x16x128xbf16> to vector<1x16x128xbf16>
    %6 = tpu.concatenate %1, %3, %5 in 0 : vector<1x16x128xbf16>, vector<8x16x128xbf16>, vector<1x16x128xbf16> -> vector<10x16x128xbf16>
    %7 = tpu.iota {dimensions = array<i32: 0>} : vector<10x1x1xi32>
    %c0_i32 = arith.constant 0 : i32
    %8 = arith.cmpi sgt, %arg1, %c0_i32 : i32
    %c0_i32_11 = arith.constant 0 : i32
    %9 = vector.broadcast %c0_i32_11 : i32 to vector<10x1x1xi32>
    %10 = arith.cmpi sgt, %7, %9 : vector<10x1x1xi32>
    %11 = vector.broadcast %8 : i1 to vector<10x1x1xi1>
    %12 = arith.ori %11, %10 : vector<10x1x1xi1>
    %c1_i32 = arith.constant 1 : i32
    %13 = arith.cmpi slt, %arg1, %c1_i32 : i32
    %c9_i32 = arith.constant 9 : i32
    %14 = vector.broadcast %c9_i32 : i32 to vector<10x1x1xi32>
    %15 = arith.cmpi slt, %7, %14 : vector<10x1x1xi32>
    %16 = vector.broadcast %13 : i1 to vector<10x1x1xi1>
    %17 = arith.ori %16, %15 : vector<10x1x1xi1>
    %18 = arith.andi %12, %17 : vector<10x1x1xi1>
    %cst = arith.constant 0.000000e+00 : f32
    %19 = arith.truncf %cst : f32 to bf16
    %20 = vector.shape_cast %18 : vector<10x1x1xi1> to vector<10x1x1xi1>
    %21 = vector.broadcast %20 : vector<10x1x1xi1> to vector<10x16x128xi1>
    %22 = vector.broadcast %19 : bf16 to vector<10x16x128xbf16>
    %23 = arith.select %21, %6, %22 : vector<10x16x128xi1>, vector<10x16x128xbf16>
    %cst_12 = arith.constant 0.000000e+00 : bf16
    %24 = vector.broadcast %cst_12 : bf16 to vector<10x1x128xbf16>
    %25 = tpu.concatenate %24, %23, %24 in 1 : vector<10x1x128xbf16>, vector<10x16x128xbf16>, vector<10x1x128xbf16> -> vector<10x18x128xbf16>
    %cst_13 = arith.constant 0.000000e+00 : f32
    %26 = vector.broadcast %cst_13 : f32 to vector<128x128xf32>
    %c0_14 = arith.constant 0 : index
    %c0_15 = arith.constant 0 : index
    %27 = vector.load %arg9[%c0_14, %c0_15] : memref<128x128xf32, #tpu.memory_space<vmem>>, vector<128x128xf32>
    tpu.vector_store %arg9[%c0_14, %c0_15], %26 {strides = array<i32>} : memref<128x128xf32, #tpu.memory_space<vmem>>, vector<128x128xf32>,
    %28 = vector.extract_strided_slice %25 {offsets = [0, 0, 0], sizes = [8, 18, 128], strides = [1, 1, 1]} : vector<10x18x128xbf16> to vector<8x18x128xbf16>
    %29 = vector.extract_strided_slice %28 {offsets = [0, 0, 0], sizes = [8, 16, 128], strides = [1, 1, 1]} : vector<8x18x128xbf16> to vector<8x16x128xbf16>
    %30 = vector.extract_strided_slice %28 {offsets = [0, 1, 0], sizes = [8, 16, 128], strides = [1, 1, 1]} : vector<8x18x128xbf16> to vector<8x16x128xbf16>
    %31 = vector.extract_strided_slice %28 {offsets = [0, 2, 0], sizes = [8, 16, 128], strides = [1, 1, 1]} : vector<8x18x128xbf16> to vector<8x16x128xbf16>
    %32 = tpu.concatenate %29, %30, %31 in 2 : vector<8x16x128xbf16>, vector<8x16x128xbf16>, vector<8x16x128xbf16> -> vector<8x16x384xbf16>
    %c0_16 = arith.constant 0 : index
    %c0_17 = arith.constant 0 : index
    %33 = vector.load %arg9[%c0_16, %c0_17] : memref<128x128xf32, #tpu.memory_space<vmem>>, vector<128x128xf32>
    %34 = vector.shape_cast %32 : vector<8x16x384xbf16> to vector<128x384xbf16>
    %c0_18 = arith.constant 0 : index
    %c0_19 = arith.constant 0 : index
    %c0_20 = arith.constant 0 : index
    %35 = vector.load %arg5[%c0_18, %c0_19, %c0_20] : memref<3x384x128xbf16, #tpu.memory_space<vmem>>, vector<1x384x128xbf16>
    %36 = vector.shape_cast %35 : vector<1x384x128xbf16> to vector<384x128xbf16>
    %cst_21 = arith.constant dense<0.000000e+00> : vector<128x128xf32>
    %37 = tpu.matmul %34, %36, %cst_21 {dimension_numbers = #tpu.dot_dimension_numbers<[1], [0], [0], [1], [0, 0, 1, 1], [], []>} : vector<128x384xbf16>, vector<384x128xbf16>, vector<128x128xf32> -> vector<128x128xf32>
    %38 = arith.addf %33, %37 : vector<128x128xf32>
    %c0_22 = arith.constant 0 : index
    %c0_23 = arith.constant 0 : index
    %39 = vector.load %arg9[%c0_22, %c0_23] : memref<128x128xf32, #tpu.memory_space<vmem>>, vector<128x128xf32>
    tpu.vector_store %arg9[%c0_22, %c0_23], %38 {strides = array<i32>} : memref<128x128xf32, #tpu.memory_space<vmem>>, vector<128x128xf32>,
    %40 = vector.extract_strided_slice %25 {offsets = [1, 0, 0], sizes = [8, 18, 128], strides = [1, 1, 1]} : vector<10x18x128xbf16> to vector<8x18x128xbf16>
    %41 = vector.extract_strided_slice %40 {offsets = [0, 0, 0], sizes = [8, 16, 128], strides = [1, 1, 1]} : vector<8x18x128xbf16> to vector<8x16x128xbf16>
    %42 = vector.extract_strided_slice %40 {offsets = [0, 1, 0], sizes = [8, 16, 128], strides = [1, 1, 1]} : vector<8x18x128xbf16> to vector<8x16x128xbf16>
    %43 = vector.extract_strided_slice %40 {offsets = [0, 2, 0], sizes = [8, 16, 128], strides = [1, 1, 1]} : vector<8x18x128xbf16> to vector<8x16x128xbf16>
    %44 = tpu.concatenate %41, %42, %43 in 2 : vector<8x16x128xbf16>, vector<8x16x128xbf16>, vector<8x16x128xbf16> -> vector<8x16x384xbf16>
    %c0_24 = arith.constant 0 : index
    %c0_25 = arith.constant 0 : index
    %45 = vector.load %arg9[%c0_24, %c0_25] : memref<128x128xf32, #tpu.memory_space<vmem>>, vector<128x128xf32>
    %46 = vector.shape_cast %44 : vector<8x16x384xbf16> to vector<128x384xbf16>
    %c1 = arith.constant 1 : index
    %c0_26 = arith.constant 0 : index
    %c0_27 = arith.constant 0 : index
    %47 = vector.load %arg5[%c1, %c0_26, %c0_27] : memref<3x384x128xbf16, #tpu.memory_space<vmem>>, vector<1x384x128xbf16>
    %48 = vector.shape_cast %47 : vector<1x384x128xbf16> to vector<384x128xbf16>
    %cst_28 = arith.constant dense<0.000000e+00> : vector<128x128xf32>
    %49 = tpu.matmul %46, %48, %cst_28 {dimension_numbers = #tpu.dot_dimension_numbers<[1], [0], [0], [1], [0, 0, 1, 1], [], []>} : vector<128x384xbf16>, vector<384x128xbf16>, vector<128x128xf32> -> vector<128x128xf32>
    %50 = arith.addf %45, %49 : vector<128x128xf32>
    %c0_29 = arith.constant 0 : index
    %c0_30 = arith.constant 0 : index
    %51 = vector.load %arg9[%c0_29, %c0_30] : memref<128x128xf32, #tpu.memory_space<vmem>>, vector<128x128xf32>
    tpu.vector_store %arg9[%c0_29, %c0_30], %50 {strides = array<i32>} : memref<128x128xf32, #tpu.memory_space<vmem>>, vector<128x128xf32>,
    %52 = vector.extract_strided_slice %25 {offsets = [2, 0, 0], sizes = [8, 18, 128], strides = [1, 1, 1]} : vector<10x18x128xbf16> to vector<8x18x128xbf16>
    %53 = vector.extract_strided_slice %52 {offsets = [0, 0, 0], sizes = [8, 16, 128], strides = [1, 1, 1]} : vector<8x18x128xbf16> to vector<8x16x128xbf16>
    %54 = vector.extract_strided_slice %52 {offsets = [0, 1, 0], sizes = [8, 16, 128], strides = [1, 1, 1]} : vector<8x18x128xbf16> to vector<8x16x128xbf16>
    %55 = vector.extract_strided_slice %52 {offsets = [0, 2, 0], sizes = [8, 16, 128], strides = [1, 1, 1]} : vector<8x18x128xbf16> to vector<8x16x128xbf16>
    %56 = tpu.concatenate %53, %54, %55 in 2 : vector<8x16x128xbf16>, vector<8x16x128xbf16>, vector<8x16x128xbf16> -> vector<8x16x384xbf16>
    %c0_31 = arith.constant 0 : index
    %c0_32 = arith.constant 0 : index
    %57 = vector.load %arg9[%c0_31, %c0_32] : memref<128x128xf32, #tpu.memory_space<vmem>>, vector<128x128xf32>
    %58 = vector.shape_cast %56 : vector<8x16x384xbf16> to vector<128x384xbf16>
    %c2 = arith.constant 2 : index
    %c0_33 = arith.constant 0 : index
    %c0_34 = arith.constant 0 : index
    %59 = vector.load %arg5[%c2, %c0_33, %c0_34] : memref<3x384x128xbf16, #tpu.memory_space<vmem>>, vector<1x384x128xbf16>
    %60 = vector.shape_cast %59 : vector<1x384x128xbf16> to vector<384x128xbf16>
    %cst_35 = arith.constant dense<0.000000e+00> : vector<128x128xf32>
    %61 = tpu.matmul %58, %60, %cst_35 {dimension_numbers = #tpu.dot_dimension_numbers<[1], [0], [0], [1], [0, 0, 1, 1], [], []>} : vector<128x384xbf16>, vector<384x128xbf16>, vector<128x128xf32> -> vector<128x128xf32>
    %62 = arith.addf %57, %61 : vector<128x128xf32>
    %c0_36 = arith.constant 0 : index
    %c0_37 = arith.constant 0 : index
    %63 = vector.load %arg9[%c0_36, %c0_37] : memref<128x128xf32, #tpu.memory_space<vmem>>, vector<128x128xf32>
    tpu.vector_store %arg9[%c0_36, %c0_37], %62 {strides = array<i32>} : memref<128x128xf32, #tpu.memory_space<vmem>>, vector<128x128xf32>,
    %c0_38 = arith.constant 0 : index
    %c0_39 = arith.constant 0 : index
    %64 = vector.load %arg9[%c0_38, %c0_39] : memref<128x128xf32, #tpu.memory_space<vmem>>, vector<128x128xf32>
    %c0_40 = arith.constant 0 : index
    %c0_41 = arith.constant 0 : index
    %65 = vector.load %arg6[%c0_40, %c0_41] : memref<1x128xf32, #tpu.memory_space<vmem>>, vector<1x128xf32>
    %66 = vector.broadcast %65 : vector<1x128xf32> to vector<128x128xf32>
    %67 = arith.mulf %64, %66 : vector<128x128xf32>
    %c0_42 = arith.constant 0 : index
    %c0_43 = arith.constant 0 : index
    %68 = vector.load %arg7[%c0_42, %c0_43] : memref<1x128xf32, #tpu.memory_space<vmem>>, vector<1x128xf32>
    %69 = vector.broadcast %68 : vector<1x128xf32> to vector<128x128xf32>
    %70 = arith.addf %67, %69 : vector<128x128xf32>
    %cst_44 = arith.constant 0.000000e+00 : f32
    %71 = vector.broadcast %cst_44 : f32 to vector<128x128xf32>
    %72 = arith.maximumf %70, %71 : vector<128x128xf32>
    %73 = vector.shape_cast %72 : vector<128x128xf32> to vector<8x16x128xf32>
    %c0_45 = arith.constant 0 : index
    %c0_46 = arith.constant 0 : index
    %c0_47 = arith.constant 0 : index
    %c0_48 = arith.constant 0 : index
    %74 = vector.load %arg8[%c0_45, %c0_46, %c0_47, %c0_48] : memref<1x8x16x128xf32, #tpu.memory_space<vmem>>, vector<1x8x16x128xf32>
    %75 = vector.shape_cast %74 : vector<1x8x16x128xf32> to vector<8x16x128xf32>
    %76 = vector.shape_cast %73 : vector<8x16x128xf32> to vector<1x8x16x128xf32>
    tpu.vector_store %arg8[%c0_45, %c0_46, %c0_47, %c0_48], %76 {strides = array<i32>} : memref<1x8x16x128xf32, #tpu.memory_space<vmem>>, vector<1x8x16x128xf32>,
    return
  }
  func.func @transform_0(%arg0: i32, %arg1: i32) -> (i32, i32, i32, i32) {
    %c0_i32 = arith.constant 0 : i32
    %c0_i32_0 = arith.constant 0 : i32
    %c0_i32_1 = arith.constant 0 : i32
    return %arg0, %arg1, %c0_i32, %c0_i32_0 : i32, i32, i32, i32
  }
  func.func @transform_1(%arg0: i32, %arg1: i32) -> (i32, i32, i32, i32) {
    %c8_i32 = arith.constant 8 : i32
    %0 = arith.muli %arg1, %c8_i32 : i32
    %c1_i32 = arith.constant 1 : i32
    %1 = arith.subi %0, %c1_i32 : i32
    %c0_i32 = arith.constant 0 : i32
    %2 = arith.maxsi %1, %c0_i32 : i32
    %c0_i32_0 = arith.constant 0 : i32
    %c0_i32_1 = arith.constant 0 : i32
    %c0_i32_2 = arith.constant 0 : i32
    return %arg0, %2, %c0_i32_0, %c0_i32_1 : i32, i32, i32, i32
  }
  func.func @transform_2(%arg0: i32, %arg1: i32) -> (i32, i32, i32, i32) {
    %c8_i32 = arith.constant 8 : i32
    %0 = arith.muli %arg1, %c8_i32 : i32
    %c8_i32_0 = arith.constant 8 : i32
    %1 = arith.addi %0, %c8_i32_0 : i32
    %c15_i32 = arith.constant 15 : i32
    %2 = arith.minsi %1, %c15_i32 : i32
    %c0_i32 = arith.constant 0 : i32
    %c0_i32_1 = arith.constant 0 : i32
    %c0_i32_2 = arith.constant 0 : i32
    return %arg0, %2, %c0_i32, %c0_i32_1 : i32, i32, i32, i32
  }
  func.func @transform_3(%arg0: i32, %arg1: i32) -> (i32, i32, i32) {
    %c0_i32 = arith.constant 0 : i32
    %c0_i32_0 = arith.constant 0 : i32
    %c0_i32_1 = arith.constant 0 : i32
    %c0_i32_2 = arith.constant 0 : i32
    return %c0_i32, %c0_i32_0, %c0_i32_1 : i32, i32, i32
  }
  func.func @transform_4(%arg0: i32, %arg1: i32) -> (i32, i32) {
    %c0_i32 = arith.constant 0 : i32
    %c0_i32_0 = arith.constant 0 : i32
    %c0_i32_1 = arith.constant 0 : i32
    return %c0_i32, %c0_i32_0 : i32, i32
  }
  func.func @transform_5(%arg0: i32, %arg1: i32) -> (i32, i32) {
    %c0_i32 = arith.constant 0 : i32
    %c0_i32_0 = arith.constant 0 : i32
    %c0_i32_1 = arith.constant 0 : i32
    return %c0_i32, %c0_i32_0 : i32, i32
  }
  func.func @transform_6(%arg0: i32, %arg1: i32) -> (i32, i32, i32, i32) {
    %c0_i32 = arith.constant 0 : i32
    %c0_i32_0 = arith.constant 0 : i32
    %c0_i32_1 = arith.constant 0 : i32
    return %arg0, %arg1, %c0_i32, %c0_i32_0 : i32, i32, i32, i32
  }
}

module attributes {stable_mosaic.version = 11 : i64} {
  func.func @fused_up_concat_conv_kernel(%arg0: i32, %arg1: i32, %arg2: memref<1x8x16x128xf32, #tpu.memory_space<vmem>>, %arg3: memref<1x1x16x128xf32, #tpu.memory_space<vmem>>, %arg4: memref<1x1x16x128xf32, #tpu.memory_space<vmem>>, %arg5: memref<1x4x8x128xf32, #tpu.memory_space<vmem>>, %arg6: memref<1x1x8x128xf32, #tpu.memory_space<vmem>>, %arg7: memref<1x1x8x128xf32, #tpu.memory_space<vmem>>, %arg8: memref<3x384x128xbf16, #tpu.memory_space<vmem>>, %arg9: memref<3x384x128xbf16, #tpu.memory_space<vmem>>, %arg10: memref<1x128xf32, #tpu.memory_space<vmem>>, %arg11: memref<1x128xf32, #tpu.memory_space<vmem>>, %arg12: memref<1x8x16x128xbf16, #tpu.memory_space<vmem>>, %arg13: memref<128x128xf32, #tpu.memory_space<vmem>>) attributes {dimension_semantics = [#tpu.dimension_semantics<parallel>, #tpu.dimension_semantics<parallel>], iteration_bounds = array<i64: 2, 2>, scalar_prefetch = 0 : i64, scratch_operands = 1 : i64, tpu.core_type = #tpu.core_type<tc>, window_params = [{transform_indices = @transform_0, window_bounds = array<i64: 1, 8, 16, 128>}, {transform_indices = @transform_1, window_bounds = array<i64: 1, 1, 16, 128>}, {transform_indices = @transform_2, window_bounds = array<i64: 1, 1, 16, 128>}, {transform_indices = @transform_3, window_bounds = array<i64: 1, 4, 8, 128>}, {transform_indices = @transform_4, window_bounds = array<i64: 1, 1, 8, 128>}, {transform_indices = @transform_5, window_bounds = array<i64: 1, 1, 8, 128>}, {pipeline_mode = #tpu.pipeline_mode<synchronous>, transform_indices = @transform_6, window_bounds = array<i64: 3, 384, 128>}, {pipeline_mode = #tpu.pipeline_mode<synchronous>, transform_indices = @transform_7, window_bounds = array<i64: 3, 384, 128>}, {pipeline_mode = #tpu.pipeline_mode<synchronous>, transform_indices = @transform_8, window_bounds = array<i64: 1, 128>}, {pipeline_mode = #tpu.pipeline_mode<synchronous>, transform_indices = @transform_9, window_bounds = array<i64: 1, 128>}, {transform_indices = @transform_10, window_bounds = array<i64: 1, 8, 16, 128>}]} {
    %c0 = arith.constant 0 : index
    %c0_0 = arith.constant 0 : index
    %c0_1 = arith.constant 0 : index
    %c0_2 = arith.constant 0 : index
    %0 = vector.load %arg3[%c0, %c0_0, %c0_1, %c0_2] : memref<1x1x16x128xf32, #tpu.memory_space<vmem>>, vector<1x1x16x128xf32>
    %1 = vector.shape_cast %0 : vector<1x1x16x128xf32> to vector<1x16x128xf32>
    %c0_3 = arith.constant 0 : index
    %c0_4 = arith.constant 0 : index
    %c0_5 = arith.constant 0 : index
    %c0_6 = arith.constant 0 : index
    %2 = vector.load %arg2[%c0_3, %c0_4, %c0_5, %c0_6] : memref<1x8x16x128xf32, #tpu.memory_space<vmem>>, vector<1x8x16x128xf32>
    %3 = vector.shape_cast %2 : vector<1x8x16x128xf32> to vector<8x16x128xf32>
    %c0_7 = arith.constant 0 : index
    %c0_8 = arith.constant 0 : index
    %c0_9 = arith.constant 0 : index
    %c0_10 = arith.constant 0 : index
    %4 = vector.load %arg4[%c0_7, %c0_8, %c0_9, %c0_10] : memref<1x1x16x128xf32, #tpu.memory_space<vmem>>, vector<1x1x16x128xf32>
    %5 = vector.shape_cast %4 : vector<1x1x16x128xf32> to vector<1x16x128xf32>
    %6 = tpu.concatenate %1, %3, %5 in 0 : vector<1x16x128xf32>, vector<8x16x128xf32>, vector<1x16x128xf32> -> vector<10x16x128xf32>
    %7 = tpu.iota {dimensions = array<i32: 0>} : vector<10x1x1xi32>
    %c0_i32 = arith.constant 0 : i32
    %8 = arith.cmpi sgt, %arg1, %c0_i32 : i32
    %c0_i32_11 = arith.constant 0 : i32
    %9 = vector.broadcast %c0_i32_11 : i32 to vector<10x1x1xi32>
    %10 = arith.cmpi sgt, %7, %9 : vector<10x1x1xi32>
    %11 = vector.broadcast %8 : i1 to vector<10x1x1xi1>
    %12 = arith.ori %11, %10 : vector<10x1x1xi1>
    %c1_i32 = arith.constant 1 : i32
    %13 = arith.cmpi slt, %arg1, %c1_i32 : i32
    %c9_i32 = arith.constant 9 : i32
    %14 = vector.broadcast %c9_i32 : i32 to vector<10x1x1xi32>
    %15 = arith.cmpi slt, %7, %14 : vector<10x1x1xi32>
    %16 = vector.broadcast %13 : i1 to vector<10x1x1xi1>
    %17 = arith.ori %16, %15 : vector<10x1x1xi1>
    %18 = arith.andi %12, %17 : vector<10x1x1xi1>
    %cst = arith.constant 0.000000e+00 : f32
    %19 = vector.shape_cast %18 : vector<10x1x1xi1> to vector<10x1x1xi1>
    %20 = vector.broadcast %19 : vector<10x1x1xi1> to vector<10x16x128xi1>
    %21 = vector.broadcast %cst : f32 to vector<10x16x128xf32>
    %22 = arith.select %20, %6, %21 : vector<10x16x128xi1>, vector<10x16x128xf32>
    %c0_12 = arith.constant 0 : index
    %c0_13 = arith.constant 0 : index
    %c0_14 = arith.constant 0 : index
    %c0_15 = arith.constant 0 : index
    %23 = vector.load %arg6[%c0_12, %c0_13, %c0_14, %c0_15] : memref<1x1x8x128xf32, #tpu.memory_space<vmem>>, vector<1x1x8x128xf32>
    %24 = vector.shape_cast %23 : vector<1x1x8x128xf32> to vector<1x8x128xf32>
    %c0_16 = arith.constant 0 : index
    %c0_17 = arith.constant 0 : index
    %c0_18 = arith.constant 0 : index
    %c0_19 = arith.constant 0 : index
    %25 = vector.load %arg5[%c0_16, %c0_17, %c0_18, %c0_19] : memref<1x4x8x128xf32, #tpu.memory_space<vmem>>, vector<1x4x8x128xf32>
    %26 = vector.shape_cast %25 : vector<1x4x8x128xf32> to vector<4x8x128xf32>
    %c0_20 = arith.constant 0 : index
    %c0_21 = arith.constant 0 : index
    %c0_22 = arith.constant 0 : index
    %c0_23 = arith.constant 0 : index
    %27 = vector.load %arg7[%c0_20, %c0_21, %c0_22, %c0_23] : memref<1x1x8x128xf32, #tpu.memory_space<vmem>>, vector<1x1x8x128xf32>
    %28 = vector.shape_cast %27 : vector<1x1x8x128xf32> to vector<1x8x128xf32>
    %29 = tpu.concatenate %24, %26, %28 in 0 : vector<1x8x128xf32>, vector<4x8x128xf32>, vector<1x8x128xf32> -> vector<6x8x128xf32>
    %30 = vector.extract_strided_slice %29 {offsets = [0, 0, 0], sizes = [1, 8, 128], strides = [1, 1, 1]} : vector<6x8x128xf32> to vector<1x8x128xf32>
    %31 = vector.extract_strided_slice %29 {offsets = [0, 0, 0], sizes = [5, 8, 128], strides = [1, 1, 1]} : vector<6x8x128xf32> to vector<5x8x128xf32>
    %32 = tpu.concatenate %30, %31 in 0 : vector<1x8x128xf32>, vector<5x8x128xf32> -> vector<6x8x128xf32>
    %33 = vector.extract_strided_slice %29 {offsets = [1, 0, 0], sizes = [5, 8, 128], strides = [1, 1, 1]} : vector<6x8x128xf32> to vector<5x8x128xf32>
    %34 = vector.extract_strided_slice %29 {offsets = [5, 0, 0], sizes = [1, 8, 128], strides = [1, 1, 1]} : vector<6x8x128xf32> to vector<1x8x128xf32>
    %35 = tpu.concatenate %33, %34 in 0 : vector<5x8x128xf32>, vector<1x8x128xf32> -> vector<6x8x128xf32>
    %cst_24 = arith.constant 2.500000e-01 : f32
    %36 = vector.broadcast %cst_24 : f32 to vector<6x8x128xf32>
    %37 = arith.mulf %36, %32 : vector<6x8x128xf32>
    %cst_25 = arith.constant 7.500000e-01 : f32
    %38 = vector.broadcast %cst_25 : f32 to vector<6x8x128xf32>
    %39 = arith.mulf %38, %29 : vector<6x8x128xf32>
    %40 = arith.addf %37, %39 : vector<6x8x128xf32>
    %cst_26 = arith.constant 7.500000e-01 : f32
    %41 = vector.broadcast %cst_26 : f32 to vector<6x8x128xf32>
    %42 = arith.mulf %41, %29 : vector<6x8x128xf32>
    %cst_27 = arith.constant 2.500000e-01 : f32
    %43 = vector.broadcast %cst_27 : f32 to vector<6x8x128xf32>
    %44 = arith.mulf %43, %35 : vector<6x8x128xf32>
    %45 = arith.addf %42, %44 : vector<6x8x128xf32>
    %46 = vector.shape_cast %40 : vector<6x8x128xf32> to vector<6x1x8x128xf32>
    %47 = vector.shape_cast %45 : vector<6x8x128xf32> to vector<6x1x8x128xf32>
    %48 = tpu.concatenate %46, %47 in 1 : vector<6x1x8x128xf32>, vector<6x1x8x128xf32> -> vector<6x2x8x128xf32>
    %49 = vector.shape_cast %48 : vector<6x2x8x128xf32> to vector<12x8x128xf32>
    %50 = vector.extract_strided_slice %49 {offsets = [1, 0, 0], sizes = [10, 8, 128], strides = [1, 1, 1]} : vector<12x8x128xf32> to vector<10x8x128xf32>
    %51 = vector.extract_strided_slice %50 {offsets = [0, 0, 0], sizes = [10, 1, 128], strides = [1, 1, 1]} : vector<10x8x128xf32> to vector<10x1x128xf32>
    %52 = vector.extract_strided_slice %50 {offsets = [0, 0, 0], sizes = [10, 7, 128], strides = [1, 1, 1]} : vector<10x8x128xf32> to vector<10x7x128xf32>
    %53 = tpu.concatenate %51, %52 in 1 : vector<10x1x128xf32>, vector<10x7x128xf32> -> vector<10x8x128xf32>
    %54 = vector.extract_strided_slice %50 {offsets = [0, 1, 0], sizes = [10, 7, 128], strides = [1, 1, 1]} : vector<10x8x128xf32> to vector<10x7x128xf32>
    %55 = vector.extract_strided_slice %50 {offsets = [0, 7, 0], sizes = [10, 1, 128], strides = [1, 1, 1]} : vector<10x8x128xf32> to vector<10x1x128xf32>
    %56 = tpu.concatenate %54, %55 in 1 : vector<10x7x128xf32>, vector<10x1x128xf32> -> vector<10x8x128xf32>
    %cst_28 = arith.constant 2.500000e-01 : f32
    %57 = vector.broadcast %cst_28 : f32 to vector<10x8x128xf32>
    %58 = arith.mulf %57, %53 : vector<10x8x128xf32>
    %cst_29 = arith.constant 7.500000e-01 : f32
    %59 = vector.broadcast %cst_29 : f32 to vector<10x8x128xf32>
    %60 = arith.mulf %59, %50 : vector<10x8x128xf32>
    %61 = arith.addf %58, %60 : vector<10x8x128xf32>
    %cst_30 = arith.constant 7.500000e-01 : f32
    %62 = vector.broadcast %cst_30 : f32 to vector<10x8x128xf32>
    %63 = arith.mulf %62, %50 : vector<10x8x128xf32>
    %cst_31 = arith.constant 2.500000e-01 : f32
    %64 = vector.broadcast %cst_31 : f32 to vector<10x8x128xf32>
    %65 = arith.mulf %64, %56 : vector<10x8x128xf32>
    %66 = arith.addf %63, %65 : vector<10x8x128xf32>
    %67 = vector.shape_cast %61 : vector<10x8x128xf32> to vector<10x8x1x128xf32>
    %68 = vector.shape_cast %66 : vector<10x8x128xf32> to vector<10x8x1x128xf32>
    %69 = tpu.concatenate %67, %68 in 2 : vector<10x8x1x128xf32>, vector<10x8x1x128xf32> -> vector<10x8x2x128xf32>
    %70 = vector.shape_cast %69 : vector<10x8x2x128xf32> to vector<10x16x128xf32>
    %71 = tpu.iota {dimensions = array<i32: 0>} : vector<10x1x1xi32>
    %c0_i32_32 = arith.constant 0 : i32
    %72 = arith.cmpi sgt, %arg1, %c0_i32_32 : i32
    %c0_i32_33 = arith.constant 0 : i32
    %73 = vector.broadcast %c0_i32_33 : i32 to vector<10x1x1xi32>
    %74 = arith.cmpi sgt, %71, %73 : vector<10x1x1xi32>
    %75 = vector.broadcast %72 : i1 to vector<10x1x1xi1>
    %76 = arith.ori %75, %74 : vector<10x1x1xi1>
    %c1_i32_34 = arith.constant 1 : i32
    %77 = arith.cmpi slt, %arg1, %c1_i32_34 : i32
    %c9_i32_35 = arith.constant 9 : i32
    %78 = vector.broadcast %c9_i32_35 : i32 to vector<10x1x1xi32>
    %79 = arith.cmpi slt, %71, %78 : vector<10x1x1xi32>
    %80 = vector.broadcast %77 : i1 to vector<10x1x1xi1>
    %81 = arith.ori %80, %79 : vector<10x1x1xi1>
    %82 = arith.andi %76, %81 : vector<10x1x1xi1>
    %cst_36 = arith.constant 0.000000e+00 : f32
    %83 = vector.shape_cast %82 : vector<10x1x1xi1> to vector<10x1x1xi1>
    %84 = vector.broadcast %83 : vector<10x1x1xi1> to vector<10x16x128xi1>
    %85 = vector.broadcast %cst_36 : f32 to vector<10x16x128xf32>
    %86 = arith.select %84, %70, %85 : vector<10x16x128xi1>, vector<10x16x128xf32>
    %cst_37 = arith.constant 0.000000e+00 : f32
    %87 = vector.broadcast %cst_37 : f32 to vector<10x1x128xf32>
    %88 = tpu.concatenate %87, %22, %87 in 1 : vector<10x1x128xf32>, vector<10x16x128xf32>, vector<10x1x128xf32> -> vector<10x18x128xf32>
    %89 = arith.truncf %88 : vector<10x18x128xf32> to vector<10x18x128xbf16>
    %cst_38 = arith.constant 0.000000e+00 : f32
    %90 = vector.broadcast %cst_38 : f32 to vector<10x1x128xf32>
    %91 = tpu.concatenate %90, %86, %90 in 1 : vector<10x1x128xf32>, vector<10x16x128xf32>, vector<10x1x128xf32> -> vector<10x18x128xf32>
    %92 = arith.truncf %91 : vector<10x18x128xf32> to vector<10x18x128xbf16>
    %cst_39 = arith.constant 0.000000e+00 : f32
    %93 = vector.broadcast %cst_39 : f32 to vector<128x128xf32>
    %c0_40 = arith.constant 0 : index
    %c0_41 = arith.constant 0 : index
    %94 = vector.load %arg13[%c0_40, %c0_41] : memref<128x128xf32, #tpu.memory_space<vmem>>, vector<128x128xf32>
    tpu.vector_store %arg13[%c0_40, %c0_41], %93 {strides = array<i32>} : memref<128x128xf32, #tpu.memory_space<vmem>>, vector<128x128xf32>,
    %95 = vector.extract_strided_slice %89 {offsets = [0, 0, 0], sizes = [8, 18, 128], strides = [1, 1, 1]} : vector<10x18x128xbf16> to vector<8x18x128xbf16>
    %96 = vector.extract_strided_slice %95 {offsets = [0, 0, 0], sizes = [8, 16, 128], strides = [1, 1, 1]} : vector<8x18x128xbf16> to vector<8x16x128xbf16>
    %97 = vector.extract_strided_slice %95 {offsets = [0, 1, 0], sizes = [8, 16, 128], strides = [1, 1, 1]} : vector<8x18x128xbf16> to vector<8x16x128xbf16>
    %98 = vector.extract_strided_slice %95 {offsets = [0, 2, 0], sizes = [8, 16, 128], strides = [1, 1, 1]} : vector<8x18x128xbf16> to vector<8x16x128xbf16>
    %99 = tpu.concatenate %96, %97, %98 in 2 : vector<8x16x128xbf16>, vector<8x16x128xbf16>, vector<8x16x128xbf16> -> vector<8x16x384xbf16>
    %c0_42 = arith.constant 0 : index
    %c0_43 = arith.constant 0 : index
    %100 = vector.load %arg13[%c0_42, %c0_43] : memref<128x128xf32, #tpu.memory_space<vmem>>, vector<128x128xf32>
    %101 = vector.shape_cast %99 : vector<8x16x384xbf16> to vector<128x384xbf16>
    %c0_44 = arith.constant 0 : index
    %c0_45 = arith.constant 0 : index
    %c0_46 = arith.constant 0 : index
    %102 = vector.load %arg8[%c0_44, %c0_45, %c0_46] : memref<3x384x128xbf16, #tpu.memory_space<vmem>>, vector<1x384x128xbf16>
    %103 = vector.shape_cast %102 : vector<1x384x128xbf16> to vector<384x128xbf16>
    %cst_47 = arith.constant dense<0.000000e+00> : vector<128x128xf32>
    %104 = tpu.matmul %101, %103, %cst_47 {dimension_numbers = #tpu.dot_dimension_numbers<[1], [0], [0], [1], [0, 0, 1, 1], [], []>} : vector<128x384xbf16>, vector<384x128xbf16>, vector<128x128xf32> -> vector<128x128xf32>
    %105 = arith.addf %100, %104 : vector<128x128xf32>
    %c0_48 = arith.constant 0 : index
    %c0_49 = arith.constant 0 : index
    %106 = vector.load %arg13[%c0_48, %c0_49] : memref<128x128xf32, #tpu.memory_space<vmem>>, vector<128x128xf32>
    tpu.vector_store %arg13[%c0_48, %c0_49], %105 {strides = array<i32>} : memref<128x128xf32, #tpu.memory_space<vmem>>, vector<128x128xf32>,
    %107 = vector.extract_strided_slice %89 {offsets = [1, 0, 0], sizes = [8, 18, 128], strides = [1, 1, 1]} : vector<10x18x128xbf16> to vector<8x18x128xbf16>
    %108 = vector.extract_strided_slice %107 {offsets = [0, 0, 0], sizes = [8, 16, 128], strides = [1, 1, 1]} : vector<8x18x128xbf16> to vector<8x16x128xbf16>
    %109 = vector.extract_strided_slice %107 {offsets = [0, 1, 0], sizes = [8, 16, 128], strides = [1, 1, 1]} : vector<8x18x128xbf16> to vector<8x16x128xbf16>
    %110 = vector.extract_strided_slice %107 {offsets = [0, 2, 0], sizes = [8, 16, 128], strides = [1, 1, 1]} : vector<8x18x128xbf16> to vector<8x16x128xbf16>
    %111 = tpu.concatenate %108, %109, %110 in 2 : vector<8x16x128xbf16>, vector<8x16x128xbf16>, vector<8x16x128xbf16> -> vector<8x16x384xbf16>
    %c0_50 = arith.constant 0 : index
    %c0_51 = arith.constant 0 : index
    %112 = vector.load %arg13[%c0_50, %c0_51] : memref<128x128xf32, #tpu.memory_space<vmem>>, vector<128x128xf32>
    %113 = vector.shape_cast %111 : vector<8x16x384xbf16> to vector<128x384xbf16>
    %c1 = arith.constant 1 : index
    %c0_52 = arith.constant 0 : index
    %c0_53 = arith.constant 0 : index
    %114 = vector.load %arg8[%c1, %c0_52, %c0_53] : memref<3x384x128xbf16, #tpu.memory_space<vmem>>, vector<1x384x128xbf16>
    %115 = vector.shape_cast %114 : vector<1x384x128xbf16> to vector<384x128xbf16>
    %cst_54 = arith.constant dense<0.000000e+00> : vector<128x128xf32>
    %116 = tpu.matmul %113, %115, %cst_54 {dimension_numbers = #tpu.dot_dimension_numbers<[1], [0], [0], [1], [0, 0, 1, 1], [], []>} : vector<128x384xbf16>, vector<384x128xbf16>, vector<128x128xf32> -> vector<128x128xf32>
    %117 = arith.addf %112, %116 : vector<128x128xf32>
    %c0_55 = arith.constant 0 : index
    %c0_56 = arith.constant 0 : index
    %118 = vector.load %arg13[%c0_55, %c0_56] : memref<128x128xf32, #tpu.memory_space<vmem>>, vector<128x128xf32>
    tpu.vector_store %arg13[%c0_55, %c0_56], %117 {strides = array<i32>} : memref<128x128xf32, #tpu.memory_space<vmem>>, vector<128x128xf32>,
    %119 = vector.extract_strided_slice %89 {offsets = [2, 0, 0], sizes = [8, 18, 128], strides = [1, 1, 1]} : vector<10x18x128xbf16> to vector<8x18x128xbf16>
    %120 = vector.extract_strided_slice %119 {offsets = [0, 0, 0], sizes = [8, 16, 128], strides = [1, 1, 1]} : vector<8x18x128xbf16> to vector<8x16x128xbf16>
    %121 = vector.extract_strided_slice %119 {offsets = [0, 1, 0], sizes = [8, 16, 128], strides = [1, 1, 1]} : vector<8x18x128xbf16> to vector<8x16x128xbf16>
    %122 = vector.extract_strided_slice %119 {offsets = [0, 2, 0], sizes = [8, 16, 128], strides = [1, 1, 1]} : vector<8x18x128xbf16> to vector<8x16x128xbf16>
    %123 = tpu.concatenate %120, %121, %122 in 2 : vector<8x16x128xbf16>, vector<8x16x128xbf16>, vector<8x16x128xbf16> -> vector<8x16x384xbf16>
    %c0_57 = arith.constant 0 : index
    %c0_58 = arith.constant 0 : index
    %124 = vector.load %arg13[%c0_57, %c0_58] : memref<128x128xf32, #tpu.memory_space<vmem>>, vector<128x128xf32>
    %125 = vector.shape_cast %123 : vector<8x16x384xbf16> to vector<128x384xbf16>
    %c2 = arith.constant 2 : index
    %c0_59 = arith.constant 0 : index
    %c0_60 = arith.constant 0 : index
    %126 = vector.load %arg8[%c2, %c0_59, %c0_60] : memref<3x384x128xbf16, #tpu.memory_space<vmem>>, vector<1x384x128xbf16>
    %127 = vector.shape_cast %126 : vector<1x384x128xbf16> to vector<384x128xbf16>
    %cst_61 = arith.constant dense<0.000000e+00> : vector<128x128xf32>
    %128 = tpu.matmul %125, %127, %cst_61 {dimension_numbers = #tpu.dot_dimension_numbers<[1], [0], [0], [1], [0, 0, 1, 1], [], []>} : vector<128x384xbf16>, vector<384x128xbf16>, vector<128x128xf32> -> vector<128x128xf32>
    %129 = arith.addf %124, %128 : vector<128x128xf32>
    %c0_62 = arith.constant 0 : index
    %c0_63 = arith.constant 0 : index
    %130 = vector.load %arg13[%c0_62, %c0_63] : memref<128x128xf32, #tpu.memory_space<vmem>>, vector<128x128xf32>
    tpu.vector_store %arg13[%c0_62, %c0_63], %129 {strides = array<i32>} : memref<128x128xf32, #tpu.memory_space<vmem>>, vector<128x128xf32>,
    %131 = vector.extract_strided_slice %92 {offsets = [0, 0, 0], sizes = [8, 18, 128], strides = [1, 1, 1]} : vector<10x18x128xbf16> to vector<8x18x128xbf16>
    %132 = vector.extract_strided_slice %131 {offsets = [0, 0, 0], sizes = [8, 16, 128], strides = [1, 1, 1]} : vector<8x18x128xbf16> to vector<8x16x128xbf16>
    %133 = vector.extract_strided_slice %131 {offsets = [0, 1, 0], sizes = [8, 16, 128], strides = [1, 1, 1]} : vector<8x18x128xbf16> to vector<8x16x128xbf16>
    %134 = vector.extract_strided_slice %131 {offsets = [0, 2, 0], sizes = [8, 16, 128], strides = [1, 1, 1]} : vector<8x18x128xbf16> to vector<8x16x128xbf16>
    %135 = tpu.concatenate %132, %133, %134 in 2 : vector<8x16x128xbf16>, vector<8x16x128xbf16>, vector<8x16x128xbf16> -> vector<8x16x384xbf16>
    %c0_64 = arith.constant 0 : index
    %c0_65 = arith.constant 0 : index
    %136 = vector.load %arg13[%c0_64, %c0_65] : memref<128x128xf32, #tpu.memory_space<vmem>>, vector<128x128xf32>
    %137 = vector.shape_cast %135 : vector<8x16x384xbf16> to vector<128x384xbf16>
    %c0_66 = arith.constant 0 : index
    %c0_67 = arith.constant 0 : index
    %c0_68 = arith.constant 0 : index
    %138 = vector.load %arg9[%c0_66, %c0_67, %c0_68] : memref<3x384x128xbf16, #tpu.memory_space<vmem>>, vector<1x384x128xbf16>
    %139 = vector.shape_cast %138 : vector<1x384x128xbf16> to vector<384x128xbf16>
    %cst_69 = arith.constant dense<0.000000e+00> : vector<128x128xf32>
    %140 = tpu.matmul %137, %139, %cst_69 {dimension_numbers = #tpu.dot_dimension_numbers<[1], [0], [0], [1], [0, 0, 1, 1], [], []>} : vector<128x384xbf16>, vector<384x128xbf16>, vector<128x128xf32> -> vector<128x128xf32>
    %141 = arith.addf %136, %140 : vector<128x128xf32>
    %c0_70 = arith.constant 0 : index
    %c0_71 = arith.constant 0 : index
    %142 = vector.load %arg13[%c0_70, %c0_71] : memref<128x128xf32, #tpu.memory_space<vmem>>, vector<128x128xf32>
    tpu.vector_store %arg13[%c0_70, %c0_71], %141 {strides = array<i32>} : memref<128x128xf32, #tpu.memory_space<vmem>>, vector<128x128xf32>,
    %143 = vector.extract_strided_slice %92 {offsets = [1, 0, 0], sizes = [8, 18, 128], strides = [1, 1, 1]} : vector<10x18x128xbf16> to vector<8x18x128xbf16>
    %144 = vector.extract_strided_slice %143 {offsets = [0, 0, 0], sizes = [8, 16, 128], strides = [1, 1, 1]} : vector<8x18x128xbf16> to vector<8x16x128xbf16>
    %145 = vector.extract_strided_slice %143 {offsets = [0, 1, 0], sizes = [8, 16, 128], strides = [1, 1, 1]} : vector<8x18x128xbf16> to vector<8x16x128xbf16>
    %146 = vector.extract_strided_slice %143 {offsets = [0, 2, 0], sizes = [8, 16, 128], strides = [1, 1, 1]} : vector<8x18x128xbf16> to vector<8x16x128xbf16>
    %147 = tpu.concatenate %144, %145, %146 in 2 : vector<8x16x128xbf16>, vector<8x16x128xbf16>, vector<8x16x128xbf16> -> vector<8x16x384xbf16>
    %c0_72 = arith.constant 0 : index
    %c0_73 = arith.constant 0 : index
    %148 = vector.load %arg13[%c0_72, %c0_73] : memref<128x128xf32, #tpu.memory_space<vmem>>, vector<128x128xf32>
    %149 = vector.shape_cast %147 : vector<8x16x384xbf16> to vector<128x384xbf16>
    %c1_74 = arith.constant 1 : index
    %c0_75 = arith.constant 0 : index
    %c0_76 = arith.constant 0 : index
    %150 = vector.load %arg9[%c1_74, %c0_75, %c0_76] : memref<3x384x128xbf16, #tpu.memory_space<vmem>>, vector<1x384x128xbf16>
    %151 = vector.shape_cast %150 : vector<1x384x128xbf16> to vector<384x128xbf16>
    %cst_77 = arith.constant dense<0.000000e+00> : vector<128x128xf32>
    %152 = tpu.matmul %149, %151, %cst_77 {dimension_numbers = #tpu.dot_dimension_numbers<[1], [0], [0], [1], [0, 0, 1, 1], [], []>} : vector<128x384xbf16>, vector<384x128xbf16>, vector<128x128xf32> -> vector<128x128xf32>
    %153 = arith.addf %148, %152 : vector<128x128xf32>
    %c0_78 = arith.constant 0 : index
    %c0_79 = arith.constant 0 : index
    %154 = vector.load %arg13[%c0_78, %c0_79] : memref<128x128xf32, #tpu.memory_space<vmem>>, vector<128x128xf32>
    tpu.vector_store %arg13[%c0_78, %c0_79], %153 {strides = array<i32>} : memref<128x128xf32, #tpu.memory_space<vmem>>, vector<128x128xf32>,
    %155 = vector.extract_strided_slice %92 {offsets = [2, 0, 0], sizes = [8, 18, 128], strides = [1, 1, 1]} : vector<10x18x128xbf16> to vector<8x18x128xbf16>
    %156 = vector.extract_strided_slice %155 {offsets = [0, 0, 0], sizes = [8, 16, 128], strides = [1, 1, 1]} : vector<8x18x128xbf16> to vector<8x16x128xbf16>
    %157 = vector.extract_strided_slice %155 {offsets = [0, 1, 0], sizes = [8, 16, 128], strides = [1, 1, 1]} : vector<8x18x128xbf16> to vector<8x16x128xbf16>
    %158 = vector.extract_strided_slice %155 {offsets = [0, 2, 0], sizes = [8, 16, 128], strides = [1, 1, 1]} : vector<8x18x128xbf16> to vector<8x16x128xbf16>
    %159 = tpu.concatenate %156, %157, %158 in 2 : vector<8x16x128xbf16>, vector<8x16x128xbf16>, vector<8x16x128xbf16> -> vector<8x16x384xbf16>
    %c0_80 = arith.constant 0 : index
    %c0_81 = arith.constant 0 : index
    %160 = vector.load %arg13[%c0_80, %c0_81] : memref<128x128xf32, #tpu.memory_space<vmem>>, vector<128x128xf32>
    %161 = vector.shape_cast %159 : vector<8x16x384xbf16> to vector<128x384xbf16>
    %c2_82 = arith.constant 2 : index
    %c0_83 = arith.constant 0 : index
    %c0_84 = arith.constant 0 : index
    %162 = vector.load %arg9[%c2_82, %c0_83, %c0_84] : memref<3x384x128xbf16, #tpu.memory_space<vmem>>, vector<1x384x128xbf16>
    %163 = vector.shape_cast %162 : vector<1x384x128xbf16> to vector<384x128xbf16>
    %cst_85 = arith.constant dense<0.000000e+00> : vector<128x128xf32>
    %164 = tpu.matmul %161, %163, %cst_85 {dimension_numbers = #tpu.dot_dimension_numbers<[1], [0], [0], [1], [0, 0, 1, 1], [], []>} : vector<128x384xbf16>, vector<384x128xbf16>, vector<128x128xf32> -> vector<128x128xf32>
    %165 = arith.addf %160, %164 : vector<128x128xf32>
    %c0_86 = arith.constant 0 : index
    %c0_87 = arith.constant 0 : index
    %166 = vector.load %arg13[%c0_86, %c0_87] : memref<128x128xf32, #tpu.memory_space<vmem>>, vector<128x128xf32>
    tpu.vector_store %arg13[%c0_86, %c0_87], %165 {strides = array<i32>} : memref<128x128xf32, #tpu.memory_space<vmem>>, vector<128x128xf32>,
    %c0_88 = arith.constant 0 : index
    %c0_89 = arith.constant 0 : index
    %167 = vector.load %arg13[%c0_88, %c0_89] : memref<128x128xf32, #tpu.memory_space<vmem>>, vector<128x128xf32>
    %c0_90 = arith.constant 0 : index
    %c0_91 = arith.constant 0 : index
    %168 = vector.load %arg10[%c0_90, %c0_91] : memref<1x128xf32, #tpu.memory_space<vmem>>, vector<1x128xf32>
    %169 = vector.broadcast %168 : vector<1x128xf32> to vector<128x128xf32>
    %170 = arith.mulf %167, %169 : vector<128x128xf32>
    %c0_92 = arith.constant 0 : index
    %c0_93 = arith.constant 0 : index
    %171 = vector.load %arg11[%c0_92, %c0_93] : memref<1x128xf32, #tpu.memory_space<vmem>>, vector<1x128xf32>
    %172 = vector.broadcast %171 : vector<1x128xf32> to vector<128x128xf32>
    %173 = arith.addf %170, %172 : vector<128x128xf32>
    %cst_94 = arith.constant 0.000000e+00 : f32
    %174 = vector.broadcast %cst_94 : f32 to vector<128x128xf32>
    %175 = arith.maximumf %173, %174 : vector<128x128xf32>
    %176 = vector.shape_cast %175 : vector<128x128xf32> to vector<8x16x128xf32>
    %177 = arith.truncf %176 : vector<8x16x128xf32> to vector<8x16x128xbf16>
    %c0_95 = arith.constant 0 : index
    %c0_96 = arith.constant 0 : index
    %c0_97 = arith.constant 0 : index
    %c0_98 = arith.constant 0 : index
    %178 = vector.load %arg12[%c0_95, %c0_96, %c0_97, %c0_98] : memref<1x8x16x128xbf16, #tpu.memory_space<vmem>>, vector<1x8x16x128xbf16>
    %179 = vector.shape_cast %178 : vector<1x8x16x128xbf16> to vector<8x16x128xbf16>
    %180 = vector.shape_cast %177 : vector<8x16x128xbf16> to vector<1x8x16x128xbf16>
    tpu.vector_store %arg12[%c0_95, %c0_96, %c0_97, %c0_98], %180 {strides = array<i32>} : memref<1x8x16x128xbf16, #tpu.memory_space<vmem>>, vector<1x8x16x128xbf16>,
    return
  }
  func.func @transform_0(%arg0: i32, %arg1: i32) -> (i32, i32, i32, i32) {
    %c0_i32 = arith.constant 0 : i32
    %c0_i32_0 = arith.constant 0 : i32
    %c0_i32_1 = arith.constant 0 : i32
    return %arg0, %arg1, %c0_i32, %c0_i32_0 : i32, i32, i32, i32
  }
  func.func @transform_1(%arg0: i32, %arg1: i32) -> (i32, i32, i32, i32) {
    %c8_i32 = arith.constant 8 : i32
    %0 = arith.muli %arg1, %c8_i32 : i32
    %c1_i32 = arith.constant 1 : i32
    %1 = arith.subi %0, %c1_i32 : i32
    %c0_i32 = arith.constant 0 : i32
    %2 = arith.maxsi %1, %c0_i32 : i32
    %c0_i32_0 = arith.constant 0 : i32
    %c0_i32_1 = arith.constant 0 : i32
    %c0_i32_2 = arith.constant 0 : i32
    return %arg0, %2, %c0_i32_0, %c0_i32_1 : i32, i32, i32, i32
  }
  func.func @transform_2(%arg0: i32, %arg1: i32) -> (i32, i32, i32, i32) {
    %c8_i32 = arith.constant 8 : i32
    %0 = arith.muli %arg1, %c8_i32 : i32
    %c8_i32_0 = arith.constant 8 : i32
    %1 = arith.addi %0, %c8_i32_0 : i32
    %c15_i32 = arith.constant 15 : i32
    %2 = arith.minsi %1, %c15_i32 : i32
    %c0_i32 = arith.constant 0 : i32
    %c0_i32_1 = arith.constant 0 : i32
    %c0_i32_2 = arith.constant 0 : i32
    return %arg0, %2, %c0_i32, %c0_i32_1 : i32, i32, i32, i32
  }
  func.func @transform_3(%arg0: i32, %arg1: i32) -> (i32, i32, i32, i32) {
    %c0_i32 = arith.constant 0 : i32
    %c0_i32_0 = arith.constant 0 : i32
    %c0_i32_1 = arith.constant 0 : i32
    return %arg0, %arg1, %c0_i32, %c0_i32_0 : i32, i32, i32, i32
  }
  func.func @transform_4(%arg0: i32, %arg1: i32) -> (i32, i32, i32, i32) {
    %c4_i32 = arith.constant 4 : i32
    %0 = arith.muli %arg1, %c4_i32 : i32
    %c1_i32 = arith.constant 1 : i32
    %1 = arith.subi %0, %c1_i32 : i32
    %c0_i32 = arith.constant 0 : i32
    %2 = arith.maxsi %1, %c0_i32 : i32
    %c0_i32_0 = arith.constant 0 : i32
    %c0_i32_1 = arith.constant 0 : i32
    %c0_i32_2 = arith.constant 0 : i32
    return %arg0, %2, %c0_i32_0, %c0_i32_1 : i32, i32, i32, i32
  }
  func.func @transform_5(%arg0: i32, %arg1: i32) -> (i32, i32, i32, i32) {
    %c4_i32 = arith.constant 4 : i32
    %0 = arith.muli %arg1, %c4_i32 : i32
    %c4_i32_0 = arith.constant 4 : i32
    %1 = arith.addi %0, %c4_i32_0 : i32
    %c7_i32 = arith.constant 7 : i32
    %2 = arith.minsi %1, %c7_i32 : i32
    %c0_i32 = arith.constant 0 : i32
    %c0_i32_1 = arith.constant 0 : i32
    %c0_i32_2 = arith.constant 0 : i32
    return %arg0, %2, %c0_i32, %c0_i32_1 : i32, i32, i32, i32
  }
  func.func @transform_6(%arg0: i32, %arg1: i32) -> (i32, i32, i32) {
    %c0_i32 = arith.constant 0 : i32
    %c0_i32_0 = arith.constant 0 : i32
    %c0_i32_1 = arith.constant 0 : i32
    %c0_i32_2 = arith.constant 0 : i32
    return %c0_i32, %c0_i32_0, %c0_i32_1 : i32, i32, i32
  }
  func.func @transform_7(%arg0: i32, %arg1: i32) -> (i32, i32, i32) {
    %c0_i32 = arith.constant 0 : i32
    %c0_i32_0 = arith.constant 0 : i32
    %c0_i32_1 = arith.constant 0 : i32
    %c0_i32_2 = arith.constant 0 : i32
    return %c0_i32, %c0_i32_0, %c0_i32_1 : i32, i32, i32
  }
  func.func @transform_8(%arg0: i32, %arg1: i32) -> (i32, i32) {
    %c0_i32 = arith.constant 0 : i32
    %c0_i32_0 = arith.constant 0 : i32
    %c0_i32_1 = arith.constant 0 : i32
    return %c0_i32, %c0_i32_0 : i32, i32
  }
  func.func @transform_9(%arg0: i32, %arg1: i32) -> (i32, i32) {
    %c0_i32 = arith.constant 0 : i32
    %c0_i32_0 = arith.constant 0 : i32
    %c0_i32_1 = arith.constant 0 : i32
    return %c0_i32, %c0_i32_0 : i32, i32
  }
  func.func @transform_10(%arg0: i32, %arg1: i32) -> (i32, i32, i32, i32) {
    %c0_i32 = arith.constant 0 : i32
    %c0_i32_0 = arith.constant 0 : i32
    %c0_i32_1 = arith.constant 0 : i32
    return %arg0, %arg1, %c0_i32, %c0_i32_0 : i32, i32, i32, i32
  }
}

</mosaic_0001>

<llo_original>
// kernel: unet_up_conv2d_ct.3
$region0: #{unet_up_conv2d_ct.3}
  #allocation0 [shape = 'u32[]', space=smem, size = 0x4, offset = 0x4, fixed_abs, tag = 'smem constant byte address 0x4 - core index']
  #allocation1 [shape = 'u32[144,128]{1,0:T(1,128)}', space=vmem, size = 0x12000, scoped, tag = 'internal scratch']
  #allocation2 [shape = 'f32[128,128]{1,0:T(8,128)}', space=vmem, size = 0x10000, scoped, tag = 'scratch operand']
  %s0 = inlined_call_operand.vmem [shape: bf16[2,16,16,128], index: 0, kind: input, shape index: {}, may-alias: {0,1,2}]
  %s1 = inlined_call_operand.vmem [shape: bf16[2,16,16,128], index: 1, kind: input, shape index: {}, may-alias: {0,1,2}]
  %s2 = inlined_call_operand.vmem [shape: bf16[2,16,16,128], index: 2, kind: input, shape index: {}, may-alias: {0,1,2}]
  %s3 = inlined_call_operand.vmem [shape: bf16[3,384,128], index: 3, kind: input, shape index: {}]
  %s4 = inlined_call_operand.vmem [shape: f32[1,128], index: 4, kind: input, shape index: {}]
  %s5 = inlined_call_operand.vmem [shape: f32[1,128], index: 5, kind: input, shape index: {}]
  %s6 = inlined_call_operand.hbm [shape: f32[2,16,16,128], index: 6, kind: output, shape index: {}]
  %s7 = sld [smem:[#allocation0]]
  $region57: #{unet_up_conv2d_ct.3} parent=0
    _
  %s9 = ssub.s32 1, %s7
  %s10 = scalar_select 0, %s9, %s7
  $region1: #{unet_up_conv2d_ct.3} parent=0
    #allocation3 [shape = 'u8[131072]{0}', space=vmem, size = 0x20000, scoped, tag = 'output window, operand 0']
    #allocation4 [shape = 's32[2]{0}', space=sflag, size = 0x8, scoped, tag = 'scoped memory for unet_up_conv2d_ct.3']
    %11 = vsyncpa [#allocation4], 0
    %s12 = scalar_lea.sflag [#allocation4], 1
    %13 = vsyncpa %s12, 0
    loop: start=0, step=1, limit=6
    $region2: #{unet_up_conv2d_ct.3} parent=1 // loop_pre_header
      _
    $region3: #{unet_up_conv2d_ct.3} parent=1 // loop_header
      %s15 = sphi 0, %s19
      %p16 = scmp.ge.s32.totalorder %s15, 6
      %s22 = sphi 0, %s34
      %s23 = sphi 0, %s30
      %s24 = sphi 0, %s22
      %s25 = sphi 0, %s23
      %s26 = sphi 0, %s24
      %s27 = sphi 0, %s25
      %s39 = sphi 0, %s41
      %s42 = sphi 0, %s39
      %s43 = sphi 0, %s42
      %s59 = sphi 0, %s43
      %s75 = sphi 0, %s77
      %s78 = sphi 0, %s75
      %s79 = sphi 0, %s78
      %s95 = sphi 0, %s79
      %s111 = sphi 0, %s113
      %s114 = sphi 0, %s111
      %s115 = sphi 0, %s114
      %s131 = sphi 0, %s115
      %s135 = sphi 0, %s135
      %s137 = sphi 0, %s135
      %s138 = sphi 0, %s137
      %s152 = sphi 0, %s138
      %s156 = sphi 0, %s156
      %s158 = sphi 0, %s156
      %s159 = sphi 0, %s158
      %s173 = sphi 0, %s159
      %s177 = sphi 0, %s177
      %s179 = sphi 0, %s177
      %s180 = sphi 0, %s179
      %s194 = sphi 0, %s180
      %s202 = sphi 0, %s204
      %s205 = sphi 0, %s202
      %s206 = sphi 0, %s205
      %s222 = sphi 0, %s206
    $region4: #{unet_up_conv2d_ct.3} parent=1 // loop_header_branch
      %18 = sbr.rel (%p16) target = $region8
    $region5: #{unet_up_conv2d_ct.3} parent=1 // loop_body
      %s20 = ssub.s32 %s15, 1
      %s21 = ssub.s32 %s15, 2
      %s28 = sadd.s32 1, %s23
      %p29 = scmp.ge.s32.totalorder %s28, 2
      %s30 = scalar_select %p29, 0, %s28
      %s31 = sadd.s32 1, %s22
      %s32 = scalar_select %p29, %s31, %s22
      %p33 = scmp.ge.s32.totalorder %s32, 2
      %s34 = scalar_select %p33, 0, %s32
      %s35 = ssub.s32 %s22, %s34
      %s36 = ssub.s32 %s23, %s30
      %s37 = sor.u32 %s35, %s36
      %p38 = scmp.eq.s32.totalorder %s37, 0
      %s40 = sadd.s32 %s39, 1
      %s41 = scalar_select %p38, %s39, %s40
      %p44 = pneg %p38
      %p45 = scmp.eq.s32.totalorder %s15, 3
      %p46 = por %p44, %p45
      %p47 = scmp.ne.s32.totalorder %s39, %s42
      %p48 = scmp.eq.s32.totalorder %s15, 0
      %p49 = por %p47, %p48
      %p50 = scmp.ne.s32.totalorder %s39, %s42
      %p51 = scmp.eq.s32.totalorder %s20, 3
      %p52 = por %p50, %p51
      %p53 = scmp.ne.s32.totalorder %s42, %s43
      %p54 = scmp.eq.s32.totalorder %s20, 0
      %p55 = por %p53, %p54
      %p56 = scmp.ne.s32.totalorder %s42, %s43
      %p57 = scmp.eq.s32.totalorder %s21, 3
      %p58 = por %p56, %p57
      %p60 = scmp.ne.s32.totalorder %s43, %s59
      %p61 = scmp.eq.s32.totalorder %s21, 0
      %p62 = por %p60, %p61
      %s63 = smul.u32 %s23, 8
      %s64 = ssub.s32 %s63, 1
      %p65 = scmp.gt.s32.totalorder %s64, 0
      %s66 = scalar_select %p65, %s64, 0
      %s67 = smul.u32 %s30, 8
      %s68 = ssub.s32 %s67, 1
      %p69 = scmp.gt.s32.totalorder %s68, 0
      %s70 = scalar_select %p69, %s68, 0
      %s71 = ssub.s32 %s22, %s34
      %s72 = ssub.s32 %s66, %s70
      %s73 = sor.u32 %s71, %s72
      %p74 = scmp.eq.s32.totalorder %s73, 0
      %s76 = sadd.s32 %s75, 1
      %s77 = scalar_select %p74, %s75, %s76
      %p80 = pneg %p74
      %p81 = scmp.eq.s32.totalorder %s15, 3
      %p82 = por %p80, %p81
      %p83 = scmp.ne.s32.totalorder %s75, %s78
      %p84 = scmp.eq.s32.totalorder %s15, 0
      %p85 = por %p83, %p84
      %p86 = scmp.ne.s32.totalorder %s75, %s78
      %p87 = scmp.eq.s32.totalorder %s20, 3
      %p88 = por %p86, %p87
      %p89 = scmp.ne.s32.totalorder %s78, %s79
      %p90 = scmp.eq.s32.totalorder %s20, 0
      %p91 = por %p89, %p90
      %p92 = scmp.ne.s32.totalorder %s78, %s79
      %p93 = scmp.eq.s32.totalorder %s21, 3
      %p94 = por %p92, %p93
      %p96 = scmp.ne.s32.totalorder %s79, %s95
      %p97 = scmp.eq.s32.totalorder %s21, 0
      %p98 = por %p96, %p97
      %s99 = smul.u32 %s23, 8
      %s100 = sadd.s32 %s99, 8
      %p101 = scmp.lt.s32.totalorder %s100, 15
      %s102 = scalar_select %p101, %s100, 15
      %s103 = smul.u32 %s30, 8
      %s104 = sadd.s32 %s103, 8
      %p105 = scmp.lt.s32.totalorder %s104, 15
      %s106 = scalar_select %p105, %s104, 15
      %s107 = ssub.s32 %s22, %s34
      %s108 = ssub.s32 %s102, %s106
      %s109 = sor.u32 %s107, %s108
      %p110 = scmp.eq.s32.totalorder %s109, 0
      %s112 = sadd.s32 %s111, 1
      %s113 = scalar_select %p110, %s111, %s112
      %p116 = pneg %p110
      %p117 = scmp.eq.s32.totalorder %s15, 3
      %p118 = por %p116, %p117
      %p119 = scmp.ne.s32.totalorder %s111, %s114
      %p120 = scmp.eq.s32.totalorder %s15, 0
      %p121 = por %p119, %p120
      %p122 = scmp.ne.s32.totalorder %s111, %s114
      %p123 = scmp.eq.s32.totalorder %s20, 3
      %p124 = por %p122, %p123
      %p125 = scmp.ne.s32.totalorder %s114, %s115
      %p126 = scmp.eq.s32.totalorder %s20, 0
      %p127 = por %p125, %p126
      %p128 = scmp.ne.s32.totalorder %s114, %s115
      %p129 = scmp.eq.s32.totalorder %s21, 3
      %p130 = por %p128, %p129
      %p132 = scmp.ne.s32.totalorder %s115, %s131
      %p133 = scmp.eq.s32.totalorder %s21, 0
      %p134 = por %p132, %p133
      %s136 = sadd.s32 %s135, 1
      %p139 = scmp.eq.s32.totalorder %s15, 3
      %p140 = scmp.ne.s32.totalorder %s135, %s137
      %p141 = scmp.eq.s32.totalorder %s15, 0
      %p142 = por %p140, %p141
      %p143 = scmp.ne.s32.totalorder %s135, %s137
      %p144 = scmp.eq.s32.totalorder %s20, 3
      %p145 = por %p143, %p144
      %p146 = scmp.ne.s32.totalorder %s137, %s138
      %p147 = scmp.eq.s32.totalorder %s20, 0
      %p148 = por %p146, %p147
      %p149 = scmp.ne.s32.totalorder %s137, %s138
      %p150 = scmp.eq.s32.totalorder %s21, 3
      %p151 = por %p149, %p150
      %p153 = scmp.ne.s32.totalorder %s138, %s152
      %p154 = scmp.eq.s32.totalorder %s21, 0
      %p155 = por %p153, %p154
      %s157 = sadd.s32 %s156, 1
      %p160 = scmp.eq.s32.totalorder %s15, 3
      %p161 = scmp.ne.s32.totalorder %s156, %s158
      %p162 = scmp.eq.s32.totalorder %s15, 0
      %p163 = por %p161, %p162
      %p164 = scmp.ne.s32.totalorder %s156, %s158
      %p165 = scmp.eq.s32.totalorder %s20, 3
      %p166 = por %p164, %p165
      %p167 = scmp.ne.s32.totalorder %s158, %s159
      %p168 = scmp.eq.s32.totalorder %s20, 0
      %p169 = por %p167, %p168
      %p170 = scmp.ne.s32.totalorder %s158, %s159
      %p171 = scmp.eq.s32.totalorder %s21, 3
      %p172 = por %p170, %p171
      %p174 = scmp.ne.s32.totalorder %s159, %s173
      %p175 = scmp.eq.s32.totalorder %s21, 0
      %p176 = por %p174, %p175
      %s178 = sadd.s32 %s177, 1
      %p181 = scmp.eq.s32.totalorder %s15, 3
      %p182 = scmp.ne.s32.totalorder %s177, %s179
      %p183 = scmp.eq.s32.totalorder %s15, 0
      %p184 = por %p182, %p183
      %p185 = scmp.ne.s32.totalorder %s177, %s179
      %p186 = scmp.eq.s32.totalorder %s20, 3
      %p187 = por %p185, %p186
      %p188 = scmp.ne.s32.totalorder %s179, %s180
      %p189 = scmp.eq.s32.totalorder %s20, 0
      %p190 = por %p188, %p189
      %p191 = scmp.ne.s32.totalorder %s179, %s180
      %p192 = scmp.eq.s32.totalorder %s21, 3
      %p193 = por %p191, %p192
      %p195 = scmp.ne.s32.totalorder %s180, %s194
      %p196 = scmp.eq.s32.totalorder %s21, 0
      %p197 = por %p195, %p196
      %s198 = ssub.s32 %s22, %s34
      %s199 = ssub.s32 %s23, %s30
      %s200 = sor.u32 %s198, %s199
      %p201 = scmp.eq.s32.totalorder %s200, 0
      %s203 = sadd.s32 %s202, 1
      %s204 = scalar_select %p201, %s202, %s203
      %p207 = pneg %p201
      %p208 = scmp.eq.s32.totalorder %s15, 3
      %p209 = por %p207, %p208
      %p210 = scmp.ne.s32.totalorder %s202, %s205
      %p211 = scmp.eq.s32.totalorder %s15, 0
      %p212 = por %p210, %p211
      %p213 = scmp.ne.s32.totalorder %s202, %s205
      %p214 = scmp.eq.s32.totalorder %s20, 3
      %p215 = por %p213, %p214
      %p216 = scmp.ne.s32.totalorder %s205, %s206
      %p217 = scmp.eq.s32.totalorder %s20, 0
      %p218 = por %p216, %p217
      %p219 = scmp.ne.s32.totalorder %s205, %s206
      %p220 = scmp.eq.s32.totalorder %s21, 3
      %p221 = por %p219, %p220
      %p223 = scmp.ne.s32.totalorder %s206, %s222
      %p224 = scmp.eq.s32.totalorder %s21, 0
      %p225 = por %p223, %p224
      %p226 = scmp.le.s32.totalorder 1, %s15
      %p227 = scmp.lt.s32.totalorder %s15, 5
      %p228 = pnand %p226, %p227
      %p229 = pneg %p228
      // Predicated region
      $region9: #{unet_up_conv2d_ct.3} parent=5 // pred_check
        _
      $region10: #{unet_up_conv2d_ct.3} parent=5 // pred_check_branch
        %231 = sbr.rel (%p228) target = $region12
      $region11: #{unet_up_conv2d_ct.3} parent=5 // pred_region
        %s232 = ssub.s32 %s15, 1
        // Predicated region
        $region13: #{unet_up_conv2d_ct.3} parent=11 // pred_check
          %p233 = pneg %p148
        $region14: #{unet_up_conv2d_ct.3} parent=11 // pred_check_branch
          %235 = sbr.rel (%p233) target = $region16
        $region15: #{unet_up_conv2d_ct.3} parent=11 // pred_region
          _
        $region16: #{unet_up_conv2d_ct.3} parent=11 // pred_fallthru
          _
        // Predicated region
        $region17: #{unet_up_conv2d_ct.3} parent=11 // pred_check
          %p236 = pneg %p169
        $region18: #{unet_up_conv2d_ct.3} parent=11 // pred_check_branch
          %238 = sbr.rel (%p236) target = $region20
        $region19: #{unet_up_conv2d_ct.3} parent=11 // pred_region
          _
        $region20: #{unet_up_conv2d_ct.3} parent=11 // pred_fallthru
          _
        // Predicated region
        $region21: #{unet_up_conv2d_ct.3} parent=11 // pred_check
          %p239 = pneg %p190
        $region22: #{unet_up_conv2d_ct.3} parent=11 // pred_check_branch
          %241 = sbr.rel (%p239) target = $region24
        $region23: #{unet_up_conv2d_ct.3} parent=11 // pred_region
          _
        $region24: #{unet_up_conv2d_ct.3} parent=11 // pred_fallthru
          _
      $region12: #{unet_up_conv2d_ct.3} parent=5 // pred_fallthru
        _
      %p242 = scmp.lt.s32.totalorder %s15, 4
      // Predicated region
      $region25: #{unet_up_conv2d_ct.3} parent=5 // pred_check
        %p243 = pneg %p242
      $region26: #{unet_up_conv2d_ct.3} parent=5 // pred_check_branch
        %245 = sbr.rel (%p243) target = $region28
      $region27: #{unet_up_conv2d_ct.3} parent=5 // pred_region
        // Predicated region
        $region29: #{unet_up_conv2d_ct.3} parent=27 // pred_check
          %p246 = pneg %p49
        $region30: #{unet_up_conv2d_ct.3} parent=27 // pred_check_branch
          %248 = sbr.rel (%p246) target = $region32
        $region31: #{unet_up_conv2d_ct.3} parent=27 // pred_region
          %s249 = smul.u32 8, %s23
          %p250 = scmp.lt.s32.totalorder %s22, 1
          %s251 = scalar_select %p250, %s22, 1
          %p252 = scmp.lt.s32.totalorder %s249, 15
          %s253 = scalar_select %p252, %s249, 15
          %s254 = smul.addr %s253, 2
          %s255 = smul.addr %s251, 32
          %s256 = sadd.s32 %s254, %s255
          %s257 = smul.addr %s256, 4
          %s258 = scalar_lea.vmem %s0, %s257
          %s259 = smul.u32 8, %s23
        $region32: #{unet_up_conv2d_ct.3} parent=27 // pred_fallthru
          _
        // Predicated region
        $region33: #{unet_up_conv2d_ct.3} parent=27 // pred_check
          %p260 = pneg %p85
        $region34: #{unet_up_conv2d_ct.3} parent=27 // pred_check_branch
          %262 = sbr.rel (%p260) target = $region36
        $region35: #{unet_up_conv2d_ct.3} parent=27 // pred_region
          %s263 = smul.u32 %s23, 8
          %s264 = ssub.s32 %s263, 1
          %p265 = scmp.gt.s32.totalorder %s264, 0
          %s266 = scalar_select %p265, %s264, 0
          %p267 = scmp.lt.s32.totalorder %s22, 1
          %s268 = scalar_select %p267, %s22, 1
          %p269 = scmp.lt.s32.totalorder %s266, 15
          %s270 = scalar_select %p269, %s266, 15
          %s271 = smul.addr %s270, 2
          %s272 = smul.addr %s268, 32
          %s273 = sadd.s32 %s271, %s272
          %s274 = smul.addr %s273, 4
          %s275 = scalar_lea.vmem %s1, %s274
          %s276 = smul.u32 %s23, 8
          %s277 = ssub.s32 %s276, 1
          %p278 = scmp.gt.s32.totalorder %s277, 0
          %s279 = scalar_select %p278, %s277, 0
        $region36: #{unet_up_conv2d_ct.3} parent=27 // pred_fallthru
          _
        // Predicated region
        $region37: #{unet_up_conv2d_ct.3} parent=27 // pred_check
          %p280 = pneg %p121
        $region38: #{unet_up_conv2d_ct.3} parent=27 // pred_check_branch
          %282 = sbr.rel (%p280) target = $region40
        $region39: #{unet_up_conv2d_ct.3} parent=27 // pred_region
          %s283 = smul.u32 %s23, 8
          %s284 = sadd.s32 %s283, 8
          %p285 = scmp.lt.s32.totalorder %s284, 15
          %s286 = scalar_select %p285, %s284, 15
          %p287 = scmp.lt.s32.totalorder %s22, 1
          %s288 = scalar_select %p287, %s22, 1
          %p289 = scmp.lt.s32.totalorder %s286, 15
          %s290 = scalar_select %p289, %s286, 15
          %s291 = smul.addr %s290, 2
          %s292 = smul.addr %s288, 32
          %s293 = sadd.s32 %s291, %s292
          %s294 = smul.addr %s293, 4
          %s295 = scalar_lea.vmem %s2, %s294
          %s296 = smul.u32 %s23, 8
          %s297 = sadd.s32 %s296, 8
          %p298 = scmp.lt.s32.totalorder %s297, 15
          %s299 = scalar_select %p298, %s297, 15
        $region40: #{unet_up_conv2d_ct.3} parent=27 // pred_fallthru
          _
      $region28: #{unet_up_conv2d_ct.3} parent=5 // pred_fallthru
        _
      %p300 = scmp.le.s32.totalorder 1, %s15
      %p301 = scmp.lt.s32.totalorder %s15, 5
      %p302 = pnand %p300, %p301
      %p303 = pneg %p302
      // Predicated region
      $region41: #{unet_up_conv2d_ct.3} parent=5 // pred_check
        _
      $region42: #{unet_up_conv2d_ct.3} parent=5 // pred_check_branch
        %305 = sbr.rel (%p302) target = $region44
      $region43: #{unet_up_conv2d_ct.3} parent=5 // pred_region
        %s306 = ssub.s32 %s15, 1
        %s307 = smul.u32 8, %s25
        %p308 = scmp.lt.s32.totalorder %s24, 1
        %s309 = scalar_select %p308, %s24, 1
        %p310 = scmp.lt.s32.totalorder %s307, 15
        %s311 = scalar_select %p310, %s307, 15
        %s312 = smul.addr %s311, 2
        %s313 = smul.addr %s309, 32
        %s314 = sadd.s32 %s312, %s313
        %s315 = smul.addr %s314, 4
        %s316 = scalar_lea.vmem %s0, %s315
        %p317 = pneg %p55
        %p318 = pneg %p52
        %s319 = smul.u32 %s25, 8
        %s320 = ssub.s32 %s319, 1
        %p321 = scmp.gt.s32.totalorder %s320, 0
        %s322 = scalar_select %p321, %s320, 0
        %p323 = scmp.lt.s32.totalorder %s24, 1
        %s324 = scalar_select %p323, %s24, 1
        %p325 = scmp.lt.s32.totalorder %s322, 15
        %s326 = scalar_select %p325, %s322, 15
        %s327 = smul.addr %s326, 2
        %s328 = smul.addr %s324, 32
        %s329 = sadd.s32 %s327, %s328
        %s330 = smul.addr %s329, 4
        %s331 = scalar_lea.vmem %s1, %s330
        %p332 = pneg %p91
        %p333 = pneg %p88
        %s334 = smul.u32 %s25, 8
        %s335 = sadd.s32 %s334, 8
        %p336 = scmp.lt.s32.totalorder %s335, 15
        %s337 = scalar_select %p336, %s335, 15
        %p338 = scmp.lt.s32.totalorder %s24, 1
        %s339 = scalar_select %p338, %s24, 1
        %p340 = scmp.lt.s32.totalorder %s337, 15
        %s341 = scalar_select %p340, %s337, 15
        %s342 = smul.addr %s341, 2
        %s343 = smul.addr %s339, 32
        %s344 = sadd.s32 %s342, %s343
        %s345 = smul.addr %s344, 4
        %s346 = scalar_lea.vmem %s2, %s345
        %p347 = pneg %p127
        %p348 = pneg %p124
        %p349 = pneg %p148
        %p350 = pneg %p145
        %p351 = pneg %p169
        %p352 = pneg %p166
        %p353 = pneg %p190
        %p354 = pneg %p187
        %p355 = pneg %p218
        %p356 = pneg %p215
        %s357 = sand.u32 %s205, 1
        %s358 = scalar_lea.sflag [#allocation4], %s357
        %s359 = sand.u32 %s205, 1
        %s360 = smul.addr %s359, 128
        %s361 = scalar_lea.vmem [#allocation3], %s360
        %s362 = smul.u32 8, %s25
        %p363 = scmp.lt.s32.totalorder %s24, 1
        %s364 = scalar_select %p363, %s24, 1
        %p365 = scmp.lt.s32.totalorder %s362, 15
        %s366 = scalar_select %p365, %s362, 15
        %s367 = smul.addr %s366, 2
        %s368 = smul.addr %s364, 32
        %s369 = sadd.s32 %s367, %s368
        %s370 = smul.addr %s369, 4
        %s371 = scalar_lea.vmem %s0, %s370
        %s372 = smul.u32 8, %s25
        %s373 = smul.u32 %s25, 8
        %s374 = ssub.s32 %s373, 1
        %p375 = scmp.gt.s32.totalorder %s374, 0
        %s376 = scalar_select %p375, %s374, 0
        %p377 = scmp.lt.s32.totalorder %s24, 1
        %s378 = scalar_select %p377, %s24, 1
        %p379 = scmp.lt.s32.totalorder %s376, 15
        %s380 = scalar_select %p379, %s376, 15
        %s381 = smul.addr %s380, 2
        %s382 = smul.addr %s378, 32
        %s383 = sadd.s32 %s381, %s382
        %s384 = smul.addr %s383, 4
        %s385 = scalar_lea.vmem %s1, %s384
        %s386 = smul.u32 %s25, 8
        %s387 = ssub.s32 %s386, 1
        %p388 = scmp.gt.s32.totalorder %s387, 0
        %s389 = scalar_select %p388, %s387, 0
        %s390 = smul.u32 %s25, 8
        %s391 = sadd.s32 %s390, 8
        %p392 = scmp.lt.s32.totalorder %s391, 15
        %s393 = scalar_select %p392, %s391, 15
        %p394 = scmp.lt.s32.totalorder %s24, 1
        %s395 = scalar_select %p394, %s24, 1
        %p396 = scmp.lt.s32.totalorder %s393, 15
        %s397 = scalar_select %p396, %s393, 15
        %s398 = smul.addr %s397, 2
        %s399 = smul.addr %s395, 32
        %s400 = sadd.s32 %s398, %s399
        %s401 = smul.addr %s400, 4
        %s402 = scalar_lea.vmem %s2, %s401
        %s403 = smul.u32 %s25, 8
        %s404 = sadd.s32 %s403, 8
        %p405 = scmp.lt.s32.totalorder %s404, 15
        %s406 = scalar_select %p405, %s404, 15
        %s407 = smul.u32 8, %s25
        %v409 = vld [vmem:[%s385] sm:$0xf]
        %v410 = vld [vmem:[%s385 + $0x4] sm:$0xf]
        %v411 = vld [vmem:[%s371] sm:$0xf]
        %v412 = vld [vmem:[%s371 + $0x4] sm:$0xf]
        %v413 = vld [vmem:[%s371 + $0x8] sm:$0xf]
        %v414 = vld [vmem:[%s371 + $0xc] sm:$0xf]
        %v415 = vld [vmem:[%s371 + $0x10] sm:$0xf]
        %v416 = vld [vmem:[%s371 + $0x14] sm:$0xf]
        %v417 = vld [vmem:[%s371 + $0x18] sm:$0xf]
        %v418 = vld [vmem:[%s371 + $0x1c] sm:$0xf]
        %v419 = vld [vmem:[%s371 + $0x20] sm:$0xf]
        %v420 = vld [vmem:[%s371 + $0x24] sm:$0xf]
        %v421 = vld [vmem:[%s371 + $0x28] sm:$0xf]
        %v422 = vld [vmem:[%s371 + $0x2c] sm:$0xf]
        %v423 = vld [vmem:[%s371 + $0x30] sm:$0xf]
        %v424 = vld [vmem:[%s371 + $0x34] sm:$0xf]
        %v425 = vld [vmem:[%s371 + $0x38] sm:$0xf]
        %v426 = vld [vmem:[%s371 + $0x3c] sm:$0xf]
        %v427 = vld [vmem:[%s402] sm:$0xf]
        %v428 = vld [vmem:[%s402 + $0x4] sm:$0xf]
        %p429 = scmp.gt.s32.totalorder %s25, 0
        %s430 = scalar_select %p429, 1, 0
        %v431 = vstv %s430
        %vm432 = vcmp.eq.s32.totalorder %v431, 1
        %p433 = scmp.lt.s32.totalorder %s25, 1
        %s434 = scalar_select %p433, 1, 0
        %v435 = vstv %s434
        %vm436 = vcmp.eq.s32.totalorder %v435, 1
        %v437 = vsel %vm432, 1, 0
        %v438 = vsel %vm436, 1, 0
        %vm439 = vcmp.eq.s32.totalorder %v437, 1
        %vm440 = vcmp.eq.s32.totalorder %v438, 1
        %v441 = vsel %vm439, %v409, 0
        %v442 = vsel %vm439, %v410, 0
        %v443 = vsel 1, %v411, 0
        %v444 = vsel 1, %v412, 0
        %v445 = vsel 1, %v413, 0
        %v446 = vsel 1, %v414, 0
        %v447 = vsel 1, %v415, 0
        %v448 = vsel 1, %v416, 0
        %v449 = vsel 1, %v417, 0
        %v450 = vsel 1, %v418, 0
        %v451 = vsel 1, %v419, 0
        %v452 = vsel 1, %v420, 0
        %v453 = vsel 1, %v421, 0
        %v454 = vsel 1, %v422, 0
        %v455 = vsel 1, %v423, 0
        %v456 = vsel 1, %v424, 0
        %v457 = vsel 1, %v425, 0
        %v458 = vsel 1, %v426, 0
        %v459 = vsel %vm440, %v427, 0
        %v460 = vsel %vm440, %v428, 0
        %v481 = vunpack.c.l.b16 %v441
        %v482 = vunpack.c.l.b16 %v442
        %v483 = vunpack.c.l.b16 %v443
        %v484 = vunpack.c.l.b16 %v444
        %v485 = vunpack.c.l.b16 %v445
        %v486 = vunpack.c.l.b16 %v446
        %v487 = vunpack.c.l.b16 %v447
        %v488 = vunpack.c.l.b16 %v448
        %v489 = vunpack.c.l.b16 %v449
        %v490 = vunpack.c.l.b16 %v450
        %v491 = vunpack.c.l.b16 %v451
        %v492 = vunpack.c.l.b16 %v452
        %v493 = vunpack.c.l.b16 %v453
        %v494 = vunpack.c.l.b16 %v454
        %v495 = vunpack.c.l.b16 %v455
        %v496 = vunpack.c.l.b16 %v456
        %v497 = vunpack.c.l.b16 %v457
        %v498 = vunpack.c.l.b16 %v458
        %v499 = vunpack.c.l.b16 %v459
        %v500 = vunpack.c.l.b16 %v460
        %v501 = vpack.c.b16 %v482, %v481
        %v502 = vpack.c.b16 %v484, %v483
        %v503 = vpack.c.b16 %v486, %v485
        %v504 = vpack.c.b16 %v488, %v487
        %v505 = vpack.c.b16 %v490, %v489
        %v506 = vpack.c.b16 %v492, %v491
        %v507 = vpack.c.b16 %v494, %v493
        %v508 = vpack.c.b16 %v496, %v495
        %v509 = vpack.c.b16 %v498, %v497
        %v510 = vpack.c.b16 %v500, %v499
        %v512 = vshrl.u32 %v501, 16
        %v514 = vrot.slane %v512, 7
        %v515 = vshll.u32 %v501, 16
        %v517 = vor.u32 %v514, %v515
        %v519 = vshrl.u32 %v502, 16
        %v521 = vrot.slane %v519, 7
        %v522 = vshll.u32 %v502, 16
        %v524 = vor.u32 %v521, %v522
        %v526 = vshrl.u32 %v503, 16
        %v528 = vrot.slane %v526, 7
        %v529 = vshll.u32 %v503, 16
        %v531 = vor.u32 %v528, %v529
        %v533 = vshrl.u32 %v504, 16
        %v535 = vrot.slane %v533, 7
        %v536 = vshll.u32 %v504, 16
        %v538 = vor.u32 %v535, %v536
        %v540 = vshrl.u32 %v505, 16
        %v542 = vrot.slane %v540, 7
        %v543 = vshll.u32 %v505, 16
        %v545 = vor.u32 %v542, %v543
        %v547 = vshrl.u32 %v506, 16
        %v549 = vrot.slane %v547, 7
        %v550 = vshll.u32 %v506, 16
        %v552 = vor.u32 %v549, %v550
        %v554 = vshrl.u32 %v507, 16
        %v556 = vrot.slane %v554, 7
        %v557 = vshll.u32 %v507, 16
        %v559 = vor.u32 %v556, %v557
        %v561 = vshrl.u32 %v508, 16
        %v563 = vrot.slane %v561, 7
        %v564 = vshll.u32 %v508, 16
        %v566 = vor.u32 %v563, %v564
        %v568 = vshrl.u32 %v509, 16
        %v570 = vrot.slane %v568, 7
        %v571 = vshll.u32 %v509, 16
        %v573 = vor.u32 %v570, %v571
        %v575 = vshrl.u32 %v510, 16
        %v577 = vrot.slane %v575, 7
        %v578 = vshll.u32 %v510, 16
        %v580 = vor.u32 %v577, %v578
        %vm601 = vcmask 1040384
        %vm602 = vsmask.f32 256
        %vm603 = vmand %vm601, %vm602
        %v604 = vsel %vm603, 0, %v517
        %v605 = vsel %vm603, 0, %v524
        %v606 = vsel %vm603, 0, %v531
        %v607 = vsel %vm603, 0, %v538
        %v608 = vsel %vm603, 0, %v545
        %v609 = vsel %vm603, 0, %v552
        %v610 = vsel %vm603, 0, %v559
        %v611 = vsel %vm603, 0, %v566
        %v612 = vsel %vm603, 0, %v573
        %v613 = vsel %vm603, 0, %v580
        %v614 = vsel %vm603, %v514, 0
        %v615 = vsel %vm603, %v521, 0
        %v616 = vsel %vm603, %v528, 0
        %v617 = vsel %vm603, %v535, 0
        %v618 = vsel %vm603, %v542, 0
        %v619 = vsel %vm603, %v549, 0
        %v620 = vsel %vm603, %v556, 0
        %v621 = vsel %vm603, %v563, 0
        %v622 = vsel %vm603, %v570, 0
        %v623 = vsel %vm603, %v577, 0
        %624 = vst [vmem:[#allocation2] sm:$0xff] 0.0
        %625 = vst [vmem:[#allocation2 + $0x8] sm:$0xff] 0.0
        %626 = vst [vmem:[#allocation2 + $0x10] sm:$0xff] 0.0
        %627 = vst [vmem:[#allocation2 + $0x18] sm:$0xff] 0.0
        %628 = vst [vmem:[#allocation2 + $0x20] sm:$0xff] 0.0
        %629 = vst [vmem:[#allocation2 + $0x28] sm:$0xff] 0.0
        %630 = vst [vmem:[#allocation2 + $0x30] sm:$0xff] 0.0
        %631 = vst [vmem:[#allocation2 + $0x38] sm:$0xff] 0.0
        %632 = vst [vmem:[#allocation2 + $0x40] sm:$0xff] 0.0
        %633 = vst [vmem:[#allocation2 + $0x48] sm:$0xff] 0.0
        %634 = vst [vmem:[#allocation2 + $0x50] sm:$0xff] 0.0
        %635 = vst [vmem:[#allocation2 + $0x58] sm:$0xff] 0.0
        %636 = vst [vmem:[#allocation2 + $0x60] sm:$0xff] 0.0
        %637 = vst [vmem:[#allocation2 + $0x68] sm:$0xff] 0.0
        %638 = vst [vmem:[#allocation2 + $0x70] sm:$0xff] 0.0
        %639 = vst [vmem:[#allocation2 + $0x78] sm:$0xff] 0.0
        %vm640 = vsmask.f32 7424
        %v642 = vshrl.u32 %v604, 16
        %v644 = vshll.u32 %v604, 16
        %v646 = vrot.slane %v644, 1
        %v647 = vor.u32 %v642, %v646
        %v649 = vshll.u32 %v614, 16
        %v651 = vrot.slane %v649, 1
        %v652 = vsel %vm640, %v647, %v651
        %v654 = vshrl.u32 %v605, 16
        %v656 = vshll.u32 %v605, 16
        %v658 = vrot.slane %v656, 1
        %v659 = vor.u32 %v654, %v658
        %v661 = vshll.u32 %v615, 16
        %v663 = vrot.slane %v661, 1
        %v664 = vsel %vm640, %v659, %v663
        %v666 = vshrl.u32 %v606, 16
        %v668 = vshll.u32 %v606, 16
        %v670 = vrot.slane %v668, 1
        %v671 = vor.u32 %v666, %v670
        %v673 = vshll.u32 %v616, 16
        %v675 = vrot.slane %v673, 1
        %v676 = vsel %vm640, %v671, %v675
        %v678 = vshrl.u32 %v607, 16
        %v680 = vshll.u32 %v607, 16
        %v682 = vrot.slane %v680, 1
        %v683 = vor.u32 %v678, %v682
        %v685 = vshll.u32 %v617, 16
        %v687 = vrot.slane %v685, 1
        %v688 = vsel %vm640, %v683, %v687
        %v690 = vshrl.u32 %v608, 16
        %v692 = vshll.u32 %v608, 16
        %v694 = vrot.slane %v692, 1
        %v695 = vor.u32 %v690, %v694
        %v697 = vshll.u32 %v618, 16
        %v699 = vrot.slane %v697, 1
        %v700 = vsel %vm640, %v695, %v699
        %v702 = vshrl.u32 %v609, 16
        %v704 = vshll.u32 %v609, 16
        %v706 = vrot.slane %v704, 1
        %v707 = vor.u32 %v702, %v706
        %v709 = vshll.u32 %v619, 16
        %v711 = vrot.slane %v709, 1
        %v712 = vsel %vm640, %v707, %v711
        %v714 = vshrl.u32 %v610, 16
        %v716 = vshll.u32 %v610, 16
        %v718 = vrot.slane %v716, 1
        %v719 = vor.u32 %v714, %v718
        %v721 = vshll.u32 %v620, 16
        %v723 = vrot.slane %v721, 1
        %v724 = vsel %vm640, %v719, %v723
        %v726 = vshrl.u32 %v611, 16
        %v728 = vshll.u32 %v611, 16
        %v730 = vrot.slane %v728, 1
        %v731 = vor.u32 %v726, %v730
        %v733 = vshll.u32 %v621, 16
        %v735 = vrot.slane %v733, 1
        %v736 = vsel %vm640, %v731, %v735
        %vm761 = vcmask 1046528
        %v762 = vrot.slane %v604, 1
        %v763 = vrot.slane %v614, 1
        %v764 = vsel %vm761, %v762, %v763
        %v765 = vrot.slane %v605, 1
        %v766 = vrot.slane %v615, 1
        %v767 = vsel %vm761, %v765, %v766
        %v768 = vrot.slane %v606, 1
        %v769 = vrot.slane %v616, 1
        %v770 = vsel %vm761, %v768, %v769
        %v771 = vrot.slane %v607, 1
        %v772 = vrot.slane %v617, 1
        %v773 = vsel %vm761, %v771, %v772
        %v774 = vrot.slane %v608, 1
        %v775 = vrot.slane %v618, 1
        %v776 = vsel %vm761, %v774, %v775
        %v777 = vrot.slane %v609, 1
        %v778 = vrot.slane %v619, 1
        %v779 = vsel %vm761, %v777, %v778
        %v780 = vrot.slane %v610, 1
        %v781 = vrot.slane %v620, 1
        %v782 = vsel %vm761, %v780, %v781
        %v783 = vrot.slane %v611, 1
        %v784 = vrot.slane %v621, 1
        %v785 = vsel %vm761, %v783, %v784
        %v794 = vld [vmem:[#allocation2] sm:$0xff]
        %v795 = vld [vmem:[#allocation2 + $0x8] sm:$0xff]
        %v796 = vld [vmem:[#allocation2 + $0x10] sm:$0xff]
        %v797 = vld [vmem:[#allocation2 + $0x18] sm:$0xff]
        %v798 = vld [vmem:[#allocation2 + $0x20] sm:$0xff]
        %v799 = vld [vmem:[#allocation2 + $0x28] sm:$0xff]
        %v800 = vld [vmem:[#allocation2 + $0x30] sm:$0xff]
        %v801 = vld [vmem:[#allocation2 + $0x38] sm:$0xff]
        %v802 = vld [vmem:[#allocation2 + $0x40] sm:$0xff]
        %v803 = vld [vmem:[#allocation2 + $0x48] sm:$0xff]
        %v804 = vld [vmem:[#allocation2 + $0x50] sm:$0xff]
        %v805 = vld [vmem:[#allocation2 + $0x58] sm:$0xff]
        %v806 = vld [vmem:[#allocation2 + $0x60] sm:$0xff]
        %v807 = vld [vmem:[#allocation2 + $0x68] sm:$0xff]
        %v808 = vld [vmem:[#allocation2 + $0x70] sm:$0xff]
        %v809 = vld [vmem:[#allocation2 + $0x78] sm:$0xff]
        %v810 = vld [vmem:[%s3] sm:$0xf]
        %v811 = vld [vmem:[%s3 + $0x4] sm:$0xf]
        %v812 = vld [vmem:[%s3 + $0x8] sm:$0xf]
        %v813 = vld [vmem:[%s3 + $0xc] sm:$0xf]
        %v814 = vld [vmem:[%s3 + $0x10] sm:$0xf]
        %v815 = vld [vmem:[%s3 + $0x14] sm:$0xf]
        %v816 = vld [vmem:[%s3 + $0x18] sm:$0xf]
        %v817 = vld [vmem:[%s3 + $0x1c] sm:$0xf]
        %v818 = vld [vmem:[%s3 + $0x20] sm:$0xf]
        %v819 = vld [vmem:[%s3 + $0x24] sm:$0xf]
        %v820 = vld [vmem:[%s3 + $0x28] sm:$0xf]
        %v821 = vld [vmem:[%s3 + $0x2c] sm:$0xf]
        %v822 = vld [vmem:[%s3 + $0x30] sm:$0xf]
        %v823 = vld [vmem:[%s3 + $0x34] sm:$0xf]
        %v824 = vld [vmem:[%s3 + $0x38] sm:$0xf]
        %v825 = vld [vmem:[%s3 + $0x3c] sm:$0xf]
        %v826 = vld [vmem:[%s3 + $0x40] sm:$0xf]
        %v827 = vld [vmem:[%s3 + $0x44] sm:$0xf]
        %v828 = vld [vmem:[%s3 + $0x48] sm:$0xf]
        %v829 = vld [vmem:[%s3 + $0x4c] sm:$0xf]
        %v830 = vld [vmem:[%s3 + $0x50] sm:$0xf]
        %v831 = vld [vmem:[%s3 + $0x54] sm:$0xf]
        %v832 = vld [vmem:[%s3 + $0x58] sm:$0xf]
        %v833 = vld [vmem:[%s3 + $0x5c] sm:$0xf]
        %v834 = vld [vmem:[%s3 + $0x60] sm:$0xf]
        %v835 = vld [vmem:[%s3 + $0x64] sm:$0xf]
        %v836 = vld [vmem:[%s3 + $0x68] sm:$0xf]
        %v837 = vld [vmem:[%s3 + $0x6c] sm:$0xf]
        %v838 = vld [vmem:[%s3 + $0x70] sm:$0xf]
        %v839 = vld [vmem:[%s3 + $0x74] sm:$0xf]
        %v840 = vld [vmem:[%s3 + $0x78] sm:$0xf]
        %v841 = vld [vmem:[%s3 + $0x7c] sm:$0xf]
        %v842 = vld [vmem:[%s3 + $0x80] sm:$0xf]
        %v843 = vld [vmem:[%s3 + $0x84] sm:$0xf]
        %v844 = vld [vmem:[%s3 + $0x88] sm:$0xf]
        %v845 = vld [vmem:[%s3 + $0x8c] sm:$0xf]
        %v846 = vld [vmem:[%s3 + $0x90] sm:$0xf]
        %v847 = vld [vmem:[%s3 + $0x94] sm:$0xf]
        %v848 = vld [vmem:[%s3 + $0x98] sm:$0xf]
        %v849 = vld [vmem:[%s3 + $0x9c] sm:$0xf]
        %v850 = vld [vmem:[%s3 + $0xa0] sm:$0xf]
        %v851 = vld [vmem:[%s3 + $0xa4] sm:$0xf]
        %v852 = vld [vmem:[%s3 + $0xa8] sm:$0xf]
        %v853 = vld [vmem:[%s3 + $0xac] sm:$0xf]
        %v854 = vld [vmem:[%s3 + $0xb0] sm:$0xf]
        %v855 = vld [vmem:[%s3 + $0xb4] sm:$0xf]
        %v856 = vld [vmem:[%s3 + $0xb8] sm:$0xf]
        %v857 = vld [vmem:[%s3 + $0xbc] sm:$0xf]
        %v906 = vunpack.c.l.b16 %v810
        %v907 = vunpack.c.l.b16 %v811
        %v908 = vunpack.c.l.b16 %v812
        %v909 = vunpack.c.l.b16 %v813
        %v910 = vunpack.c.l.b16 %v814
        %v911 = vunpack.c.l.b16 %v815
        %v912 = vunpack.c.l.b16 %v816
        %v913 = vunpack.c.l.b16 %v817
        %v914 = vunpack.c.l.b16 %v818
        %v915 = vunpack.c.l.b16 %v819
        %v916 = vunpack.c.l.b16 %v820
        %v917 = vunpack.c.l.b16 %v821
        %v918 = vunpack.c.l.b16 %v822
        %v919 = vunpack.c.l.b16 %v823
        %v920 = vunpack.c.l.b16 %v824
        %v921 = vunpack.c.l.b16 %v825
        %v922 = vunpack.c.l.b16 %v826
        %v923 = vunpack.c.l.b16 %v827
        %v924 = vunpack.c.l.b16 %v828
        %v925 = vunpack.c.l.b16 %v829
        %v926 = vunpack.c.l.b16 %v830
        %v927 = vunpack.c.l.b16 %v831
        %v928 = vunpack.c.l.b16 %v832
        %v929 = vunpack.c.l.b16 %v833
        %v930 = vunpack.c.l.b16 %v834
        %v931 = vunpack.c.l.b16 %v835
        %v932 = vunpack.c.l.b16 %v836
        %v933 = vunpack.c.l.b16 %v837
        %v934 = vunpack.c.l.b16 %v838
        %v935 = vunpack.c.l.b16 %v839
        %v936 = vunpack.c.l.b16 %v840
        %v937 = vunpack.c.l.b16 %v841
        %v938 = vunpack.c.l.b16 %v842
        %v939 = vunpack.c.l.b16 %v843
        %v940 = vunpack.c.l.b16 %v844
        %v941 = vunpack.c.l.b16 %v845
        %v942 = vunpack.c.l.b16 %v846
        %v943 = vunpack.c.l.b16 %v847
        %v944 = vunpack.c.l.b16 %v848
        %v945 = vunpack.c.l.b16 %v849
        %v946 = vunpack.c.l.b16 %v850
        %v947 = vunpack.c.l.b16 %v851
        %v948 = vunpack.c.l.b16 %v852
        %v949 = vunpack.c.l.b16 %v853
        %v950 = vunpack.c.l.b16 %v854
        %v951 = vunpack.c.l.b16 %v855
        %v952 = vunpack.c.l.b16 %v856
        %v953 = vunpack.c.l.b16 %v857
        %v954 = vpack.c.b16 %v907, %v906
        %v955 = vpack.c.b16 %v909, %v908
        %v956 = vpack.c.b16 %v911, %v910
        %v957 = vpack.c.b16 %v913, %v912
        %v958 = vpack.c.b16 %v915, %v914
        %v959 = vpack.c.b16 %v917, %v916
        %v960 = vpack.c.b16 %v919, %v918
        %v961 = vpack.c.b16 %v921, %v920
        %v962 = vpack.c.b16 %v923, %v922
        %v963 = vpack.c.b16 %v925, %v924
        %v964 = vpack.c.b16 %v927, %v926
        %v965 = vpack.c.b16 %v929, %v928
        %v966 = vpack.c.b16 %v931, %v930
        %v967 = vpack.c.b16 %v933, %v932
        %v968 = vpack.c.b16 %v935, %v934
        %v969 = vpack.c.b16 %v937, %v936
        %v970 = vpack.c.b16 %v939, %v938
        %v971 = vpack.c.b16 %v941, %v940
        %v972 = vpack.c.b16 %v943, %v942
        %v973 = vpack.c.b16 %v945, %v944
        %v974 = vpack.c.b16 %v947, %v946
        %v975 = vpack.c.b16 %v949, %v948
        %v976 = vpack.c.b16 %v951, %v950
        %v977 = vpack.c.b16 %v953, %v952
        %1002 = vmatprep.subr.bf16.mxu0 0
        %1003 = vmatpush1.bf16.msra.mxu0 %v954
        %1004 = vmatprep.subr.bf16.mxu0 0
        %1005 = vmatpush1.bf16.msra.mxu0 %v955
        %1006 = vmatprep.subr.bf16.mxu0 0
        %1007 = vmatpush1.bf16.msra.mxu0 %v956
        %1008 = vmatprep.subr.bf16.mxu0 0
        %1009 = vmatpush1.bf16.msra.mxu0 %v957
        %1010 = vmatprep.subr.bf16.mxu0 0
        %1011 = vmatpush1.bf16.msra.mxu0 %v958
        %1012 = vmatprep.subr.bf16.mxu0 0
        %1013 = vmatpush1.bf16.msra.mxu0 %v959
        %1014 = vmatprep.subr.bf16.mxu0 0
        %1015 = vmatpush1.bf16.msra.mxu0 %v960
        %1016 = vmatprep.subr.bf16.mxu0 0
        %1017 = vmatpush1.bf16.msra.mxu0 %v961
        %1018 = vmatprep.subr.bf16.mxu0 0
        %1019 = vmatpush1.bf16.msra.mxu0 %v962
        %1020 = vmatprep.subr.bf16.mxu0 0
        %1021 = vmatpush1.bf16.msra.mxu0 %v963
        %1022 = vmatprep.subr.bf16.mxu0 0
        %1023 = vmatpush1.bf16.msra.mxu0 %v964
        %1024 = vmatprep.subr.bf16.mxu0 0
        %1025 = vmatpush1.bf16.msra.mxu0 %v965
        %1026 = vmatprep.subr.bf16.mxu0 0
        %1027 = vmatpush1.bf16.msra.mxu0 %v966
        %1028 = vmatprep.subr.bf16.mxu0 0
        %1029 = vmatpush1.bf16.msra.mxu0 %v967
        %1030 = vmatprep.subr.bf16.mxu0 0
        %1031 = vmatpush1.bf16.msra.mxu0 %v968
        %1032 = vmatprep.subr.bf16.mxu0 0
        %1033 = vmatpush1.bf16.msra.mxu0 %v969
        %1034 = vmatprep.mubr.bf16.mxu0 %v652
        %1035 = vmatmul.mubr.bf16.gmra.mrb[0].mxu0 %v604
        %v1036 = vpop.f32.mrb[0].mxu0
        %v1037 = vadd.f32 0.0, %v1036
        %v1038 = vpop.f32.mrb[0].mxu0
        %v1039 = vpop.f32.mrb[0].mxu0
        %v1040 = vadd.f32 0.0, %v1039
        %v1041 = vpop.f32.mrb[0].mxu0
        %1042 = vmatprep.mubr.bf16.mxu0 %v664
        %1043 = vmatmul.mubr.bf16.gmra.mrb[0].mxu0 %v605
        %v1044 = vpop.f32.mrb[0].mxu0
        %v1045 = vadd.f32 0.0, %v1044
        %v1046 = vpop.f32.mrb[0].mxu0
        %v1047 = vpop.f32.mrb[0].mxu0
        %v1048 = vadd.f32 0.0, %v1047
        %v1049 = vpop.f32.mrb[0].mxu0
        %1050 = vmatprep.mubr.bf16.mxu0 %v676
        %1051 = vmatmul.mubr.bf16.gmra.mrb[0].mxu0 %v606
        %v1052 = vpop.f32.mrb[0].mxu0
        %v1053 = vadd.f32 0.0, %v1052
        %v1054 = vpop.f32.mrb[0].mxu0
        %v1055 = vpop.f32.mrb[0].mxu0
        %v1056 = vadd.f32 0.0, %v1055
        %v1057 = vpop.f32.mrb[0].mxu0
        %1058 = vmatprep.mubr.bf16.mxu0 %v688
        %1059 = vmatmul.mubr.bf16.gmra.mrb[0].mxu0 %v607
        %v1060 = vpop.f32.mrb[0].mxu0
        %v1061 = vadd.f32 0.0, %v1060
        %v1062 = vpop.f32.mrb[0].mxu0
        %v1063 = vpop.f32.mrb[0].mxu0
        %v1064 = vadd.f32 0.0, %v1063
        %v1065 = vpop.f32.mrb[0].mxu0
        %1066 = vmatprep.mubr.bf16.mxu0 %v700
        %1067 = vmatmul.mubr.bf16.gmra.mrb[0].mxu0 %v608
        %v1068 = vpop.f32.mrb[0].mxu0
        %v1069 = vadd.f32 0.0, %v1068
        %v1070 = vpop.f32.mrb[0].mxu0
        %v1071 = vpop.f32.mrb[0].mxu0
        %v1072 = vadd.f32 0.0, %v1071
        %v1073 = vpop.f32.mrb[0].mxu0
        %1074 = vmatprep.mubr.bf16.mxu0 %v712
        %1075 = vmatmul.mubr.bf16.gmra.mrb[0].mxu0 %v609
        %v1076 = vpop.f32.mrb[0].mxu0
        %v1077 = vadd.f32 0.0, %v1076
        %v1078 = vpop.f32.mrb[0].mxu0
        %v1079 = vpop.f32.mrb[0].mxu0
        %v1080 = vadd.f32 0.0, %v1079
        %v1081 = vpop.f32.mrb[0].mxu0
        %1082 = vmatprep.mubr.bf16.mxu0 %v724
        %1083 = vmatmul.mubr.bf16.gmra.mrb[0].mxu0 %v610
        %v1084 = vpop.f32.mrb[0].mxu0
        %v1085 = vadd.f32 0.0, %v1084
        %v1086 = vpop.f32.mrb[0].mxu0
        %v1087 = vpop.f32.mrb[0].mxu0
        %v1088 = vadd.f32 0.0, %v1087
        %v1089 = vpop.f32.mrb[0].mxu0
        %1090 = vmatprep.mubr.bf16.mxu0 %v736
        %1091 = vmatmul.mubr.bf16.gmra.mrb[0].mxu0 %v611
        %v1092 = vpop.f32.mrb[0].mxu0
        %v1093 = vadd.f32 0.0, %v1092
        %v1094 = vpop.f32.mrb[0].mxu0
        %v1095 = vpop.f32.mrb[0].mxu0
        %v1096 = vadd.f32 0.0, %v1095
        %v1097 = vpop.f32.mrb[0].mxu0
        %1098 = vdwg.mxu0
        %1099 = vmatprep.subr.bf16.mxu0 0
        %1100 = vmatpush1.bf16.msra.mxu0 %v970
        %1101 = vmatprep.subr.bf16.mxu0 0
        %1102 = vmatpush1.bf16.msra.mxu0 %v971
        %1103 = vmatprep.subr.bf16.mxu0 0
        %1104 = vmatpush1.bf16.msra.mxu0 %v972
        %1105 = vmatprep.subr.bf16.mxu0 0
        %1106 = vmatpush1.bf16.msra.mxu0 %v973
        %1107 = vmatprep.subr.bf16.mxu0 0
        %1108 = vmatpush1.bf16.msra.mxu0 %v974
        %1109 = vmatprep.subr.bf16.mxu0 0
        %1110 = vmatpush1.bf16.msra.mxu0 %v975
        %1111 = vmatprep.subr.bf16.mxu0 0
        %1112 = vmatpush1.bf16.msra.mxu0 %v976
        %1113 = vmatprep.subr.bf16.mxu0 0
        %1114 = vmatpush1.bf16.msra.mxu0 %v977
        %1115 = vmatprep.subr.bf16.mxu0 0
        %1116 = vmatpush1.bf16.msra.mxu0 0
        %1117 = vmatprep.subr.bf16.mxu0 0
        %1118 = vmatpush1.bf16.msra.mxu0 0
        %1119 = vmatprep.subr.bf16.mxu0 0
        %1120 = vmatpush1.bf16.msra.mxu0 0
        %1121 = vmatprep.subr.bf16.mxu0 0
        %1122 = vmatpush1.bf16.msra.mxu0 0
        %1123 = vmatprep.subr.bf16.mxu0 0
        %1124 = vmatpush1.bf16.msra.mxu0 0
        %1125 = vmatprep.subr.bf16.mxu0 0
        %1126 = vmatpush1.bf16.msra.mxu0 0
        %1127 = vmatprep.subr.bf16.mxu0 0
        %1128 = vmatpush1.bf16.msra.mxu0 0
        %1129 = vmatprep.subr.bf16.mxu0 0
        %1130 = vmatpush1.bf16.msra.mxu0 0
        %1131 = vmatprep.mubr.bf16.mxu0 0
        %1132 = vmatmul.mubr.bf16.gmra.mrb[0].mxu0 %v764
        %v1133 = vpop.f32.mrb[0].mxu0
        %v1134 = vadd.f32 %v1037, %v1133
        %v1135 = vpop.f32.mrb[0].mxu0
        %v1136 = vpop.f32.mrb[0].mxu0
        %v1137 = vadd.f32 %v1040, %v1136
        %v1138 = vpop.f32.mrb[0].mxu0
        %1139 = vmatprep.mubr.bf16.mxu0 0
        %1140 = vmatmul.mubr.bf16.gmra.mrb[0].mxu0 %v767
        %v1141 = vpop.f32.mrb[0].mxu0
        %v1142 = vadd.f32 %v1045, %v1141
        %v1143 = vpop.f32.mrb[0].mxu0
        %v1144 = vpop.f32.mrb[0].mxu0
        %v1145 = vadd.f32 %v1048, %v1144
        %v1146 = vpop.f32.mrb[0].mxu0
        %1147 = vmatprep.mubr.bf16.mxu0 0
        %1148 = vmatmul.mubr.bf16.gmra.mrb[0].mxu0 %v770
        %v1149 = vpop.f32.mrb[0].mxu0
        %v1150 = vadd.f32 %v1053, %v1149
        %v1151 = vpop.f32.mrb[0].mxu0
        %v1152 = vpop.f32.mrb[0].mxu0
        %v1153 = vadd.f32 %v1056, %v1152
        %v1154 = vpop.f32.mrb[0].mxu0
        %1155 = vmatprep.mubr.bf16.mxu0 0
        %1156 = vmatmul.mubr.bf16.gmra.mrb[0].mxu0 %v773
        %v1157 = vpop.f32.mrb[0].mxu0
        %v1158 = vadd.f32 %v1061, %v1157
        %v1159 = vpop.f32.mrb[0].mxu0
        %v1160 = vpop.f32.mrb[0].mxu0
        %v1161 = vadd.f32 %v1064, %v1160
        %v1162 = vpop.f32.mrb[0].mxu0
        %1163 = vmatprep.mubr.bf16.mxu0 0
        %1164 = vmatmul.mubr.bf16.gmra.mrb[0].mxu0 %v776
        %v1165 = vpop.f32.mrb[0].mxu0
        %v1166 = vadd.f32 %v1069, %v1165
        %v1167 = vpop.f32.mrb[0].mxu0
        %v1168 = vpop.f32.mrb[0].mxu0
        %v1169 = vadd.f32 %v1072, %v1168
        %v1170 = vpop.f32.mrb[0].mxu0
        %1171 = vmatprep.mubr.bf16.mxu0 0
        %1172 = vmatmul.mubr.bf16.gmra.mrb[0].mxu0 %v779
        %v1173 = vpop.f32.mrb[0].mxu0
        %v1174 = vadd.f32 %v1077, %v1173
        %v1175 = vpop.f32.mrb[0].mxu0
        %v1176 = vpop.f32.mrb[0].mxu0
        %v1177 = vadd.f32 %v1080, %v1176
        %v1178 = vpop.f32.mrb[0].mxu0
        %1179 = vmatprep.mubr.bf16.mxu0 0
        %1180 = vmatmul.mubr.bf16.gmra.mrb[0].mxu0 %v782
        %v1181 = vpop.f32.mrb[0].mxu0
        %v1182 = vadd.f32 %v1085, %v1181
        %v1183 = vpop.f32.mrb[0].mxu0
        %v1184 = vpop.f32.mrb[0].mxu0
        %v1185 = vadd.f32 %v1088, %v1184
        %v1186 = vpop.f32.mrb[0].mxu0
        %1187 = vmatprep.mubr.bf16.mxu0 0
        %1188 = vmatmul.mubr.bf16.gmra.mrb[0].mxu0 %v785
        %v1189 = vpop.f32.mrb[0].mxu0
        %v1190 = vadd.f32 %v1093, %v1189
        %v1191 = vpop.f32.mrb[0].mxu0
        %v1192 = vpop.f32.mrb[0].mxu0
        %v1193 = vadd.f32 %v1096, %v1192
        %v1194 = vpop.f32.mrb[0].mxu0
        %1195 = vdwg.mxu0
        %v1196 = vadd.f32 %v794, %v1134
        %v1197 = vadd.f32 %v795, %v1137
        %v1198 = vadd.f32 %v796, %v1142
        %v1199 = vadd.f32 %v797, %v1145
        %v1200 = vadd.f32 %v798, %v1150
        %v1201 = vadd.f32 %v799, %v1153
        %v1202 = vadd.f32 %v800, %v1158
        %v1203 = vadd.f32 %v801, %v1161
        %v1204 = vadd.f32 %v802, %v1166
        %v1205 = vadd.f32 %v803, %v1169
        %v1206 = vadd.f32 %v804, %v1174
        %v1207 = vadd.f32 %v805, %v1177
        %v1208 = vadd.f32 %v806, %v1182
        %v1209 = vadd.f32 %v807, %v1185
        %v1210 = vadd.f32 %v808, %v1190
        %v1211 = vadd.f32 %v809, %v1193
        %1212 = vst [vmem:[#allocation2] sm:$0xff] %v1196
        %1213 = vst [vmem:[#allocation2 + $0x8] sm:$0xff] %v1197
        %1214 = vst [vmem:[#allocation2 + $0x10] sm:$0xff] %v1198
        %1215 = vst [vmem:[#allocation2 + $0x18] sm:$0xff] %v1199
        %1216 = vst [vmem:[#allocation2 + $0x20] sm:$0xff] %v1200
        %1217 = vst [vmem:[#allocation2 + $0x28] sm:$0xff] %v1201
        %1218 = vst [vmem:[#allocation2 + $0x30] sm:$0xff] %v1202
        %1219 = vst [vmem:[#allocation2 + $0x38] sm:$0xff] %v1203
        %1220 = vst [vmem:[#allocation2 + $0x40] sm:$0xff] %v1204
        %1221 = vst [vmem:[#allocation2 + $0x48] sm:$0xff] %v1205
        %1222 = vst [vmem:[#allocation2 + $0x50] sm:$0xff] %v1206
        %1223 = vst [vmem:[#allocation2 + $0x58] sm:$0xff] %v1207
        %1224 = vst [vmem:[#allocation2 + $0x60] sm:$0xff] %v1208
        %1225 = vst [vmem:[#allocation2 + $0x68] sm:$0xff] %v1209
        %1226 = vst [vmem:[#allocation2 + $0x70] sm:$0xff] %v1210
        %1227 = vst [vmem:[#allocation2 + $0x78] sm:$0xff] %v1211
        %v1229 = vshrl.u32 %v612, 16
        %v1231 = vshll.u32 %v612, 16
        %v1233 = vrot.slane %v1231, 1
        %v1234 = vor.u32 %v1229, %v1233
        %v1236 = vshll.u32 %v622, 16
        %v1238 = vrot.slane %v1236, 1
        %v1239 = vsel %vm640, %v1234, %v1238
        %v1243 = vrot.slane %v612, 1
        %v1244 = vrot.slane %v622, 1
        %v1245 = vsel %vm761, %v1243, %v1244
        %v1247 = vld [vmem:[#allocation2] sm:$0xff]
        %v1248 = vld [vmem:[#allocation2 + $0x8] sm:$0xff]
        %v1249 = vld [vmem:[#allocation2 + $0x10] sm:$0xff]
        %v1250 = vld [vmem:[#allocation2 + $0x18] sm:$0xff]
        %v1251 = vld [vmem:[#allocation2 + $0x20] sm:$0xff]
        %v1252 = vld [vmem:[#allocation2 + $0x28] sm:$0xff]
        %v1253 = vld [vmem:[#allocation2 + $0x30] sm:$0xff]
        %v1254 = vld [vmem:[#allocation2 + $0x38] sm:$0xff]
        %v1255 = vld [vmem:[#allocation2 + $0x40] sm:$0xff]
        %v1256 = vld [vmem:[#allocation2 + $0x48] sm:$0xff]
        %v1257 = vld [vmem:[#allocation2 + $0x50] sm:$0xff]
        %v1258 = vld [vmem:[#allocation2 + $0x58] sm:$0xff]
        %v1259 = vld [vmem:[#allocation2 + $0x60] sm:$0xff]
        %v1260 = vld [vmem:[#allocation2 + $0x68] sm:$0xff]
        %v1261 = vld [vmem:[#allocation2 + $0x70] sm:$0xff]
        %v1262 = vld [vmem:[#allocation2 + $0x78] sm:$0xff]
        %s1263 = scalar_lea.vmem %s3, 192
        %v1264 = vld [vmem:[%s1263] sm:$0xf]
        %v1265 = vld [vmem:[%s1263 + $0x4] sm:$0xf]
        %v1266 = vld [vmem:[%s1263 + $0x8] sm:$0xf]
        %v1267 = vld [vmem:[%s1263 + $0xc] sm:$0xf]
        %v1268 = vld [vmem:[%s1263 + $0x10] sm:$0xf]
        %v1269 = vld [vmem:[%s1263 + $0x14] sm:$0xf]
        %v1270 = vld [vmem:[%s1263 + $0x18] sm:$0xf]
        %v1271 = vld [vmem:[%s1263 + $0x1c] sm:$0xf]
        %v1272 = vld [vmem:[%s1263 + $0x20] sm:$0xf]
        %v1273 = vld [vmem:[%s1263 + $0x24] sm:$0xf]
        %v1274 = vld [vmem:[%s1263 + $0x28] sm:$0xf]
        %v1275 = vld [vmem:[%s1263 + $0x2c] sm:$0xf]
        %v1276 = vld [vmem:[%s1263 + $0x30] sm:$0xf]
        %v1277 = vld [vmem:[%s1263 + $0x34] sm:$0xf]
        %v1278 = vld [vmem:[%s1263 + $0x38] sm:$0xf]
        %v1279 = vld [vmem:[%s1263 + $0x3c] sm:$0xf]
        %v1280 = vld [vmem:[%s1263 + $0x40] sm:$0xf]
        %v1281 = vld [vmem:[%s1263 + $0x44] sm:$0xf]
        %v1282 = vld [vmem:[%s1263 + $0x48] sm:$0xf]
        %v1283 = vld [vmem:[%s1263 + $0x4c] sm:$0xf]
        %v1284 = vld [vmem:[%s1263 + $0x50] sm:$0xf]
        %v1285 = vld [vmem:[%s1263 + $0x54] sm:$0xf]
        %v1286 = vld [vmem:[%s1263 + $0x58] sm:$0xf]
        %v1287 = vld [vmem:[%s1263 + $0x5c] sm:$0xf]
        %v1288 = vld [vmem:[%s1263 + $0x60] sm:$0xf]
        %v1289 = vld [vmem:[%s1263 + $0x64] sm:$0xf]
        %v1290 = vld [vmem:[%s1263 + $0x68] sm:$0xf]
        %v1291 = vld [vmem:[%s1263 + $0x6c] sm:$0xf]
        %v1292 = vld [vmem:[%s1263 + $0x70] sm:$0xf]
        %v1293 = vld [vmem:[%s1263 + $0x74] sm:$0xf]
        %v1294 = vld [vmem:[%s1263 + $0x78] sm:$0xf]
        %v1295 = vld [vmem:[%s1263 + $0x7c] sm:$0xf]
        %v1296 = vld [vmem:[%s1263 + $0x80] sm:$0xf]
        %v1297 = vld [vmem:[%s1263 + $0x84] sm:$0xf]
        %v1298 = vld [vmem:[%s1263 + $0x88] sm:$0xf]
        %v1299 = vld [vmem:[%s1263 + $0x8c] sm:$0xf]
        %v1300 = vld [vmem:[%s1263 + $0x90] sm:$0xf]
        %v1301 = vld [vmem:[%s1263 + $0x94] sm:$0xf]
        %v1302 = vld [vmem:[%s1263 + $0x98] sm:$0xf]
        %v1303 = vld [vmem:[%s1263 + $0x9c] sm:$0xf]
        %v1304 = vld [vmem:[%s1263 + $0xa0] sm:$0xf]
        %v1305 = vld [vmem:[%s1263 + $0xa4] sm:$0xf]
        %v1306 = vld [vmem:[%s1263 + $0xa8] sm:$0xf]
        %v1307 = vld [vmem:[%s1263 + $0xac] sm:$0xf]
        %v1308 = vld [vmem:[%s1263 + $0xb0] sm:$0xf]
        %v1309 = vld [vmem:[%s1263 + $0xb4] sm:$0xf]
        %v1310 = vld [vmem:[%s1263 + $0xb8] sm:$0xf]
        %v1311 = vld [vmem:[%s1263 + $0xbc] sm:$0xf]
        %v1360 = vunpack.c.l.b16 %v1264
        %v1361 = vunpack.c.l.b16 %v1265
        %v1362 = vunpack.c.l.b16 %v1266
        %v1363 = vunpack.c.l.b16 %v1267
        %v1364 = vunpack.c.l.b16 %v1268
        %v1365 = vunpack.c.l.b16 %v1269
        %v1366 = vunpack.c.l.b16 %v1270
        %v1367 = vunpack.c.l.b16 %v1271
        %v1368 = vunpack.c.l.b16 %v1272
        %v1369 = vunpack.c.l.b16 %v1273
        %v1370 = vunpack.c.l.b16 %v1274
        %v1371 = vunpack.c.l.b16 %v1275
        %v1372 = vunpack.c.l.b16 %v1276
        %v1373 = vunpack.c.l.b16 %v1277
        %v1374 = vunpack.c.l.b16 %v1278
        %v1375 = vunpack.c.l.b16 %v1279
        %v1376 = vunpack.c.l.b16 %v1280
        %v1377 = vunpack.c.l.b16 %v1281
        %v1378 = vunpack.c.l.b16 %v1282
        %v1379 = vunpack.c.l.b16 %v1283
        %v1380 = vunpack.c.l.b16 %v1284
        %v1381 = vunpack.c.l.b16 %v1285
        %v1382 = vunpack.c.l.b16 %v1286
        %v1383 = vunpack.c.l.b16 %v1287
        %v1384 = vunpack.c.l.b16 %v1288
        %v1385 = vunpack.c.l.b16 %v1289
        %v1386 = vunpack.c.l.b16 %v1290
        %v1387 = vunpack.c.l.b16 %v1291
        %v1388 = vunpack.c.l.b16 %v1292
        %v1389 = vunpack.c.l.b16 %v1293
        %v1390 = vunpack.c.l.b16 %v1294
        %v1391 = vunpack.c.l.b16 %v1295
        %v1392 = vunpack.c.l.b16 %v1296
        %v1393 = vunpack.c.l.b16 %v1297
        %v1394 = vunpack.c.l.b16 %v1298
        %v1395 = vunpack.c.l.b16 %v1299
        %v1396 = vunpack.c.l.b16 %v1300
        %v1397 = vunpack.c.l.b16 %v1301
        %v1398 = vunpack.c.l.b16 %v1302
        %v1399 = vunpack.c.l.b16 %v1303
        %v1400 = vunpack.c.l.b16 %v1304
        %v1401 = vunpack.c.l.b16 %v1305
        %v1402 = vunpack.c.l.b16 %v1306
        %v1403 = vunpack.c.l.b16 %v1307
        %v1404 = vunpack.c.l.b16 %v1308
        %v1405 = vunpack.c.l.b16 %v1309
        %v1406 = vunpack.c.l.b16 %v1310
        %v1407 = vunpack.c.l.b16 %v1311
        %v1408 = vpack.c.b16 %v1361, %v1360
        %v1409 = vpack.c.b16 %v1363, %v1362
        %v1410 = vpack.c.b16 %v1365, %v1364
        %v1411 = vpack.c.b16 %v1367, %v1366
        %v1412 = vpack.c.b16 %v1369, %v1368
        %v1413 = vpack.c.b16 %v1371, %v1370
        %v1414 = vpack.c.b16 %v1373, %v1372
        %v1415 = vpack.c.b16 %v1375, %v1374
        %v1416 = vpack.c.b16 %v1377, %v1376
        %v1417 = vpack.c.b16 %v1379, %v1378
        %v1418 = vpack.c.b16 %v1381, %v1380
        %v1419 = vpack.c.b16 %v1383, %v1382
        %v1420 = vpack.c.b16 %v1385, %v1384
        %v1421 = vpack.c.b16 %v1387, %v1386
        %v1422 = vpack.c.b16 %v1389, %v1388
        %v1423 = vpack.c.b16 %v1391, %v1390
        %v1424 = vpack.c.b16 %v1393, %v1392
        %v1425 = vpack.c.b16 %v1395, %v1394
        %v1426 = vpack.c.b16 %v1397, %v1396
        %v1427 = vpack.c.b16 %v1399, %v1398
        %v1428 = vpack.c.b16 %v1401, %v1400
        %v1429 = vpack.c.b16 %v1403, %v1402
        %v1430 = vpack.c.b16 %v1405, %v1404
        %v1431 = vpack.c.b16 %v1407, %v1406
        %1456 = vmatprep.subr.bf16.mxu0 0
        %1457 = vmatpush1.bf16.msra.mxu0 %v1408
        %1458 = vmatprep.subr.bf16.mxu0 0
        %1459 = vmatpush1.bf16.msra.mxu0 %v1409
        %1460 = vmatprep.subr.bf16.mxu0 0
        %1461 = vmatpush1.bf16.msra.mxu0 %v1410
        %1462 = vmatprep.subr.bf16.mxu0 0
        %1463 = vmatpush1.bf16.msra.mxu0 %v1411
        %1464 = vmatprep.subr.bf16.mxu0 0
        %1465 = vmatpush1.bf16.msra.mxu0 %v1412
        %1466 = vmatprep.subr.bf16.mxu0 0
        %1467 = vmatpush1.bf16.msra.mxu0 %v1413
        %1468 = vmatprep.subr.bf16.mxu0 0
        %1469 = vmatpush1.bf16.msra.mxu0 %v1414
        %1470 = vmatprep.subr.bf16.mxu0 0
        %1471 = vmatpush1.bf16.msra.mxu0 %v1415
        %1472 = vmatprep.subr.bf16.mxu0 0
        %1473 = vmatpush1.bf16.msra.mxu0 %v1416
        %1474 = vmatprep.subr.bf16.mxu0 0
        %1475 = vmatpush1.bf16.msra.mxu0 %v1417
        %1476 = vmatprep.subr.bf16.mxu0 0
        %1477 = vmatpush1.bf16.msra.mxu0 %v1418
        %1478 = vmatprep.subr.bf16.mxu0 0
        %1479 = vmatpush1.bf16.msra.mxu0 %v1419
        %1480 = vmatprep.subr.bf16.mxu0 0
        %1481 = vmatpush1.bf16.msra.mxu0 %v1420
        %1482 = vmatprep.subr.bf16.mxu0 0
        %1483 = vmatpush1.bf16.msra.mxu0 %v1421
        %1484 = vmatprep.subr.bf16.mxu0 0
        %1485 = vmatpush1.bf16.msra.mxu0 %v1422
        %1486 = vmatprep.subr.bf16.mxu0 0
        %1487 = vmatpush1.bf16.msra.mxu0 %v1423
        %1488 = vmatprep.mubr.bf16.mxu0 %v664
        %1489 = vmatmul.mubr.bf16.gmra.mrb[0].mxu0 %v605
        %v1490 = vpop.f32.mrb[0].mxu0
        %v1491 = vadd.f32 0.0, %v1490
        %v1492 = vpop.f32.mrb[0].mxu0
        %v1493 = vpop.f32.mrb[0].mxu0
        %v1494 = vadd.f32 0.0, %v1493
        %v1495 = vpop.f32.mrb[0].mxu0
        %1496 = vmatprep.mubr.bf16.mxu0 %v676
        %1497 = vmatmul.mubr.bf16.gmra.mrb[0].mxu0 %v606
        %v1498 = vpop.f32.mrb[0].mxu0
        %v1499 = vadd.f32 0.0, %v1498
        %v1500 = vpop.f32.mrb[0].mxu0
        %v1501 = vpop.f32.mrb[0].mxu0
        %v1502 = vadd.f32 0.0, %v1501
        %v1503 = vpop.f32.mrb[0].mxu0
        %1504 = vmatprep.mubr.bf16.mxu0 %v688
        %1505 = vmatmul.mubr.bf16.gmra.mrb[0].mxu0 %v607
        %v1506 = vpop.f32.mrb[0].mxu0
        %v1507 = vadd.f32 0.0, %v1506
        %v1508 = vpop.f32.mrb[0].mxu0
        %v1509 = vpop.f32.mrb[0].mxu0
        %v1510 = vadd.f32 0.0, %v1509
        %v1511 = vpop.f32.mrb[0].mxu0
        %1512 = vmatprep.mubr.bf16.mxu0 %v700
        %1513 = vmatmul.mubr.bf16.gmra.mrb[0].mxu0 %v608
        %v1514 = vpop.f32.mrb[0].mxu0
        %v1515 = vadd.f32 0.0, %v1514
        %v1516 = vpop.f32.mrb[0].mxu0
        %v1517 = vpop.f32.mrb[0].mxu0
        %v1518 = vadd.f32 0.0, %v1517
        %v1519 = vpop.f32.mrb[0].mxu0
        %1520 = vmatprep.mubr.bf16.mxu0 %v712
        %1521 = vmatmul.mubr.bf16.gmra.mrb[0].mxu0 %v609
        %v1522 = vpop.f32.mrb[0].mxu0
        %v1523 = vadd.f32 0.0, %v1522
        %v1524 = vpop.f32.mrb[0].mxu0
        %v1525 = vpop.f32.mrb[0].mxu0
        %v1526 = vadd.f32 0.0, %v1525
        %v1527 = vpop.f32.mrb[0].mxu0
        %1528 = vmatprep.mubr.bf16.mxu0 %v724
        %1529 = vmatmul.mubr.bf16.gmra.mrb[0].mxu0 %v610
        %v1530 = vpop.f32.mrb[0].mxu0
        %v1531 = vadd.f32 0.0, %v1530
        %v1532 = vpop.f32.mrb[0].mxu0
        %v1533 = vpop.f32.mrb[0].mxu0
        %v1534 = vadd.f32 0.0, %v1533
        %v1535 = vpop.f32.mrb[0].mxu0
        %1536 = vmatprep.mubr.bf16.mxu0 %v736
        %1537 = vmatmul.mubr.bf16.gmra.mrb[0].mxu0 %v611
        %v1538 = vpop.f32.mrb[0].mxu0
        %v1539 = vadd.f32 0.0, %v1538
        %v1540 = vpop.f32.mrb[0].mxu0
        %v1541 = vpop.f32.mrb[0].mxu0
        %v1542 = vadd.f32 0.0, %v1541
        %v1543 = vpop.f32.mrb[0].mxu0
        %1544 = vmatprep.mubr.bf16.mxu0 %v1239
        %1545 = vmatmul.mubr.bf16.gmra.mrb[0].mxu0 %v612
        %v1546 = vpop.f32.mrb[0].mxu0
        %v1547 = vadd.f32 0.0, %v1546
        %v1548 = vpop.f32.mrb[0].mxu0
        %v1549 = vpop.f32.mrb[0].mxu0
        %v1550 = vadd.f32 0.0, %v1549
        %v1551 = vpop.f32.mrb[0].mxu0
        %1552 = vdwg.mxu0
        %1553 = vmatprep.subr.bf16.mxu0 0
        %1554 = vmatpush1.bf16.msra.mxu0 %v1424
        %1555 = vmatprep.subr.bf16.mxu0 0
        %1556 = vmatpush1.bf16.msra.mxu0 %v1425
        %1557 = vmatprep.subr.bf16.mxu0 0
        %1558 = vmatpush1.bf16.msra.mxu0 %v1426
        %1559 = vmatprep.subr.bf16.mxu0 0
        %1560 = vmatpush1.bf16.msra.mxu0 %v1427
        %1561 = vmatprep.subr.bf16.mxu0 0
        %1562 = vmatpush1.bf16.msra.mxu0 %v1428
        %1563 = vmatprep.subr.bf16.mxu0 0
        %1564 = vmatpush1.bf16.msra.mxu0 %v1429
        %1565 = vmatprep.subr.bf16.mxu0 0
        %1566 = vmatpush1.bf16.msra.mxu0 %v1430
        %1567 = vmatprep.subr.bf16.mxu0 0
        %1568 = vmatpush1.bf16.msra.mxu0 %v1431
        %1569 = vmatprep.subr.bf16.mxu0 0
        %1570 = vmatpush1.bf16.msra.mxu0 0
        %1571 = vmatprep.subr.bf16.mxu0 0
        %1572 = vmatpush1.bf16.msra.mxu0 0
        %1573 = vmatprep.subr.bf16.mxu0 0
        %1574 = vmatpush1.bf16.msra.mxu0 0
        %1575 = vmatprep.subr.bf16.mxu0 0
        %1576 = vmatpush1.bf16.msra.mxu0 0
        %1577 = vmatprep.subr.bf16.mxu0 0
        %1578 = vmatpush1.bf16.msra.mxu0 0
        %1579 = vmatprep.subr.bf16.mxu0 0
        %1580 = vmatpush1.bf16.msra.mxu0 0
        %1581 = vmatprep.subr.bf16.mxu0 0
        %1582 = vmatpush1.bf16.msra.mxu0 0
        %1583 = vmatprep.subr.bf16.mxu0 0
        %1584 = vmatpush1.bf16.msra.mxu0 0
        %1585 = vmatprep.mubr.bf16.mxu0 0
        %1586 = vmatmul.mubr.bf16.gmra.mrb[0].mxu0 %v767
        %v1587 = vpop.f32.mrb[0].mxu0
        %v1588 = vadd.f32 %v1491, %v1587
        %v1589 = vpop.f32.mrb[0].mxu0
        %v1590 = vpop.f32.mrb[0].mxu0
        %v1591 = vadd.f32 %v1494, %v1590
        %v1592 = vpop.f32.mrb[0].mxu0
        %1593 = vmatprep.mubr.bf16.mxu0 0
        %1594 = vmatmul.mubr.bf16.gmra.mrb[0].mxu0 %v770
        %v1595 = vpop.f32.mrb[0].mxu0
        %v1596 = vadd.f32 %v1499, %v1595
        %v1597 = vpop.f32.mrb[0].mxu0
        %v1598 = vpop.f32.mrb[0].mxu0
        %v1599 = vadd.f32 %v1502, %v1598
        %v1600 = vpop.f32.mrb[0].mxu0
        %1601 = vmatprep.mubr.bf16.mxu0 0
        %1602 = vmatmul.mubr.bf16.gmra.mrb[0].mxu0 %v773
        %v1603 = vpop.f32.mrb[0].mxu0
        %v1604 = vadd.f32 %v1507, %v1603
        %v1605 = vpop.f32.mrb[0].mxu0
        %v1606 = vpop.f32.mrb[0].mxu0
        %v1607 = vadd.f32 %v1510, %v1606
        %v1608 = vpop.f32.mrb[0].mxu0
        %1609 = vmatprep.mubr.bf16.mxu0 0
        %1610 = vmatmul.mubr.bf16.gmra.mrb[0].mxu0 %v776
        %v1611 = vpop.f32.mrb[0].mxu0
        %v1612 = vadd.f32 %v1515, %v1611
        %v1613 = vpop.f32.mrb[0].mxu0
        %v1614 = vpop.f32.mrb[0].mxu0
        %v1615 = vadd.f32 %v1518, %v1614
        %v1616 = vpop.f32.mrb[0].mxu0
        %1617 = vmatprep.mubr.bf16.mxu0 0
        %1618 = vmatmul.mubr.bf16.gmra.mrb[0].mxu0 %v779
        %v1619 = vpop.f32.mrb[0].mxu0
        %v1620 = vadd.f32 %v1523, %v1619
        %v1621 = vpop.f32.mrb[0].mxu0
        %v1622 = vpop.f32.mrb[0].mxu0
        %v1623 = vadd.f32 %v1526, %v1622
        %v1624 = vpop.f32.mrb[0].mxu0
        %1625 = vmatprep.mubr.bf16.mxu0 0
        %1626 = vmatmul.mubr.bf16.gmra.mrb[0].mxu0 %v782
        %v1627 = vpop.f32.mrb[0].mxu0
        %v1628 = vadd.f32 %v1531, %v1627
        %v1629 = vpop.f32.mrb[0].mxu0
        %v1630 = vpop.f32.mrb[0].mxu0
        %v1631 = vadd.f32 %v1534, %v1630
        %v1632 = vpop.f32.mrb[0].mxu0
        %1633 = vmatprep.mubr.bf16.mxu0 0
        %1634 = vmatmul.mubr.bf16.gmra.mrb[0].mxu0 %v785
        %v1635 = vpop.f32.mrb[0].mxu0
        %v1636 = vadd.f32 %v1539, %v1635
        %v1637 = vpop.f32.mrb[0].mxu0
        %v1638 = vpop.f32.mrb[0].mxu0
        %v1639 = vadd.f32 %v1542, %v1638
        %v1640 = vpop.f32.mrb[0].mxu0
        %1641 = vmatprep.mubr.bf16.mxu0 0
        %1642 = vmatmul.mubr.bf16.gmra.mrb[0].mxu0 %v1245
        %v1643 = vpop.f32.mrb[0].mxu0
        %v1644 = vadd.f32 %v1547, %v1643
        %v1645 = vpop.f32.mrb[0].mxu0
        %v1646 = vpop.f32.mrb[0].mxu0
        %v1647 = vadd.f32 %v1550, %v1646
        %v1648 = vpop.f32.mrb[0].mxu0
        %1649 = vdwg.mxu0
        %v1650 = vadd.f32 %v1247, %v1588
        %v1651 = vadd.f32 %v1248, %v1591
        %v1652 = vadd.f32 %v1249, %v1596
        %v1653 = vadd.f32 %v1250, %v1599
        %v1654 = vadd.f32 %v1251, %v1604
        %v1655 = vadd.f32 %v1252, %v1607
        %v1656 = vadd.f32 %v1253, %v1612
        %v1657 = vadd.f32 %v1254, %v1615
        %v1658 = vadd.f32 %v1255, %v1620
        %v1659 = vadd.f32 %v1256, %v1623
        %v1660 = vadd.f32 %v1257, %v1628
        %v1661 = vadd.f32 %v1258, %v1631
        %v1662 = vadd.f32 %v1259, %v1636
        %v1663 = vadd.f32 %v1260, %v1639
        %v1664 = vadd.f32 %v1261, %v1644
        %v1665 = vadd.f32 %v1262, %v1647
        %1666 = vst [vmem:[#allocation2] sm:$0xff] %v1650
        %1667 = vst [vmem:[#allocation2 + $0x8] sm:$0xff] %v1651
        %1668 = vst [vmem:[#allocation2 + $0x10] sm:$0xff] %v1652
        %1669 = vst [vmem:[#allocation2 + $0x18] sm:$0xff] %v1653
        %1670 = vst [vmem:[#allocation2 + $0x20] sm:$0xff] %v1654
        %1671 = vst [vmem:[#allocation2 + $0x28] sm:$0xff] %v1655
        %1672 = vst [vmem:[#allocation2 + $0x30] sm:$0xff] %v1656
        %1673 = vst [vmem:[#allocation2 + $0x38] sm:$0xff] %v1657
        %1674 = vst [vmem:[#allocation2 + $0x40] sm:$0xff] %v1658
        %1675 = vst [vmem:[#allocation2 + $0x48] sm:$0xff] %v1659
        %1676 = vst [vmem:[#allocation2 + $0x50] sm:$0xff] %v1660
        %1677 = vst [vmem:[#allocation2 + $0x58] sm:$0xff] %v1661
        %1678 = vst [vmem:[#allocation2 + $0x60] sm:$0xff] %v1662
        %1679 = vst [vmem:[#allocation2 + $0x68] sm:$0xff] %v1663
        %1680 = vst [vmem:[#allocation2 + $0x70] sm:$0xff] %v1664
        %1681 = vst [vmem:[#allocation2 + $0x78] sm:$0xff] %v1665
        %v1683 = vshrl.u32 %v613, 16
        %v1685 = vshll.u32 %v613, 16
        %v1687 = vrot.slane %v1685, 1
        %v1688 = vor.u32 %v1683, %v1687
        %v1690 = vshll.u32 %v623, 16
        %v1692 = vrot.slane %v1690, 1
        %v1693 = vsel %vm640, %v1688, %v1692
        %v1697 = vrot.slane %v613, 1
        %v1698 = vrot.slane %v623, 1
        %v1699 = vsel %vm761, %v1697, %v1698
        %v1701 = vld [vmem:[#allocation2] sm:$0xff]
        %v1702 = vld [vmem:[#allocation2 + $0x8] sm:$0xff]
        %v1703 = vld [vmem:[#allocation2 + $0x10] sm:$0xff]
        %v1704 = vld [vmem:[#allocation2 + $0x18] sm:$0xff]
        %v1705 = vld [vmem:[#allocation2 + $0x20] sm:$0xff]
        %v1706 = vld [vmem:[#allocation2 + $0x28] sm:$0xff]
        %v1707 = vld [vmem:[#allocation2 + $0x30] sm:$0xff]
        %v1708 = vld [vmem:[#allocation2 + $0x38] sm:$0xff]
        %v1709 = vld [vmem:[#allocation2 + $0x40] sm:$0xff]
        %v1710 = vld [vmem:[#allocation2 + $0x48] sm:$0xff]
        %v1711 = vld [vmem:[#allocation2 + $0x50] sm:$0xff]
        %v1712 = vld [vmem:[#allocation2 + $0x58] sm:$0xff]
        %v1713 = vld [vmem:[#allocation2 + $0x60] sm:$0xff]
        %v1714 = vld [vmem:[#allocation2 + $0x68] sm:$0xff]
        %v1715 = vld [vmem:[#allocation2 + $0x70] sm:$0xff]
        %v1716 = vld [vmem:[#allocation2 + $0x78] sm:$0xff]
        %s1717 = scalar_lea.vmem %s3, 384
        %v1718 = vld [vmem:[%s1717] sm:$0xf]
        %v1719 = vld [vmem:[%s1717 + $0x4] sm:$0xf]
        %v1720 = vld [vmem:[%s1717 + $0x8] sm:$0xf]
        %v1721 = vld [vmem:[%s1717 + $0xc] sm:$0xf]
        %v1722 = vld [vmem:[%s1717 + $0x10] sm:$0xf]
        %v1723 = vld [vmem:[%s1717 + $0x14] sm:$0xf]
        %v1724 = vld [vmem:[%s1717 + $0x18] sm:$0xf]
        %v1725 = vld [vmem:[%s1717 + $0x1c] sm:$0xf]
        %v1726 = vld [vmem:[%s1717 + $0x20] sm:$0xf]
        %v1727 = vld [vmem:[%s1717 + $0x24] sm:$0xf]
        %v1728 = vld [vmem:[%s1717 + $0x28] sm:$0xf]
        %v1729 = vld [vmem:[%s1717 + $0x2c] sm:$0xf]
        %v1730 = vld [vmem:[%s1717 + $0x30] sm:$0xf]
        %v1731 = vld [vmem:[%s1717 + $0x34] sm:$0xf]
        %v1732 = vld [vmem:[%s1717 + $0x38] sm:$0xf]
        %v1733 = vld [vmem:[%s1717 + $0x3c] sm:$0xf]
        %v1734 = vld [vmem:[%s1717 + $0x40] sm:$0xf]
        %v1735 = vld [vmem:[%s1717 + $0x44] sm:$0xf]
        %v1736 = vld [vmem:[%s1717 + $0x48] sm:$0xf]
        %v1737 = vld [vmem:[%s1717 + $0x4c] sm:$0xf]
        %v1738 = vld [vmem:[%s1717 + $0x50] sm:$0xf]
        %v1739 = vld [vmem:[%s1717 + $0x54] sm:$0xf]
        %v1740 = vld [vmem:[%s1717 + $0x58] sm:$0xf]
        %v1741 = vld [vmem:[%s1717 + $0x5c] sm:$0xf]
        %v1742 = vld [vmem:[%s1717 + $0x60] sm:$0xf]
        %v1743 = vld [vmem:[%s1717 + $0x64] sm:$0xf]
        %v1744 = vld [vmem:[%s1717 + $0x68] sm:$0xf]
        %v1745 = vld [vmem:[%s1717 + $0x6c] sm:$0xf]
        %v1746 = vld [vmem:[%s1717 + $0x70] sm:$0xf]
        %v1747 = vld [vmem:[%s1717 + $0x74] sm:$0xf]
        %v1748 = vld [vmem:[%s1717 + $0x78] sm:$0xf]
        %v1749 = vld [vmem:[%s1717 + $0x7c] sm:$0xf]
        %v1750 = vld [vmem:[%s1717 + $0x80] sm:$0xf]
        %v1751 = vld [vmem:[%s1717 + $0x84] sm:$0xf]
        %v1752 = vld [vmem:[%s1717 + $0x88] sm:$0xf]
        %v1753 = vld [vmem:[%s1717 + $0x8c] sm:$0xf]
        %v1754 = vld [vmem:[%s1717 + $0x90] sm:$0xf]
        %v1755 = vld [vmem:[%s1717 + $0x94] sm:$0xf]
        %v1756 = vld [vmem:[%s1717 + $0x98] sm:$0xf]
        %v1757 = vld [vmem:[%s1717 + $0x9c] sm:$0xf]
        %v1758 = vld [vmem:[%s1717 + $0xa0] sm:$0xf]
        %v1759 = vld [vmem:[%s1717 + $0xa4] sm:$0xf]
        %v1760 = vld [vmem:[%s1717 + $0xa8] sm:$0xf]
        %v1761 = vld [vmem:[%s1717 + $0xac] sm:$0xf]
        %v1762 = vld [vmem:[%s1717 + $0xb0] sm:$0xf]
        %v1763 = vld [vmem:[%s1717 + $0xb4] sm:$0xf]
        %v1764 = vld [vmem:[%s1717 + $0xb8] sm:$0xf]
        %v1765 = vld [vmem:[%s1717 + $0xbc] sm:$0xf]
        %v1814 = vunpack.c.l.b16 %v1718
        %v1815 = vunpack.c.l.b16 %v1719
        %v1816 = vunpack.c.l.b16 %v1720
        %v1817 = vunpack.c.l.b16 %v1721
        %v1818 = vunpack.c.l.b16 %v1722
        %v1819 = vunpack.c.l.b16 %v1723
        %v1820 = vunpack.c.l.b16 %v1724
        %v1821 = vunpack.c.l.b16 %v1725
        %v1822 = vunpack.c.l.b16 %v1726
        %v1823 = vunpack.c.l.b16 %v1727
        %v1824 = vunpack.c.l.b16 %v1728
        %v1825 = vunpack.c.l.b16 %v1729
        %v1826 = vunpack.c.l.b16 %v1730
        %v1827 = vunpack.c.l.b16 %v1731
        %v1828 = vunpack.c.l.b16 %v1732
        %v1829 = vunpack.c.l.b16 %v1733
        %v1830 = vunpack.c.l.b16 %v1734
        %v1831 = vunpack.c.l.b16 %v1735
        %v1832 = vunpack.c.l.b16 %v1736
        %v1833 = vunpack.c.l.b16 %v1737
        %v1834 = vunpack.c.l.b16 %v1738
        %v1835 = vunpack.c.l.b16 %v1739
        %v1836 = vunpack.c.l.b16 %v1740
        %v1837 = vunpack.c.l.b16 %v1741
        %v1838 = vunpack.c.l.b16 %v1742
        %v1839 = vunpack.c.l.b16 %v1743
        %v1840 = vunpack.c.l.b16 %v1744
        %v1841 = vunpack.c.l.b16 %v1745
        %v1842 = vunpack.c.l.b16 %v1746
        %v1843 = vunpack.c.l.b16 %v1747
        %v1844 = vunpack.c.l.b16 %v1748
        %v1845 = vunpack.c.l.b16 %v1749
        %v1846 = vunpack.c.l.b16 %v1750
        %v1847 = vunpack.c.l.b16 %v1751
        %v1848 = vunpack.c.l.b16 %v1752
        %v1849 = vunpack.c.l.b16 %v1753
        %v1850 = vunpack.c.l.b16 %v1754
        %v1851 = vunpack.c.l.b16 %v1755
        %v1852 = vunpack.c.l.b16 %v1756
        %v1853 = vunpack.c.l.b16 %v1757
        %v1854 = vunpack.c.l.b16 %v1758
        %v1855 = vunpack.c.l.b16 %v1759
        %v1856 = vunpack.c.l.b16 %v1760
        %v1857 = vunpack.c.l.b16 %v1761
        %v1858 = vunpack.c.l.b16 %v1762
        %v1859 = vunpack.c.l.b16 %v1763
        %v1860 = vunpack.c.l.b16 %v1764
        %v1861 = vunpack.c.l.b16 %v1765
        %v1862 = vpack.c.b16 %v1815, %v1814
        %v1863 = vpack.c.b16 %v1817, %v1816
        %v1864 = vpack.c.b16 %v1819, %v1818
        %v1865 = vpack.c.b16 %v1821, %v1820
        %v1866 = vpack.c.b16 %v1823, %v1822
        %v1867 = vpack.c.b16 %v1825, %v1824
        %v1868 = vpack.c.b16 %v1827, %v1826
        %v1869 = vpack.c.b16 %v1829, %v1828
        %v1870 = vpack.c.b16 %v1831, %v1830
        %v1871 = vpack.c.b16 %v1833, %v1832
        %v1872 = vpack.c.b16 %v1835, %v1834
        %v1873 = vpack.c.b16 %v1837, %v1836
        %v1874 = vpack.c.b16 %v1839, %v1838
        %v1875 = vpack.c.b16 %v1841, %v1840
        %v1876 = vpack.c.b16 %v1843, %v1842
        %v1877 = vpack.c.b16 %v1845, %v1844
        %v1878 = vpack.c.b16 %v1847, %v1846
        %v1879 = vpack.c.b16 %v1849, %v1848
        %v1880 = vpack.c.b16 %v1851, %v1850
        %v1881 = vpack.c.b16 %v1853, %v1852
        %v1882 = vpack.c.b16 %v1855, %v1854
        %v1883 = vpack.c.b16 %v1857, %v1856
        %v1884 = vpack.c.b16 %v1859, %v1858
        %v1885 = vpack.c.b16 %v1861, %v1860
        %1910 = vmatprep.subr.bf16.mxu0 0
        %1911 = vmatpush1.bf16.msra.mxu0 %v1862
        %1912 = vmatprep.subr.bf16.mxu0 0
        %1913 = vmatpush1.bf16.msra.mxu0 %v1863
        %1914 = vmatprep.subr.bf16.mxu0 0
        %1915 = vmatpush1.bf16.msra.mxu0 %v1864
        %1916 = vmatprep.subr.bf16.mxu0 0
        %1917 = vmatpush1.bf16.msra.mxu0 %v1865
        %1918 = vmatprep.subr.bf16.mxu0 0
        %1919 = vmatpush1.bf16.msra.mxu0 %v1866
        %1920 = vmatprep.subr.bf16.mxu0 0
        %1921 = vmatpush1.bf16.msra.mxu0 %v1867
        %1922 = vmatprep.subr.bf16.mxu0 0
        %1923 = vmatpush1.bf16.msra.mxu0 %v1868
        %1924 = vmatprep.subr.bf16.mxu0 0
        %1925 = vmatpush1.bf16.msra.mxu0 %v1869
        %1926 = vmatprep.subr.bf16.mxu0 0
        %1927 = vmatpush1.bf16.msra.mxu0 %v1870
        %1928 = vmatprep.subr.bf16.mxu0 0
        %1929 = vmatpush1.bf16.msra.mxu0 %v1871
        %1930 = vmatprep.subr.bf16.mxu0 0
        %1931 = vmatpush1.bf16.msra.mxu0 %v1872
        %1932 = vmatprep.subr.bf16.mxu0 0
        %1933 = vmatpush1.bf16.msra.mxu0 %v1873
        %1934 = vmatprep.subr.bf16.mxu0 0
        %1935 = vmatpush1.bf16.msra.mxu0 %v1874
        %1936 = vmatprep.subr.bf16.mxu0 0
        %1937 = vmatpush1.bf16.msra.mxu0 %v1875
        %1938 = vmatprep.subr.bf16.mxu0 0
        %1939 = vmatpush1.bf16.msra.mxu0 %v1876
        %1940 = vmatprep.subr.bf16.mxu0 0
        %1941 = vmatpush1.bf16.msra.mxu0 %v1877
        %1942 = vmatprep.mubr.bf16.mxu0 %v676
        %1943 = vmatmul.mubr.bf16.gmra.mrb[0].mxu0 %v606
        %v1944 = vpop.f32.mrb[0].mxu0
        %v1945 = vadd.f32 0.0, %v1944
        %v1946 = vpop.f32.mrb[0].mxu0
        %v1947 = vpop.f32.mrb[0].mxu0
        %v1948 = vadd.f32 0.0, %v1947
        %v1949 = vpop.f32.mrb[0].mxu0
        %1950 = vmatprep.mubr.bf16.mxu0 %v688
        %1951 = vmatmul.mubr.bf16.gmra.mrb[0].mxu0 %v607
        %v1952 = vpop.f32.mrb[0].mxu0
        %v1953 = vadd.f32 0.0, %v1952
        %v1954 = vpop.f32.mrb[0].mxu0
        %v1955 = vpop.f32.mrb[0].mxu0
        %v1956 = vadd.f32 0.0, %v1955
        %v1957 = vpop.f32.mrb[0].mxu0
        %1958 = vmatprep.mubr.bf16.mxu0 %v700
        %1959 = vmatmul.mubr.bf16.gmra.mrb[0].mxu0 %v608
        %v1960 = vpop.f32.mrb[0].mxu0
        %v1961 = vadd.f32 0.0, %v1960
        %v1962 = vpop.f32.mrb[0].mxu0
        %v1963 = vpop.f32.mrb[0].mxu0
        %v1964 = vadd.f32 0.0, %v1963
        %v1965 = vpop.f32.mrb[0].mxu0
        %1966 = vmatprep.mubr.bf16.mxu0 %v712
        %1967 = vmatmul.mubr.bf16.gmra.mrb[0].mxu0 %v609
        %v1968 = vpop.f32.mrb[0].mxu0
        %v1969 = vadd.f32 0.0, %v1968
        %v1970 = vpop.f32.mrb[0].mxu0
        %v1971 = vpop.f32.mrb[0].mxu0
        %v1972 = vadd.f32 0.0, %v1971
        %v1973 = vpop.f32.mrb[0].mxu0
        %1974 = vmatprep.mubr.bf16.mxu0 %v724
        %1975 = vmatmul.mubr.bf16.gmra.mrb[0].mxu0 %v610
        %v1976 = vpop.f32.mrb[0].mxu0
        %v1977 = vadd.f32 0.0, %v1976
        %v1978 = vpop.f32.mrb[0].mxu0
        %v1979 = vpop.f32.mrb[0].mxu0
        %v1980 = vadd.f32 0.0, %v1979
        %v1981 = vpop.f32.mrb[0].mxu0
        %1982 = vmatprep.mubr.bf16.mxu0 %v736
        %1983 = vmatmul.mubr.bf16.gmra.mrb[0].mxu0 %v611
        %v1984 = vpop.f32.mrb[0].mxu0
        %v1985 = vadd.f32 0.0, %v1984
        %v1986 = vpop.f32.mrb[0].mxu0
        %v1987 = vpop.f32.mrb[0].mxu0
        %v1988 = vadd.f32 0.0, %v1987
        %v1989 = vpop.f32.mrb[0].mxu0
        %1990 = vmatprep.mubr.bf16.mxu0 %v1239
        %1991 = vmatmul.mubr.bf16.gmra.mrb[0].mxu0 %v612
        %v1992 = vpop.f32.mrb[0].mxu0
        %v1993 = vadd.f32 0.0, %v1992
        %v1994 = vpop.f32.mrb[0].mxu0
        %v1995 = vpop.f32.mrb[0].mxu0
        %v1996 = vadd.f32 0.0, %v1995
        %v1997 = vpop.f32.mrb[0].mxu0
        %1998 = vmatprep.mubr.bf16.mxu0 %v1693
        %1999 = vmatmul.mubr.bf16.gmra.mrb[0].mxu0 %v613
        %v2000 = vpop.f32.mrb[0].mxu0
        %v2001 = vadd.f32 0.0, %v2000
        %v2002 = vpop.f32.mrb[0].mxu0
        %v2003 = vpop.f32.mrb[0].mxu0
        %v2004 = vadd.f32 0.0, %v2003
        %v2005 = vpop.f32.mrb[0].mxu0
        %2006 = vdwg.mxu0
        %2007 = vmatprep.subr.bf16.mxu0 0
        %2008 = vmatpush1.bf16.msra.mxu0 %v1878
        %2009 = vmatprep.subr.bf16.mxu0 0
        %2010 = vmatpush1.bf16.msra.mxu0 %v1879
        %2011 = vmatprep.subr.bf16.mxu0 0
        %2012 = vmatpush1.bf16.msra.mxu0 %v1880
        %2013 = vmatprep.subr.bf16.mxu0 0
        %2014 = vmatpush1.bf16.msra.mxu0 %v1881
        %2015 = vmatprep.subr.bf16.mxu0 0
        %2016 = vmatpush1.bf16.msra.mxu0 %v1882
        %2017 = vmatprep.subr.bf16.mxu0 0
        %2018 = vmatpush1.bf16.msra.mxu0 %v1883
        %2019 = vmatprep.subr.bf16.mxu0 0
        %2020 = vmatpush1.bf16.msra.mxu0 %v1884
        %2021 = vmatprep.subr.bf16.mxu0 0
        %2022 = vmatpush1.bf16.msra.mxu0 %v1885
        %2023 = vmatprep.subr.bf16.mxu0 0
        %2024 = vmatpush1.bf16.msra.mxu0 0
        %2025 = vmatprep.subr.bf16.mxu0 0
        %2026 = vmatpush1.bf16.msra.mxu0 0
        %2027 = vmatprep.subr.bf16.mxu0 0
        %2028 = vmatpush1.bf16.msra.mxu0 0
        %2029 = vmatprep.subr.bf16.mxu0 0
        %2030 = vmatpush1.bf16.msra.mxu0 0
        %2031 = vmatprep.subr.bf16.mxu0 0
        %2032 = vmatpush1.bf16.msra.mxu0 0
        %2033 = vmatprep.subr.bf16.mxu0 0
        %2034 = vmatpush1.bf16.msra.mxu0 0
        %2035 = vmatprep.subr.bf16.mxu0 0
        %2036 = vmatpush1.bf16.msra.mxu0 0
        %2037 = vmatprep.subr.bf16.mxu0 0
        %2038 = vmatpush1.bf16.msra.mxu0 0
        %2039 = vmatprep.mubr.bf16.mxu0 0
        %2040 = vmatmul.mubr.bf16.gmra.mrb[0].mxu0 %v770
        %v2041 = vpop.f32.mrb[0].mxu0
        %v2042 = vadd.f32 %v1945, %v2041
        %v2043 = vpop.f32.mrb[0].mxu0
        %v2044 = vpop.f32.mrb[0].mxu0
        %v2045 = vadd.f32 %v1948, %v2044
        %v2046 = vpop.f32.mrb[0].mxu0
        %2047 = vmatprep.mubr.bf16.mxu0 0
        %2048 = vmatmul.mubr.bf16.gmra.mrb[0].mxu0 %v773
        %v2049 = vpop.f32.mrb[0].mxu0
        %v2050 = vadd.f32 %v1953, %v2049
        %v2051 = vpop.f32.mrb[0].mxu0
        %v2052 = vpop.f32.mrb[0].mxu0
        %v2053 = vadd.f32 %v1956, %v2052
        %v2054 = vpop.f32.mrb[0].mxu0
        %2055 = vmatprep.mubr.bf16.mxu0 0
        %2056 = vmatmul.mubr.bf16.gmra.mrb[0].mxu0 %v776
        %v2057 = vpop.f32.mrb[0].mxu0
        %v2058 = vadd.f32 %v1961, %v2057
        %v2059 = vpop.f32.mrb[0].mxu0
        %v2060 = vpop.f32.mrb[0].mxu0
        %v2061 = vadd.f32 %v1964, %v2060
        %v2062 = vpop.f32.mrb[0].mxu0
        %2063 = vmatprep.mubr.bf16.mxu0 0
        %2064 = vmatmul.mubr.bf16.gmra.mrb[0].mxu0 %v779
        %v2065 = vpop.f32.mrb[0].mxu0
        %v2066 = vadd.f32 %v1969, %v2065
        %v2067 = vpop.f32.mrb[0].mxu0
        %v2068 = vpop.f32.mrb[0].mxu0
        %v2069 = vadd.f32 %v1972, %v2068
        %v2070 = vpop.f32.mrb[0].mxu0
        %2071 = vmatprep.mubr.bf16.mxu0 0
        %2072 = vmatmul.mubr.bf16.gmra.mrb[0].mxu0 %v782
        %v2073 = vpop.f32.mrb[0].mxu0
        %v2074 = vadd.f32 %v1977, %v2073
        %v2075 = vpop.f32.mrb[0].mxu0
        %v2076 = vpop.f32.mrb[0].mxu0
        %v2077 = vadd.f32 %v1980, %v2076
        %v2078 = vpop.f32.mrb[0].mxu0
        %2079 = vmatprep.mubr.bf16.mxu0 0
        %2080 = vmatmul.mubr.bf16.gmra.mrb[0].mxu0 %v785
        %v2081 = vpop.f32.mrb[0].mxu0
        %v2082 = vadd.f32 %v1985, %v2081
        %v2083 = vpop.f32.mrb[0].mxu0
        %v2084 = vpop.f32.mrb[0].mxu0
        %v2085 = vadd.f32 %v1988, %v2084
        %v2086 = vpop.f32.mrb[0].mxu0
        %2087 = vmatprep.mubr.bf16.mxu0 0
        %2088 = vmatmul.mubr.bf16.gmra.mrb[0].mxu0 %v1245
        %v2089 = vpop.f32.mrb[0].mxu0
        %v2090 = vadd.f32 %v1993, %v2089
        %v2091 = vpop.f32.mrb[0].mxu0
        %v2092 = vpop.f32.mrb[0].mxu0
        %v2093 = vadd.f32 %v1996, %v2092
        %v2094 = vpop.f32.mrb[0].mxu0
        %2095 = vmatprep.mubr.bf16.mxu0 0
        %2096 = vmatmul.mubr.bf16.gmra.mrb[0].mxu0 %v1699
        %v2097 = vpop.f32.mrb[0].mxu0
        %v2098 = vadd.f32 %v2001, %v2097
        %v2099 = vpop.f32.mrb[0].mxu0
        %v2100 = vpop.f32.mrb[0].mxu0
        %v2101 = vadd.f32 %v2004, %v2100
        %v2102 = vpop.f32.mrb[0].mxu0
        %2103 = vdwg.mxu0
        %v2104 = vadd.f32 %v1701, %v2042
        %v2105 = vadd.f32 %v1702, %v2045
        %v2106 = vadd.f32 %v1703, %v2050
        %v2107 = vadd.f32 %v1704, %v2053
        %v2108 = vadd.f32 %v1705, %v2058
        %v2109 = vadd.f32 %v1706, %v2061
        %v2110 = vadd.f32 %v1707, %v2066
        %v2111 = vadd.f32 %v1708, %v2069
        %v2112 = vadd.f32 %v1709, %v2074
        %v2113 = vadd.f32 %v1710, %v2077
        %v2114 = vadd.f32 %v1711, %v2082
        %v2115 = vadd.f32 %v1712, %v2085
        %v2116 = vadd.f32 %v1713, %v2090
        %v2117 = vadd.f32 %v1714, %v2093
        %v2118 = vadd.f32 %v1715, %v2098
        %v2119 = vadd.f32 %v1716, %v2101
        %2120 = vst [vmem:[#allocation2] sm:$0xff] %v2104
        %2121 = vst [vmem:[#allocation2 + $0x8] sm:$0xff] %v2105
        %2122 = vst [vmem:[#allocation2 + $0x10] sm:$0xff] %v2106
        %2123 = vst [vmem:[#allocation2 + $0x18] sm:$0xff] %v2107
        %2124 = vst [vmem:[#allocation2 + $0x20] sm:$0xff] %v2108
        %2125 = vst [vmem:[#allocation2 + $0x28] sm:$0xff] %v2109
        %2126 = vst [vmem:[#allocation2 + $0x30] sm:$0xff] %v2110
        %2127 = vst [vmem:[#allocation2 + $0x38] sm:$0xff] %v2111
        %2128 = vst [vmem:[#allocation2 + $0x40] sm:$0xff] %v2112
        %2129 = vst [vmem:[#allocation2 + $0x48] sm:$0xff] %v2113
        %2130 = vst [vmem:[#allocation2 + $0x50] sm:$0xff] %v2114
        %2131 = vst [vmem:[#allocation2 + $0x58] sm:$0xff] %v2115
        %2132 = vst [vmem:[#allocation2 + $0x60] sm:$0xff] %v2116
        %2133 = vst [vmem:[#allocation2 + $0x68] sm:$0xff] %v2117
        %2134 = vst [vmem:[#allocation2 + $0x70] sm:$0xff] %v2118
        %2135 = vst [vmem:[#allocation2 + $0x78] sm:$0xff] %v2119
        %v2136 = vld [vmem:[#allocation2] sm:$0xff]
        %v2137 = vld [vmem:[#allocation2 + $0x8] sm:$0xff]
        %v2138 = vld [vmem:[#allocation2 + $0x10] sm:$0xff]
        %v2139 = vld [vmem:[#allocation2 + $0x18] sm:$0xff]
        %v2140 = vld [vmem:[#allocation2 + $0x20] sm:$0xff]
        %v2141 = vld [vmem:[#allocation2 + $0x28] sm:$0xff]
        %v2142 = vld [vmem:[#allocation2 + $0x30] sm:$0xff]
        %v2143 = vld [vmem:[#allocation2 + $0x38] sm:$0xff]
        %v2144 = vld [vmem:[#allocation2 + $0x40] sm:$0xff]
        %v2145 = vld [vmem:[#allocation2 + $0x48] sm:$0xff]
        %v2146 = vld [vmem:[#allocation2 + $0x50] sm:$0xff]
        %v2147 = vld [vmem:[#allocation2 + $0x58] sm:$0xff]
        %v2148 = vld [vmem:[#allocation2 + $0x60] sm:$0xff]
        %v2149 = vld [vmem:[#allocation2 + $0x68] sm:$0xff]
        %v2150 = vld [vmem:[#allocation2 + $0x70] sm:$0xff]
        %v2151 = vld [vmem:[#allocation2 + $0x78] sm:$0xff]
        %v2152 = vld [vmem:[%s4] sm:$0x1]
        %v2154 = vlaneseq
        %v2155 = vshrl.u32 %v2154, 7
        %v2156 = vsub.s32 0, %v2155
        %v2157 = vrot.slane %v2152, %v2156
        %v2159 = vmul.f32 %v2136, %v2157
        %v2160 = vmul.f32 %v2137, %v2157
        %v2161 = vmul.f32 %v2138, %v2157
        %v2162 = vmul.f32 %v2139, %v2157
        %v2163 = vmul.f32 %v2140, %v2157
        %v2164 = vmul.f32 %v2141, %v2157
        %v2165 = vmul.f32 %v2142, %v2157
        %v2166 = vmul.f32 %v2143, %v2157
        %v2167 = vmul.f32 %v2144, %v2157
        %v2168 = vmul.f32 %v2145, %v2157
        %v2169 = vmul.f32 %v2146, %v2157
        %v2170 = vmul.f32 %v2147, %v2157
        %v2171 = vmul.f32 %v2148, %v2157
        %v2172 = vmul.f32 %v2149, %v2157
        %v2173 = vmul.f32 %v2150, %v2157
        %v2174 = vmul.f32 %v2151, %v2157
        %v2175 = vld [vmem:[%s5] sm:$0x1]
        %v2177 = vlaneseq
        %v2178 = vshrl.u32 %v2177, 7
        %v2179 = vsub.s32 0, %v2178
        %v2180 = vrot.slane %v2175, %v2179
        %v2182 = vadd.f32 %v2159, %v2180
        %v2183 = vadd.f32 %v2160, %v2180
        %v2184 = vadd.f32 %v2161, %v2180
        %v2185 = vadd.f32 %v2162, %v2180
        %v2186 = vadd.f32 %v2163, %v2180
        %v2187 = vadd.f32 %v2164, %v2180
        %v2188 = vadd.f32 %v2165, %v2180
        %v2189 = vadd.f32 %v2166, %v2180
        %v2190 = vadd.f32 %v2167, %v2180
        %v2191 = vadd.f32 %v2168, %v2180
        %v2192 = vadd.f32 %v2169, %v2180
        %v2193 = vadd.f32 %v2170, %v2180
        %v2194 = vadd.f32 %v2171, %v2180
        %v2195 = vadd.f32 %v2172, %v2180
        %v2196 = vadd.f32 %v2173, %v2180
        %v2197 = vadd.f32 %v2174, %v2180
        %v2198 = vmax.f32 %v2182, 0.0
        %v2199 = vmax.f32 %v2183, 0.0
        %v2200 = vmax.f32 %v2184, 0.0
        %v2201 = vmax.f32 %v2185, 0.0
        %v2202 = vmax.f32 %v2186, 0.0
        %v2203 = vmax.f32 %v2187, 0.0
        %v2204 = vmax.f32 %v2188, 0.0
        %v2205 = vmax.f32 %v2189, 0.0
        %v2206 = vmax.f32 %v2190, 0.0
        %v2207 = vmax.f32 %v2191, 0.0
        %v2208 = vmax.f32 %v2192, 0.0
        %v2209 = vmax.f32 %v2193, 0.0
        %v2210 = vmax.f32 %v2194, 0.0
        %v2211 = vmax.f32 %v2195, 0.0
        %v2212 = vmax.f32 %v2196, 0.0
        %v2213 = vmax.f32 %v2197, 0.0
        %2214 = vst [vmem:[%s361] sm:$0xff] %v2198
        %2215 = vst [vmem:[%s361 + $0x8] sm:$0xff] %v2199
        %2216 = vst [vmem:[%s361 + $0x10] sm:$0xff] %v2200
        %2217 = vst [vmem:[%s361 + $0x18] sm:$0xff] %v2201
        %2218 = vst [vmem:[%s361 + $0x20] sm:$0xff] %v2202
        %2219 = vst [vmem:[%s361 + $0x28] sm:$0xff] %v2203
        %2220 = vst [vmem:[%s361 + $0x30] sm:$0xff] %v2204
        %2221 = vst [vmem:[%s361 + $0x38] sm:$0xff] %v2205
        %2222 = vst [vmem:[%s361 + $0x40] sm:$0xff] %v2206
        %2223 = vst [vmem:[%s361 + $0x48] sm:$0xff] %v2207
        %2224 = vst [vmem:[%s361 + $0x50] sm:$0xff] %v2208
        %2225 = vst [vmem:[%s361 + $0x58] sm:$0xff] %v2209
        %2226 = vst [vmem:[%s361 + $0x60] sm:$0xff] %v2210
        %2227 = vst [vmem:[%s361 + $0x68] sm:$0xff] %v2211
        %2228 = vst [vmem:[%s361 + $0x70] sm:$0xff] %v2212
        %2229 = vst [vmem:[%s361 + $0x78] sm:$0xff] %v2213
        %s2230 = sand.u32 %s205, 1
        %s2231 = scalar_lea.sflag [#allocation4], %s2230
        %s2232 = sand.u32 %s205, 1
        %s2233 = smul.addr %s2232, 128
        %s2234 = scalar_lea.vmem [#allocation3], %s2233
        // Predicated region
        $region45: #{unet_up_conv2d_ct.3} parent=43 // pred_check
          %p2235 = pneg %p215
        $region46: #{unet_up_conv2d_ct.3} parent=43 // pred_check_branch
          %2237 = sbr.rel (%p2235) target = $region48
        $region47: #{unet_up_conv2d_ct.3} parent=43 // pred_region
          %s2238 = smul.u32 8, %s25
          %s2240 = ssub.s32 2048, 2048
          %2241 = vsyncadd %s2231, %s2240
          %s2242 = smul.addr %s2238, 2
          %s2243 = smul.addr %s24, 32
          %s2244 = sadd.s32 %s2242, %s2243
          %s2245 = smul.addr %s2244, 128
          %s2246 = scalar_lea.hbm %s6, %s2245
          %s2247 = sshll.u32 %s2234, 4
          %s2248 = int_to_ptr.vmem [resolvable:$true] %s2247
          %2253 = dma.vmem_to_hbm [thread:$0]  %s2248, 2048, %s2246, %s2231, 128, 128, 8
        $region48: #{unet_up_conv2d_ct.3} parent=43 // pred_fallthru
          _
      $region44: #{unet_up_conv2d_ct.3} parent=5 // pred_fallthru
        _
      %p2254 = scmp.le.s32.totalorder 2, %s15
      // Predicated region
      $region49: #{unet_up_conv2d_ct.3} parent=5 // pred_check
        %p2255 = pneg %p2254
      $region50: #{unet_up_conv2d_ct.3} parent=5 // pred_check_branch
        %2257 = sbr.rel (%p2255) target = $region52
      $region51: #{unet_up_conv2d_ct.3} parent=5 // pred_region
        %s2258 = ssub.s32 %s15, 2
        // Predicated region
        $region53: #{unet_up_conv2d_ct.3} parent=51 // pred_check
          %p2259 = pneg %p221
        $region54: #{unet_up_conv2d_ct.3} parent=51 // pred_check_branch
          %2261 = sbr.rel (%p2259) target = $region56
        $region55: #{unet_up_conv2d_ct.3} parent=51 // pred_region
          %s2262 = sand.u32 %s206, 1
          %s2263 = scalar_lea.sflag [#allocation4], %s2262
          %s2264 = sand.u32 %s206, 1
          %s2265 = smul.addr %s2264, 128
          %s2266 = scalar_lea.vmem [#allocation3], %s2265
          %2267 = dma.done %s2263, 2048
        $region56: #{unet_up_conv2d_ct.3} parent=51 // pred_fallthru
          _
      $region52: #{unet_up_conv2d_ct.3} parent=5 // pred_fallthru
        _
    $region6: #{unet_up_conv2d_ct.3} parent=1 // loop_footer
      %s19 = sadd.s32 1, %s15
    $region7: #{unet_up_conv2d_ct.3} parent=1 // loop_footer_branch
      %14 = sbr.rel target = $region3
    $region8: #{unet_up_conv2d_ct.3} parent=1 // loop_exit
      _
    %2268 = vsyncpa [#allocation4], 1
    %s2269 = scalar_lea.sflag [#allocation4], 1
    %2270 = vsyncpa %s2269, 1

// kernel: unet_up_conv2d_ct.2
$region0: #{unet_up_conv2d_ct.2}
  #allocation0 [shape = 'u32[]', space=smem, size = 0x4, offset = 0x4, fixed_abs, tag = 'smem constant byte address 0x4 - core index']
  #allocation1 [shape = 'u32[144,128]{1,0:T(1,128)}', space=vmem, size = 0x12000, scoped, tag = 'internal scratch']
  #allocation2 [shape = 'f32[128,128]{1,0:T(8,128)}', space=vmem, size = 0x10000, scoped, tag = 'scratch operand']
  %s0 = inlined_call_operand.hbm [shape: f32[2,16,16,128], index: 0, kind: input, shape index: {}, may-alias: {0,1,2}]
  %s1 = inlined_call_operand.hbm [shape: f32[2,16,16,128], index: 1, kind: input, shape index: {}, may-alias: {0,1,2}]
  %s2 = inlined_call_operand.hbm [shape: f32[2,16,16,128], index: 2, kind: input, shape index: {}, may-alias: {0,1,2}]
  %s3 = inlined_call_operand.hbm [shape: f32[2,8,8,128], index: 3, kind: input, shape index: {}, may-alias: {3,4,5}]
  %s4 = inlined_call_operand.hbm [shape: f32[2,8,8,128], index: 4, kind: input, shape index: {}, may-alias: {3,4,5}]
  %s5 = inlined_call_operand.hbm [shape: f32[2,8,8,128], index: 5, kind: input, shape index: {}, may-alias: {3,4,5}]
  %s6 = inlined_call_operand.hbm [shape: bf16[3,384,128], index: 6, kind: input, shape index: {}]
  %s7 = inlined_call_operand.hbm [shape: bf16[3,384,128], index: 7, kind: input, shape index: {}]
  %s8 = inlined_call_operand.vmem [shape: f32[1,128], index: 8, kind: input, shape index: {}]
  %s9 = inlined_call_operand.vmem [shape: f32[1,128], index: 9, kind: input, shape index: {}]
  %s10 = inlined_call_operand.vmem [shape: bf16[2,16,16,128], index: 10, kind: output, shape index: {}]
  %s11 = sld [smem:[#allocation0]]
  $region105: #{unet_up_conv2d_ct.2} parent=0
    _
  %s13 = ssub.s32 1, %s11
  %s14 = scalar_select 0, %s13, %s11
  $region1: #{unet_up_conv2d_ct.2} parent=0
    #allocation3 [shape = 'u8[131072]{0}', space=vmem, size = 0x20000, scoped, tag = 'input window, operand 0']
    #allocation4 [shape = 's32[2]{0}', space=sflag, size = 0x8, scoped, tag = 'scoped memory for unet_up_conv2d_ct.2']
    #allocation5 [shape = 'u8[16384]{0}', space=vmem, size = 0x4000, scoped, tag = 'input window, operand 1']
    #allocation6 [shape = 's32[2]{0}', space=sflag, size = 0x8, scoped, tag = 'scoped memory for unet_up_conv2d_ct.2']
    #allocation7 [shape = 'u8[16384]{0}', space=vmem, size = 0x4000, scoped, tag = 'input window, operand 2']
    #allocation8 [shape = 'u8[32768]{0}', space=vmem, size = 0x8000, scoped, tag = 'input window, operand 3']
    #allocation9 [shape = 's32[2]{0}', space=sflag, size = 0x8, scoped, tag = 'scoped memory for unet_up_conv2d_ct.2']
    #allocation10 [shape = 'u8[8192]{0}', space=vmem, size = 0x2000, scoped, tag = 'input window, operand 4']
    #allocation11 [shape = 'u8[8192]{0}', space=vmem, size = 0x2000, scoped, tag = 'input window, operand 5']
    #allocation12 [shape = 's32[2]{0}', space=sflag, size = 0x8, scoped, tag = 'scoped memory for unet_up_conv2d_ct.2']
    #allocation13 [shape = 'u8[294912]{0}', space=vmem, size = 0x48000, scoped, tag = 'input window, operand 6, single buffered']
    #allocation14 [shape = 'u8[294912]{0}', space=vmem, size = 0x48000, scoped, tag = 'input window, operand 7, single buffered']
    #allocation15 [shape = 's32[1]{0}', space=sflag, size = 0x4, scoped, tag = 'scoped memory for unet_up_conv2d_ct.2']
    %15 = vsyncpa [#allocation4], 0
    %s16 = scalar_lea.sflag [#allocation4], 1
    %17 = vsyncpa %s16, 0
    %18 = vsyncpa [#allocation6], 0
    %s19 = scalar_lea.sflag [#allocation6], 1
    %20 = vsyncpa %s19, 0
    %21 = vsyncpa [#allocation9], 0
    %s22 = scalar_lea.sflag [#allocation9], 1
    %23 = vsyncpa %s22, 0
    %24 = vsyncpa [#allocation12], 0
    %s25 = scalar_lea.sflag [#allocation12], 1
    %26 = vsyncpa %s25, 0
    %27 = vsyncpa [#allocation15], 0
    loop: start=0, step=1, limit=6
    $region2: #{unet_up_conv2d_ct.2} parent=1 // loop_pre_header
      _
    $region3: #{unet_up_conv2d_ct.2} parent=1 // loop_header
      %s29 = sphi 0, %s33
      %p30 = scmp.ge.s32.totalorder %s29, 6
      %s36 = sphi 0, %s48
      %s37 = sphi 0, %s44
      %s38 = sphi 0, %s36
      %s39 = sphi 0, %s37
      %s40 = sphi 0, %s38
      %s41 = sphi 0, %s39
      %s53 = sphi 0, %s55
      %s56 = sphi 0, %s53
      %s57 = sphi 0, %s56
      %s73 = sphi 0, %s57
      %s89 = sphi 0, %s91
      %s92 = sphi 0, %s89
      %s93 = sphi 0, %s92
      %s109 = sphi 0, %s93
      %s125 = sphi 0, %s127
      %s128 = sphi 0, %s125
      %s129 = sphi 0, %s128
      %s145 = sphi 0, %s129
      %s153 = sphi 0, %s155
      %s156 = sphi 0, %s153
      %s157 = sphi 0, %s156
      %s173 = sphi 0, %s157
      %s189 = sphi 0, %s191
      %s192 = sphi 0, %s189
      %s193 = sphi 0, %s192
      %s209 = sphi 0, %s193
      %s225 = sphi 0, %s227
      %s228 = sphi 0, %s225
      %s229 = sphi 0, %s228
      %s245 = sphi 0, %s229
      %s249 = sphi 0, %s249
      %s251 = sphi 0, %s249
      %s252 = sphi 0, %s251
      %s266 = sphi 0, %s252
      %s270 = sphi 0, %s270
      %s272 = sphi 0, %s270
      %s273 = sphi 0, %s272
      %s287 = sphi 0, %s273
      %s291 = sphi 0, %s291
      %s293 = sphi 0, %s291
      %s294 = sphi 0, %s293
      %s308 = sphi 0, %s294
      %s312 = sphi 0, %s312
      %s314 = sphi 0, %s312
      %s315 = sphi 0, %s314
      %s329 = sphi 0, %s315
      %s337 = sphi 0, %s339
      %s340 = sphi 0, %s337
      %s341 = sphi 0, %s340
      %s357 = sphi 0, %s341
    $region4: #{unet_up_conv2d_ct.2} parent=1 // loop_header_branch
      %32 = sbr.rel (%p30) target = $region8
    $region5: #{unet_up_conv2d_ct.2} parent=1 // loop_body
      %s34 = ssub.s32 %s29, 1
      %s35 = ssub.s32 %s29, 2
      %s42 = sadd.s32 1, %s37
      %p43 = scmp.ge.s32.totalorder %s42, 2
      %s44 = scalar_select %p43, 0, %s42
      %s45 = sadd.s32 1, %s36
      %s46 = scalar_select %p43, %s45, %s36
      %p47 = scmp.ge.s32.totalorder %s46, 2
      %s48 = scalar_select %p47, 0, %s46
      %s49 = ssub.s32 %s36, %s48
      %s50 = ssub.s32 %s37, %s44
      %s51 = sor.u32 %s49, %s50
      %p52 = scmp.eq.s32.totalorder %s51, 0
      %s54 = sadd.s32 %s53, 1
      %s55 = scalar_select %p52, %s53, %s54
      %p58 = pneg %p52
      %p59 = scmp.eq.s32.totalorder %s29, 3
      %p60 = por %p58, %p59
      %p61 = scmp.ne.s32.totalorder %s53, %s56
      %p62 = scmp.eq.s32.totalorder %s29, 0
      %p63 = por %p61, %p62
      %p64 = scmp.ne.s32.totalorder %s53, %s56
      %p65 = scmp.eq.s32.totalorder %s34, 3
      %p66 = por %p64, %p65
      %p67 = scmp.ne.s32.totalorder %s56, %s57
      %p68 = scmp.eq.s32.totalorder %s34, 0
      %p69 = por %p67, %p68
      %p70 = scmp.ne.s32.totalorder %s56, %s57
      %p71 = scmp.eq.s32.totalorder %s35, 3
      %p72 = por %p70, %p71
      %p74 = scmp.ne.s32.totalorder %s57, %s73
      %p75 = scmp.eq.s32.totalorder %s35, 0
      %p76 = por %p74, %p75
      %s77 = smul.u32 %s37, 8
      %s78 = ssub.s32 %s77, 1
      %p79 = scmp.gt.s32.totalorder %s78, 0
      %s80 = scalar_select %p79, %s78, 0
      %s81 = smul.u32 %s44, 8
      %s82 = ssub.s32 %s81, 1
      %p83 = scmp.gt.s32.totalorder %s82, 0
      %s84 = scalar_select %p83, %s82, 0
      %s85 = ssub.s32 %s36, %s48
      %s86 = ssub.s32 %s80, %s84
      %s87 = sor.u32 %s85, %s86
      %p88 = scmp.eq.s32.totalorder %s87, 0
      %s90 = sadd.s32 %s89, 1
      %s91 = scalar_select %p88, %s89, %s90
      %p94 = pneg %p88
      %p95 = scmp.eq.s32.totalorder %s29, 3
      %p96 = por %p94, %p95
      %p97 = scmp.ne.s32.totalorder %s89, %s92
      %p98 = scmp.eq.s32.totalorder %s29, 0
      %p99 = por %p97, %p98
      %p100 = scmp.ne.s32.totalorder %s89, %s92
      %p101 = scmp.eq.s32.totalorder %s34, 3
      %p102 = por %p100, %p101
      %p103 = scmp.ne.s32.totalorder %s92, %s93
      %p104 = scmp.eq.s32.totalorder %s34, 0
      %p105 = por %p103, %p104
      %p106 = scmp.ne.s32.totalorder %s92, %s93
      %p107 = scmp.eq.s32.totalorder %s35, 3
      %p108 = por %p106, %p107
      %p110 = scmp.ne.s32.totalorder %s93, %s109
      %p111 = scmp.eq.s32.totalorder %s35, 0
      %p112 = por %p110, %p111
      %s113 = smul.u32 %s37, 8
      %s114 = sadd.s32 %s113, 8
      %p115 = scmp.lt.s32.totalorder %s114, 15
      %s116 = scalar_select %p115, %s114, 15
      %s117 = smul.u32 %s44, 8
      %s118 = sadd.s32 %s117, 8
      %p119 = scmp.lt.s32.totalorder %s118, 15
      %s120 = scalar_select %p119, %s118, 15
      %s121 = ssub.s32 %s36, %s48
      %s122 = ssub.s32 %s116, %s120
      %s123 = sor.u32 %s121, %s122
      %p124 = scmp.eq.s32.totalorder %s123, 0
      %s126 = sadd.s32 %s125, 1
      %s127 = scalar_select %p124, %s125, %s126
      %p130 = pneg %p124
      %p131 = scmp.eq.s32.totalorder %s29, 3
      %p132 = por %p130, %p131
      %p133 = scmp.ne.s32.totalorder %s125, %s128
      %p134 = scmp.eq.s32.totalorder %s29, 0
      %p135 = por %p133, %p134
      %p136 = scmp.ne.s32.totalorder %s125, %s128
      %p137 = scmp.eq.s32.totalorder %s34, 3
      %p138 = por %p136, %p137
      %p139 = scmp.ne.s32.totalorder %s128, %s129
      %p140 = scmp.eq.s32.totalorder %s34, 0
      %p141 = por %p139, %p140
      %p142 = scmp.ne.s32.totalorder %s128, %s129
      %p143 = scmp.eq.s32.totalorder %s35, 3
      %p144 = por %p142, %p143
      %p146 = scmp.ne.s32.totalorder %s129, %s145
      %p147 = scmp.eq.s32.totalorder %s35, 0
      %p148 = por %p146, %p147
      %s149 = ssub.s32 %s36, %s48
      %s150 = ssub.s32 %s37, %s44
      %s151 = sor.u32 %s149, %s150
      %p152 = scmp.eq.s32.totalorder %s151, 0
      %s154 = sadd.s32 %s153, 1
      %s155 = scalar_select %p152, %s153, %s154
      %p158 = pneg %p152
      %p159 = scmp.eq.s32.totalorder %s29, 3
      %p160 = por %p158, %p159
      %p161 = scmp.ne.s32.totalorder %s153, %s156
      %p162 = scmp.eq.s32.totalorder %s29, 0
      %p163 = por %p161, %p162
      %p164 = scmp.ne.s32.totalorder %s153, %s156
      %p165 = scmp.eq.s32.totalorder %s34, 3
      %p166 = por %p164, %p165
      %p167 = scmp.ne.s32.totalorder %s156, %s157
      %p168 = scmp.eq.s32.totalorder %s34, 0
      %p169 = por %p167, %p168
      %p170 = scmp.ne.s32.totalorder %s156, %s157
      %p171 = scmp.eq.s32.totalorder %s35, 3
      %p172 = por %p170, %p171
      %p174 = scmp.ne.s32.totalorder %s157, %s173
      %p175 = scmp.eq.s32.totalorder %s35, 0
      %p176 = por %p174, %p175
      %s177 = smul.u32 %s37, 4
      %s178 = ssub.s32 %s177, 1
      %p179 = scmp.gt.s32.totalorder %s178, 0
      %s180 = scalar_select %p179, %s178, 0
      %s181 = smul.u32 %s44, 4
      %s182 = ssub.s32 %s181, 1
      %p183 = scmp.gt.s32.totalorder %s182, 0
      %s184 = scalar_select %p183, %s182, 0
      %s185 = ssub.s32 %s36, %s48
      %s186 = ssub.s32 %s180, %s184
      %s187 = sor.u32 %s185, %s186
      %p188 = scmp.eq.s32.totalorder %s187, 0
      %s190 = sadd.s32 %s189, 1
      %s191 = scalar_select %p188, %s189, %s190
      %p194 = pneg %p188
      %p195 = scmp.eq.s32.totalorder %s29, 3
      %p196 = por %p194, %p195
      %p197 = scmp.ne.s32.totalorder %s189, %s192
      %p198 = scmp.eq.s32.totalorder %s29, 0
      %p199 = por %p197, %p198
      %p200 = scmp.ne.s32.totalorder %s189, %s192
      %p201 = scmp.eq.s32.totalorder %s34, 3
      %p202 = por %p200, %p201
      %p203 = scmp.ne.s32.totalorder %s192, %s193
      %p204 = scmp.eq.s32.totalorder %s34, 0
      %p205 = por %p203, %p204
      %p206 = scmp.ne.s32.totalorder %s192, %s193
      %p207 = scmp.eq.s32.totalorder %s35, 3
      %p208 = por %p206, %p207
      %p210 = scmp.ne.s32.totalorder %s193, %s209
      %p211 = scmp.eq.s32.totalorder %s35, 0
      %p212 = por %p210, %p211
      %s213 = smul.u32 %s37, 4
      %s214 = sadd.s32 %s213, 4
      %p215 = scmp.lt.s32.totalorder %s214, 7
      %s216 = scalar_select %p215, %s214, 7
      %s217 = smul.u32 %s44, 4
      %s218 = sadd.s32 %s217, 4
      %p219 = scmp.lt.s32.totalorder %s218, 7
      %s220 = scalar_select %p219, %s218, 7
      %s221 = ssub.s32 %s36, %s48
      %s222 = ssub.s32 %s216, %s220
      %s223 = sor.u32 %s221, %s222
      %p224 = scmp.eq.s32.totalorder %s223, 0
      %s226 = sadd.s32 %s225, 1
      %s227 = scalar_select %p224, %s225, %s226
      %p230 = pneg %p224
      %p231 = scmp.eq.s32.totalorder %s29, 3
      %p232 = por %p230, %p231
      %p233 = scmp.ne.s32.totalorder %s225, %s228
      %p234 = scmp.eq.s32.totalorder %s29, 0
      %p235 = por %p233, %p234
      %p236 = scmp.ne.s32.totalorder %s225, %s228
      %p237 = scmp.eq.s32.totalorder %s34, 3
      %p238 = por %p236, %p237
      %p239 = scmp.ne.s32.totalorder %s228, %s229
      %p240 = scmp.eq.s32.totalorder %s34, 0
      %p241 = por %p239, %p240
      %p242 = scmp.ne.s32.totalorder %s228, %s229
      %p243 = scmp.eq.s32.totalorder %s35, 3
      %p244 = por %p242, %p243
      %p246 = scmp.ne.s32.totalorder %s229, %s245
      %p247 = scmp.eq.s32.totalorder %s35, 0
      %p248 = por %p246, %p247
      %s250 = sadd.s32 %s249, 1
      %p253 = scmp.eq.s32.totalorder %s29, 3
      %p254 = scmp.ne.s32.totalorder %s249, %s251
      %p255 = scmp.eq.s32.totalorder %s29, 0
      %p256 = por %p254, %p255
      %p257 = scmp.ne.s32.totalorder %s249, %s251
      %p258 = scmp.eq.s32.totalorder %s34, 3
      %p259 = por %p257, %p258
      %p260 = scmp.ne.s32.totalorder %s251, %s252
      %p261 = scmp.eq.s32.totalorder %s34, 0
      %p262 = por %p260, %p261
      %p263 = scmp.ne.s32.totalorder %s251, %s252
      %p264 = scmp.eq.s32.totalorder %s35, 3
      %p265 = por %p263, %p264
      %p267 = scmp.ne.s32.totalorder %s252, %s266
      %p268 = scmp.eq.s32.totalorder %s35, 0
      %p269 = por %p267, %p268
      %s271 = sadd.s32 %s270, 1
      %p274 = scmp.eq.s32.totalorder %s29, 3
      %p275 = scmp.ne.s32.totalorder %s270, %s272
      %p276 = scmp.eq.s32.totalorder %s29, 0
      %p277 = por %p275, %p276
      %p278 = scmp.ne.s32.totalorder %s270, %s272
      %p279 = scmp.eq.s32.totalorder %s34, 3
      %p280 = por %p278, %p279
      %p281 = scmp.ne.s32.totalorder %s272, %s273
      %p282 = scmp.eq.s32.totalorder %s34, 0
      %p283 = por %p281, %p282
      %p284 = scmp.ne.s32.totalorder %s272, %s273
      %p285 = scmp.eq.s32.totalorder %s35, 3
      %p286 = por %p284, %p285
      %p288 = scmp.ne.s32.totalorder %s273, %s287
      %p289 = scmp.eq.s32.totalorder %s35, 0
      %p290 = por %p288, %p289
      %s292 = sadd.s32 %s291, 1
      %p295 = scmp.eq.s32.totalorder %s29, 3
      %p296 = scmp.ne.s32.totalorder %s291, %s293
      %p297 = scmp.eq.s32.totalorder %s29, 0
      %p298 = por %p296, %p297
      %p299 = scmp.ne.s32.totalorder %s291, %s293
      %p300 = scmp.eq.s32.totalorder %s34, 3
      %p301 = por %p299, %p300
      %p302 = scmp.ne.s32.totalorder %s293, %s294
      %p303 = scmp.eq.s32.totalorder %s34, 0
      %p304 = por %p302, %p303
      %p305 = scmp.ne.s32.totalorder %s293, %s294
      %p306 = scmp.eq.s32.totalorder %s35, 3
      %p307 = por %p305, %p306
      %p309 = scmp.ne.s32.totalorder %s294, %s308
      %p310 = scmp.eq.s32.totalorder %s35, 0
      %p311 = por %p309, %p310
      %s313 = sadd.s32 %s312, 1
      %p316 = scmp.eq.s32.totalorder %s29, 3
      %p317 = scmp.ne.s32.totalorder %s312, %s314
      %p318 = scmp.eq.s32.totalorder %s29, 0
      %p319 = por %p317, %p318
      %p320 = scmp.ne.s32.totalorder %s312, %s314
      %p321 = scmp.eq.s32.totalorder %s34, 3
      %p322 = por %p320, %p321
      %p323 = scmp.ne.s32.totalorder %s314, %s315
      %p324 = scmp.eq.s32.totalorder %s34, 0
      %p325 = por %p323, %p324
      %p326 = scmp.ne.s32.totalorder %s314, %s315
      %p327 = scmp.eq.s32.totalorder %s35, 3
      %p328 = por %p326, %p327
      %p330 = scmp.ne.s32.totalorder %s315, %s329
      %p331 = scmp.eq.s32.totalorder %s35, 0
      %p332 = por %p330, %p331
      %s333 = ssub.s32 %s36, %s48
      %s334 = ssub.s32 %s37, %s44
      %s335 = sor.u32 %s333, %s334
      %p336 = scmp.eq.s32.totalorder %s335, 0
      %s338 = sadd.s32 %s337, 1
      %s339 = scalar_select %p336, %s337, %s338
      %p342 = pneg %p336
      %p343 = scmp.eq.s32.totalorder %s29, 3
      %p344 = por %p342, %p343
      %p345 = scmp.ne.s32.totalorder %s337, %s340
      %p346 = scmp.eq.s32.totalorder %s29, 0
      %p347 = por %p345, %p346
      %p348 = scmp.ne.s32.totalorder %s337, %s340
      %p349 = scmp.eq.s32.totalorder %s34, 3
      %p350 = por %p348, %p349
      %p351 = scmp.ne.s32.totalorder %s340, %s341
      %p352 = scmp.eq.s32.totalorder %s34, 0
      %p353 = por %p351, %p352
      %p354 = scmp.ne.s32.totalorder %s340, %s341
      %p355 = scmp.eq.s32.totalorder %s35, 3
      %p356 = por %p354, %p355
      %p358 = scmp.ne.s32.totalorder %s341, %s357
      %p359 = scmp.eq.s32.totalorder %s35, 0
      %p360 = por %p358, %p359
      %p361 = scmp.le.s32.totalorder 1, %s29
      %p362 = scmp.lt.s32.totalorder %s29, 5
      %p363 = pnand %p361, %p362
      %p364 = pneg %p363
      // Predicated region
      $region9: #{unet_up_conv2d_ct.2} parent=5 // pred_check
        _
      $region10: #{unet_up_conv2d_ct.2} parent=5 // pred_check_branch
        %366 = sbr.rel (%p363) target = $region12
      $region11: #{unet_up_conv2d_ct.2} parent=5 // pred_region
        %s367 = ssub.s32 %s29, 1
        // Predicated region
        $region13: #{unet_up_conv2d_ct.2} parent=11 // pred_check
          %p368 = pneg %p262
        $region14: #{unet_up_conv2d_ct.2} parent=11 // pred_check_branch
          %370 = sbr.rel (%p368) target = $region16
        $region15: #{unet_up_conv2d_ct.2} parent=11 // pred_region
          %s372 = ssub.s32 9216, 9216
          %373 = vsyncadd [#allocation12], %s372
          %s374 = sshll.u32 [#allocation13], 4
          %s375 = int_to_ptr.vmem [resolvable:$true] %s374
          %380 = dma.hbm_to_vmem [thread:$0]  %s6, 9216, %s375, [#allocation12], 64, 64, 4
        $region16: #{unet_up_conv2d_ct.2} parent=11 // pred_fallthru
          _
        // Predicated region
        $region17: #{unet_up_conv2d_ct.2} parent=11 // pred_check
          %p381 = pneg %p283
        $region18: #{unet_up_conv2d_ct.2} parent=11 // pred_check_branch
          %383 = sbr.rel (%p381) target = $region20
        $region19: #{unet_up_conv2d_ct.2} parent=11 // pred_region
          %s385 = ssub.s32 9216, 9216
          %386 = vsyncadd [#allocation15], %s385
          %s387 = sshll.u32 [#allocation14], 4
          %s388 = int_to_ptr.vmem [resolvable:$true] %s387
          %393 = dma.hbm_to_vmem [thread:$0]  %s7, 9216, %s388, [#allocation15], 64, 64, 4
        $region20: #{unet_up_conv2d_ct.2} parent=11 // pred_fallthru
          _
        // Predicated region
        $region21: #{unet_up_conv2d_ct.2} parent=11 // pred_check
          %p394 = pneg %p304
        $region22: #{unet_up_conv2d_ct.2} parent=11 // pred_check_branch
          %396 = sbr.rel (%p394) target = $region24
        $region23: #{unet_up_conv2d_ct.2} parent=11 // pred_region
          _
        $region24: #{unet_up_conv2d_ct.2} parent=11 // pred_fallthru
          _
        // Predicated region
        $region25: #{unet_up_conv2d_ct.2} parent=11 // pred_check
          %p397 = pneg %p325
        $region26: #{unet_up_conv2d_ct.2} parent=11 // pred_check_branch
          %399 = sbr.rel (%p397) target = $region28
        $region27: #{unet_up_conv2d_ct.2} parent=11 // pred_region
          _
        $region28: #{unet_up_conv2d_ct.2} parent=11 // pred_fallthru
          _
      $region12: #{unet_up_conv2d_ct.2} parent=5 // pred_fallthru
        _
      %p400 = scmp.lt.s32.totalorder %s29, 4
      // Predicated region
      $region29: #{unet_up_conv2d_ct.2} parent=5 // pred_check
        %p401 = pneg %p400
      $region30: #{unet_up_conv2d_ct.2} parent=5 // pred_check_branch
        %403 = sbr.rel (%p401) target = $region32
      $region31: #{unet_up_conv2d_ct.2} parent=5 // pred_region
        // Predicated region
        $region33: #{unet_up_conv2d_ct.2} parent=31 // pred_check
          %p404 = pneg %p63
        $region34: #{unet_up_conv2d_ct.2} parent=31 // pred_check_branch
          %406 = sbr.rel (%p404) target = $region36
        $region35: #{unet_up_conv2d_ct.2} parent=31 // pred_region
          %s407 = sand.u32 %s53, 1
          %s408 = scalar_lea.sflag [#allocation4], %s407
          %s409 = sand.u32 %s53, 1
          %s410 = smul.addr %s409, 128
          %s411 = scalar_lea.vmem [#allocation3], %s410
          %s412 = smul.u32 8, %s37
          %s414 = ssub.s32 2048, 2048
          %415 = vsyncadd %s408, %s414
          %s416 = smul.addr %s412, 2
          %s417 = smul.addr %s36, 32
          %s418 = sadd.s32 %s416, %s417
          %s419 = smul.addr %s418, 128
          %s420 = scalar_lea.hbm %s0, %s419
          %s421 = sshll.u32 %s411, 4
          %s422 = int_to_ptr.vmem [resolvable:$true] %s421
          %427 = dma.hbm_to_vmem [thread:$0]  %s420, 2048, %s422, %s408, 128, 128, 8
        $region36: #{unet_up_conv2d_ct.2} parent=31 // pred_fallthru
          _
        // Predicated region
        $region37: #{unet_up_conv2d_ct.2} parent=31 // pred_check
          %p428 = pneg %p99
        $region38: #{unet_up_conv2d_ct.2} parent=31 // pred_check_branch
          %430 = sbr.rel (%p428) target = $region40
        $region39: #{unet_up_conv2d_ct.2} parent=31 // pred_region
          %s431 = sand.u32 %s29, 1
          %s432 = scalar_lea.sflag [#allocation6], %s431
          %s433 = sand.u32 %s89, 1
          %s434 = smul.addr %s433, 16
          %s435 = scalar_lea.vmem [#allocation5], %s434
          %s436 = smul.u32 %s37, 8
          %s437 = ssub.s32 %s436, 1
          %p438 = scmp.gt.s32.totalorder %s437, 0
          %s439 = scalar_select %p438, %s437, 0
          %s441 = ssub.s32 256, 256
          %442 = vsyncadd %s432, %s441
          %s443 = smul.addr %s439, 2
          %s444 = smul.addr %s36, 32
          %s445 = sadd.s32 %s443, %s444
          %s446 = smul.addr %s445, 128
          %s447 = scalar_lea.hbm %s1, %s446
          %s448 = sshll.u32 %s435, 4
          %s449 = int_to_ptr.vmem [resolvable:$true] %s448
          %454 = dma.hbm_to_vmem [thread:$0]  %s447, 256, %s449, %s432, 128, 128, 8
        $region40: #{unet_up_conv2d_ct.2} parent=31 // pred_fallthru
          _
        // Predicated region
        $region41: #{unet_up_conv2d_ct.2} parent=31 // pred_check
          %p455 = pneg %p135
        $region42: #{unet_up_conv2d_ct.2} parent=31 // pred_check_branch
          %457 = sbr.rel (%p455) target = $region44
        $region43: #{unet_up_conv2d_ct.2} parent=31 // pred_region
          %s458 = sand.u32 %s29, 1
          %s459 = scalar_lea.sflag [#allocation6], %s458
          %s460 = sand.u32 %s125, 1
          %s461 = smul.addr %s460, 16
          %s462 = scalar_lea.vmem [#allocation7], %s461
          %s463 = smul.u32 %s37, 8
          %s464 = sadd.s32 %s463, 8
          %p465 = scmp.lt.s32.totalorder %s464, 15
          %s466 = scalar_select %p465, %s464, 15
          %s468 = ssub.s32 256, 256
          %469 = vsyncadd %s459, %s468
          %s470 = smul.addr %s466, 2
          %s471 = smul.addr %s36, 32
          %s472 = sadd.s32 %s470, %s471
          %s473 = smul.addr %s472, 128
          %s474 = scalar_lea.hbm %s2, %s473
          %s475 = sshll.u32 %s462, 4
          %s476 = int_to_ptr.vmem [resolvable:$true] %s475
          %481 = dma.hbm_to_vmem [thread:$0]  %s474, 256, %s476, %s459, 128, 128, 8
        $region44: #{unet_up_conv2d_ct.2} parent=31 // pred_fallthru
          _
        // Predicated region
        $region45: #{unet_up_conv2d_ct.2} parent=31 // pred_check
          %p482 = pneg %p163
        $region46: #{unet_up_conv2d_ct.2} parent=31 // pred_check_branch
          %484 = sbr.rel (%p482) target = $region48
        $region47: #{unet_up_conv2d_ct.2} parent=31 // pred_region
          %s485 = sand.u32 %s29, 1
          %s486 = scalar_lea.sflag [#allocation9], %s485
          %s487 = sand.u32 %s153, 1
          %s488 = smul.addr %s487, 32
          %s489 = scalar_lea.vmem [#allocation8], %s488
          %s490 = smul.u32 4, %s37
          %s492 = ssub.s32 512, 512
          %493 = vsyncadd %s486, %s492
          %s494 = smul.addr %s36, 8
          %s495 = sadd.s32 %s490, %s494
          %s496 = smul.addr %s495, 128
          %s497 = scalar_lea.hbm %s3, %s496
          %s498 = sshll.u32 %s489, 4
          %s499 = int_to_ptr.vmem [resolvable:$true] %s498
          %504 = dma.hbm_to_vmem [thread:$0]  %s497, 512, %s499, %s486, 128, 128, 8
        $region48: #{unet_up_conv2d_ct.2} parent=31 // pred_fallthru
          _
        // Predicated region
        $region49: #{unet_up_conv2d_ct.2} parent=31 // pred_check
          %p505 = pneg %p199
        $region50: #{unet_up_conv2d_ct.2} parent=31 // pred_check_branch
          %507 = sbr.rel (%p505) target = $region52
        $region51: #{unet_up_conv2d_ct.2} parent=31 // pred_region
          %s508 = sand.u32 %s29, 1
          %s509 = scalar_lea.sflag [#allocation9], %s508
          %s510 = sand.u32 %s189, 1
          %s511 = smul.addr %s510, 8
          %s512 = scalar_lea.vmem [#allocation10], %s511
          %s513 = smul.u32 %s37, 4
          %s514 = ssub.s32 %s513, 1
          %p515 = scmp.gt.s32.totalorder %s514, 0
          %s516 = scalar_select %p515, %s514, 0
          %s518 = ssub.s32 128, 128
          %519 = vsyncadd %s509, %s518
          %s520 = smul.addr %s36, 8
          %s521 = sadd.s32 %s516, %s520
          %s522 = smul.addr %s521, 128
          %s523 = scalar_lea.hbm %s4, %s522
          %s525 = sshll.u32 %s512, 4
          %s526 = int_to_ptr.vmem [resolvable:$true] %s525
          %528 = dma.hbm_to_vmem [thread:$0]  %s523, 128, %s526, %s509
        $region52: #{unet_up_conv2d_ct.2} parent=31 // pred_fallthru
          _
        // Predicated region
        $region53: #{unet_up_conv2d_ct.2} parent=31 // pred_check
          %p529 = pneg %p235
        $region54: #{unet_up_conv2d_ct.2} parent=31 // pred_check_branch
          %531 = sbr.rel (%p529) target = $region56
        $region55: #{unet_up_conv2d_ct.2} parent=31 // pred_region
          %s532 = sand.u32 %s29, 1
          %s533 = scalar_lea.sflag [#allocation12], %s532
          %s534 = sand.u32 %s225, 1
          %s535 = smul.addr %s534, 8
          %s536 = scalar_lea.vmem [#allocation11], %s535
          %s537 = smul.u32 %s37, 4
          %s538 = sadd.s32 %s537, 4
          %p539 = scmp.lt.s32.totalorder %s538, 7
          %s540 = scalar_select %p539, %s538, 7
          %s542 = ssub.s32 128, 128
          %543 = vsyncadd %s533, %s542
          %s544 = smul.addr %s36, 8
          %s545 = sadd.s32 %s540, %s544
          %s546 = smul.addr %s545, 128
          %s547 = scalar_lea.hbm %s5, %s546
          %s549 = sshll.u32 %s536, 4
          %s550 = int_to_ptr.vmem [resolvable:$true] %s549
          %552 = dma.hbm_to_vmem [thread:$0]  %s547, 128, %s550, %s533
        $region56: #{unet_up_conv2d_ct.2} parent=31 // pred_fallthru
          _
      $region32: #{unet_up_conv2d_ct.2} parent=5 // pred_fallthru
        _
      %p553 = scmp.le.s32.totalorder 1, %s29
      %p554 = scmp.lt.s32.totalorder %s29, 5
      %p555 = pnand %p553, %p554
      %p556 = pneg %p555
      // Predicated region
      $region57: #{unet_up_conv2d_ct.2} parent=5 // pred_check
        _
      $region58: #{unet_up_conv2d_ct.2} parent=5 // pred_check_branch
        %558 = sbr.rel (%p555) target = $region60
      $region59: #{unet_up_conv2d_ct.2} parent=5 // pred_region
        %s559 = ssub.s32 %s29, 1
        %s560 = sand.u32 %s56, 1
        %s561 = scalar_lea.sflag [#allocation4], %s560
        %s562 = sand.u32 %s56, 1
        %s563 = smul.addr %s562, 128
        %s564 = scalar_lea.vmem [#allocation3], %s563
        // Predicated region
        $region61: #{unet_up_conv2d_ct.2} parent=59 // pred_check
          %p565 = pneg %p69
        $region62: #{unet_up_conv2d_ct.2} parent=59 // pred_check_branch
          %567 = sbr.rel (%p565) target = $region64
        $region63: #{unet_up_conv2d_ct.2} parent=59 // pred_region
          %568 = dma.done %s561, 2048
        $region64: #{unet_up_conv2d_ct.2} parent=59 // pred_fallthru
          _
        %s569 = sand.u32 %s34, 1
        %s570 = scalar_lea.sflag [#allocation6], %s569
        %s571 = sand.u32 %s92, 1
        %s572 = smul.addr %s571, 16
        %s573 = scalar_lea.vmem [#allocation5], %s572
        // Predicated region
        $region65: #{unet_up_conv2d_ct.2} parent=59 // pred_check
          %p574 = pneg %p105
        $region66: #{unet_up_conv2d_ct.2} parent=59 // pred_check_branch
          %576 = sbr.rel (%p574) target = $region68
        $region67: #{unet_up_conv2d_ct.2} parent=59 // pred_region
          %577 = dma.done %s570, 256
        $region68: #{unet_up_conv2d_ct.2} parent=59 // pred_fallthru
          _
        %s578 = sand.u32 %s34, 1
        %s579 = scalar_lea.sflag [#allocation6], %s578
        %s580 = sand.u32 %s128, 1
        %s581 = smul.addr %s580, 16
        %s582 = scalar_lea.vmem [#allocation7], %s581
        // Predicated region
        $region69: #{unet_up_conv2d_ct.2} parent=59 // pred_check
          %p583 = pneg %p141
        $region70: #{unet_up_conv2d_ct.2} parent=59 // pred_check_branch
          %585 = sbr.rel (%p583) target = $region72
        $region71: #{unet_up_conv2d_ct.2} parent=59 // pred_region
          %586 = dma.done %s579, 256
        $region72: #{unet_up_conv2d_ct.2} parent=59 // pred_fallthru
          _
        %s587 = sand.u32 %s34, 1
        %s588 = scalar_lea.sflag [#allocation9], %s587
        %s589 = sand.u32 %s156, 1
        %s590 = smul.addr %s589, 32
        %s591 = scalar_lea.vmem [#allocation8], %s590
        // Predicated region
        $region73: #{unet_up_conv2d_ct.2} parent=59 // pred_check
          %p592 = pneg %p169
        $region74: #{unet_up_conv2d_ct.2} parent=59 // pred_check_branch
          %594 = sbr.rel (%p592) target = $region76
        $region75: #{unet_up_conv2d_ct.2} parent=59 // pred_region
          %595 = dma.done %s588, 512
        $region76: #{unet_up_conv2d_ct.2} parent=59 // pred_fallthru
          _
        %s596 = sand.u32 %s34, 1
        %s597 = scalar_lea.sflag [#allocation9], %s596
        %s598 = sand.u32 %s192, 1
        %s599 = smul.addr %s598, 8
        %s600 = scalar_lea.vmem [#allocation10], %s599
        // Predicated region
        $region77: #{unet_up_conv2d_ct.2} parent=59 // pred_check
          %p601 = pneg %p205
        $region78: #{unet_up_conv2d_ct.2} parent=59 // pred_check_branch
          %603 = sbr.rel (%p601) target = $region80
        $region79: #{unet_up_conv2d_ct.2} parent=59 // pred_region
          %604 = dma.done %s597, 128
        $region80: #{unet_up_conv2d_ct.2} parent=59 // pred_fallthru
          _
        %s605 = sand.u32 %s34, 1
        %s606 = scalar_lea.sflag [#allocation12], %s605
        %s607 = sand.u32 %s228, 1
        %s608 = smul.addr %s607, 8
        %s609 = scalar_lea.vmem [#allocation11], %s608
        // Predicated region
        $region81: #{unet_up_conv2d_ct.2} parent=59 // pred_check
          %p610 = pneg %p241
        $region82: #{unet_up_conv2d_ct.2} parent=59 // pred_check_branch
          %612 = sbr.rel (%p610) target = $region84
        $region83: #{unet_up_conv2d_ct.2} parent=59 // pred_region
          %613 = dma.done %s606, 128
        $region84: #{unet_up_conv2d_ct.2} parent=59 // pred_fallthru
          _
        // Predicated region
        $region85: #{unet_up_conv2d_ct.2} parent=59 // pred_check
          %p614 = pneg %p262
        $region86: #{unet_up_conv2d_ct.2} parent=59 // pred_check_branch
          %616 = sbr.rel (%p614) target = $region88
        $region87: #{unet_up_conv2d_ct.2} parent=59 // pred_region
          %617 = dma.done [#allocation12], 9216
        $region88: #{unet_up_conv2d_ct.2} parent=59 // pred_fallthru
          _
        // Predicated region
        $region89: #{unet_up_conv2d_ct.2} parent=59 // pred_check
          %p618 = pneg %p283
        $region90: #{unet_up_conv2d_ct.2} parent=59 // pred_check_branch
          %620 = sbr.rel (%p618) target = $region92
        $region91: #{unet_up_conv2d_ct.2} parent=59 // pred_region
          %621 = dma.done [#allocation15], 9216
        $region92: #{unet_up_conv2d_ct.2} parent=59 // pred_fallthru
          _
        %s622 = sand.u32 %s56, 1
        %s623 = scalar_lea.sflag [#allocation4], %s622
        %s624 = sand.u32 %s56, 1
        %s625 = smul.addr %s624, 128
        %s626 = scalar_lea.vmem [#allocation3], %s625
        %p627 = pneg %p69
        %p628 = pneg %p66
        %s629 = sand.u32 %s34, 1
        %s630 = scalar_lea.sflag [#allocation6], %s629
        %s631 = sand.u32 %s92, 1
        %s632 = smul.addr %s631, 16
        %s633 = scalar_lea.vmem [#allocation5], %s632
        %p634 = pneg %p105
        %p635 = pneg %p102
        %s636 = sand.u32 %s34, 1
        %s637 = scalar_lea.sflag [#allocation6], %s636
        %s638 = sand.u32 %s128, 1
        %s639 = smul.addr %s638, 16
        %s640 = scalar_lea.vmem [#allocation7], %s639
        %p641 = pneg %p141
        %p642 = pneg %p138
        %s643 = sand.u32 %s34, 1
        %s644 = scalar_lea.sflag [#allocation9], %s643
        %s645 = sand.u32 %s156, 1
        %s646 = smul.addr %s645, 32
        %s647 = scalar_lea.vmem [#allocation8], %s646
        %p648 = pneg %p169
        %p649 = pneg %p166
        %s650 = sand.u32 %s34, 1
        %s651 = scalar_lea.sflag [#allocation9], %s650
        %s652 = sand.u32 %s192, 1
        %s653 = smul.addr %s652, 8
        %s654 = scalar_lea.vmem [#allocation10], %s653
        %p655 = pneg %p205
        %p656 = pneg %p202
        %s657 = sand.u32 %s34, 1
        %s658 = scalar_lea.sflag [#allocation12], %s657
        %s659 = sand.u32 %s228, 1
        %s660 = smul.addr %s659, 8
        %s661 = scalar_lea.vmem [#allocation11], %s660
        %p662 = pneg %p241
        %p663 = pneg %p238
        %p664 = pneg %p262
        %p665 = pneg %p259
        %p666 = pneg %p283
        %p667 = pneg %p280
        %p668 = pneg %p304
        %p669 = pneg %p301
        %p670 = pneg %p325
        %p671 = pneg %p322
        %p672 = pneg %p353
        %p673 = pneg %p350
        %s674 = smul.u32 8, %s39
        %p675 = scmp.lt.s32.totalorder %s38, 1
        %s676 = scalar_select %p675, %s38, 1
        %p677 = scmp.lt.s32.totalorder %s674, 15
        %s678 = scalar_select %p677, %s674, 15
        %s679 = smul.addr %s678, 2
        %s680 = smul.addr %s676, 32
        %s681 = sadd.s32 %s679, %s680
        %s682 = smul.addr %s681, 4
        %s683 = scalar_lea.vmem %s10, %s682
        %s684 = smul.u32 8, %s39
        %s685 = smul.u32 %s39, 8
        %s686 = ssub.s32 %s685, 1
        %p687 = scmp.gt.s32.totalorder %s686, 0
        %s688 = scalar_select %p687, %s686, 0
        %s689 = smul.u32 %s39, 8
        %s690 = sadd.s32 %s689, 8
        %p691 = scmp.lt.s32.totalorder %s690, 15
        %s692 = scalar_select %p691, %s690, 15
        %s693 = smul.u32 4, %s39
        %s694 = smul.u32 %s39, 4
        %s695 = ssub.s32 %s694, 1
        %p696 = scmp.gt.s32.totalorder %s695, 0
        %s697 = scalar_select %p696, %s695, 0
        %s698 = smul.u32 %s39, 4
        %s699 = sadd.s32 %s698, 4
        %p700 = scmp.lt.s32.totalorder %s699, 7
        %s701 = scalar_select %p700, %s699, 7
        %s702 = smul.u32 8, %s39
        %p703 = scmp.lt.s32.totalorder %s38, 1
        %s704 = scalar_select %p703, %s38, 1
        %p705 = scmp.lt.s32.totalorder %s702, 15
        %s706 = scalar_select %p705, %s702, 15
        %s707 = smul.addr %s706, 2
        %s708 = smul.addr %s704, 32
        %s709 = sadd.s32 %s707, %s708
        %s710 = smul.addr %s709, 4
        %s711 = scalar_lea.vmem %s10, %s710
        %s712 = smul.u32 8, %s39
        %v714 = vld [vmem:[%s573] sm:$0xff]
        %v715 = vld [vmem:[%s573 + $0x8] sm:$0xff]
        %v716 = vld [vmem:[%s564] sm:$0xff]
        %v717 = vld [vmem:[%s564 + $0x8] sm:$0xff]
        %v718 = vld [vmem:[%s564 + $0x10] sm:$0xff]
        %v719 = vld [vmem:[%s564 + $0x18] sm:$0xff]
        %v720 = vld [vmem:[%s564 + $0x20] sm:$0xff]
        %v721 = vld [vmem:[%s564 + $0x28] sm:$0xff]
        %v722 = vld [vmem:[%s564 + $0x30] sm:$0xff]
        %v723 = vld [vmem:[%s564 + $0x38] sm:$0xff]
        %v724 = vld [vmem:[%s564 + $0x40] sm:$0xff]
        %v725 = vld [vmem:[%s564 + $0x48] sm:$0xff]
        %v726 = vld [vmem:[%s564 + $0x50] sm:$0xff]
        %v727 = vld [vmem:[%s564 + $0x58] sm:$0xff]
        %v728 = vld [vmem:[%s564 + $0x60] sm:$0xff]
        %v729 = vld [vmem:[%s564 + $0x68] sm:$0xff]
        %v730 = vld [vmem:[%s564 + $0x70] sm:$0xff]
        %v731 = vld [vmem:[%s564 + $0x78] sm:$0xff]
        %v732 = vld [vmem:[%s582] sm:$0xff]
        %v733 = vld [vmem:[%s582 + $0x8] sm:$0xff]
        %p734 = scmp.gt.s32.totalorder %s39, 0
        %s735 = scalar_select %p734, 1, 0
        %v736 = vstv %s735
        %vm737 = vcmp.eq.s32.totalorder %v736, 1
        %p738 = scmp.lt.s32.totalorder %s39, 1
        %s739 = scalar_select %p738, 1, 0
        %v740 = vstv %s739
        %vm741 = vcmp.eq.s32.totalorder %v740, 1
        %v742 = vsel %vm737, 1, 0
        %v743 = vsel %vm741, 1, 0
        %vm744 = vcmp.eq.s32.totalorder %v742, 1
        %vm745 = vcmp.eq.s32.totalorder %v743, 1
        %v746 = vsel %vm744, %v714, 0.0
        %v747 = vsel %vm744, %v715, 0.0
        %v748 = vsel 1, %v716, 0.0
        %v749 = vsel 1, %v717, 0.0
        %v750 = vsel 1, %v718, 0.0
        %v751 = vsel 1, %v719, 0.0
        %v752 = vsel 1, %v720, 0.0
        %v753 = vsel 1, %v721, 0.0
        %v754 = vsel 1, %v722, 0.0
        %v755 = vsel 1, %v723, 0.0
        %v756 = vsel 1, %v724, 0.0
        %v757 = vsel 1, %v725, 0.0
        %v758 = vsel 1, %v726, 0.0
        %v759 = vsel 1, %v727, 0.0
        %v760 = vsel 1, %v728, 0.0
        %v761 = vsel 1, %v729, 0.0
        %v762 = vsel 1, %v730, 0.0
        %v763 = vsel 1, %v731, 0.0
        %v764 = vsel %vm745, %v732, 0.0
        %v765 = vsel %vm745, %v733, 0.0
        %v766 = vld [vmem:[%s600] sm:$0xff]
        %v767 = vld [vmem:[%s591] sm:$0xff]
        %v768 = vld [vmem:[%s591 + $0x8] sm:$0xff]
        %v769 = vld [vmem:[%s591 + $0x10] sm:$0xff]
        %v770 = vld [vmem:[%s591 + $0x18] sm:$0xff]
        %v771 = vld [vmem:[%s609] sm:$0xff]
        %v772 = vmul.f32 %v766, 0.25
        %v773 = vmul.f32 %v767, 0.25
        %v774 = vmul.f32 %v768, 0.25
        %v775 = vmul.f32 %v769, 0.25
        %v776 = vmul.f32 %v770, 0.25
        %v777 = vmul.f32 %v766, 0.75
        %v778 = vmul.f32 %v767, 0.75
        %v779 = vmul.f32 %v768, 0.75
        %v780 = vmul.f32 %v769, 0.75
        %v781 = vmul.f32 %v770, 0.75
        %v782 = vmul.f32 %v771, 0.75
        %v783 = vadd.f32 %v772, %v778
        %v784 = vadd.f32 %v773, %v779
        %v785 = vadd.f32 %v774, %v780
        %v786 = vadd.f32 %v775, %v781
        %v787 = vadd.f32 %v776, %v782
        %v788 = vmul.f32 %v771, 0.25
        %v789 = vadd.f32 %v777, %v773
        %v790 = vadd.f32 %v778, %v774
        %v791 = vadd.f32 %v779, %v775
        %v792 = vadd.f32 %v780, %v776
        %v793 = vadd.f32 %v781, %v788
        %v804 = vrot.slane %v789, 7
        %v805 = vrot.slane %v783, 7
        %v806 = vrot.slane %v790, 7
        %v807 = vrot.slane %v784, 7
        %v808 = vrot.slane %v791, 7
        %v809 = vrot.slane %v785, 7
        %v810 = vrot.slane %v792, 7
        %v811 = vrot.slane %v786, 7
        %v812 = vrot.slane %v793, 7
        %v813 = vrot.slane %v787, 7
        %vm824 = vcmask 1040384
        %v825 = vsel %vm824, %v789, %v804
        %v826 = vsel %vm824, %v783, %v805
        %v827 = vsel %vm824, %v790, %v806
        %v828 = vsel %vm824, %v784, %v807
        %v829 = vsel %vm824, %v791, %v808
        %v830 = vsel %vm824, %v785, %v809
        %v831 = vsel %vm824, %v792, %v810
        %v832 = vsel %vm824, %v786, %v811
        %v833 = vsel %vm824, %v793, %v812
        %v834 = vsel %vm824, %v787, %v813
        %v835 = vrot.slane %v789, 1
        %v836 = vrot.slane %v783, 1
        %v837 = vrot.slane %v790, 1
        %v838 = vrot.slane %v784, 1
        %v839 = vrot.slane %v791, 1
        %v840 = vrot.slane %v785, 1
        %v841 = vrot.slane %v792, 1
        %v842 = vrot.slane %v786, 1
        %v843 = vrot.slane %v793, 1
        %v844 = vrot.slane %v787, 1
        %vm855 = vcmask 1046528
        %v856 = vsel %vm855, %v835, %v789
        %v857 = vsel %vm855, %v836, %v783
        %v858 = vsel %vm855, %v837, %v790
        %v859 = vsel %vm855, %v838, %v784
        %v860 = vsel %vm855, %v839, %v791
        %v861 = vsel %vm855, %v840, %v785
        %v862 = vsel %vm855, %v841, %v792
        %v863 = vsel %vm855, %v842, %v786
        %v864 = vsel %vm855, %v843, %v793
        %v865 = vsel %vm855, %v844, %v787
        %v866 = vmul.f32 %v825, 0.25
        %v867 = vmul.f32 %v826, 0.25
        %v868 = vmul.f32 %v827, 0.25
        %v869 = vmul.f32 %v828, 0.25
        %v870 = vmul.f32 %v829, 0.25
        %v871 = vmul.f32 %v830, 0.25
        %v872 = vmul.f32 %v831, 0.25
        %v873 = vmul.f32 %v832, 0.25
        %v874 = vmul.f32 %v833, 0.25
        %v875 = vmul.f32 %v834, 0.25
        %v876 = vmul.f32 %v789, 0.75
        %v877 = vmul.f32 %v783, 0.75
        %v878 = vmul.f32 %v790, 0.75
        %v879 = vmul.f32 %v784, 0.75
        %v880 = vmul.f32 %v791, 0.75
        %v881 = vmul.f32 %v785, 0.75
        %v882 = vmul.f32 %v792, 0.75
        %v883 = vmul.f32 %v786, 0.75
        %v884 = vmul.f32 %v793, 0.75
        %v885 = vmul.f32 %v787, 0.75
        %v886 = vadd.f32 %v866, %v876
        %v887 = vadd.f32 %v867, %v877
        %v888 = vadd.f32 %v868, %v878
        %v889 = vadd.f32 %v869, %v879
        %v890 = vadd.f32 %v870, %v880
        %v891 = vadd.f32 %v871, %v881
        %v892 = vadd.f32 %v872, %v882
        %v893 = vadd.f32 %v873, %v883
        %v894 = vadd.f32 %v874, %v884
        %v895 = vadd.f32 %v875, %v885
        %v896 = vmul.f32 %v856, 0.25
        %v897 = vmul.f32 %v857, 0.25
        %v898 = vmul.f32 %v858, 0.25
        %v899 = vmul.f32 %v859, 0.25
        %v900 = vmul.f32 %v860, 0.25
        %v901 = vmul.f32 %v861, 0.25
        %v902 = vmul.f32 %v862, 0.25
        %v903 = vmul.f32 %v863, 0.25
        %v904 = vmul.f32 %v864, 0.25
        %v905 = vmul.f32 %v865, 0.25
        %v906 = vadd.f32 %v876, %v896
        %v907 = vadd.f32 %v877, %v897
        %v908 = vadd.f32 %v878, %v898
        %v909 = vadd.f32 %v879, %v899
        %v910 = vadd.f32 %v880, %v900
        %v911 = vadd.f32 %v881, %v901
        %v912 = vadd.f32 %v882, %v902
        %v913 = vadd.f32 %v883, %v903
        %v914 = vadd.f32 %v884, %v904
        %v915 = vadd.f32 %v885, %v905
        %v926 = vcombine.high %v886, %v886
        %v928 = vunpack.c.l.s4 1966171168
        %v929 = vunpack.c.0.s8 %v928
        %v930 = vlaneseq
        %v931 = vshrl.u32 %v930, 7
        %v932 = vsub.s32 %v929, %v931
        %v933 = vrot.slane %v886, %v932
        %v935 = vunpack.c.l.s4 1966171168
        %v936 = vunpack.c.0.s8 %v935
        %v937 = vlaneseq
        %v938 = vshrl.u32 %v937, 7
        %v939 = vsub.s32 %v936, %v938
        %v940 = vrot.slane %v926, %v939
        %v941 = vcombine.high %v933, %v933
        %v942 = vcombine.high %v940, %v940
        %v944 = vunpack.c.l.s4 1966171168
        %v945 = vunpack.c.0.s8 %v944
        %v946 = vlaneseq
        %v947 = vshrl.u32 %v946, 7
        %v948 = vsub.s32 %v945, %v947
        %v949 = vrot.slane %v933, %v948
        %v951 = vunpack.c.l.s4 1966171168
        %v952 = vunpack.c.0.s8 %v951
        %v953 = vlaneseq
        %v954 = vshrl.u32 %v953, 7
        %v955 = vsub.s32 %v952, %v954
        %v956 = vrot.slane %v940, %v955
        %v958 = vunpack.c.l.s4 1966171168
        %v959 = vunpack.c.0.s8 %v958
        %v960 = vlaneseq
        %v961 = vshrl.u32 %v960, 7
        %v962 = vsub.s32 %v959, %v961
        %v963 = vrot.slane %v941, %v962
        %v965 = vunpack.c.l.s4 1966171168
        %v966 = vunpack.c.0.s8 %v965
        %v967 = vlaneseq
        %v968 = vshrl.u32 %v967, 7
        %v969 = vsub.s32 %v966, %v968
        %v970 = vrot.slane %v942, %v969
        %v971 = vcombine.high %v949, %v949
        %v972 = vcombine.high %v956, %v956
        %v973 = vcombine.high %v963, %v963
        %v974 = vcombine.high %v970, %v970
        %v975 = vcombine.high %v887, %v887
        %v977 = vunpack.c.l.s4 1966171168
        %v978 = vunpack.c.0.s8 %v977
        %v979 = vlaneseq
        %v980 = vshrl.u32 %v979, 7
        %v981 = vsub.s32 %v978, %v980
        %v982 = vrot.slane %v887, %v981
        %v984 = vunpack.c.l.s4 1966171168
        %v985 = vunpack.c.0.s8 %v984
        %v986 = vlaneseq
        %v987 = vshrl.u32 %v986, 7
        %v988 = vsub.s32 %v985, %v987
        %v989 = vrot.slane %v975, %v988
        %v990 = vcombine.high %v982, %v982
        %v991 = vcombine.high %v989, %v989
        %v993 = vunpack.c.l.s4 1966171168
        %v994 = vunpack.c.0.s8 %v993
        %v995 = vlaneseq
        %v996 = vshrl.u32 %v995, 7
        %v997 = vsub.s32 %v994, %v996
        %v998 = vrot.slane %v982, %v997
        %v1000 = vunpack.c.l.s4 1966171168
        %v1001 = vunpack.c.0.s8 %v1000
        %v1002 = vlaneseq
        %v1003 = vshrl.u32 %v1002, 7
        %v1004 = vsub.s32 %v1001, %v1003
        %v1005 = vrot.slane %v989, %v1004
        %v1007 = vunpack.c.l.s4 1966171168
        %v1008 = vunpack.c.0.s8 %v1007
        %v1009 = vlaneseq
        %v1010 = vshrl.u32 %v1009, 7
        %v1011 = vsub.s32 %v1008, %v1010
        %v1012 = vrot.slane %v990, %v1011
        %v1014 = vunpack.c.l.s4 1966171168
        %v1015 = vunpack.c.0.s8 %v1014
        %v1016 = vlaneseq
        %v1017 = vshrl.u32 %v1016, 7
        %v1018 = vsub.s32 %v1015, %v1017
        %v1019 = vrot.slane %v991, %v1018
        %v1020 = vcombine.high %v998, %v998
        %v1021 = vcombine.high %v1005, %v1005
        %v1022 = vcombine.high %v1012, %v1012
        %v1023 = vcombine.high %v1019, %v1019
        %v1024 = vcombine.high %v888, %v888
        %v1026 = vunpack.c.l.s4 1966171168
        %v1027 = vunpack.c.0.s8 %v1026
        %v1028 = vlaneseq
        %v1029 = vshrl.u32 %v1028, 7
        %v1030 = vsub.s32 %v1027, %v1029
        %v1031 = vrot.slane %v888, %v1030
        %v1033 = vunpack.c.l.s4 1966171168
        %v1034 = vunpack.c.0.s8 %v1033
        %v1035 = vlaneseq
        %v1036 = vshrl.u32 %v1035, 7
        %v1037 = vsub.s32 %v1034, %v1036
        %v1038 = vrot.slane %v1024, %v1037
        %v1039 = vcombine.high %v1031, %v1031
        %v1040 = vcombine.high %v1038, %v1038
        %v1042 = vunpack.c.l.s4 1966171168
        %v1043 = vunpack.c.0.s8 %v1042
        %v1044 = vlaneseq
        %v1045 = vshrl.u32 %v1044, 7
        %v1046 = vsub.s32 %v1043, %v1045
        %v1047 = vrot.slane %v1031, %v1046
        %v1049 = vunpack.c.l.s4 1966171168
        %v1050 = vunpack.c.0.s8 %v1049
        %v1051 = vlaneseq
        %v1052 = vshrl.u32 %v1051, 7
        %v1053 = vsub.s32 %v1050, %v1052
        %v1054 = vrot.slane %v1038, %v1053
        %v1056 = vunpack.c.l.s4 1966171168
        %v1057 = vunpack.c.0.s8 %v1056
        %v1058 = vlaneseq
        %v1059 = vshrl.u32 %v1058, 7
        %v1060 = vsub.s32 %v1057, %v1059
        %v1061 = vrot.slane %v1039, %v1060
        %v1063 = vunpack.c.l.s4 1966171168
        %v1064 = vunpack.c.0.s8 %v1063
        %v1065 = vlaneseq
        %v1066 = vshrl.u32 %v1065, 7
        %v1067 = vsub.s32 %v1064, %v1066
        %v1068 = vrot.slane %v1040, %v1067
        %v1069 = vcombine.high %v1047, %v1047
        %v1070 = vcombine.high %v1054, %v1054
        %v1071 = vcombine.high %v1061, %v1061
        %v1072 = vcombine.high %v1068, %v1068
        %v1073 = vcombine.high %v889, %v889
        %v1075 = vunpack.c.l.s4 1966171168
        %v1076 = vunpack.c.0.s8 %v1075
        %v1077 = vlaneseq
        %v1078 = vshrl.u32 %v1077, 7
        %v1079 = vsub.s32 %v1076, %v1078
        %v1080 = vrot.slane %v889, %v1079
        %v1082 = vunpack.c.l.s4 1966171168
        %v1083 = vunpack.c.0.s8 %v1082
        %v1084 = vlaneseq
        %v1085 = vshrl.u32 %v1084, 7
        %v1086 = vsub.s32 %v1083, %v1085
        %v1087 = vrot.slane %v1073, %v1086
        %v1088 = vcombine.high %v1080, %v1080
        %v1089 = vcombine.high %v1087, %v1087
        %v1091 = vunpack.c.l.s4 1966171168
        %v1092 = vunpack.c.0.s8 %v1091
        %v1093 = vlaneseq
        %v1094 = vshrl.u32 %v1093, 7
        %v1095 = vsub.s32 %v1092, %v1094
        %v1096 = vrot.slane %v1080, %v1095
        %v1098 = vunpack.c.l.s4 1966171168
        %v1099 = vunpack.c.0.s8 %v1098
        %v1100 = vlaneseq
        %v1101 = vshrl.u32 %v1100, 7
        %v1102 = vsub.s32 %v1099, %v1101
        %v1103 = vrot.slane %v1087, %v1102
        %v1105 = vunpack.c.l.s4 1966171168
        %v1106 = vunpack.c.0.s8 %v1105
        %v1107 = vlaneseq
        %v1108 = vshrl.u32 %v1107, 7
        %v1109 = vsub.s32 %v1106, %v1108
        %v1110 = vrot.slane %v1088, %v1109
        %v1112 = vunpack.c.l.s4 1966171168
        %v1113 = vunpack.c.0.s8 %v1112
        %v1114 = vlaneseq
        %v1115 = vshrl.u32 %v1114, 7
        %v1116 = vsub.s32 %v1113, %v1115
        %v1117 = vrot.slane %v1089, %v1116
        %v1118 = vcombine.high %v1096, %v1096
        %v1119 = vcombine.high %v1103, %v1103
        %v1120 = vcombine.high %v1110, %v1110
        %v1121 = vcombine.high %v1117, %v1117
        %v1122 = vcombine.high %v890, %v890
        %v1124 = vunpack.c.l.s4 1966171168
        %v1125 = vunpack.c.0.s8 %v1124
        %v1126 = vlaneseq
        %v1127 = vshrl.u32 %v1126, 7
        %v1128 = vsub.s32 %v1125, %v1127
        %v1129 = vrot.slane %v890, %v1128
        %v1131 = vunpack.c.l.s4 1966171168
        %v1132 = vunpack.c.0.s8 %v1131
        %v1133 = vlaneseq
        %v1134 = vshrl.u32 %v1133, 7
        %v1135 = vsub.s32 %v1132, %v1134
        %v1136 = vrot.slane %v1122, %v1135
        %v1137 = vcombine.high %v1129, %v1129
        %v1138 = vcombine.high %v1136, %v1136
        %v1140 = vunpack.c.l.s4 1966171168
        %v1141 = vunpack.c.0.s8 %v1140
        %v1142 = vlaneseq
        %v1143 = vshrl.u32 %v1142, 7
        %v1144 = vsub.s32 %v1141, %v1143
        %v1145 = vrot.slane %v1129, %v1144
        %v1147 = vunpack.c.l.s4 1966171168
        %v1148 = vunpack.c.0.s8 %v1147
        %v1149 = vlaneseq
        %v1150 = vshrl.u32 %v1149, 7
        %v1151 = vsub.s32 %v1148, %v1150
        %v1152 = vrot.slane %v1136, %v1151
        %v1154 = vunpack.c.l.s4 1966171168
        %v1155 = vunpack.c.0.s8 %v1154
        %v1156 = vlaneseq
        %v1157 = vshrl.u32 %v1156, 7
        %v1158 = vsub.s32 %v1155, %v1157
        %v1159 = vrot.slane %v1137, %v1158
        %v1161 = vunpack.c.l.s4 1966171168
        %v1162 = vunpack.c.0.s8 %v1161
        %v1163 = vlaneseq
        %v1164 = vshrl.u32 %v1163, 7
        %v1165 = vsub.s32 %v1162, %v1164
        %v1166 = vrot.slane %v1138, %v1165
        %v1167 = vcombine.high %v1145, %v1145
        %v1168 = vcombine.high %v1152, %v1152
        %v1169 = vcombine.high %v1159, %v1159
        %v1170 = vcombine.high %v1166, %v1166
        %v1171 = vcombine.high %v891, %v891
        %v1173 = vunpack.c.l.s4 1966171168
        %v1174 = vunpack.c.0.s8 %v1173
        %v1175 = vlaneseq
        %v1176 = vshrl.u32 %v1175, 7
        %v1177 = vsub.s32 %v1174, %v1176
        %v1178 = vrot.slane %v891, %v1177
        %v1180 = vunpack.c.l.s4 1966171168
        %v1181 = vunpack.c.0.s8 %v1180
        %v1182 = vlaneseq
        %v1183 = vshrl.u32 %v1182, 7
        %v1184 = vsub.s32 %v1181, %v1183
        %v1185 = vrot.slane %v1171, %v1184
        %v1186 = vcombine.high %v1178, %v1178
        %v1187 = vcombine.high %v1185, %v1185
        %v1189 = vunpack.c.l.s4 1966171168
        %v1190 = vunpack.c.0.s8 %v1189
        %v1191 = vlaneseq
        %v1192 = vshrl.u32 %v1191, 7
        %v1193 = vsub.s32 %v1190, %v1192
        %v1194 = vrot.slane %v1178, %v1193
        %v1196 = vunpack.c.l.s4 1966171168
        %v1197 = vunpack.c.0.s8 %v1196
        %v1198 = vlaneseq
        %v1199 = vshrl.u32 %v1198, 7
        %v1200 = vsub.s32 %v1197, %v1199
        %v1201 = vrot.slane %v1185, %v1200
        %v1203 = vunpack.c.l.s4 1966171168
        %v1204 = vunpack.c.0.s8 %v1203
        %v1205 = vlaneseq
        %v1206 = vshrl.u32 %v1205, 7
        %v1207 = vsub.s32 %v1204, %v1206
        %v1208 = vrot.slane %v1186, %v1207
        %v1210 = vunpack.c.l.s4 1966171168
        %v1211 = vunpack.c.0.s8 %v1210
        %v1212 = vlaneseq
        %v1213 = vshrl.u32 %v1212, 7
        %v1214 = vsub.s32 %v1211, %v1213
        %v1215 = vrot.slane %v1187, %v1214
        %v1216 = vcombine.high %v1194, %v1194
        %v1217 = vcombine.high %v1201, %v1201
        %v1218 = vcombine.high %v1208, %v1208
        %v1219 = vcombine.high %v1215, %v1215
        %v1220 = vcombine.high %v892, %v892
        %v1222 = vunpack.c.l.s4 1966171168
        %v1223 = vunpack.c.0.s8 %v1222
        %v1224 = vlaneseq
        %v1225 = vshrl.u32 %v1224, 7
        %v1226 = vsub.s32 %v1223, %v1225
        %v1227 = vrot.slane %v892, %v1226
        %v1229 = vunpack.c.l.s4 1966171168
        %v1230 = vunpack.c.0.s8 %v1229
        %v1231 = vlaneseq
        %v1232 = vshrl.u32 %v1231, 7
        %v1233 = vsub.s32 %v1230, %v1232
        %v1234 = vrot.slane %v1220, %v1233
        %v1235 = vcombine.high %v1227, %v1227
        %v1236 = vcombine.high %v1234, %v1234
        %v1238 = vunpack.c.l.s4 1966171168
        %v1239 = vunpack.c.0.s8 %v1238
        %v1240 = vlaneseq
        %v1241 = vshrl.u32 %v1240, 7
        %v1242 = vsub.s32 %v1239, %v1241
        %v1243 = vrot.slane %v1227, %v1242
        %v1245 = vunpack.c.l.s4 1966171168
        %v1246 = vunpack.c.0.s8 %v1245
        %v1247 = vlaneseq
        %v1248 = vshrl.u32 %v1247, 7
        %v1249 = vsub.s32 %v1246, %v1248
        %v1250 = vrot.slane %v1234, %v1249
        %v1252 = vunpack.c.l.s4 1966171168
        %v1253 = vunpack.c.0.s8 %v1252
        %v1254 = vlaneseq
        %v1255 = vshrl.u32 %v1254, 7
        %v1256 = vsub.s32 %v1253, %v1255
        %v1257 = vrot.slane %v1235, %v1256
        %v1259 = vunpack.c.l.s4 1966171168
        %v1260 = vunpack.c.0.s8 %v1259
        %v1261 = vlaneseq
        %v1262 = vshrl.u32 %v1261, 7
        %v1263 = vsub.s32 %v1260, %v1262
        %v1264 = vrot.slane %v1236, %v1263
        %v1265 = vcombine.high %v1243, %v1243
        %v1266 = vcombine.high %v1250, %v1250
        %v1267 = vcombine.high %v1257, %v1257
        %v1268 = vcombine.high %v1264, %v1264
        %v1269 = vcombine.high %v893, %v893
        %v1271 = vunpack.c.l.s4 1966171168
        %v1272 = vunpack.c.0.s8 %v1271
        %v1273 = vlaneseq
        %v1274 = vshrl.u32 %v1273, 7
        %v1275 = vsub.s32 %v1272, %v1274
        %v1276 = vrot.slane %v893, %v1275
        %v1278 = vunpack.c.l.s4 1966171168
        %v1279 = vunpack.c.0.s8 %v1278
        %v1280 = vlaneseq
        %v1281 = vshrl.u32 %v1280, 7
        %v1282 = vsub.s32 %v1279, %v1281
        %v1283 = vrot.slane %v1269, %v1282
        %v1284 = vcombine.high %v1276, %v1276
        %v1285 = vcombine.high %v1283, %v1283
        %v1287 = vunpack.c.l.s4 1966171168
        %v1288 = vunpack.c.0.s8 %v1287
        %v1289 = vlaneseq
        %v1290 = vshrl.u32 %v1289, 7
        %v1291 = vsub.s32 %v1288, %v1290
        %v1292 = vrot.slane %v1276, %v1291
        %v1294 = vunpack.c.l.s4 1966171168
        %v1295 = vunpack.c.0.s8 %v1294
        %v1296 = vlaneseq
        %v1297 = vshrl.u32 %v1296, 7
        %v1298 = vsub.s32 %v1295, %v1297
        %v1299 = vrot.slane %v1283, %v1298
        %v1301 = vunpack.c.l.s4 1966171168
        %v1302 = vunpack.c.0.s8 %v1301
        %v1303 = vlaneseq
        %v1304 = vshrl.u32 %v1303, 7
        %v1305 = vsub.s32 %v1302, %v1304
        %v1306 = vrot.slane %v1284, %v1305
        %v1308 = vunpack.c.l.s4 1966171168
        %v1309 = vunpack.c.0.s8 %v1308
        %v1310 = vlaneseq
        %v1311 = vshrl.u32 %v1310, 7
        %v1312 = vsub.s32 %v1309, %v1311
        %v1313 = vrot.slane %v1285, %v1312
        %v1314 = vcombine.high %v1292, %v1292
        %v1315 = vcombine.high %v1299, %v1299
        %v1316 = vcombine.high %v1306, %v1306
        %v1317 = vcombine.high %v1313, %v1313
        %v1318 = vcombine.high %v894, %v894
        %v1320 = vunpack.c.l.s4 1966171168
        %v1321 = vunpack.c.0.s8 %v1320
        %v1322 = vlaneseq
        %v1323 = vshrl.u32 %v1322, 7
        %v1324 = vsub.s32 %v1321, %v1323
        %v1325 = vrot.slane %v894, %v1324
        %v1327 = vunpack.c.l.s4 1966171168
        %v1328 = vunpack.c.0.s8 %v1327
        %v1329 = vlaneseq
        %v1330 = vshrl.u32 %v1329, 7
        %v1331 = vsub.s32 %v1328, %v1330
        %v1332 = vrot.slane %v1318, %v1331
        %v1333 = vcombine.high %v1325, %v1325
        %v1334 = vcombine.high %v1332, %v1332
        %v1336 = vunpack.c.l.s4 1966171168
        %v1337 = vunpack.c.0.s8 %v1336
        %v1338 = vlaneseq
        %v1339 = vshrl.u32 %v1338, 7
        %v1340 = vsub.s32 %v1337, %v1339
        %v1341 = vrot.slane %v1325, %v1340
        %v1343 = vunpack.c.l.s4 1966171168
        %v1344 = vunpack.c.0.s8 %v1343
        %v1345 = vlaneseq
        %v1346 = vshrl.u32 %v1345, 7
        %v1347 = vsub.s32 %v1344, %v1346
        %v1348 = vrot.slane %v1332, %v1347
        %v1350 = vunpack.c.l.s4 1966171168
        %v1351 = vunpack.c.0.s8 %v1350
        %v1352 = vlaneseq
        %v1353 = vshrl.u32 %v1352, 7
        %v1354 = vsub.s32 %v1351, %v1353
        %v1355 = vrot.slane %v1333, %v1354
        %v1357 = vunpack.c.l.s4 1966171168
        %v1358 = vunpack.c.0.s8 %v1357
        %v1359 = vlaneseq
        %v1360 = vshrl.u32 %v1359, 7
        %v1361 = vsub.s32 %v1358, %v1360
        %v1362 = vrot.slane %v1334, %v1361
        %v1363 = vcombine.high %v1341, %v1341
        %v1364 = vcombine.high %v1348, %v1348
        %v1365 = vcombine.high %v1355, %v1355
        %v1366 = vcombine.high %v1362, %v1362
        %v1367 = vcombine.high %v895, %v895
        %v1369 = vunpack.c.l.s4 1966171168
        %v1370 = vunpack.c.0.s8 %v1369
        %v1371 = vlaneseq
        %v1372 = vshrl.u32 %v1371, 7
        %v1373 = vsub.s32 %v1370, %v1372
        %v1374 = vrot.slane %v895, %v1373
        %v1376 = vunpack.c.l.s4 1966171168
        %v1377 = vunpack.c.0.s8 %v1376
        %v1378 = vlaneseq
        %v1379 = vshrl.u32 %v1378, 7
        %v1380 = vsub.s32 %v1377, %v1379
        %v1381 = vrot.slane %v1367, %v1380
        %v1382 = vcombine.high %v1374, %v1374
        %v1383 = vcombine.high %v1381, %v1381
        %v1385 = vunpack.c.l.s4 1966171168
        %v1386 = vunpack.c.0.s8 %v1385
        %v1387 = vlaneseq
        %v1388 = vshrl.u32 %v1387, 7
        %v1389 = vsub.s32 %v1386, %v1388
        %v1390 = vrot.slane %v1374, %v1389
        %v1392 = vunpack.c.l.s4 1966171168
        %v1393 = vunpack.c.0.s8 %v1392
        %v1394 = vlaneseq
        %v1395 = vshrl.u32 %v1394, 7
        %v1396 = vsub.s32 %v1393, %v1395
        %v1397 = vrot.slane %v1381, %v1396
        %v1399 = vunpack.c.l.s4 1966171168
        %v1400 = vunpack.c.0.s8 %v1399
        %v1401 = vlaneseq
        %v1402 = vshrl.u32 %v1401, 7
        %v1403 = vsub.s32 %v1400, %v1402
        %v1404 = vrot.slane %v1382, %v1403
        %v1406 = vunpack.c.l.s4 1966171168
        %v1407 = vunpack.c.0.s8 %v1406
        %v1408 = vlaneseq
        %v1409 = vshrl.u32 %v1408, 7
        %v1410 = vsub.s32 %v1407, %v1409
        %v1411 = vrot.slane %v1383, %v1410
        %v1412 = vcombine.high %v1390, %v1390
        %v1413 = vcombine.high %v1397, %v1397
        %v1414 = vcombine.high %v1404, %v1404
        %v1415 = vcombine.high %v1411, %v1411
        %v1506 = vcombine.high %v906, %v906
        %v1508 = vunpack.c.l.s4 1966171168
        %v1509 = vunpack.c.0.s8 %v1508
        %v1510 = vlaneseq
        %v1511 = vshrl.u32 %v1510, 7
        %v1512 = vsub.s32 %v1509, %v1511
        %v1513 = vrot.slane %v906, %v1512
        %v1515 = vunpack.c.l.s4 1966171168
        %v1516 = vunpack.c.0.s8 %v1515
        %v1517 = vlaneseq
        %v1518 = vshrl.u32 %v1517, 7
        %v1519 = vsub.s32 %v1516, %v1518
        %v1520 = vrot.slane %v1506, %v1519
        %v1521 = vcombine.high %v1513, %v1513
        %v1522 = vcombine.high %v1520, %v1520
        %v1524 = vunpack.c.l.s4 1966171168
        %v1525 = vunpack.c.0.s8 %v1524
        %v1526 = vlaneseq
        %v1527 = vshrl.u32 %v1526, 7
        %v1528 = vsub.s32 %v1525, %v1527
        %v1529 = vrot.slane %v1513, %v1528
        %v1531 = vunpack.c.l.s4 1966171168
        %v1532 = vunpack.c.0.s8 %v1531
        %v1533 = vlaneseq
        %v1534 = vshrl.u32 %v1533, 7
        %v1535 = vsub.s32 %v1532, %v1534
        %v1536 = vrot.slane %v1520, %v1535
        %v1538 = vunpack.c.l.s4 1966171168
        %v1539 = vunpack.c.0.s8 %v1538
        %v1540 = vlaneseq
        %v1541 = vshrl.u32 %v1540, 7
        %v1542 = vsub.s32 %v1539, %v1541
        %v1543 = vrot.slane %v1521, %v1542
        %v1545 = vunpack.c.l.s4 1966171168
        %v1546 = vunpack.c.0.s8 %v1545
        %v1547 = vlaneseq
        %v1548 = vshrl.u32 %v1547, 7
        %v1549 = vsub.s32 %v1546, %v1548
        %v1550 = vrot.slane %v1522, %v1549
        %v1551 = vcombine.high %v1529, %v1529
        %v1552 = vcombine.high %v1536, %v1536
        %v1553 = vcombine.high %v1543, %v1543
        %v1554 = vcombine.high %v1550, %v1550
        %v1555 = vcombine.high %v907, %v907
        %v1557 = vunpack.c.l.s4 1966171168
        %v1558 = vunpack.c.0.s8 %v1557
        %v1559 = vlaneseq
        %v1560 = vshrl.u32 %v1559, 7
        %v1561 = vsub.s32 %v1558, %v1560
        %v1562 = vrot.slane %v907, %v1561
        %v1564 = vunpack.c.l.s4 1966171168
        %v1565 = vunpack.c.0.s8 %v1564
        %v1566 = vlaneseq
        %v1567 = vshrl.u32 %v1566, 7
        %v1568 = vsub.s32 %v1565, %v1567
        %v1569 = vrot.slane %v1555, %v1568
        %v1570 = vcombine.high %v1562, %v1562
        %v1571 = vcombine.high %v1569, %v1569
        %v1573 = vunpack.c.l.s4 1966171168
        %v1574 = vunpack.c.0.s8 %v1573
        %v1575 = vlaneseq
        %v1576 = vshrl.u32 %v1575, 7
        %v1577 = vsub.s32 %v1574, %v1576
        %v1578 = vrot.slane %v1562, %v1577
        %v1580 = vunpack.c.l.s4 1966171168
        %v1581 = vunpack.c.0.s8 %v1580
        %v1582 = vlaneseq
        %v1583 = vshrl.u32 %v1582, 7
        %v1584 = vsub.s32 %v1581, %v1583
        %v1585 = vrot.slane %v1569, %v1584
        %v1587 = vunpack.c.l.s4 1966171168
        %v1588 = vunpack.c.0.s8 %v1587
        %v1589 = vlaneseq
        %v1590 = vshrl.u32 %v1589, 7
        %v1591 = vsub.s32 %v1588, %v1590
        %v1592 = vrot.slane %v1570, %v1591
        %v1594 = vunpack.c.l.s4 1966171168
        %v1595 = vunpack.c.0.s8 %v1594
        %v1596 = vlaneseq
        %v1597 = vshrl.u32 %v1596, 7
        %v1598 = vsub.s32 %v1595, %v1597
        %v1599 = vrot.slane %v1571, %v1598
        %v1600 = vcombine.high %v1578, %v1578
        %v1601 = vcombine.high %v1585, %v1585
        %v1602 = vcombine.high %v1592, %v1592
        %v1603 = vcombine.high %v1599, %v1599
        %v1604 = vcombine.high %v908, %v908
        %v1606 = vunpack.c.l.s4 1966171168
        %v1607 = vunpack.c.0.s8 %v1606
        %v1608 = vlaneseq
        %v1609 = vshrl.u32 %v1608, 7
        %v1610 = vsub.s32 %v1607, %v1609
        %v1611 = vrot.slane %v908, %v1610
        %v1613 = vunpack.c.l.s4 1966171168
        %v1614 = vunpack.c.0.s8 %v1613
        %v1615 = vlaneseq
        %v1616 = vshrl.u32 %v1615, 7
        %v1617 = vsub.s32 %v1614, %v1616
        %v1618 = vrot.slane %v1604, %v1617
        %v1619 = vcombine.high %v1611, %v1611
        %v1620 = vcombine.high %v1618, %v1618
        %v1622 = vunpack.c.l.s4 1966171168
        %v1623 = vunpack.c.0.s8 %v1622
        %v1624 = vlaneseq
        %v1625 = vshrl.u32 %v1624, 7
        %v1626 = vsub.s32 %v1623, %v1625
        %v1627 = vrot.slane %v1611, %v1626
        %v1629 = vunpack.c.l.s4 1966171168
        %v1630 = vunpack.c.0.s8 %v1629
        %v1631 = vlaneseq
        %v1632 = vshrl.u32 %v1631, 7
        %v1633 = vsub.s32 %v1630, %v1632
        %v1634 = vrot.slane %v1618, %v1633
        %v1636 = vunpack.c.l.s4 1966171168
        %v1637 = vunpack.c.0.s8 %v1636
        %v1638 = vlaneseq
        %v1639 = vshrl.u32 %v1638, 7
        %v1640 = vsub.s32 %v1637, %v1639
        %v1641 = vrot.slane %v1619, %v1640
        %v1643 = vunpack.c.l.s4 1966171168
        %v1644 = vunpack.c.0.s8 %v1643
        %v1645 = vlaneseq
        %v1646 = vshrl.u32 %v1645, 7
        %v1647 = vsub.s32 %v1644, %v1646
        %v1648 = vrot.slane %v1620, %v1647
        %v1649 = vcombine.high %v1627, %v1627
        %v1650 = vcombine.high %v1634, %v1634
        %v1651 = vcombine.high %v1641, %v1641
        %v1652 = vcombine.high %v1648, %v1648
        %v1653 = vcombine.high %v909, %v909
        %v1655 = vunpack.c.l.s4 1966171168
        %v1656 = vunpack.c.0.s8 %v1655
        %v1657 = vlaneseq
        %v1658 = vshrl.u32 %v1657, 7
        %v1659 = vsub.s32 %v1656, %v1658
        %v1660 = vrot.slane %v909, %v1659
        %v1662 = vunpack.c.l.s4 1966171168
        %v1663 = vunpack.c.0.s8 %v1662
        %v1664 = vlaneseq
        %v1665 = vshrl.u32 %v1664, 7
        %v1666 = vsub.s32 %v1663, %v1665
        %v1667 = vrot.slane %v1653, %v1666
        %v1668 = vcombine.high %v1660, %v1660
        %v1669 = vcombine.high %v1667, %v1667
        %v1671 = vunpack.c.l.s4 1966171168
        %v1672 = vunpack.c.0.s8 %v1671
        %v1673 = vlaneseq
        %v1674 = vshrl.u32 %v1673, 7
        %v1675 = vsub.s32 %v1672, %v1674
        %v1676 = vrot.slane %v1660, %v1675
        %v1678 = vunpack.c.l.s4 1966171168
        %v1679 = vunpack.c.0.s8 %v1678
        %v1680 = vlaneseq
        %v1681 = vshrl.u32 %v1680, 7
        %v1682 = vsub.s32 %v1679, %v1681
        %v1683 = vrot.slane %v1667, %v1682
        %v1685 = vunpack.c.l.s4 1966171168
        %v1686 = vunpack.c.0.s8 %v1685
        %v1687 = vlaneseq
        %v1688 = vshrl.u32 %v1687, 7
        %v1689 = vsub.s32 %v1686, %v1688
        %v1690 = vrot.slane %v1668, %v1689
        %v1692 = vunpack.c.l.s4 1966171168
        %v1693 = vunpack.c.0.s8 %v1692
        %v1694 = vlaneseq
        %v1695 = vshrl.u32 %v1694, 7
        %v1696 = vsub.s32 %v1693, %v1695
        %v1697 = vrot.slane %v1669, %v1696
        %v1698 = vcombine.high %v1676, %v1676
        %v1699 = vcombine.high %v1683, %v1683
        %v1700 = vcombine.high %v1690, %v1690
        %v1701 = vcombine.high %v1697, %v1697
        %v1702 = vcombine.high %v910, %v910
        %v1704 = vunpack.c.l.s4 1966171168
        %v1705 = vunpack.c.0.s8 %v1704
        %v1706 = vlaneseq
        %v1707 = vshrl.u32 %v1706, 7
        %v1708 = vsub.s32 %v1705, %v1707
        %v1709 = vrot.slane %v910, %v1708
        %v1711 = vunpack.c.l.s4 1966171168
        %v1712 = vunpack.c.0.s8 %v1711
        %v1713 = vlaneseq
        %v1714 = vshrl.u32 %v1713, 7
        %v1715 = vsub.s32 %v1712, %v1714
        %v1716 = vrot.slane %v1702, %v1715
        %v1717 = vcombine.high %v1709, %v1709
        %v1718 = vcombine.high %v1716, %v1716
        %v1720 = vunpack.c.l.s4 1966171168
        %v1721 = vunpack.c.0.s8 %v1720
        %v1722 = vlaneseq
        %v1723 = vshrl.u32 %v1722, 7
        %v1724 = vsub.s32 %v1721, %v1723
        %v1725 = vrot.slane %v1709, %v1724
        %v1727 = vunpack.c.l.s4 1966171168
        %v1728 = vunpack.c.0.s8 %v1727
        %v1729 = vlaneseq
        %v1730 = vshrl.u32 %v1729, 7
        %v1731 = vsub.s32 %v1728, %v1730
        %v1732 = vrot.slane %v1716, %v1731
        %v1734 = vunpack.c.l.s4 1966171168
        %v1735 = vunpack.c.0.s8 %v1734
        %v1736 = vlaneseq
        %v1737 = vshrl.u32 %v1736, 7
        %v1738 = vsub.s32 %v1735, %v1737
        %v1739 = vrot.slane %v1717, %v1738
        %v1741 = vunpack.c.l.s4 1966171168
        %v1742 = vunpack.c.0.s8 %v1741
        %v1743 = vlaneseq
        %v1744 = vshrl.u32 %v1743, 7
        %v1745 = vsub.s32 %v1742, %v1744
        %v1746 = vrot.slane %v1718, %v1745
        %v1747 = vcombine.high %v1725, %v1725
        %v1748 = vcombine.high %v1732, %v1732
        %v1749 = vcombine.high %v1739, %v1739
        %v1750 = vcombine.high %v1746, %v1746
        %v1751 = vcombine.high %v911, %v911
        %v1753 = vunpack.c.l.s4 1966171168
        %v1754 = vunpack.c.0.s8 %v1753
        %v1755 = vlaneseq
        %v1756 = vshrl.u32 %v1755, 7
        %v1757 = vsub.s32 %v1754, %v1756
        %v1758 = vrot.slane %v911, %v1757
        %v1760 = vunpack.c.l.s4 1966171168
        %v1761 = vunpack.c.0.s8 %v1760
        %v1762 = vlaneseq
        %v1763 = vshrl.u32 %v1762, 7
        %v1764 = vsub.s32 %v1761, %v1763
        %v1765 = vrot.slane %v1751, %v1764
        %v1766 = vcombine.high %v1758, %v1758
        %v1767 = vcombine.high %v1765, %v1765
        %v1769 = vunpack.c.l.s4 1966171168
        %v1770 = vunpack.c.0.s8 %v1769
        %v1771 = vlaneseq
        %v1772 = vshrl.u32 %v1771, 7
        %v1773 = vsub.s32 %v1770, %v1772
        %v1774 = vrot.slane %v1758, %v1773
        %v1776 = vunpack.c.l.s4 1966171168
        %v1777 = vunpack.c.0.s8 %v1776
        %v1778 = vlaneseq
        %v1779 = vshrl.u32 %v1778, 7
        %v1780 = vsub.s32 %v1777, %v1779
        %v1781 = vrot.slane %v1765, %v1780
        %v1783 = vunpack.c.l.s4 1966171168
        %v1784 = vunpack.c.0.s8 %v1783
        %v1785 = vlaneseq
        %v1786 = vshrl.u32 %v1785, 7
        %v1787 = vsub.s32 %v1784, %v1786
        %v1788 = vrot.slane %v1766, %v1787
        %v1790 = vunpack.c.l.s4 1966171168
        %v1791 = vunpack.c.0.s8 %v1790
        %v1792 = vlaneseq
        %v1793 = vshrl.u32 %v1792, 7
        %v1794 = vsub.s32 %v1791, %v1793
        %v1795 = vrot.slane %v1767, %v1794
        %v1796 = vcombine.high %v1774, %v1774
        %v1797 = vcombine.high %v1781, %v1781
        %v1798 = vcombine.high %v1788, %v1788
        %v1799 = vcombine.high %v1795, %v1795
        %v1800 = vcombine.high %v912, %v912
        %v1802 = vunpack.c.l.s4 1966171168
        %v1803 = vunpack.c.0.s8 %v1802
        %v1804 = vlaneseq
        %v1805 = vshrl.u32 %v1804, 7
        %v1806 = vsub.s32 %v1803, %v1805
        %v1807 = vrot.slane %v912, %v1806
        %v1809 = vunpack.c.l.s4 1966171168
        %v1810 = vunpack.c.0.s8 %v1809
        %v1811 = vlaneseq
        %v1812 = vshrl.u32 %v1811, 7
        %v1813 = vsub.s32 %v1810, %v1812
        %v1814 = vrot.slane %v1800, %v1813
        %v1815 = vcombine.high %v1807, %v1807
        %v1816 = vcombine.high %v1814, %v1814
        %v1818 = vunpack.c.l.s4 1966171168
        %v1819 = vunpack.c.0.s8 %v1818
        %v1820 = vlaneseq
        %v1821 = vshrl.u32 %v1820, 7
        %v1822 = vsub.s32 %v1819, %v1821
        %v1823 = vrot.slane %v1807, %v1822
        %v1825 = vunpack.c.l.s4 1966171168
        %v1826 = vunpack.c.0.s8 %v1825
        %v1827 = vlaneseq
        %v1828 = vshrl.u32 %v1827, 7
        %v1829 = vsub.s32 %v1826, %v1828
        %v1830 = vrot.slane %v1814, %v1829
        %v1832 = vunpack.c.l.s4 1966171168
        %v1833 = vunpack.c.0.s8 %v1832
        %v1834 = vlaneseq
        %v1835 = vshrl.u32 %v1834, 7
        %v1836 = vsub.s32 %v1833, %v1835
        %v1837 = vrot.slane %v1815, %v1836
        %v1839 = vunpack.c.l.s4 1966171168
        %v1840 = vunpack.c.0.s8 %v1839
        %v1841 = vlaneseq
        %v1842 = vshrl.u32 %v1841, 7
        %v1843 = vsub.s32 %v1840, %v1842
        %v1844 = vrot.slane %v1816, %v1843
        %v1845 = vcombine.high %v1823, %v1823
        %v1846 = vcombine.high %v1830, %v1830
        %v1847 = vcombine.high %v1837, %v1837
        %v1848 = vcombine.high %v1844, %v1844
        %v1849 = vcombine.high %v913, %v913
        %v1851 = vunpack.c.l.s4 1966171168
        %v1852 = vunpack.c.0.s8 %v1851
        %v1853 = vlaneseq
        %v1854 = vshrl.u32 %v1853, 7
        %v1855 = vsub.s32 %v1852, %v1854
        %v1856 = vrot.slane %v913, %v1855
        %v1858 = vunpack.c.l.s4 1966171168
        %v1859 = vunpack.c.0.s8 %v1858
        %v1860 = vlaneseq
        %v1861 = vshrl.u32 %v1860, 7
        %v1862 = vsub.s32 %v1859, %v1861
        %v1863 = vrot.slane %v1849, %v1862
        %v1864 = vcombine.high %v1856, %v1856
        %v1865 = vcombine.high %v1863, %v1863
        %v1867 = vunpack.c.l.s4 1966171168
        %v1868 = vunpack.c.0.s8 %v1867
        %v1869 = vlaneseq
        %v1870 = vshrl.u32 %v1869, 7
        %v1871 = vsub.s32 %v1868, %v1870
        %v1872 = vrot.slane %v1856, %v1871
        %v1874 = vunpack.c.l.s4 1966171168
        %v1875 = vunpack.c.0.s8 %v1874
        %v1876 = vlaneseq
        %v1877 = vshrl.u32 %v1876, 7
        %v1878 = vsub.s32 %v1875, %v1877
        %v1879 = vrot.slane %v1863, %v1878
        %v1881 = vunpack.c.l.s4 1966171168
        %v1882 = vunpack.c.0.s8 %v1881
        %v1883 = vlaneseq
        %v1884 = vshrl.u32 %v1883, 7
        %v1885 = vsub.s32 %v1882, %v1884
        %v1886 = vrot.slane %v1864, %v1885
        %v1888 = vunpack.c.l.s4 1966171168
        %v1889 = vunpack.c.0.s8 %v1888
        %v1890 = vlaneseq
        %v1891 = vshrl.u32 %v1890, 7
        %v1892 = vsub.s32 %v1889, %v1891
        %v1893 = vrot.slane %v1865, %v1892
        %v1894 = vcombine.high %v1872, %v1872
        %v1895 = vcombine.high %v1879, %v1879
        %v1896 = vcombine.high %v1886, %v1886
        %v1897 = vcombine.high %v1893, %v1893
        %v1898 = vcombine.high %v914, %v914
        %v1900 = vunpack.c.l.s4 1966171168
        %v1901 = vunpack.c.0.s8 %v1900
        %v1902 = vlaneseq
        %v1903 = vshrl.u32 %v1902, 7
        %v1904 = vsub.s32 %v1901, %v1903
        %v1905 = vrot.slane %v914, %v1904
        %v1907 = vunpack.c.l.s4 1966171168
        %v1908 = vunpack.c.0.s8 %v1907
        %v1909 = vlaneseq
        %v1910 = vshrl.u32 %v1909, 7
        %v1911 = vsub.s32 %v1908, %v1910
        %v1912 = vrot.slane %v1898, %v1911
        %v1913 = vcombine.high %v1905, %v1905
        %v1914 = vcombine.high %v1912, %v1912
        %v1916 = vunpack.c.l.s4 1966171168
        %v1917 = vunpack.c.0.s8 %v1916
        %v1918 = vlaneseq
        %v1919 = vshrl.u32 %v1918, 7
        %v1920 = vsub.s32 %v1917, %v1919
        %v1921 = vrot.slane %v1905, %v1920
        %v1923 = vunpack.c.l.s4 1966171168
        %v1924 = vunpack.c.0.s8 %v1923
        %v1925 = vlaneseq
        %v1926 = vshrl.u32 %v1925, 7
        %v1927 = vsub.s32 %v1924, %v1926
        %v1928 = vrot.slane %v1912, %v1927
        %v1930 = vunpack.c.l.s4 1966171168
        %v1931 = vunpack.c.0.s8 %v1930
        %v1932 = vlaneseq
        %v1933 = vshrl.u32 %v1932, 7
        %v1934 = vsub.s32 %v1931, %v1933
        %v1935 = vrot.slane %v1913, %v1934
        %v1937 = vunpack.c.l.s4 1966171168
        %v1938 = vunpack.c.0.s8 %v1937
        %v1939 = vlaneseq
        %v1940 = vshrl.u32 %v1939, 7
        %v1941 = vsub.s32 %v1938, %v1940
        %v1942 = vrot.slane %v1914, %v1941
        %v1943 = vcombine.high %v1921, %v1921
        %v1944 = vcombine.high %v1928, %v1928
        %v1945 = vcombine.high %v1935, %v1935
        %v1946 = vcombine.high %v1942, %v1942
        %v1947 = vcombine.high %v915, %v915
        %v1949 = vunpack.c.l.s4 1966171168
        %v1950 = vunpack.c.0.s8 %v1949
        %v1951 = vlaneseq
        %v1952 = vshrl.u32 %v1951, 7
        %v1953 = vsub.s32 %v1950, %v1952
        %v1954 = vrot.slane %v915, %v1953
        %v1956 = vunpack.c.l.s4 1966171168
        %v1957 = vunpack.c.0.s8 %v1956
        %v1958 = vlaneseq
        %v1959 = vshrl.u32 %v1958, 7
        %v1960 = vsub.s32 %v1957, %v1959
        %v1961 = vrot.slane %v1947, %v1960
        %v1962 = vcombine.high %v1954, %v1954
        %v1963 = vcombine.high %v1961, %v1961
        %v1965 = vunpack.c.l.s4 1966171168
        %v1966 = vunpack.c.0.s8 %v1965
        %v1967 = vlaneseq
        %v1968 = vshrl.u32 %v1967, 7
        %v1969 = vsub.s32 %v1966, %v1968
        %v1970 = vrot.slane %v1954, %v1969
        %v1972 = vunpack.c.l.s4 1966171168
        %v1973 = vunpack.c.0.s8 %v1972
        %v1974 = vlaneseq
        %v1975 = vshrl.u32 %v1974, 7
        %v1976 = vsub.s32 %v1973, %v1975
        %v1977 = vrot.slane %v1961, %v1976
        %v1979 = vunpack.c.l.s4 1966171168
        %v1980 = vunpack.c.0.s8 %v1979
        %v1981 = vlaneseq
        %v1982 = vshrl.u32 %v1981, 7
        %v1983 = vsub.s32 %v1980, %v1982
        %v1984 = vrot.slane %v1962, %v1983
        %v1986 = vunpack.c.l.s4 1966171168
        %v1987 = vunpack.c.0.s8 %v1986
        %v1988 = vlaneseq
        %v1989 = vshrl.u32 %v1988, 7
        %v1990 = vsub.s32 %v1987, %v1989
        %v1991 = vrot.slane %v1963, %v1990
        %v1992 = vcombine.high %v1970, %v1970
        %v1993 = vcombine.high %v1977, %v1977
        %v1994 = vcombine.high %v1984, %v1984
        %v1995 = vcombine.high %v1991, %v1991
        %v1996 = vlaneseq
        %v1997 = vshrl.u32 %v1996, 7
        %v1998 = vsub.s32 0, %v1997
        %v1999 = vrot.slane %v1529, %v1998
        %v2000 = vlaneseq
        %v2001 = vshrl.u32 %v2000, 7
        %v2002 = vsub.s32 0, %v2001
        %v2003 = vrot.slane %v1543, %v2002
        %v2004 = vlaneseq
        %v2005 = vshrl.u32 %v2004, 7
        %v2006 = vsub.s32 0, %v2005
        %v2007 = vrot.slane %v1551, %v2006
        %v2008 = vlaneseq
        %v2009 = vshrl.u32 %v2008, 7
        %v2010 = vsub.s32 0, %v2009
        %v2011 = vrot.slane %v1553, %v2010
        %v2012 = vlaneseq
        %v2013 = vshrl.u32 %v2012, 7
        %v2014 = vsub.s32 0, %v2013
        %v2015 = vrot.slane %v1536, %v2014
        %v2016 = vlaneseq
        %v2017 = vshrl.u32 %v2016, 7
        %v2018 = vsub.s32 0, %v2017
        %v2019 = vrot.slane %v1550, %v2018
        %v2020 = vlaneseq
        %v2021 = vshrl.u32 %v2020, 7
        %v2022 = vsub.s32 0, %v2021
        %v2023 = vrot.slane %v1552, %v2022
        %v2024 = vlaneseq
        %v2025 = vshrl.u32 %v2024, 7
        %v2026 = vsub.s32 0, %v2025
        %v2027 = vrot.slane %v1554, %v2026
        %v2028 = vlaneseq
        %v2029 = vshrl.u32 %v2028, 7
        %v2030 = vsub.s32 0, %v2029
        %v2031 = vrot.slane %v1578, %v2030
        %v2032 = vlaneseq
        %v2033 = vshrl.u32 %v2032, 7
        %v2034 = vsub.s32 0, %v2033
        %v2035 = vrot.slane %v1592, %v2034
        %v2036 = vlaneseq
        %v2037 = vshrl.u32 %v2036, 7
        %v2038 = vsub.s32 0, %v2037
        %v2039 = vrot.slane %v1600, %v2038
        %v2040 = vlaneseq
        %v2041 = vshrl.u32 %v2040, 7
        %v2042 = vsub.s32 0, %v2041
        %v2043 = vrot.slane %v1602, %v2042
        %v2044 = vlaneseq
        %v2045 = vshrl.u32 %v2044, 7
        %v2046 = vsub.s32 0, %v2045
        %v2047 = vrot.slane %v1585, %v2046
        %v2048 = vlaneseq
        %v2049 = vshrl.u32 %v2048, 7
        %v2050 = vsub.s32 0, %v2049
        %v2051 = vrot.slane %v1599, %v2050
        %v2052 = vlaneseq
        %v2053 = vshrl.u32 %v2052, 7
        %v2054 = vsub.s32 0, %v2053
        %v2055 = vrot.slane %v1601, %v2054
        %v2056 = vlaneseq
        %v2057 = vshrl.u32 %v2056, 7
        %v2058 = vsub.s32 0, %v2057
        %v2059 = vrot.slane %v1603, %v2058
        %v2060 = vlaneseq
        %v2061 = vshrl.u32 %v2060, 7
        %v2062 = vsub.s32 0, %v2061
        %v2063 = vrot.slane %v1627, %v2062
        %v2064 = vlaneseq
        %v2065 = vshrl.u32 %v2064, 7
        %v2066 = vsub.s32 0, %v2065
        %v2067 = vrot.slane %v1641, %v2066
        %v2068 = vlaneseq
        %v2069 = vshrl.u32 %v2068, 7
        %v2070 = vsub.s32 0, %v2069
        %v2071 = vrot.slane %v1649, %v2070
        %v2072 = vlaneseq
        %v2073 = vshrl.u32 %v2072, 7
        %v2074 = vsub.s32 0, %v2073
        %v2075 = vrot.slane %v1651, %v2074
        %v2076 = vlaneseq
        %v2077 = vshrl.u32 %v2076, 7
        %v2078 = vsub.s32 0, %v2077
        %v2079 = vrot.slane %v1634, %v2078
        %v2080 = vlaneseq
        %v2081 = vshrl.u32 %v2080, 7
        %v2082 = vsub.s32 0, %v2081
        %v2083 = vrot.slane %v1648, %v2082
        %v2084 = vlaneseq
        %v2085 = vshrl.u32 %v2084, 7
        %v2086 = vsub.s32 0, %v2085
        %v2087 = vrot.slane %v1650, %v2086
        %v2088 = vlaneseq
        %v2089 = vshrl.u32 %v2088, 7
        %v2090 = vsub.s32 0, %v2089
        %v2091 = vrot.slane %v1652, %v2090
        %v2092 = vlaneseq
        %v2093 = vshrl.u32 %v2092, 7
        %v2094 = vsub.s32 0, %v2093
        %v2095 = vrot.slane %v1676, %v2094
        %v2096 = vlaneseq
        %v2097 = vshrl.u32 %v2096, 7
        %v2098 = vsub.s32 0, %v2097
        %v2099 = vrot.slane %v1690, %v2098
        %v2100 = vlaneseq
        %v2101 = vshrl.u32 %v2100, 7
        %v2102 = vsub.s32 0, %v2101
        %v2103 = vrot.slane %v1698, %v2102
        %v2104 = vlaneseq
        %v2105 = vshrl.u32 %v2104, 7
        %v2106 = vsub.s32 0, %v2105
        %v2107 = vrot.slane %v1700, %v2106
        %v2108 = vlaneseq
        %v2109 = vshrl.u32 %v2108, 7
        %v2110 = vsub.s32 0, %v2109
        %v2111 = vrot.slane %v1683, %v2110
        %v2112 = vlaneseq
        %v2113 = vshrl.u32 %v2112, 7
        %v2114 = vsub.s32 0, %v2113
        %v2115 = vrot.slane %v1697, %v2114
        %v2116 = vlaneseq
        %v2117 = vshrl.u32 %v2116, 7
        %v2118 = vsub.s32 0, %v2117
        %v2119 = vrot.slane %v1699, %v2118
        %v2120 = vlaneseq
        %v2121 = vshrl.u32 %v2120, 7
        %v2122 = vsub.s32 0, %v2121
        %v2123 = vrot.slane %v1701, %v2122
        %v2124 = vlaneseq
        %v2125 = vshrl.u32 %v2124, 7
        %v2126 = vsub.s32 0, %v2125
        %v2127 = vrot.slane %v1725, %v2126
        %v2128 = vlaneseq
        %v2129 = vshrl.u32 %v2128, 7
        %v2130 = vsub.s32 0, %v2129
        %v2131 = vrot.slane %v1739, %v2130
        %v2132 = vlaneseq
        %v2133 = vshrl.u32 %v2132, 7
        %v2134 = vsub.s32 0, %v2133
        %v2135 = vrot.slane %v1747, %v2134
        %v2136 = vlaneseq
        %v2137 = vshrl.u32 %v2136, 7
        %v2138 = vsub.s32 0, %v2137
        %v2139 = vrot.slane %v1749, %v2138
        %v2140 = vlaneseq
        %v2141 = vshrl.u32 %v2140, 7
        %v2142 = vsub.s32 0, %v2141
        %v2143 = vrot.slane %v1732, %v2142
        %v2144 = vlaneseq
        %v2145 = vshrl.u32 %v2144, 7
        %v2146 = vsub.s32 0, %v2145
        %v2147 = vrot.slane %v1746, %v2146
        %v2148 = vlaneseq
        %v2149 = vshrl.u32 %v2148, 7
        %v2150 = vsub.s32 0, %v2149
        %v2151 = vrot.slane %v1748, %v2150
        %v2152 = vlaneseq
        %v2153 = vshrl.u32 %v2152, 7
        %v2154 = vsub.s32 0, %v2153
        %v2155 = vrot.slane %v1750, %v2154
        %v2156 = vlaneseq
        %v2157 = vshrl.u32 %v2156, 7
        %v2158 = vsub.s32 0, %v2157
        %v2159 = vrot.slane %v1774, %v2158
        %v2160 = vlaneseq
        %v2161 = vshrl.u32 %v2160, 7
        %v2162 = vsub.s32 0, %v2161
        %v2163 = vrot.slane %v1788, %v2162
        %v2164 = vlaneseq
        %v2165 = vshrl.u32 %v2164, 7
        %v2166 = vsub.s32 0, %v2165
        %v2167 = vrot.slane %v1796, %v2166
        %v2168 = vlaneseq
        %v2169 = vshrl.u32 %v2168, 7
        %v2170 = vsub.s32 0, %v2169
        %v2171 = vrot.slane %v1798, %v2170
        %v2172 = vlaneseq
        %v2173 = vshrl.u32 %v2172, 7
        %v2174 = vsub.s32 0, %v2173
        %v2175 = vrot.slane %v1781, %v2174
        %v2176 = vlaneseq
        %v2177 = vshrl.u32 %v2176, 7
        %v2178 = vsub.s32 0, %v2177
        %v2179 = vrot.slane %v1795, %v2178
        %v2180 = vlaneseq
        %v2181 = vshrl.u32 %v2180, 7
        %v2182 = vsub.s32 0, %v2181
        %v2183 = vrot.slane %v1797, %v2182
        %v2184 = vlaneseq
        %v2185 = vshrl.u32 %v2184, 7
        %v2186 = vsub.s32 0, %v2185
        %v2187 = vrot.slane %v1799, %v2186
        %v2188 = vlaneseq
        %v2189 = vshrl.u32 %v2188, 7
        %v2190 = vsub.s32 0, %v2189
        %v2191 = vrot.slane %v1823, %v2190
        %v2192 = vlaneseq
        %v2193 = vshrl.u32 %v2192, 7
        %v2194 = vsub.s32 0, %v2193
        %v2195 = vrot.slane %v1837, %v2194
        %v2196 = vlaneseq
        %v2197 = vshrl.u32 %v2196, 7
        %v2198 = vsub.s32 0, %v2197
        %v2199 = vrot.slane %v1845, %v2198
        %v2200 = vlaneseq
        %v2201 = vshrl.u32 %v2200, 7
        %v2202 = vsub.s32 0, %v2201
        %v2203 = vrot.slane %v1847, %v2202
        %v2204 = vlaneseq
        %v2205 = vshrl.u32 %v2204, 7
        %v2206 = vsub.s32 0, %v2205
        %v2207 = vrot.slane %v1830, %v2206
        %v2208 = vlaneseq
        %v2209 = vshrl.u32 %v2208, 7
        %v2210 = vsub.s32 0, %v2209
        %v2211 = vrot.slane %v1844, %v2210
        %v2212 = vlaneseq
        %v2213 = vshrl.u32 %v2212, 7
        %v2214 = vsub.s32 0, %v2213
        %v2215 = vrot.slane %v1846, %v2214
        %v2216 = vlaneseq
        %v2217 = vshrl.u32 %v2216, 7
        %v2218 = vsub.s32 0, %v2217
        %v2219 = vrot.slane %v1848, %v2218
        %v2220 = vlaneseq
        %v2221 = vshrl.u32 %v2220, 7
        %v2222 = vsub.s32 0, %v2221
        %v2223 = vrot.slane %v1872, %v2222
        %v2224 = vlaneseq
        %v2225 = vshrl.u32 %v2224, 7
        %v2226 = vsub.s32 0, %v2225
        %v2227 = vrot.slane %v1886, %v2226
        %v2228 = vlaneseq
        %v2229 = vshrl.u32 %v2228, 7
        %v2230 = vsub.s32 0, %v2229
        %v2231 = vrot.slane %v1894, %v2230
        %v2232 = vlaneseq
        %v2233 = vshrl.u32 %v2232, 7
        %v2234 = vsub.s32 0, %v2233
        %v2235 = vrot.slane %v1896, %v2234
        %v2236 = vlaneseq
        %v2237 = vshrl.u32 %v2236, 7
        %v2238 = vsub.s32 0, %v2237
        %v2239 = vrot.slane %v1879, %v2238
        %v2240 = vlaneseq
        %v2241 = vshrl.u32 %v2240, 7
        %v2242 = vsub.s32 0, %v2241
        %v2243 = vrot.slane %v1893, %v2242
        %v2244 = vlaneseq
        %v2245 = vshrl.u32 %v2244, 7
        %v2246 = vsub.s32 0, %v2245
        %v2247 = vrot.slane %v1895, %v2246
        %v2248 = vlaneseq
        %v2249 = vshrl.u32 %v2248, 7
        %v2250 = vsub.s32 0, %v2249
        %v2251 = vrot.slane %v1897, %v2250
        %v2252 = vlaneseq
        %v2253 = vshrl.u32 %v2252, 7
        %v2254 = vsub.s32 0, %v2253
        %v2255 = vrot.slane %v1921, %v2254
        %v2256 = vlaneseq
        %v2257 = vshrl.u32 %v2256, 7
        %v2258 = vsub.s32 0, %v2257
        %v2259 = vrot.slane %v1935, %v2258
        %v2260 = vlaneseq
        %v2261 = vshrl.u32 %v2260, 7
        %v2262 = vsub.s32 0, %v2261
        %v2263 = vrot.slane %v1943, %v2262
        %v2264 = vlaneseq
        %v2265 = vshrl.u32 %v2264, 7
        %v2266 = vsub.s32 0, %v2265
        %v2267 = vrot.slane %v1945, %v2266
        %v2268 = vlaneseq
        %v2269 = vshrl.u32 %v2268, 7
        %v2270 = vsub.s32 0, %v2269
        %v2271 = vrot.slane %v1928, %v2270
        %v2272 = vlaneseq
        %v2273 = vshrl.u32 %v2272, 7
        %v2274 = vsub.s32 0, %v2273
        %v2275 = vrot.slane %v1942, %v2274
        %v2276 = vlaneseq
        %v2277 = vshrl.u32 %v2276, 7
        %v2278 = vsub.s32 0, %v2277
        %v2279 = vrot.slane %v1944, %v2278
        %v2280 = vlaneseq
        %v2281 = vshrl.u32 %v2280, 7
        %v2282 = vsub.s32 0, %v2281
        %v2283 = vrot.slane %v1946, %v2282
        %v2284 = vlaneseq
        %v2285 = vshrl.u32 %v2284, 7
        %v2286 = vsub.s32 0, %v2285
        %v2287 = vrot.slane %v1970, %v2286
        %v2288 = vlaneseq
        %v2289 = vshrl.u32 %v2288, 7
        %v2290 = vsub.s32 0, %v2289
        %v2291 = vrot.slane %v1984, %v2290
        %v2292 = vlaneseq
        %v2293 = vshrl.u32 %v2292, 7
        %v2294 = vsub.s32 0, %v2293
        %v2295 = vrot.slane %v1992, %v2294
        %v2296 = vlaneseq
        %v2297 = vshrl.u32 %v2296, 7
        %v2298 = vsub.s32 0, %v2297
        %v2299 = vrot.slane %v1994, %v2298
        %v2300 = vlaneseq
        %v2301 = vshrl.u32 %v2300, 7
        %v2302 = vsub.s32 0, %v2301
        %v2303 = vrot.slane %v1977, %v2302
        %v2304 = vlaneseq
        %v2305 = vshrl.u32 %v2304, 7
        %v2306 = vsub.s32 0, %v2305
        %v2307 = vrot.slane %v1991, %v2306
        %v2308 = vlaneseq
        %v2309 = vshrl.u32 %v2308, 7
        %v2310 = vsub.s32 0, %v2309
        %v2311 = vrot.slane %v1993, %v2310
        %v2312 = vlaneseq
        %v2313 = vshrl.u32 %v2312, 7
        %v2314 = vsub.s32 0, %v2313
        %v2315 = vrot.slane %v1995, %v2314
        %v2396 = vsel %vm824, %v949, %v1999
        %v2397 = vsel %vm824, %v963, %v2003
        %v2398 = vsel %vm824, %v971, %v2007
        %v2399 = vsel %vm824, %v973, %v2011
        %v2400 = vsel %vm824, %v956, %v2015
        %v2401 = vsel %vm824, %v970, %v2019
        %v2402 = vsel %vm824, %v972, %v2023
        %v2403 = vsel %vm824, %v974, %v2027
        %v2404 = vsel %vm824, %v998, %v2031
        %v2405 = vsel %vm824, %v1012, %v2035
        %v2406 = vsel %vm824, %v1020, %v2039
        %v2407 = vsel %vm824, %v1022, %v2043
        %v2408 = vsel %vm824, %v1005, %v2047
        %v2409 = vsel %vm824, %v1019, %v2051
        %v2410 = vsel %vm824, %v1021, %v2055
        %v2411 = vsel %vm824, %v1023, %v2059
        %v2412 = vsel %vm824, %v1047, %v2063
        %v2413 = vsel %vm824, %v1061, %v2067
        %v2414 = vsel %vm824, %v1069, %v2071
        %v2415 = vsel %vm824, %v1071, %v2075
        %v2416 = vsel %vm824, %v1054, %v2079
        %v2417 = vsel %vm824, %v1068, %v2083
        %v2418 = vsel %vm824, %v1070, %v2087
        %v2419 = vsel %vm824, %v1072, %v2091
        %v2420 = vsel %vm824, %v1096, %v2095
        %v2421 = vsel %vm824, %v1110, %v2099
        %v2422 = vsel %vm824, %v1118, %v2103
        %v2423 = vsel %vm824, %v1120, %v2107
        %v2424 = vsel %vm824, %v1103, %v2111
        %v2425 = vsel %vm824, %v1117, %v2115
        %v2426 = vsel %vm824, %v1119, %v2119
        %v2427 = vsel %vm824, %v1121, %v2123
        %v2428 = vsel %vm824, %v1145, %v2127
        %v2429 = vsel %vm824, %v1159, %v2131
        %v2430 = vsel %vm824, %v1167, %v2135
        %v2431 = vsel %vm824, %v1169, %v2139
        %v2432 = vsel %vm824, %v1152, %v2143
        %v2433 = vsel %vm824, %v1166, %v2147
        %v2434 = vsel %vm824, %v1168, %v2151
        %v2435 = vsel %vm824, %v1170, %v2155
        %v2436 = vsel %vm824, %v1194, %v2159
        %v2437 = vsel %vm824, %v1208, %v2163
        %v2438 = vsel %vm824, %v1216, %v2167
        %v2439 = vsel %vm824, %v1218, %v2171
        %v2440 = vsel %vm824, %v1201, %v2175
        %v2441 = vsel %vm824, %v1215, %v2179
        %v2442 = vsel %vm824, %v1217, %v2183
        %v2443 = vsel %vm824, %v1219, %v2187
        %v2444 = vsel %vm824, %v1243, %v2191
        %v2445 = vsel %vm824, %v1257, %v2195
        %v2446 = vsel %vm824, %v1265, %v2199
        %v2447 = vsel %vm824, %v1267, %v2203
        %v2448 = vsel %vm824, %v1250, %v2207
        %v2449 = vsel %vm824, %v1264, %v2211
        %v2450 = vsel %vm824, %v1266, %v2215
        %v2451 = vsel %vm824, %v1268, %v2219
        %v2452 = vsel %vm824, %v1292, %v2223
        %v2453 = vsel %vm824, %v1306, %v2227
        %v2454 = vsel %vm824, %v1314, %v2231
        %v2455 = vsel %vm824, %v1316, %v2235
        %v2456 = vsel %vm824, %v1299, %v2239
        %v2457 = vsel %vm824, %v1313, %v2243
        %v2458 = vsel %vm824, %v1315, %v2247
        %v2459 = vsel %vm824, %v1317, %v2251
        %v2460 = vsel %vm824, %v1341, %v2255
        %v2461 = vsel %vm824, %v1355, %v2259
        %v2462 = vsel %vm824, %v1363, %v2263
        %v2463 = vsel %vm824, %v1365, %v2267
        %v2464 = vsel %vm824, %v1348, %v2271
        %v2465 = vsel %vm824, %v1362, %v2275
        %v2466 = vsel %vm824, %v1364, %v2279
        %v2467 = vsel %vm824, %v1366, %v2283
        %v2468 = vsel %vm824, %v1390, %v2287
        %v2469 = vsel %vm824, %v1404, %v2291
        %v2470 = vsel %vm824, %v1412, %v2295
        %v2471 = vsel %vm824, %v1414, %v2299
        %v2472 = vsel %vm824, %v1397, %v2303
        %v2473 = vsel %vm824, %v1411, %v2307
        %v2474 = vsel %vm824, %v1413, %v2311
        %v2475 = vsel %vm824, %v1415, %v2315
        %v2476 = vsel %vm744, %v2396, 0.0
        %v2477 = vsel %vm744, %v2397, 0.0
        %v2478 = vsel %vm744, %v2398, 0.0
        %v2479 = vsel %vm744, %v2399, 0.0
        %v2480 = vsel %vm744, %v2400, 0.0
        %v2481 = vsel %vm744, %v2401, 0.0
        %v2482 = vsel %vm744, %v2402, 0.0
        %v2483 = vsel %vm744, %v2403, 0.0
        %v2484 = vsel 1, %v2404, 0.0
        %v2485 = vsel 1, %v2405, 0.0
        %v2486 = vsel 1, %v2406, 0.0
        %v2487 = vsel 1, %v2407, 0.0
        %v2488 = vsel 1, %v2408, 0.0
        %v2489 = vsel 1, %v2409, 0.0
        %v2490 = vsel 1, %v2410, 0.0
        %v2491 = vsel 1, %v2411, 0.0
        %v2492 = vsel 1, %v2412, 0.0
        %v2493 = vsel 1, %v2413, 0.0
        %v2494 = vsel 1, %v2414, 0.0
        %v2495 = vsel 1, %v2415, 0.0
        %v2496 = vsel 1, %v2416, 0.0
        %v2497 = vsel 1, %v2417, 0.0
        %v2498 = vsel 1, %v2418, 0.0
        %v2499 = vsel 1, %v2419, 0.0
        %v2500 = vsel 1, %v2420, 0.0
        %v2501 = vsel 1, %v2421, 0.0
        %v2502 = vsel 1, %v2422, 0.0
        %v2503 = vsel 1, %v2423, 0.0
        %v2504 = vsel 1, %v2424, 0.0
        %v2505 = vsel 1, %v2425, 0.0
        %v2506 = vsel 1, %v2426, 0.0
        %v2507 = vsel 1, %v2427, 0.0
        %v2508 = vsel 1, %v2428, 0.0
        %v2509 = vsel 1, %v2429, 0.0
        %v2510 = vsel 1, %v2430, 0.0
        %v2511 = vsel 1, %v2431, 0.0
        %v2512 = vsel 1, %v2432, 0.0
        %v2513 = vsel 1, %v2433, 0.0
        %v2514 = vsel 1, %v2434, 0.0
        %v2515 = vsel 1, %v2435, 0.0
        %v2516 = vsel 1, %v2436, 0.0
        %v2517 = vsel 1, %v2437, 0.0
        %v2518 = vsel 1, %v2438, 0.0
        %v2519 = vsel 1, %v2439, 0.0
        %v2520 = vsel 1, %v2440, 0.0
        %v2521 = vsel 1, %v2441, 0.0
        %v2522 = vsel 1, %v2442, 0.0
        %v2523 = vsel 1, %v2443, 0.0
        %v2524 = vsel 1, %v2444, 0.0
        %v2525 = vsel 1, %v2445, 0.0
        %v2526 = vsel 1, %v2446, 0.0
        %v2527 = vsel 1, %v2447, 0.0
        %v2528 = vsel 1, %v2448, 0.0
        %v2529 = vsel 1, %v2449, 0.0
        %v2530 = vsel 1, %v2450, 0.0
        %v2531 = vsel 1, %v2451, 0.0
        %v2532 = vsel 1, %v2452, 0.0
        %v2533 = vsel 1, %v2453, 0.0
        %v2534 = vsel 1, %v2454, 0.0
        %v2535 = vsel 1, %v2455, 0.0
        %v2536 = vsel 1, %v2456, 0.0
        %v2537 = vsel 1, %v2457, 0.0
        %v2538 = vsel 1, %v2458, 0.0
        %v2539 = vsel 1, %v2459, 0.0
        %v2540 = vsel 1, %v2460, 0.0
        %v2541 = vsel 1, %v2461, 0.0
        %v2542 = vsel 1, %v2462, 0.0
        %v2543 = vsel 1, %v2463, 0.0
        %v2544 = vsel 1, %v2464, 0.0
        %v2545 = vsel 1, %v2465, 0.0
        %v2546 = vsel 1, %v2466, 0.0
        %v2547 = vsel 1, %v2467, 0.0
        %v2548 = vsel %vm745, %v2468, 0.0
        %v2549 = vsel %vm745, %v2469, 0.0
        %v2550 = vsel %vm745, %v2470, 0.0
        %v2551 = vsel %vm745, %v2471, 0.0
        %v2552 = vsel %vm745, %v2472, 0.0
        %v2553 = vsel %vm745, %v2473, 0.0
        %v2554 = vsel %vm745, %v2474, 0.0
        %v2555 = vsel %vm745, %v2475, 0.0
        %v2576 = vrot.slane %v746, 7
        %v2577 = vrot.slane %v747, 7
        %v2578 = vsel %vm824, %v2576, %v2577
        %v2579 = vrot.slane %v748, 7
        %v2580 = vrot.slane %v749, 7
        %v2581 = vsel %vm824, %v2579, %v2580
        %v2582 = vrot.slane %v750, 7
        %v2583 = vrot.slane %v751, 7
        %v2584 = vsel %vm824, %v2582, %v2583
        %v2585 = vrot.slane %v752, 7
        %v2586 = vrot.slane %v753, 7
        %v2587 = vsel %vm824, %v2585, %v2586
        %v2588 = vrot.slane %v754, 7
        %v2589 = vrot.slane %v755, 7
        %v2590 = vsel %vm824, %v2588, %v2589
        %v2591 = vrot.slane %v756, 7
        %v2592 = vrot.slane %v757, 7
        %v2593 = vsel %vm824, %v2591, %v2592
        %v2594 = vrot.slane %v758, 7
        %v2595 = vrot.slane %v759, 7
        %v2596 = vsel %vm824, %v2594, %v2595
        %v2597 = vrot.slane %v760, 7
        %v2598 = vrot.slane %v761, 7
        %v2599 = vsel %vm824, %v2597, %v2598
        %v2600 = vrot.slane %v762, 7
        %v2601 = vrot.slane %v763, 7
        %v2602 = vsel %vm824, %v2600, %v2601
        %v2603 = vrot.slane %v764, 7
        %v2604 = vrot.slane %v765, 7
        %v2605 = vsel %vm824, %v2603, %v2604
        %v2636 = vsel %vm824, 0.0, %v2576
        %v2637 = vsel %vm824, 0.0, %v2579
        %v2638 = vsel %vm824, 0.0, %v2582
        %v2639 = vsel %vm824, 0.0, %v2585
        %v2640 = vsel %vm824, 0.0, %v2588
        %v2641 = vsel %vm824, 0.0, %v2591
        %v2642 = vsel %vm824, 0.0, %v2594
        %v2643 = vsel %vm824, 0.0, %v2597
        %v2644 = vsel %vm824, 0.0, %v2600
        %v2645 = vsel %vm824, 0.0, %v2603
        %v2646 = vsel %vm824, %v2577, 0.0
        %v2647 = vsel %vm824, %v2580, 0.0
        %v2648 = vsel %vm824, %v2583, 0.0
        %v2649 = vsel %vm824, %v2586, 0.0
        %v2650 = vsel %vm824, %v2589, 0.0
        %v2651 = vsel %vm824, %v2592, 0.0
        %v2652 = vsel %vm824, %v2595, 0.0
        %v2653 = vsel %vm824, %v2598, 0.0
        %v2654 = vsel %vm824, %v2601, 0.0
        %v2655 = vsel %vm824, %v2604, 0.0
        %v2656 = vpack.c.bf16 %v2578, %v2636
        %v2657 = vpack.c.bf16 %v2646, %v2646
        %v2658 = vpack.c.bf16 %v2581, %v2637
        %v2659 = vpack.c.bf16 %v2647, %v2647
        %v2660 = vpack.c.bf16 %v2584, %v2638
        %v2661 = vpack.c.bf16 %v2648, %v2648
        %v2662 = vpack.c.bf16 %v2587, %v2639
        %v2663 = vpack.c.bf16 %v2649, %v2649
        %v2664 = vpack.c.bf16 %v2590, %v2640
        %v2665 = vpack.c.bf16 %v2650, %v2650
        %v2666 = vpack.c.bf16 %v2593, %v2641
        %v2667 = vpack.c.bf16 %v2651, %v2651
        %v2668 = vpack.c.bf16 %v2596, %v2642
        %v2669 = vpack.c.bf16 %v2652, %v2652
        %v2670 = vpack.c.bf16 %v2599, %v2643
        %v2671 = vpack.c.bf16 %v2653, %v2653
        %v2672 = vpack.c.bf16 %v2602, %v2644
        %v2673 = vpack.c.bf16 %v2654, %v2654
        %v2674 = vpack.c.bf16 %v2605, %v2645
        %v2675 = vpack.c.bf16 %v2655, %v2655
        %v2756 = vcombine.low %v2476, %v2477
        %v2757 = vcombine.low %v2478, %v2479
        %v2759 = vunpack.c.l.s4 1983009808
        %v2760 = vunpack.c.0.s8 %v2759
        %v2761 = vlaneseq
        %v2762 = vshrl.u32 %v2761, 7
        %v2763 = vsub.s32 %v2760, %v2762
        %v2764 = vrot.slane %v2756, %v2763
        %v2766 = vunpack.c.l.s4 1983009808
        %v2767 = vunpack.c.0.s8 %v2766
        %v2768 = vlaneseq
        %v2769 = vshrl.u32 %v2768, 7
        %v2770 = vsub.s32 %v2767, %v2769
        %v2771 = vrot.slane %v2757, %v2770
        %v2772 = vcombine.low %v2764, %v2771
        %v2773 = vcombine.low %v2480, %v2481
        %v2774 = vcombine.low %v2482, %v2483
        %v2776 = vunpack.c.l.s4 1983009808
        %v2777 = vunpack.c.0.s8 %v2776
        %v2778 = vlaneseq
        %v2779 = vshrl.u32 %v2778, 7
        %v2780 = vsub.s32 %v2777, %v2779
        %v2781 = vrot.slane %v2773, %v2780
        %v2783 = vunpack.c.l.s4 1983009808
        %v2784 = vunpack.c.0.s8 %v2783
        %v2785 = vlaneseq
        %v2786 = vshrl.u32 %v2785, 7
        %v2787 = vsub.s32 %v2784, %v2786
        %v2788 = vrot.slane %v2774, %v2787
        %v2789 = vcombine.low %v2781, %v2788
        %v2790 = vcombine.low %v2484, %v2485
        %v2791 = vcombine.low %v2486, %v2487
        %v2793 = vunpack.c.l.s4 1983009808
        %v2794 = vunpack.c.0.s8 %v2793
        %v2795 = vlaneseq
        %v2796 = vshrl.u32 %v2795, 7
        %v2797 = vsub.s32 %v2794, %v2796
        %v2798 = vrot.slane %v2790, %v2797
        %v2800 = vunpack.c.l.s4 1983009808
        %v2801 = vunpack.c.0.s8 %v2800
        %v2802 = vlaneseq
        %v2803 = vshrl.u32 %v2802, 7
        %v2804 = vsub.s32 %v2801, %v2803
        %v2805 = vrot.slane %v2791, %v2804
        %v2806 = vcombine.low %v2798, %v2805
        %v2807 = vcombine.low %v2488, %v2489
        %v2808 = vcombine.low %v2490, %v2491
        %v2810 = vunpack.c.l.s4 1983009808
        %v2811 = vunpack.c.0.s8 %v2810
        %v2812 = vlaneseq
        %v2813 = vshrl.u32 %v2812, 7
        %v2814 = vsub.s32 %v2811, %v2813
        %v2815 = vrot.slane %v2807, %v2814
        %v2817 = vunpack.c.l.s4 1983009808
        %v2818 = vunpack.c.0.s8 %v2817
        %v2819 = vlaneseq
        %v2820 = vshrl.u32 %v2819, 7
        %v2821 = vsub.s32 %v2818, %v2820
        %v2822 = vrot.slane %v2808, %v2821
        %v2823 = vcombine.low %v2815, %v2822
        %v2824 = vcombine.low %v2492, %v2493
        %v2825 = vcombine.low %v2494, %v2495
        %v2827 = vunpack.c.l.s4 1983009808
        %v2828 = vunpack.c.0.s8 %v2827
        %v2829 = vlaneseq
        %v2830 = vshrl.u32 %v2829, 7
        %v2831 = vsub.s32 %v2828, %v2830
        %v2832 = vrot.slane %v2824, %v2831
        %v2834 = vunpack.c.l.s4 1983009808
        %v2835 = vunpack.c.0.s8 %v2834
        %v2836 = vlaneseq
        %v2837 = vshrl.u32 %v2836, 7
        %v2838 = vsub.s32 %v2835, %v2837
        %v2839 = vrot.slane %v2825, %v2838
        %v2840 = vcombine.low %v2832, %v2839
        %v2841 = vcombine.low %v2496, %v2497
        %v2842 = vcombine.low %v2498, %v2499
        %v2844 = vunpack.c.l.s4 1983009808
        %v2845 = vunpack.c.0.s8 %v2844
        %v2846 = vlaneseq
        %v2847 = vshrl.u32 %v2846, 7
        %v2848 = vsub.s32 %v2845, %v2847
        %v2849 = vrot.slane %v2841, %v2848
        %v2851 = vunpack.c.l.s4 1983009808
        %v2852 = vunpack.c.0.s8 %v2851
        %v2853 = vlaneseq
        %v2854 = vshrl.u32 %v2853, 7
        %v2855 = vsub.s32 %v2852, %v2854
        %v2856 = vrot.slane %v2842, %v2855
        %v2857 = vcombine.low %v2849, %v2856
        %v2858 = vcombine.low %v2500, %v2501
        %v2859 = vcombine.low %v2502, %v2503
        %v2861 = vunpack.c.l.s4 1983009808
        %v2862 = vunpack.c.0.s8 %v2861
        %v2863 = vlaneseq
        %v2864 = vshrl.u32 %v2863, 7
        %v2865 = vsub.s32 %v2862, %v2864
        %v2866 = vrot.slane %v2858, %v2865
        %v2868 = vunpack.c.l.s4 1983009808
        %v2869 = vunpack.c.0.s8 %v2868
        %v2870 = vlaneseq
        %v2871 = vshrl.u32 %v2870, 7
        %v2872 = vsub.s32 %v2869, %v2871
        %v2873 = vrot.slane %v2859, %v2872
        %v2874 = vcombine.low %v2866, %v2873
        %v2875 = vcombine.low %v2504, %v2505
        %v2876 = vcombine.low %v2506, %v2507
        %v2878 = vunpack.c.l.s4 1983009808
        %v2879 = vunpack.c.0.s8 %v2878
        %v2880 = vlaneseq
        %v2881 = vshrl.u32 %v2880, 7
        %v2882 = vsub.s32 %v2879, %v2881
        %v2883 = vrot.slane %v2875, %v2882
        %v2885 = vunpack.c.l.s4 1983009808
        %v2886 = vunpack.c.0.s8 %v2885
        %v2887 = vlaneseq
        %v2888 = vshrl.u32 %v2887, 7
        %v2889 = vsub.s32 %v2886, %v2888
        %v2890 = vrot.slane %v2876, %v2889
        %v2891 = vcombine.low %v2883, %v2890
        %v2892 = vcombine.low %v2508, %v2509
        %v2893 = vcombine.low %v2510, %v2511
        %v2895 = vunpack.c.l.s4 1983009808
        %v2896 = vunpack.c.0.s8 %v2895
        %v2897 = vlaneseq
        %v2898 = vshrl.u32 %v2897, 7
        %v2899 = vsub.s32 %v2896, %v2898
        %v2900 = vrot.slane %v2892, %v2899
        %v2902 = vunpack.c.l.s4 1983009808
        %v2903 = vunpack.c.0.s8 %v2902
        %v2904 = vlaneseq
        %v2905 = vshrl.u32 %v2904, 7
        %v2906 = vsub.s32 %v2903, %v2905
        %v2907 = vrot.slane %v2893, %v2906
        %v2908 = vcombine.low %v2900, %v2907
        %v2909 = vcombine.low %v2512, %v2513
        %v2910 = vcombine.low %v2514, %v2515
        %v2912 = vunpack.c.l.s4 1983009808
        %v2913 = vunpack.c.0.s8 %v2912
        %v2914 = vlaneseq
        %v2915 = vshrl.u32 %v2914, 7
        %v2916 = vsub.s32 %v2913, %v2915
        %v2917 = vrot.slane %v2909, %v2916
        %v2919 = vunpack.c.l.s4 1983009808
        %v2920 = vunpack.c.0.s8 %v2919
        %v2921 = vlaneseq
        %v2922 = vshrl.u32 %v2921, 7
        %v2923 = vsub.s32 %v2920, %v2922
        %v2924 = vrot.slane %v2910, %v2923
        %v2925 = vcombine.low %v2917, %v2924
        %v2926 = vcombine.low %v2516, %v2517
        %v2927 = vcombine.low %v2518, %v2519
        %v2929 = vunpack.c.l.s4 1983009808
        %v2930 = vunpack.c.0.s8 %v2929
        %v2931 = vlaneseq
        %v2932 = vshrl.u32 %v2931, 7
        %v2933 = vsub.s32 %v2930, %v2932
        %v2934 = vrot.slane %v2926, %v2933
        %v2936 = vunpack.c.l.s4 1983009808
        %v2937 = vunpack.c.0.s8 %v2936
        %v2938 = vlaneseq
        %v2939 = vshrl.u32 %v2938, 7
        %v2940 = vsub.s32 %v2937, %v2939
        %v2941 = vrot.slane %v2927, %v2940
        %v2942 = vcombine.low %v2934, %v2941
        %v2943 = vcombine.low %v2520, %v2521
        %v2944 = vcombine.low %v2522, %v2523
        %v2946 = vunpack.c.l.s4 1983009808
        %v2947 = vunpack.c.0.s8 %v2946
        %v2948 = vlaneseq
        %v2949 = vshrl.u32 %v2948, 7
        %v2950 = vsub.s32 %v2947, %v2949
        %v2951 = vrot.slane %v2943, %v2950
        %v2953 = vunpack.c.l.s4 1983009808
        %v2954 = vunpack.c.0.s8 %v2953
        %v2955 = vlaneseq
        %v2956 = vshrl.u32 %v2955, 7
        %v2957 = vsub.s32 %v2954, %v2956
        %v2958 = vrot.slane %v2944, %v2957
        %v2959 = vcombine.low %v2951, %v2958
        %v2960 = vcombine.low %v2524, %v2525
        %v2961 = vcombine.low %v2526, %v2527
        %v2963 = vunpack.c.l.s4 1983009808
        %v2964 = vunpack.c.0.s8 %v2963
        %v2965 = vlaneseq
        %v2966 = vshrl.u32 %v2965, 7
        %v2967 = vsub.s32 %v2964, %v2966
        %v2968 = vrot.slane %v2960, %v2967
        %v2970 = vunpack.c.l.s4 1983009808
        %v2971 = vunpack.c.0.s8 %v2970
        %v2972 = vlaneseq
        %v2973 = vshrl.u32 %v2972, 7
        %v2974 = vsub.s32 %v2971, %v2973
        %v2975 = vrot.slane %v2961, %v2974
        %v2976 = vcombine.low %v2968, %v2975
        %v2977 = vcombine.low %v2528, %v2529
        %v2978 = vcombine.low %v2530, %v2531
        %v2980 = vunpack.c.l.s4 1983009808
        %v2981 = vunpack.c.0.s8 %v2980
        %v2982 = vlaneseq
        %v2983 = vshrl.u32 %v2982, 7
        %v2984 = vsub.s32 %v2981, %v2983
        %v2985 = vrot.slane %v2977, %v2984
        %v2987 = vunpack.c.l.s4 1983009808
        %v2988 = vunpack.c.0.s8 %v2987
        %v2989 = vlaneseq
        %v2990 = vshrl.u32 %v2989, 7
        %v2991 = vsub.s32 %v2988, %v2990
        %v2992 = vrot.slane %v2978, %v2991
        %v2993 = vcombine.low %v2985, %v2992
        %v2994 = vcombine.low %v2532, %v2533
        %v2995 = vcombine.low %v2534, %v2535
        %v2997 = vunpack.c.l.s4 1983009808
        %v2998 = vunpack.c.0.s8 %v2997
        %v2999 = vlaneseq
        %v3000 = vshrl.u32 %v2999, 7
        %v3001 = vsub.s32 %v2998, %v3000
        %v3002 = vrot.slane %v2994, %v3001
        %v3004 = vunpack.c.l.s4 1983009808
        %v3005 = vunpack.c.0.s8 %v3004
        %v3006 = vlaneseq
        %v3007 = vshrl.u32 %v3006, 7
        %v3008 = vsub.s32 %v3005, %v3007
        %v3009 = vrot.slane %v2995, %v3008
        %v3010 = vcombine.low %v3002, %v3009
        %v3011 = vcombine.low %v2536, %v2537
        %v3012 = vcombine.low %v2538, %v2539
        %v3014 = vunpack.c.l.s4 1983009808
        %v3015 = vunpack.c.0.s8 %v3014
        %v3016 = vlaneseq
        %v3017 = vshrl.u32 %v3016, 7
        %v3018 = vsub.s32 %v3015, %v3017
        %v3019 = vrot.slane %v3011, %v3018
        %v3021 = vunpack.c.l.s4 1983009808
        %v3022 = vunpack.c.0.s8 %v3021
        %v3023 = vlaneseq
        %v3024 = vshrl.u32 %v3023, 7
        %v3025 = vsub.s32 %v3022, %v3024
        %v3026 = vrot.slane %v3012, %v3025
        %v3027 = vcombine.low %v3019, %v3026
        %v3028 = vcombine.low %v2540, %v2541
        %v3029 = vcombine.low %v2542, %v2543
        %v3031 = vunpack.c.l.s4 1983009808
        %v3032 = vunpack.c.0.s8 %v3031
        %v3033 = vlaneseq
        %v3034 = vshrl.u32 %v3033, 7
        %v3035 = vsub.s32 %v3032, %v3034
        %v3036 = vrot.slane %v3028, %v3035
        %v3038 = vunpack.c.l.s4 1983009808
        %v3039 = vunpack.c.0.s8 %v3038
        %v3040 = vlaneseq
        %v3041 = vshrl.u32 %v3040, 7
        %v3042 = vsub.s32 %v3039, %v3041
        %v3043 = vrot.slane %v3029, %v3042
        %v3044 = vcombine.low %v3036, %v3043
        %v3045 = vcombine.low %v2544, %v2545
        %v3046 = vcombine.low %v2546, %v2547
        %v3048 = vunpack.c.l.s4 1983009808
        %v3049 = vunpack.c.0.s8 %v3048
        %v3050 = vlaneseq
        %v3051 = vshrl.u32 %v3050, 7
        %v3052 = vsub.s32 %v3049, %v3051
        %v3053 = vrot.slane %v3045, %v3052
        %v3055 = vunpack.c.l.s4 1983009808
        %v3056 = vunpack.c.0.s8 %v3055
        %v3057 = vlaneseq
        %v3058 = vshrl.u32 %v3057, 7
        %v3059 = vsub.s32 %v3056, %v3058
        %v3060 = vrot.slane %v3046, %v3059
        %v3061 = vcombine.low %v3053, %v3060
        %v3062 = vcombine.low %v2548, %v2549
        %v3063 = vcombine.low %v2550, %v2551
        %v3065 = vunpack.c.l.s4 1983009808
        %v3066 = vunpack.c.0.s8 %v3065
        %v3067 = vlaneseq
        %v3068 = vshrl.u32 %v3067, 7
        %v3069 = vsub.s32 %v3066, %v3068
        %v3070 = vrot.slane %v3062, %v3069
        %v3072 = vunpack.c.l.s4 1983009808
        %v3073 = vunpack.c.0.s8 %v3072
        %v3074 = vlaneseq
        %v3075 = vshrl.u32 %v3074, 7
        %v3076 = vsub.s32 %v3073, %v3075
        %v3077 = vrot.slane %v3063, %v3076
        %v3078 = vcombine.low %v3070, %v3077
        %v3079 = vcombine.low %v2552, %v2553
        %v3080 = vcombine.low %v2554, %v2555
        %v3082 = vunpack.c.l.s4 1983009808
        %v3083 = vunpack.c.0.s8 %v3082
        %v3084 = vlaneseq
        %v3085 = vshrl.u32 %v3084, 7
        %v3086 = vsub.s32 %v3083, %v3085
        %v3087 = vrot.slane %v3079, %v3086
        %v3089 = vunpack.c.l.s4 1983009808
        %v3090 = vunpack.c.0.s8 %v3089
        %v3091 = vlaneseq
        %v3092 = vshrl.u32 %v3091, 7
        %v3093 = vsub.s32 %v3090, %v3092
        %v3094 = vrot.slane %v3080, %v3093
        %v3095 = vcombine.low %v3087, %v3094
        %v3096 = vrot.slane %v2772, 7
        %v3097 = vrot.slane %v2789, 7
        %v3098 = vsel %vm824, %v3096, %v3097
        %v3099 = vrot.slane %v2806, 7
        %v3100 = vrot.slane %v2823, 7
        %v3101 = vsel %vm824, %v3099, %v3100
        %v3102 = vrot.slane %v2840, 7
        %v3103 = vrot.slane %v2857, 7
        %v3104 = vsel %vm824, %v3102, %v3103
        %v3105 = vrot.slane %v2874, 7
        %v3106 = vrot.slane %v2891, 7
        %v3107 = vsel %vm824, %v3105, %v3106
        %v3108 = vrot.slane %v2908, 7
        %v3109 = vrot.slane %v2925, 7
        %v3110 = vsel %vm824, %v3108, %v3109
        %v3111 = vrot.slane %v2942, 7
        %v3112 = vrot.slane %v2959, 7
        %v3113 = vsel %vm824, %v3111, %v3112
        %v3114 = vrot.slane %v2976, 7
        %v3115 = vrot.slane %v2993, 7
        %v3116 = vsel %vm824, %v3114, %v3115
        %v3117 = vrot.slane %v3010, 7
        %v3118 = vrot.slane %v3027, 7
        %v3119 = vsel %vm824, %v3117, %v3118
        %v3120 = vrot.slane %v3044, 7
        %v3121 = vrot.slane %v3061, 7
        %v3122 = vsel %vm824, %v3120, %v3121
        %v3123 = vrot.slane %v3078, 7
        %v3124 = vrot.slane %v3095, 7
        %v3125 = vsel %vm824, %v3123, %v3124
        %v3156 = vsel %vm824, 0.0, %v3096
        %v3157 = vsel %vm824, 0.0, %v3099
        %v3158 = vsel %vm824, 0.0, %v3102
        %v3159 = vsel %vm824, 0.0, %v3105
        %v3160 = vsel %vm824, 0.0, %v3108
        %v3161 = vsel %vm824, 0.0, %v3111
        %v3162 = vsel %vm824, 0.0, %v3114
        %v3163 = vsel %vm824, 0.0, %v3117
        %v3164 = vsel %vm824, 0.0, %v3120
        %v3165 = vsel %vm824, 0.0, %v3123
        %v3166 = vsel %vm824, %v3097, 0.0
        %v3167 = vsel %vm824, %v3100, 0.0
        %v3168 = vsel %vm824, %v3103, 0.0
        %v3169 = vsel %vm824, %v3106, 0.0
        %v3170 = vsel %vm824, %v3109, 0.0
        %v3171 = vsel %vm824, %v3112, 0.0
        %v3172 = vsel %vm824, %v3115, 0.0
        %v3173 = vsel %vm824, %v3118, 0.0
        %v3174 = vsel %vm824, %v3121, 0.0
        %v3175 = vsel %vm824, %v3124, 0.0
        %v3176 = vpack.c.bf16 %v3098, %v3156
        %v3177 = vpack.c.bf16 %v3166, %v3166
        %v3178 = vpack.c.bf16 %v3101, %v3157
        %v3179 = vpack.c.bf16 %v3167, %v3167
        %v3180 = vpack.c.bf16 %v3104, %v3158
        %v3181 = vpack.c.bf16 %v3168, %v3168
        %v3182 = vpack.c.bf16 %v3107, %v3159
        %v3183 = vpack.c.bf16 %v3169, %v3169
        %v3184 = vpack.c.bf16 %v3110, %v3160
        %v3185 = vpack.c.bf16 %v3170, %v3170
        %v3186 = vpack.c.bf16 %v3113, %v3161
        %v3187 = vpack.c.bf16 %v3171, %v3171
        %v3188 = vpack.c.bf16 %v3116, %v3162
        %v3189 = vpack.c.bf16 %v3172, %v3172
        %v3190 = vpack.c.bf16 %v3119, %v3163
        %v3191 = vpack.c.bf16 %v3173, %v3173
        %v3192 = vpack.c.bf16 %v3122, %v3164
        %v3193 = vpack.c.bf16 %v3174, %v3174
        %v3194 = vpack.c.bf16 %v3125, %v3165
        %v3195 = vpack.c.bf16 %v3175, %v3175
        %3196 = vst [vmem:[#allocation2] sm:$0xff] 0.0
        %3197 = vst [vmem:[#allocation2 + $0x8] sm:$0xff] 0.0
        %3198 = vst [vmem:[#allocation2 + $0x10] sm:$0xff] 0.0
        %3199 = vst [vmem:[#allocation2 + $0x18] sm:$0xff] 0.0
        %3200 = vst [vmem:[#allocation2 + $0x20] sm:$0xff] 0.0
        %3201 = vst [vmem:[#allocation2 + $0x28] sm:$0xff] 0.0
        %3202 = vst [vmem:[#allocation2 + $0x30] sm:$0xff] 0.0
        %3203 = vst [vmem:[#allocation2 + $0x38] sm:$0xff] 0.0
        %3204 = vst [vmem:[#allocation2 + $0x40] sm:$0xff] 0.0
        %3205 = vst [vmem:[#allocation2 + $0x48] sm:$0xff] 0.0
        %3206 = vst [vmem:[#allocation2 + $0x50] sm:$0xff] 0.0
        %3207 = vst [vmem:[#allocation2 + $0x58] sm:$0xff] 0.0
        %3208 = vst [vmem:[#allocation2 + $0x60] sm:$0xff] 0.0
        %3209 = vst [vmem:[#allocation2 + $0x68] sm:$0xff] 0.0
        %3210 = vst [vmem:[#allocation2 + $0x70] sm:$0xff] 0.0
        %3211 = vst [vmem:[#allocation2 + $0x78] sm:$0xff] 0.0
        %vm3212 = vsmask.f32 7424
        %v3214 = vshrl.u32 %v2656, 16
        %v3216 = vshll.u32 %v2656, 16
        %v3218 = vrot.slane %v3216, 1
        %v3219 = vor.u32 %v3214, %v3218
        %v3221 = vshll.u32 %v2657, 16
        %v3223 = vrot.slane %v3221, 1
        %v3224 = vsel %vm3212, %v3219, %v3223
        %v3226 = vshrl.u32 %v2658, 16
        %v3228 = vshll.u32 %v2658, 16
        %v3230 = vrot.slane %v3228, 1
        %v3231 = vor.u32 %v3226, %v3230
        %v3233 = vshll.u32 %v2659, 16
        %v3235 = vrot.slane %v3233, 1
        %v3236 = vsel %vm3212, %v3231, %v3235
        %v3238 = vshrl.u32 %v2660, 16
        %v3240 = vshll.u32 %v2660, 16
        %v3242 = vrot.slane %v3240, 1
        %v3243 = vor.u32 %v3238, %v3242
        %v3245 = vshll.u32 %v2661, 16
        %v3247 = vrot.slane %v3245, 1
        %v3248 = vsel %vm3212, %v3243, %v3247
        %v3250 = vshrl.u32 %v2662, 16
        %v3252 = vshll.u32 %v2662, 16
        %v3254 = vrot.slane %v3252, 1
        %v3255 = vor.u32 %v3250, %v3254
        %v3257 = vshll.u32 %v2663, 16
        %v3259 = vrot.slane %v3257, 1
        %v3260 = vsel %vm3212, %v3255, %v3259
        %v3262 = vshrl.u32 %v2664, 16
        %v3264 = vshll.u32 %v2664, 16
        %v3266 = vrot.slane %v3264, 1
        %v3267 = vor.u32 %v3262, %v3266
        %v3269 = vshll.u32 %v2665, 16
        %v3271 = vrot.slane %v3269, 1
        %v3272 = vsel %vm3212, %v3267, %v3271
        %v3274 = vshrl.u32 %v2666, 16
        %v3276 = vshll.u32 %v2666, 16
        %v3278 = vrot.slane %v3276, 1
        %v3279 = vor.u32 %v3274, %v3278
        %v3281 = vshll.u32 %v2667, 16
        %v3283 = vrot.slane %v3281, 1
        %v3284 = vsel %vm3212, %v3279, %v3283
        %v3286 = vshrl.u32 %v2668, 16
        %v3288 = vshll.u32 %v2668, 16
        %v3290 = vrot.slane %v3288, 1
        %v3291 = vor.u32 %v3286, %v3290
        %v3293 = vshll.u32 %v2669, 16
        %v3295 = vrot.slane %v3293, 1
        %v3296 = vsel %vm3212, %v3291, %v3295
        %v3298 = vshrl.u32 %v2670, 16
        %v3300 = vshll.u32 %v2670, 16
        %v3302 = vrot.slane %v3300, 1
        %v3303 = vor.u32 %v3298, %v3302
        %v3305 = vshll.u32 %v2671, 16
        %v3307 = vrot.slane %v3305, 1
        %v3308 = vsel %vm3212, %v3303, %v3307
        %vm3333 = vcmask 1046528
        %v3334 = vrot.slane %v2656, 1
        %v3335 = vrot.slane %v2657, 1
        %v3336 = vsel %vm3333, %v3334, %v3335
        %v3337 = vrot.slane %v2658, 1
        %v3338 = vrot.slane %v2659, 1
        %v3339 = vsel %vm3333, %v3337, %v3338
        %v3340 = vrot.slane %v2660, 1
        %v3341 = vrot.slane %v2661, 1
        %v3342 = vsel %vm3333, %v3340, %v3341
        %v3343 = vrot.slane %v2662, 1
        %v3344 = vrot.slane %v2663, 1
        %v3345 = vsel %vm3333, %v3343, %v3344
        %v3346 = vrot.slane %v2664, 1
        %v3347 = vrot.slane %v2665, 1
        %v3348 = vsel %vm3333, %v3346, %v3347
        %v3349 = vrot.slane %v2666, 1
        %v3350 = vrot.slane %v2667, 1
        %v3351 = vsel %vm3333, %v3349, %v3350
        %v3352 = vrot.slane %v2668, 1
        %v3353 = vrot.slane %v2669, 1
        %v3354 = vsel %vm3333, %v3352, %v3353
        %v3355 = vrot.slane %v2670, 1
        %v3356 = vrot.slane %v2671, 1
        %v3357 = vsel %vm3333, %v3355, %v3356
        %v3366 = vld [vmem:[#allocation2] sm:$0xff]
        %v3367 = vld [vmem:[#allocation2 + $0x8] sm:$0xff]
        %v3368 = vld [vmem:[#allocation2 + $0x10] sm:$0xff]
        %v3369 = vld [vmem:[#allocation2 + $0x18] sm:$0xff]
        %v3370 = vld [vmem:[#allocation2 + $0x20] sm:$0xff]
        %v3371 = vld [vmem:[#allocation2 + $0x28] sm:$0xff]
        %v3372 = vld [vmem:[#allocation2 + $0x30] sm:$0xff]
        %v3373 = vld [vmem:[#allocation2 + $0x38] sm:$0xff]
        %v3374 = vld [vmem:[#allocation2 + $0x40] sm:$0xff]
        %v3375 = vld [vmem:[#allocation2 + $0x48] sm:$0xff]
        %v3376 = vld [vmem:[#allocation2 + $0x50] sm:$0xff]
        %v3377 = vld [vmem:[#allocation2 + $0x58] sm:$0xff]
        %v3378 = vld [vmem:[#allocation2 + $0x60] sm:$0xff]
        %v3379 = vld [vmem:[#allocation2 + $0x68] sm:$0xff]
        %v3380 = vld [vmem:[#allocation2 + $0x70] sm:$0xff]
        %v3381 = vld [vmem:[#allocation2 + $0x78] sm:$0xff]
        %v3382 = vld [vmem:[#allocation13] sm:$0xf]
        %v3383 = vld [vmem:[#allocation13 + $0x4] sm:$0xf]
        %v3384 = vld [vmem:[#allocation13 + $0x8] sm:$0xf]
        %v3385 = vld [vmem:[#allocation13 + $0xc] sm:$0xf]
        %v3386 = vld [vmem:[#allocation13 + $0x10] sm:$0xf]
        %v3387 = vld [vmem:[#allocation13 + $0x14] sm:$0xf]
        %v3388 = vld [vmem:[#allocation13 + $0x18] sm:$0xf]
        %v3389 = vld [vmem:[#allocation13 + $0x1c] sm:$0xf]
        %v3390 = vld [vmem:[#allocation13 + $0x20] sm:$0xf]
        %v3391 = vld [vmem:[#allocation13 + $0x24] sm:$0xf]
        %v3392 = vld [vmem:[#allocation13 + $0x28] sm:$0xf]
        %v3393 = vld [vmem:[#allocation13 + $0x2c] sm:$0xf]
        %v3394 = vld [vmem:[#allocation13 + $0x30] sm:$0xf]
        %v3395 = vld [vmem:[#allocation13 + $0x34] sm:$0xf]
        %v3396 = vld [vmem:[#allocation13 + $0x38] sm:$0xf]
        %v3397 = vld [vmem:[#allocation13 + $0x3c] sm:$0xf]
        %v3398 = vld [vmem:[#allocation13 + $0x40] sm:$0xf]
        %v3399 = vld [vmem:[#allocation13 + $0x44] sm:$0xf]
        %v3400 = vld [vmem:[#allocation13 + $0x48] sm:$0xf]
        %v3401 = vld [vmem:[#allocation13 + $0x4c] sm:$0xf]
        %v3402 = vld [vmem:[#allocation13 + $0x50] sm:$0xf]
        %v3403 = vld [vmem:[#allocation13 + $0x54] sm:$0xf]
        %v3404 = vld [vmem:[#allocation13 + $0x58] sm:$0xf]
        %v3405 = vld [vmem:[#allocation13 + $0x5c] sm:$0xf]
        %v3406 = vld [vmem:[#allocation13 + $0x60] sm:$0xf]
        %v3407 = vld [vmem:[#allocation13 + $0x64] sm:$0xf]
        %v3408 = vld [vmem:[#allocation13 + $0x68] sm:$0xf]
        %v3409 = vld [vmem:[#allocation13 + $0x6c] sm:$0xf]
        %v3410 = vld [vmem:[#allocation13 + $0x70] sm:$0xf]
        %v3411 = vld [vmem:[#allocation13 + $0x74] sm:$0xf]
        %v3412 = vld [vmem:[#allocation13 + $0x78] sm:$0xf]
        %v3413 = vld [vmem:[#allocation13 + $0x7c] sm:$0xf]
        %v3414 = vld [vmem:[#allocation13 + $0x80] sm:$0xf]
        %v3415 = vld [vmem:[#allocation13 + $0x84] sm:$0xf]
        %v3416 = vld [vmem:[#allocation13 + $0x88] sm:$0xf]
        %v3417 = vld [vmem:[#allocation13 + $0x8c] sm:$0xf]
        %v3418 = vld [vmem:[#allocation13 + $0x90] sm:$0xf]
        %v3419 = vld [vmem:[#allocation13 + $0x94] sm:$0xf]
        %v3420 = vld [vmem:[#allocation13 + $0x98] sm:$0xf]
        %v3421 = vld [vmem:[#allocation13 + $0x9c] sm:$0xf]
        %v3422 = vld [vmem:[#allocation13 + $0xa0] sm:$0xf]
        %v3423 = vld [vmem:[#allocation13 + $0xa4] sm:$0xf]
        %v3424 = vld [vmem:[#allocation13 + $0xa8] sm:$0xf]
        %v3425 = vld [vmem:[#allocation13 + $0xac] sm:$0xf]
        %v3426 = vld [vmem:[#allocation13 + $0xb0] sm:$0xf]
        %v3427 = vld [vmem:[#allocation13 + $0xb4] sm:$0xf]
        %v3428 = vld [vmem:[#allocation13 + $0xb8] sm:$0xf]
        %v3429 = vld [vmem:[#allocation13 + $0xbc] sm:$0xf]
        %v3478 = vunpack.c.l.b16 %v3382
        %v3479 = vunpack.c.l.b16 %v3383
        %v3480 = vunpack.c.l.b16 %v3384
        %v3481 = vunpack.c.l.b16 %v3385
        %v3482 = vunpack.c.l.b16 %v3386
        %v3483 = vunpack.c.l.b16 %v3387
        %v3484 = vunpack.c.l.b16 %v3388
        %v3485 = vunpack.c.l.b16 %v3389
        %v3486 = vunpack.c.l.b16 %v3390
        %v3487 = vunpack.c.l.b16 %v3391
        %v3488 = vunpack.c.l.b16 %v3392
        %v3489 = vunpack.c.l.b16 %v3393
        %v3490 = vunpack.c.l.b16 %v3394
        %v3491 = vunpack.c.l.b16 %v3395
        %v3492 = vunpack.c.l.b16 %v3396
        %v3493 = vunpack.c.l.b16 %v3397
        %v3494 = vunpack.c.l.b16 %v3398
        %v3495 = vunpack.c.l.b16 %v3399
        %v3496 = vunpack.c.l.b16 %v3400
        %v3497 = vunpack.c.l.b16 %v3401
        %v3498 = vunpack.c.l.b16 %v3402
        %v3499 = vunpack.c.l.b16 %v3403
        %v3500 = vunpack.c.l.b16 %v3404
        %v3501 = vunpack.c.l.b16 %v3405
        %v3502 = vunpack.c.l.b16 %v3406
        %v3503 = vunpack.c.l.b16 %v3407
        %v3504 = vunpack.c.l.b16 %v3408
        %v3505 = vunpack.c.l.b16 %v3409
        %v3506 = vunpack.c.l.b16 %v3410
        %v3507 = vunpack.c.l.b16 %v3411
        %v3508 = vunpack.c.l.b16 %v3412
        %v3509 = vunpack.c.l.b16 %v3413
        %v3510 = vunpack.c.l.b16 %v3414
        %v3511 = vunpack.c.l.b16 %v3415
        %v3512 = vunpack.c.l.b16 %v3416
        %v3513 = vunpack.c.l.b16 %v3417
        %v3514 = vunpack.c.l.b16 %v3418
        %v3515 = vunpack.c.l.b16 %v3419
        %v3516 = vunpack.c.l.b16 %v3420
        %v3517 = vunpack.c.l.b16 %v3421
        %v3518 = vunpack.c.l.b16 %v3422
        %v3519 = vunpack.c.l.b16 %v3423
        %v3520 = vunpack.c.l.b16 %v3424
        %v3521 = vunpack.c.l.b16 %v3425
        %v3522 = vunpack.c.l.b16 %v3426
        %v3523 = vunpack.c.l.b16 %v3427
        %v3524 = vunpack.c.l.b16 %v3428
        %v3525 = vunpack.c.l.b16 %v3429
        %v3526 = vpack.c.b16 %v3479, %v3478
        %v3527 = vpack.c.b16 %v3481, %v3480
        %v3528 = vpack.c.b16 %v3483, %v3482
        %v3529 = vpack.c.b16 %v3485, %v3484
        %v3530 = vpack.c.b16 %v3487, %v3486
        %v3531 = vpack.c.b16 %v3489, %v3488
        %v3532 = vpack.c.b16 %v3491, %v3490
        %v3533 = vpack.c.b16 %v3493, %v3492
        %v3534 = vpack.c.b16 %v3495, %v3494
        %v3535 = vpack.c.b16 %v3497, %v3496
        %v3536 = vpack.c.b16 %v3499, %v3498
        %v3537 = vpack.c.b16 %v3501, %v3500
        %v3538 = vpack.c.b16 %v3503, %v3502
        %v3539 = vpack.c.b16 %v3505, %v3504
        %v3540 = vpack.c.b16 %v3507, %v3506
        %v3541 = vpack.c.b16 %v3509, %v3508
        %v3542 = vpack.c.b16 %v3511, %v3510
        %v3543 = vpack.c.b16 %v3513, %v3512
        %v3544 = vpack.c.b16 %v3515, %v3514
        %v3545 = vpack.c.b16 %v3517, %v3516
        %v3546 = vpack.c.b16 %v3519, %v3518
        %v3547 = vpack.c.b16 %v3521, %v3520
        %v3548 = vpack.c.b16 %v3523, %v3522
        %v3549 = vpack.c.b16 %v3525, %v3524
        %3574 = vmatprep.subr.bf16.mxu0 0
        %3575 = vmatpush1.bf16.msra.mxu0 %v3526
        %3576 = vmatprep.subr.bf16.mxu0 0
        %3577 = vmatpush1.bf16.msra.mxu0 %v3527
        %3578 = vmatprep.subr.bf16.mxu0 0
        %3579 = vmatpush1.bf16.msra.mxu0 %v3528
        %3580 = vmatprep.subr.bf16.mxu0 0
        %3581 = vmatpush1.bf16.msra.mxu0 %v3529
        %3582 = vmatprep.subr.bf16.mxu0 0
        %3583 = vmatpush1.bf16.msra.mxu0 %v3530
        %3584 = vmatprep.subr.bf16.mxu0 0
        %3585 = vmatpush1.bf16.msra.mxu0 %v3531
        %3586 = vmatprep.subr.bf16.mxu0 0
        %3587 = vmatpush1.bf16.msra.mxu0 %v3532
        %3588 = vmatprep.subr.bf16.mxu0 0
        %3589 = vmatpush1.bf16.msra.mxu0 %v3533
        %3590 = vmatprep.subr.bf16.mxu0 0
        %3591 = vmatpush1.bf16.msra.mxu0 %v3534
        %3592 = vmatprep.subr.bf16.mxu0 0
        %3593 = vmatpush1.bf16.msra.mxu0 %v3535
        %3594 = vmatprep.subr.bf16.mxu0 0
        %3595 = vmatpush1.bf16.msra.mxu0 %v3536
        %3596 = vmatprep.subr.bf16.mxu0 0
        %3597 = vmatpush1.bf16.msra.mxu0 %v3537
        %3598 = vmatprep.subr.bf16.mxu0 0
        %3599 = vmatpush1.bf16.msra.mxu0 %v3538
        %3600 = vmatprep.subr.bf16.mxu0 0
        %3601 = vmatpush1.bf16.msra.mxu0 %v3539
        %3602 = vmatprep.subr.bf16.mxu0 0
        %3603 = vmatpush1.bf16.msra.mxu0 %v3540
        %3604 = vmatprep.subr.bf16.mxu0 0
        %3605 = vmatpush1.bf16.msra.mxu0 %v3541
        %3606 = vmatprep.mubr.bf16.mxu0 %v3224
        %3607 = vmatmul.mubr.bf16.gmra.mrb[0].mxu0 %v2656
        %v3608 = vpop.f32.mrb[0].mxu0
        %v3609 = vadd.f32 0.0, %v3608
        %v3610 = vpop.f32.mrb[0].mxu0
        %v3611 = vpop.f32.mrb[0].mxu0
        %v3612 = vadd.f32 0.0, %v3611
        %v3613 = vpop.f32.mrb[0].mxu0
        %3614 = vmatprep.mubr.bf16.mxu0 %v3236
        %3615 = vmatmul.mubr.bf16.gmra.mrb[0].mxu0 %v2658
        %v3616 = vpop.f32.mrb[0].mxu0
        %v3617 = vadd.f32 0.0, %v3616
        %v3618 = vpop.f32.mrb[0].mxu0
        %v3619 = vpop.f32.mrb[0].mxu0
        %v3620 = vadd.f32 0.0, %v3619
        %v3621 = vpop.f32.mrb[0].mxu0
        %3622 = vmatprep.mubr.bf16.mxu0 %v3248
        %3623 = vmatmul.mubr.bf16.gmra.mrb[0].mxu0 %v2660
        %v3624 = vpop.f32.mrb[0].mxu0
        %v3625 = vadd.f32 0.0, %v3624
        %v3626 = vpop.f32.mrb[0].mxu0
        %v3627 = vpop.f32.mrb[0].mxu0
        %v3628 = vadd.f32 0.0, %v3627
        %v3629 = vpop.f32.mrb[0].mxu0
        %3630 = vmatprep.mubr.bf16.mxu0 %v3260
        %3631 = vmatmul.mubr.bf16.gmra.mrb[0].mxu0 %v2662
        %v3632 = vpop.f32.mrb[0].mxu0
        %v3633 = vadd.f32 0.0, %v3632
        %v3634 = vpop.f32.mrb[0].mxu0
        %v3635 = vpop.f32.mrb[0].mxu0
        %v3636 = vadd.f32 0.0, %v3635
        %v3637 = vpop.f32.mrb[0].mxu0
        %3638 = vmatprep.mubr.bf16.mxu0 %v3272
        %3639 = vmatmul.mubr.bf16.gmra.mrb[0].mxu0 %v2664
        %v3640 = vpop.f32.mrb[0].mxu0
        %v3641 = vadd.f32 0.0, %v3640
        %v3642 = vpop.f32.mrb[0].mxu0
        %v3643 = vpop.f32.mrb[0].mxu0
        %v3644 = vadd.f32 0.0, %v3643
        %v3645 = vpop.f32.mrb[0].mxu0
        %3646 = vmatprep.mubr.bf16.mxu0 %v3284
        %3647 = vmatmul.mubr.bf16.gmra.mrb[0].mxu0 %v2666
        %v3648 = vpop.f32.mrb[0].mxu0
        %v3649 = vadd.f32 0.0, %v3648
        %v3650 = vpop.f32.mrb[0].mxu0
        %v3651 = vpop.f32.mrb[0].mxu0
        %v3652 = vadd.f32 0.0, %v3651
        %v3653 = vpop.f32.mrb[0].mxu0
        %3654 = vmatprep.mubr.bf16.mxu0 %v3296
        %3655 = vmatmul.mubr.bf16.gmra.mrb[0].mxu0 %v2668
        %v3656 = vpop.f32.mrb[0].mxu0
        %v3657 = vadd.f32 0.0, %v3656
        %v3658 = vpop.f32.mrb[0].mxu0
        %v3659 = vpop.f32.mrb[0].mxu0
        %v3660 = vadd.f32 0.0, %v3659
        %v3661 = vpop.f32.mrb[0].mxu0
        %3662 = vmatprep.mubr.bf16.mxu0 %v3308
        %3663 = vmatmul.mubr.bf16.gmra.mrb[0].mxu0 %v2670
        %v3664 = vpop.f32.mrb[0].mxu0
        %v3665 = vadd.f32 0.0, %v3664
        %v3666 = vpop.f32.mrb[0].mxu0
        %v3667 = vpop.f32.mrb[0].mxu0
        %v3668 = vadd.f32 0.0, %v3667
        %v3669 = vpop.f32.mrb[0].mxu0
        %3670 = vdwg.mxu0
        %3671 = vmatprep.subr.bf16.mxu0 0
        %3672 = vmatpush1.bf16.msra.mxu0 %v3542
        %3673 = vmatprep.subr.bf16.mxu0 0
        %3674 = vmatpush1.bf16.msra.mxu0 %v3543
        %3675 = vmatprep.subr.bf16.mxu0 0
        %3676 = vmatpush1.bf16.msra.mxu0 %v3544
        %3677 = vmatprep.subr.bf16.mxu0 0
        %3678 = vmatpush1.bf16.msra.mxu0 %v3545
        %3679 = vmatprep.subr.bf16.mxu0 0
        %3680 = vmatpush1.bf16.msra.mxu0 %v3546
        %3681 = vmatprep.subr.bf16.mxu0 0
        %3682 = vmatpush1.bf16.msra.mxu0 %v3547
        %3683 = vmatprep.subr.bf16.mxu0 0
        %3684 = vmatpush1.bf16.msra.mxu0 %v3548
        %3685 = vmatprep.subr.bf16.mxu0 0
        %3686 = vmatpush1.bf16.msra.mxu0 %v3549
        %3687 = vmatprep.subr.bf16.mxu0 0
        %3688 = vmatpush1.bf16.msra.mxu0 0
        %3689 = vmatprep.subr.bf16.mxu0 0
        %3690 = vmatpush1.bf16.msra.mxu0 0
        %3691 = vmatprep.subr.bf16.mxu0 0
        %3692 = vmatpush1.bf16.msra.mxu0 0
        %3693 = vmatprep.subr.bf16.mxu0 0
        %3694 = vmatpush1.bf16.msra.mxu0 0
        %3695 = vmatprep.subr.bf16.mxu0 0
        %3696 = vmatpush1.bf16.msra.mxu0 0
        %3697 = vmatprep.subr.bf16.mxu0 0
        %3698 = vmatpush1.bf16.msra.mxu0 0
        %3699 = vmatprep.subr.bf16.mxu0 0
        %3700 = vmatpush1.bf16.msra.mxu0 0
        %3701 = vmatprep.subr.bf16.mxu0 0
        %3702 = vmatpush1.bf16.msra.mxu0 0
        %3703 = vmatprep.mubr.bf16.mxu0 0
        %3704 = vmatmul.mubr.bf16.gmra.mrb[0].mxu0 %v3336
        %v3705 = vpop.f32.mrb[0].mxu0
        %v3706 = vadd.f32 %v3609, %v3705
        %v3707 = vpop.f32.mrb[0].mxu0
        %v3708 = vpop.f32.mrb[0].mxu0
        %v3709 = vadd.f32 %v3612, %v3708
        %v3710 = vpop.f32.mrb[0].mxu0
        %3711 = vmatprep.mubr.bf16.mxu0 0
        %3712 = vmatmul.mubr.bf16.gmra.mrb[0].mxu0 %v3339
        %v3713 = vpop.f32.mrb[0].mxu0
        %v3714 = vadd.f32 %v3617, %v3713
        %v3715 = vpop.f32.mrb[0].mxu0
        %v3716 = vpop.f32.mrb[0].mxu0
        %v3717 = vadd.f32 %v3620, %v3716
        %v3718 = vpop.f32.mrb[0].mxu0
        %3719 = vmatprep.mubr.bf16.mxu0 0
        %3720 = vmatmul.mubr.bf16.gmra.mrb[0].mxu0 %v3342
        %v3721 = vpop.f32.mrb[0].mxu0
        %v3722 = vadd.f32 %v3625, %v3721
        %v3723 = vpop.f32.mrb[0].mxu0
        %v3724 = vpop.f32.mrb[0].mxu0
        %v3725 = vadd.f32 %v3628, %v3724
        %v3726 = vpop.f32.mrb[0].mxu0
        %3727 = vmatprep.mubr.bf16.mxu0 0
        %3728 = vmatmul.mubr.bf16.gmra.mrb[0].mxu0 %v3345
        %v3729 = vpop.f32.mrb[0].mxu0
        %v3730 = vadd.f32 %v3633, %v3729
        %v3731 = vpop.f32.mrb[0].mxu0
        %v3732 = vpop.f32.mrb[0].mxu0
        %v3733 = vadd.f32 %v3636, %v3732
        %v3734 = vpop.f32.mrb[0].mxu0
        %3735 = vmatprep.mubr.bf16.mxu0 0
        %3736 = vmatmul.mubr.bf16.gmra.mrb[0].mxu0 %v3348
        %v3737 = vpop.f32.mrb[0].mxu0
        %v3738 = vadd.f32 %v3641, %v3737
        %v3739 = vpop.f32.mrb[0].mxu0
        %v3740 = vpop.f32.mrb[0].mxu0
        %v3741 = vadd.f32 %v3644, %v3740
        %v3742 = vpop.f32.mrb[0].mxu0
        %3743 = vmatprep.mubr.bf16.mxu0 0
        %3744 = vmatmul.mubr.bf16.gmra.mrb[0].mxu0 %v3351
        %v3745 = vpop.f32.mrb[0].mxu0
        %v3746 = vadd.f32 %v3649, %v3745
        %v3747 = vpop.f32.mrb[0].mxu0
        %v3748 = vpop.f32.mrb[0].mxu0
        %v3749 = vadd.f32 %v3652, %v3748
        %v3750 = vpop.f32.mrb[0].mxu0
        %3751 = vmatprep.mubr.bf16.mxu0 0
        %3752 = vmatmul.mubr.bf16.gmra.mrb[0].mxu0 %v3354
        %v3753 = vpop.f32.mrb[0].mxu0
        %v3754 = vadd.f32 %v3657, %v3753
        %v3755 = vpop.f32.mrb[0].mxu0
        %v3756 = vpop.f32.mrb[0].mxu0
        %v3757 = vadd.f32 %v3660, %v3756
        %v3758 = vpop.f32.mrb[0].mxu0
        %3759 = vmatprep.mubr.bf16.mxu0 0
        %3760 = vmatmul.mubr.bf16.gmra.mrb[0].mxu0 %v3357
        %v3761 = vpop.f32.mrb[0].mxu0
        %v3762 = vadd.f32 %v3665, %v3761
        %v3763 = vpop.f32.mrb[0].mxu0
        %v3764 = vpop.f32.mrb[0].mxu0
        %v3765 = vadd.f32 %v3668, %v3764
        %v3766 = vpop.f32.mrb[0].mxu0
        %3767 = vdwg.mxu0
        %v3768 = vadd.f32 %v3366, %v3706
        %v3769 = vadd.f32 %v3367, %v3709
        %v3770 = vadd.f32 %v3368, %v3714
        %v3771 = vadd.f32 %v3369, %v3717
        %v3772 = vadd.f32 %v3370, %v3722
        %v3773 = vadd.f32 %v3371, %v3725
        %v3774 = vadd.f32 %v3372, %v3730
        %v3775 = vadd.f32 %v3373, %v3733
        %v3776 = vadd.f32 %v3374, %v3738
        %v3777 = vadd.f32 %v3375, %v3741
        %v3778 = vadd.f32 %v3376, %v3746
        %v3779 = vadd.f32 %v3377, %v3749
        %v3780 = vadd.f32 %v3378, %v3754
        %v3781 = vadd.f32 %v3379, %v3757
        %v3782 = vadd.f32 %v3380, %v3762
        %v3783 = vadd.f32 %v3381, %v3765
        %3784 = vst [vmem:[#allocation2] sm:$0xff] %v3768
        %3785 = vst [vmem:[#allocation2 + $0x8] sm:$0xff] %v3769
        %3786 = vst [vmem:[#allocation2 + $0x10] sm:$0xff] %v3770
        %3787 = vst [vmem:[#allocation2 + $0x18] sm:$0xff] %v3771
        %3788 = vst [vmem:[#allocation2 + $0x20] sm:$0xff] %v3772
        %3789 = vst [vmem:[#allocation2 + $0x28] sm:$0xff] %v3773
        %3790 = vst [vmem:[#allocation2 + $0x30] sm:$0xff] %v3774
        %3791 = vst [vmem:[#allocation2 + $0x38] sm:$0xff] %v3775
        %3792 = vst [vmem:[#allocation2 + $0x40] sm:$0xff] %v3776
        %3793 = vst [vmem:[#allocation2 + $0x48] sm:$0xff] %v3777
        %3794 = vst [vmem:[#allocation2 + $0x50] sm:$0xff] %v3778
        %3795 = vst [vmem:[#allocation2 + $0x58] sm:$0xff] %v3779
        %3796 = vst [vmem:[#allocation2 + $0x60] sm:$0xff] %v3780
        %3797 = vst [vmem:[#allocation2 + $0x68] sm:$0xff] %v3781
        %3798 = vst [vmem:[#allocation2 + $0x70] sm:$0xff] %v3782
        %3799 = vst [vmem:[#allocation2 + $0x78] sm:$0xff] %v3783
        %v3801 = vshrl.u32 %v2672, 16
        %v3803 = vshll.u32 %v2672, 16
        %v3805 = vrot.slane %v3803, 1
        %v3806 = vor.u32 %v3801, %v3805
        %v3808 = vshll.u32 %v2673, 16
        %v3810 = vrot.slane %v3808, 1
        %v3811 = vsel %vm3212, %v3806, %v3810
        %v3815 = vrot.slane %v2672, 1
        %v3816 = vrot.slane %v2673, 1
        %v3817 = vsel %vm3333, %v3815, %v3816
        %v3819 = vld [vmem:[#allocation2] sm:$0xff]
        %v3820 = vld [vmem:[#allocation2 + $0x8] sm:$0xff]
        %v3821 = vld [vmem:[#allocation2 + $0x10] sm:$0xff]
        %v3822 = vld [vmem:[#allocation2 + $0x18] sm:$0xff]
        %v3823 = vld [vmem:[#allocation2 + $0x20] sm:$0xff]
        %v3824 = vld [vmem:[#allocation2 + $0x28] sm:$0xff]
        %v3825 = vld [vmem:[#allocation2 + $0x30] sm:$0xff]
        %v3826 = vld [vmem:[#allocation2 + $0x38] sm:$0xff]
        %v3827 = vld [vmem:[#allocation2 + $0x40] sm:$0xff]
        %v3828 = vld [vmem:[#allocation2 + $0x48] sm:$0xff]
        %v3829 = vld [vmem:[#allocation2 + $0x50] sm:$0xff]
        %v3830 = vld [vmem:[#allocation2 + $0x58] sm:$0xff]
        %v3831 = vld [vmem:[#allocation2 + $0x60] sm:$0xff]
        %v3832 = vld [vmem:[#allocation2 + $0x68] sm:$0xff]
        %v3833 = vld [vmem:[#allocation2 + $0x70] sm:$0xff]
        %v3834 = vld [vmem:[#allocation2 + $0x78] sm:$0xff]
        %s3835 = scalar_lea.vmem [#allocation13], 192
        %v3836 = vld [vmem:[%s3835] sm:$0xf]
        %v3837 = vld [vmem:[%s3835 + $0x4] sm:$0xf]
        %v3838 = vld [vmem:[%s3835 + $0x8] sm:$0xf]
        %v3839 = vld [vmem:[%s3835 + $0xc] sm:$0xf]
        %v3840 = vld [vmem:[%s3835 + $0x10] sm:$0xf]
        %v3841 = vld [vmem:[%s3835 + $0x14] sm:$0xf]
        %v3842 = vld [vmem:[%s3835 + $0x18] sm:$0xf]
        %v3843 = vld [vmem:[%s3835 + $0x1c] sm:$0xf]
        %v3844 = vld [vmem:[%s3835 + $0x20] sm:$0xf]
        %v3845 = vld [vmem:[%s3835 + $0x24] sm:$0xf]
        %v3846 = vld [vmem:[%s3835 + $0x28] sm:$0xf]
        %v3847 = vld [vmem:[%s3835 + $0x2c] sm:$0xf]
        %v3848 = vld [vmem:[%s3835 + $0x30] sm:$0xf]
        %v3849 = vld [vmem:[%s3835 + $0x34] sm:$0xf]
        %v3850 = vld [vmem:[%s3835 + $0x38] sm:$0xf]
        %v3851 = vld [vmem:[%s3835 + $0x3c] sm:$0xf]
        %v3852 = vld [vmem:[%s3835 + $0x40] sm:$0xf]
        %v3853 = vld [vmem:[%s3835 + $0x44] sm:$0xf]
        %v3854 = vld [vmem:[%s3835 + $0x48] sm:$0xf]
        %v3855 = vld [vmem:[%s3835 + $0x4c] sm:$0xf]
        %v3856 = vld [vmem:[%s3835 + $0x50] sm:$0xf]
        %v3857 = vld [vmem:[%s3835 + $0x54] sm:$0xf]
        %v3858 = vld [vmem:[%s3835 + $0x58] sm:$0xf]
        %v3859 = vld [vmem:[%s3835 + $0x5c] sm:$0xf]
        %v3860 = vld [vmem:[%s3835 + $0x60] sm:$0xf]
        %v3861 = vld [vmem:[%s3835 + $0x64] sm:$0xf]
        %v3862 = vld [vmem:[%s3835 + $0x68] sm:$0xf]
        %v3863 = vld [vmem:[%s3835 + $0x6c] sm:$0xf]
        %v3864 = vld [vmem:[%s3835 + $0x70] sm:$0xf]
        %v3865 = vld [vmem:[%s3835 + $0x74] sm:$0xf]
        %v3866 = vld [vmem:[%s3835 + $0x78] sm:$0xf]
        %v3867 = vld [vmem:[%s3835 + $0x7c] sm:$0xf]
        %v3868 = vld [vmem:[%s3835 + $0x80] sm:$0xf]
        %v3869 = vld [vmem:[%s3835 + $0x84] sm:$0xf]
        %v3870 = vld [vmem:[%s3835 + $0x88] sm:$0xf]
        %v3871 = vld [vmem:[%s3835 + $0x8c] sm:$0xf]
        %v3872 = vld [vmem:[%s3835 + $0x90] sm:$0xf]
        %v3873 = vld [vmem:[%s3835 + $0x94] sm:$0xf]
        %v3874 = vld [vmem:[%s3835 + $0x98] sm:$0xf]
        %v3875 = vld [vmem:[%s3835 + $0x9c] sm:$0xf]
        %v3876 = vld [vmem:[%s3835 + $0xa0] sm:$0xf]
        %v3877 = vld [vmem:[%s3835 + $0xa4] sm:$0xf]
        %v3878 = vld [vmem:[%s3835 + $0xa8] sm:$0xf]
        %v3879 = vld [vmem:[%s3835 + $0xac] sm:$0xf]
        %v3880 = vld [vmem:[%s3835 + $0xb0] sm:$0xf]
        %v3881 = vld [vmem:[%s3835 + $0xb4] sm:$0xf]
        %v3882 = vld [vmem:[%s3835 + $0xb8] sm:$0xf]
        %v3883 = vld [vmem:[%s3835 + $0xbc] sm:$0xf]
        %v3932 = vunpack.c.l.b16 %v3836
        %v3933 = vunpack.c.l.b16 %v3837
        %v3934 = vunpack.c.l.b16 %v3838
        %v3935 = vunpack.c.l.b16 %v3839
        %v3936 = vunpack.c.l.b16 %v3840
        %v3937 = vunpack.c.l.b16 %v3841
        %v3938 = vunpack.c.l.b16 %v3842
        %v3939 = vunpack.c.l.b16 %v3843
        %v3940 = vunpack.c.l.b16 %v3844
        %v3941 = vunpack.c.l.b16 %v3845
        %v3942 = vunpack.c.l.b16 %v3846
        %v3943 = vunpack.c.l.b16 %v3847
        %v3944 = vunpack.c.l.b16 %v3848
        %v3945 = vunpack.c.l.b16 %v3849
        %v3946 = vunpack.c.l.b16 %v3850
        %v3947 = vunpack.c.l.b16 %v3851
        %v3948 = vunpack.c.l.b16 %v3852
        %v3949 = vunpack.c.l.b16 %v3853
        %v3950 = vunpack.c.l.b16 %v3854
        %v3951 = vunpack.c.l.b16 %v3855
        %v3952 = vunpack.c.l.b16 %v3856
        %v3953 = vunpack.c.l.b16 %v3857
        %v3954 = vunpack.c.l.b16 %v3858
        %v3955 = vunpack.c.l.b16 %v3859
        %v3956 = vunpack.c.l.b16 %v3860
        %v3957 = vunpack.c.l.b16 %v3861
        %v3958 = vunpack.c.l.b16 %v3862
        %v3959 = vunpack.c.l.b16 %v3863
        %v3960 = vunpack.c.l.b16 %v3864
        %v3961 = vunpack.c.l.b16 %v3865
        %v3962 = vunpack.c.l.b16 %v3866
        %v3963 = vunpack.c.l.b16 %v3867
        %v3964 = vunpack.c.l.b16 %v3868
        %v3965 = vunpack.c.l.b16 %v3869
        %v3966 = vunpack.c.l.b16 %v3870
        %v3967 = vunpack.c.l.b16 %v3871
        %v3968 = vunpack.c.l.b16 %v3872
        %v3969 = vunpack.c.l.b16 %v3873
        %v3970 = vunpack.c.l.b16 %v3874
        %v3971 = vunpack.c.l.b16 %v3875
        %v3972 = vunpack.c.l.b16 %v3876
        %v3973 = vunpack.c.l.b16 %v3877
        %v3974 = vunpack.c.l.b16 %v3878
        %v3975 = vunpack.c.l.b16 %v3879
        %v3976 = vunpack.c.l.b16 %v3880
        %v3977 = vunpack.c.l.b16 %v3881
        %v3978 = vunpack.c.l.b16 %v3882
        %v3979 = vunpack.c.l.b16 %v3883
        %v3980 = vpack.c.b16 %v3933, %v3932
        %v3981 = vpack.c.b16 %v3935, %v3934
        %v3982 = vpack.c.b16 %v3937, %v3936
        %v3983 = vpack.c.b16 %v3939, %v3938
        %v3984 = vpack.c.b16 %v3941, %v3940
        %v3985 = vpack.c.b16 %v3943, %v3942
        %v3986 = vpack.c.b16 %v3945, %v3944
        %v3987 = vpack.c.b16 %v3947, %v3946
        %v3988 = vpack.c.b16 %v3949, %v3948
        %v3989 = vpack.c.b16 %v3951, %v3950
        %v3990 = vpack.c.b16 %v3953, %v3952
        %v3991 = vpack.c.b16 %v3955, %v3954
        %v3992 = vpack.c.b16 %v3957, %v3956
        %v3993 = vpack.c.b16 %v3959, %v3958
        %v3994 = vpack.c.b16 %v3961, %v3960
        %v3995 = vpack.c.b16 %v3963, %v3962
        %v3996 = vpack.c.b16 %v3965, %v3964
        %v3997 = vpack.c.b16 %v3967, %v3966
        %v3998 = vpack.c.b16 %v3969, %v3968
        %v3999 = vpack.c.b16 %v3971, %v3970
        %v4000 = vpack.c.b16 %v3973, %v3972
        %v4001 = vpack.c.b16 %v3975, %v3974
        %v4002 = vpack.c.b16 %v3977, %v3976
        %v4003 = vpack.c.b16 %v3979, %v3978
        %4028 = vmatprep.subr.bf16.mxu0 0
        %4029 = vmatpush1.bf16.msra.mxu0 %v3980
        %4030 = vmatprep.subr.bf16.mxu0 0
        %4031 = vmatpush1.bf16.msra.mxu0 %v3981
        %4032 = vmatprep.subr.bf16.mxu0 0
        %4033 = vmatpush1.bf16.msra.mxu0 %v3982
        %4034 = vmatprep.subr.bf16.mxu0 0
        %4035 = vmatpush1.bf16.msra.mxu0 %v3983
        %4036 = vmatprep.subr.bf16.mxu0 0
        %4037 = vmatpush1.bf16.msra.mxu0 %v3984
        %4038 = vmatprep.subr.bf16.mxu0 0
        %4039 = vmatpush1.bf16.msra.mxu0 %v3985
        %4040 = vmatprep.subr.bf16.mxu0 0
        %4041 = vmatpush1.bf16.msra.mxu0 %v3986
        %4042 = vmatprep.subr.bf16.mxu0 0
        %4043 = vmatpush1.bf16.msra.mxu0 %v3987
        %4044 = vmatprep.subr.bf16.mxu0 0
        %4045 = vmatpush1.bf16.msra.mxu0 %v3988
        %4046 = vmatprep.subr.bf16.mxu0 0
        %4047 = vmatpush1.bf16.msra.mxu0 %v3989
        %4048 = vmatprep.subr.bf16.mxu0 0
        %4049 = vmatpush1.bf16.msra.mxu0 %v3990
        %4050 = vmatprep.subr.bf16.mxu0 0
        %4051 = vmatpush1.bf16.msra.mxu0 %v3991
        %4052 = vmatprep.subr.bf16.mxu0 0
        %4053 = vmatpush1.bf16.msra.mxu0 %v3992
        %4054 = vmatprep.subr.bf16.mxu0 0
        %4055 = vmatpush1.bf16.msra.mxu0 %v3993
        %4056 = vmatprep.subr.bf16.mxu0 0
        %4057 = vmatpush1.bf16.msra.mxu0 %v3994
        %4058 = vmatprep.subr.bf16.mxu0 0
        %4059 = vmatpush1.bf16.msra.mxu0 %v3995
        %4060 = vmatprep.mubr.bf16.mxu0 %v3236
        %4061 = vmatmul.mubr.bf16.gmra.mrb[0].mxu0 %v2658
        %v4062 = vpop.f32.mrb[0].mxu0
        %v4063 = vadd.f32 0.0, %v4062
        %v4064 = vpop.f32.mrb[0].mxu0
        %v4065 = vpop.f32.mrb[0].mxu0
        %v4066 = vadd.f32 0.0, %v4065
        %v4067 = vpop.f32.mrb[0].mxu0
        %4068 = vmatprep.mubr.bf16.mxu0 %v3248
        %4069 = vmatmul.mubr.bf16.gmra.mrb[0].mxu0 %v2660
        %v4070 = vpop.f32.mrb[0].mxu0
        %v4071 = vadd.f32 0.0, %v4070
        %v4072 = vpop.f32.mrb[0].mxu0
        %v4073 = vpop.f32.mrb[0].mxu0
        %v4074 = vadd.f32 0.0, %v4073
        %v4075 = vpop.f32.mrb[0].mxu0
        %4076 = vmatprep.mubr.bf16.mxu0 %v3260
        %4077 = vmatmul.mubr.bf16.gmra.mrb[0].mxu0 %v2662
        %v4078 = vpop.f32.mrb[0].mxu0
        %v4079 = vadd.f32 0.0, %v4078
        %v4080 = vpop.f32.mrb[0].mxu0
        %v4081 = vpop.f32.mrb[0].mxu0
        %v4082 = vadd.f32 0.0, %v4081
        %v4083 = vpop.f32.mrb[0].mxu0
        %4084 = vmatprep.mubr.bf16.mxu0 %v3272
        %4085 = vmatmul.mubr.bf16.gmra.mrb[0].mxu0 %v2664
        %v4086 = vpop.f32.mrb[0].mxu0
        %v4087 = vadd.f32 0.0, %v4086
        %v4088 = vpop.f32.mrb[0].mxu0
        %v4089 = vpop.f32.mrb[0].mxu0
        %v4090 = vadd.f32 0.0, %v4089
        %v4091 = vpop.f32.mrb[0].mxu0
        %4092 = vmatprep.mubr.bf16.mxu0 %v3284
        %4093 = vmatmul.mubr.bf16.gmra.mrb[0].mxu0 %v2666
        %v4094 = vpop.f32.mrb[0].mxu0
        %v4095 = vadd.f32 0.0, %v4094
        %v4096 = vpop.f32.mrb[0].mxu0
        %v4097 = vpop.f32.mrb[0].mxu0
        %v4098 = vadd.f32 0.0, %v4097
        %v4099 = vpop.f32.mrb[0].mxu0
        %4100 = vmatprep.mubr.bf16.mxu0 %v3296
        %4101 = vmatmul.mubr.bf16.gmra.mrb[0].mxu0 %v2668
        %v4102 = vpop.f32.mrb[0].mxu0
        %v4103 = vadd.f32 0.0, %v4102
        %v4104 = vpop.f32.mrb[0].mxu0
        %v4105 = vpop.f32.mrb[0].mxu0
        %v4106 = vadd.f32 0.0, %v4105
        %v4107 = vpop.f32.mrb[0].mxu0
        %4108 = vmatprep.mubr.bf16.mxu0 %v3308
        %4109 = vmatmul.mubr.bf16.gmra.mrb[0].mxu0 %v2670
        %v4110 = vpop.f32.mrb[0].mxu0
        %v4111 = vadd.f32 0.0, %v4110
        %v4112 = vpop.f32.mrb[0].mxu0
        %v4113 = vpop.f32.mrb[0].mxu0
        %v4114 = vadd.f32 0.0, %v4113
        %v4115 = vpop.f32.mrb[0].mxu0
        %4116 = vmatprep.mubr.bf16.mxu0 %v3811
        %4117 = vmatmul.mubr.bf16.gmra.mrb[0].mxu0 %v2672
        %v4118 = vpop.f32.mrb[0].mxu0
        %v4119 = vadd.f32 0.0, %v4118
        %v4120 = vpop.f32.mrb[0].mxu0
        %v4121 = vpop.f32.mrb[0].mxu0
        %v4122 = vadd.f32 0.0, %v4121
        %v4123 = vpop.f32.mrb[0].mxu0
        %4124 = vdwg.mxu0
        %4125 = vmatprep.subr.bf16.mxu0 0
        %4126 = vmatpush1.bf16.msra.mxu0 %v3996
        %4127 = vmatprep.subr.bf16.mxu0 0
        %4128 = vmatpush1.bf16.msra.mxu0 %v3997
        %4129 = vmatprep.subr.bf16.mxu0 0
        %4130 = vmatpush1.bf16.msra.mxu0 %v3998
        %4131 = vmatprep.subr.bf16.mxu0 0
        %4132 = vmatpush1.bf16.msra.mxu0 %v3999
        %4133 = vmatprep.subr.bf16.mxu0 0
        %4134 = vmatpush1.bf16.msra.mxu0 %v4000
        %4135 = vmatprep.subr.bf16.mxu0 0
        %4136 = vmatpush1.bf16.msra.mxu0 %v4001
        %4137 = vmatprep.subr.bf16.mxu0 0
        %4138 = vmatpush1.bf16.msra.mxu0 %v4002
        %4139 = vmatprep.subr.bf16.mxu0 0
        %4140 = vmatpush1.bf16.msra.mxu0 %v4003
        %4141 = vmatprep.subr.bf16.mxu0 0
        %4142 = vmatpush1.bf16.msra.mxu0 0
        %4143 = vmatprep.subr.bf16.mxu0 0
        %4144 = vmatpush1.bf16.msra.mxu0 0
        %4145 = vmatprep.subr.bf16.mxu0 0
        %4146 = vmatpush1.bf16.msra.mxu0 0
        %4147 = vmatprep.subr.bf16.mxu0 0
        %4148 = vmatpush1.bf16.msra.mxu0 0
        %4149 = vmatprep.subr.bf16.mxu0 0
        %4150 = vmatpush1.bf16.msra.mxu0 0
        %4151 = vmatprep.subr.bf16.mxu0 0
        %4152 = vmatpush1.bf16.msra.mxu0 0
        %4153 = vmatprep.subr.bf16.mxu0 0
        %4154 = vmatpush1.bf16.msra.mxu0 0
        %4155 = vmatprep.subr.bf16.mxu0 0
        %4156 = vmatpush1.bf16.msra.mxu0 0
        %4157 = vmatprep.mubr.bf16.mxu0 0
        %4158 = vmatmul.mubr.bf16.gmra.mrb[0].mxu0 %v3339
        %v4159 = vpop.f32.mrb[0].mxu0
        %v4160 = vadd.f32 %v4063, %v4159
        %v4161 = vpop.f32.mrb[0].mxu0
        %v4162 = vpop.f32.mrb[0].mxu0
        %v4163 = vadd.f32 %v4066, %v4162
        %v4164 = vpop.f32.mrb[0].mxu0
        %4165 = vmatprep.mubr.bf16.mxu0 0
        %4166 = vmatmul.mubr.bf16.gmra.mrb[0].mxu0 %v3342
        %v4167 = vpop.f32.mrb[0].mxu0
        %v4168 = vadd.f32 %v4071, %v4167
        %v4169 = vpop.f32.mrb[0].mxu0
        %v4170 = vpop.f32.mrb[0].mxu0
        %v4171 = vadd.f32 %v4074, %v4170
        %v4172 = vpop.f32.mrb[0].mxu0
        %4173 = vmatprep.mubr.bf16.mxu0 0
        %4174 = vmatmul.mubr.bf16.gmra.mrb[0].mxu0 %v3345
        %v4175 = vpop.f32.mrb[0].mxu0
        %v4176 = vadd.f32 %v4079, %v4175
        %v4177 = vpop.f32.mrb[0].mxu0
        %v4178 = vpop.f32.mrb[0].mxu0
        %v4179 = vadd.f32 %v4082, %v4178
        %v4180 = vpop.f32.mrb[0].mxu0
        %4181 = vmatprep.mubr.bf16.mxu0 0
        %4182 = vmatmul.mubr.bf16.gmra.mrb[0].mxu0 %v3348
        %v4183 = vpop.f32.mrb[0].mxu0
        %v4184 = vadd.f32 %v4087, %v4183
        %v4185 = vpop.f32.mrb[0].mxu0
        %v4186 = vpop.f32.mrb[0].mxu0
        %v4187 = vadd.f32 %v4090, %v4186
        %v4188 = vpop.f32.mrb[0].mxu0
        %4189 = vmatprep.mubr.bf16.mxu0 0
        %4190 = vmatmul.mubr.bf16.gmra.mrb[0].mxu0 %v3351
        %v4191 = vpop.f32.mrb[0].mxu0
        %v4192 = vadd.f32 %v4095, %v4191
        %v4193 = vpop.f32.mrb[0].mxu0
        %v4194 = vpop.f32.mrb[0].mxu0
        %v4195 = vadd.f32 %v4098, %v4194
        %v4196 = vpop.f32.mrb[0].mxu0
        %4197 = vmatprep.mubr.bf16.mxu0 0
        %4198 = vmatmul.mubr.bf16.gmra.mrb[0].mxu0 %v3354
        %v4199 = vpop.f32.mrb[0].mxu0
        %v4200 = vadd.f32 %v4103, %v4199
        %v4201 = vpop.f32.mrb[0].mxu0
        %v4202 = vpop.f32.mrb[0].mxu0
        %v4203 = vadd.f32 %v4106, %v4202
        %v4204 = vpop.f32.mrb[0].mxu0
        %4205 = vmatprep.mubr.bf16.mxu0 0
        %4206 = vmatmul.mubr.bf16.gmra.mrb[0].mxu0 %v3357
        %v4207 = vpop.f32.mrb[0].mxu0
        %v4208 = vadd.f32 %v4111, %v4207
        %v4209 = vpop.f32.mrb[0].mxu0
        %v4210 = vpop.f32.mrb[0].mxu0
        %v4211 = vadd.f32 %v4114, %v4210
        %v4212 = vpop.f32.mrb[0].mxu0
        %4213 = vmatprep.mubr.bf16.mxu0 0
        %4214 = vmatmul.mubr.bf16.gmra.mrb[0].mxu0 %v3817
        %v4215 = vpop.f32.mrb[0].mxu0
        %v4216 = vadd.f32 %v4119, %v4215
        %v4217 = vpop.f32.mrb[0].mxu0
        %v4218 = vpop.f32.mrb[0].mxu0
        %v4219 = vadd.f32 %v4122, %v4218
        %v4220 = vpop.f32.mrb[0].mxu0
        %4221 = vdwg.mxu0
        %v4222 = vadd.f32 %v3819, %v4160
        %v4223 = vadd.f32 %v3820, %v4163
        %v4224 = vadd.f32 %v3821, %v4168
        %v4225 = vadd.f32 %v3822, %v4171
        %v4226 = vadd.f32 %v3823, %v4176
        %v4227 = vadd.f32 %v3824, %v4179
        %v4228 = vadd.f32 %v3825, %v4184
        %v4229 = vadd.f32 %v3826, %v4187
        %v4230 = vadd.f32 %v3827, %v4192
        %v4231 = vadd.f32 %v3828, %v4195
        %v4232 = vadd.f32 %v3829, %v4200
        %v4233 = vadd.f32 %v3830, %v4203
        %v4234 = vadd.f32 %v3831, %v4208
        %v4235 = vadd.f32 %v3832, %v4211
        %v4236 = vadd.f32 %v3833, %v4216
        %v4237 = vadd.f32 %v3834, %v4219
        %4238 = vst [vmem:[#allocation2] sm:$0xff] %v4222
        %4239 = vst [vmem:[#allocation2 + $0x8] sm:$0xff] %v4223
        %4240 = vst [vmem:[#allocation2 + $0x10] sm:$0xff] %v4224
        %4241 = vst [vmem:[#allocation2 + $0x18] sm:$0xff] %v4225
        %4242 = vst [vmem:[#allocation2 + $0x20] sm:$0xff] %v4226
        %4243 = vst [vmem:[#allocation2 + $0x28] sm:$0xff] %v4227
        %4244 = vst [vmem:[#allocation2 + $0x30] sm:$0xff] %v4228
        %4245 = vst [vmem:[#allocation2 + $0x38] sm:$0xff] %v4229
        %4246 = vst [vmem:[#allocation2 + $0x40] sm:$0xff] %v4230
        %4247 = vst [vmem:[#allocation2 + $0x48] sm:$0xff] %v4231
        %4248 = vst [vmem:[#allocation2 + $0x50] sm:$0xff] %v4232
        %4249 = vst [vmem:[#allocation2 + $0x58] sm:$0xff] %v4233
        %4250 = vst [vmem:[#allocation2 + $0x60] sm:$0xff] %v4234
        %4251 = vst [vmem:[#allocation2 + $0x68] sm:$0xff] %v4235
        %4252 = vst [vmem:[#allocation2 + $0x70] sm:$0xff] %v4236
        %4253 = vst [vmem:[#allocation2 + $0x78] sm:$0xff] %v4237
        %v4255 = vshrl.u32 %v2674, 16
        %v4257 = vshll.u32 %v2674, 16
        %v4259 = vrot.slane %v4257, 1
        %v4260 = vor.u32 %v4255, %v4259
        %v4262 = vshll.u32 %v2675, 16
        %v4264 = vrot.slane %v4262, 1
        %v4265 = vsel %vm3212, %v4260, %v4264
        %v4269 = vrot.slane %v2674, 1
        %v4270 = vrot.slane %v2675, 1
        %v4271 = vsel %vm3333, %v4269, %v4270
        %v4273 = vld [vmem:[#allocation2] sm:$0xff]
        %v4274 = vld [vmem:[#allocation2 + $0x8] sm:$0xff]
        %v4275 = vld [vmem:[#allocation2 + $0x10] sm:$0xff]
        %v4276 = vld [vmem:[#allocation2 + $0x18] sm:$0xff]
        %v4277 = vld [vmem:[#allocation2 + $0x20] sm:$0xff]
        %v4278 = vld [vmem:[#allocation2 + $0x28] sm:$0xff]
        %v4279 = vld [vmem:[#allocation2 + $0x30] sm:$0xff]
        %v4280 = vld [vmem:[#allocation2 + $0x38] sm:$0xff]
        %v4281 = vld [vmem:[#allocation2 + $0x40] sm:$0xff]
        %v4282 = vld [vmem:[#allocation2 + $0x48] sm:$0xff]
        %v4283 = vld [vmem:[#allocation2 + $0x50] sm:$0xff]
        %v4284 = vld [vmem:[#allocation2 + $0x58] sm:$0xff]
        %v4285 = vld [vmem:[#allocation2 + $0x60] sm:$0xff]
        %v4286 = vld [vmem:[#allocation2 + $0x68] sm:$0xff]
        %v4287 = vld [vmem:[#allocation2 + $0x70] sm:$0xff]
        %v4288 = vld [vmem:[#allocation2 + $0x78] sm:$0xff]
        %s4289 = scalar_lea.vmem [#allocation13], 384
        %v4290 = vld [vmem:[%s4289] sm:$0xf]
        %v4291 = vld [vmem:[%s4289 + $0x4] sm:$0xf]
        %v4292 = vld [vmem:[%s4289 + $0x8] sm:$0xf]
        %v4293 = vld [vmem:[%s4289 + $0xc] sm:$0xf]
        %v4294 = vld [vmem:[%s4289 + $0x10] sm:$0xf]
        %v4295 = vld [vmem:[%s4289 + $0x14] sm:$0xf]
        %v4296 = vld [vmem:[%s4289 + $0x18] sm:$0xf]
        %v4297 = vld [vmem:[%s4289 + $0x1c] sm:$0xf]
        %v4298 = vld [vmem:[%s4289 + $0x20] sm:$0xf]
        %v4299 = vld [vmem:[%s4289 + $0x24] sm:$0xf]
        %v4300 = vld [vmem:[%s4289 + $0x28] sm:$0xf]
        %v4301 = vld [vmem:[%s4289 + $0x2c] sm:$0xf]
        %v4302 = vld [vmem:[%s4289 + $0x30] sm:$0xf]
        %v4303 = vld [vmem:[%s4289 + $0x34] sm:$0xf]
        %v4304 = vld [vmem:[%s4289 + $0x38] sm:$0xf]
        %v4305 = vld [vmem:[%s4289 + $0x3c] sm:$0xf]
        %v4306 = vld [vmem:[%s4289 + $0x40] sm:$0xf]
        %v4307 = vld [vmem:[%s4289 + $0x44] sm:$0xf]
        %v4308 = vld [vmem:[%s4289 + $0x48] sm:$0xf]
        %v4309 = vld [vmem:[%s4289 + $0x4c] sm:$0xf]
        %v4310 = vld [vmem:[%s4289 + $0x50] sm:$0xf]
        %v4311 = vld [vmem:[%s4289 + $0x54] sm:$0xf]
        %v4312 = vld [vmem:[%s4289 + $0x58] sm:$0xf]
        %v4313 = vld [vmem:[%s4289 + $0x5c] sm:$0xf]
        %v4314 = vld [vmem:[%s4289 + $0x60] sm:$0xf]
        %v4315 = vld [vmem:[%s4289 + $0x64] sm:$0xf]
        %v4316 = vld [vmem:[%s4289 + $0x68] sm:$0xf]
        %v4317 = vld [vmem:[%s4289 + $0x6c] sm:$0xf]
        %v4318 = vld [vmem:[%s4289 + $0x70] sm:$0xf]
        %v4319 = vld [vmem:[%s4289 + $0x74] sm:$0xf]
        %v4320 = vld [vmem:[%s4289 + $0x78] sm:$0xf]
        %v4321 = vld [vmem:[%s4289 + $0x7c] sm:$0xf]
        %v4322 = vld [vmem:[%s4289 + $0x80] sm:$0xf]
        %v4323 = vld [vmem:[%s4289 + $0x84] sm:$0xf]
        %v4324 = vld [vmem:[%s4289 + $0x88] sm:$0xf]
        %v4325 = vld [vmem:[%s4289 + $0x8c] sm:$0xf]
        %v4326 = vld [vmem:[%s4289 + $0x90] sm:$0xf]
        %v4327 = vld [vmem:[%s4289 + $0x94] sm:$0xf]
        %v4328 = vld [vmem:[%s4289 + $0x98] sm:$0xf]
        %v4329 = vld [vmem:[%s4289 + $0x9c] sm:$0xf]
        %v4330 = vld [vmem:[%s4289 + $0xa0] sm:$0xf]
        %v4331 = vld [vmem:[%s4289 + $0xa4] sm:$0xf]
        %v4332 = vld [vmem:[%s4289 + $0xa8] sm:$0xf]
        %v4333 = vld [vmem:[%s4289 + $0xac] sm:$0xf]
        %v4334 = vld [vmem:[%s4289 + $0xb0] sm:$0xf]
        %v4335 = vld [vmem:[%s4289 + $0xb4] sm:$0xf]
        %v4336 = vld [vmem:[%s4289 + $0xb8] sm:$0xf]
        %v4337 = vld [vmem:[%s4289 + $0xbc] sm:$0xf]
        %v4386 = vunpack.c.l.b16 %v4290
        %v4387 = vunpack.c.l.b16 %v4291
        %v4388 = vunpack.c.l.b16 %v4292
        %v4389 = vunpack.c.l.b16 %v4293
        %v4390 = vunpack.c.l.b16 %v4294
        %v4391 = vunpack.c.l.b16 %v4295
        %v4392 = vunpack.c.l.b16 %v4296
        %v4393 = vunpack.c.l.b16 %v4297
        %v4394 = vunpack.c.l.b16 %v4298
        %v4395 = vunpack.c.l.b16 %v4299
        %v4396 = vunpack.c.l.b16 %v4300
        %v4397 = vunpack.c.l.b16 %v4301
        %v4398 = vunpack.c.l.b16 %v4302
        %v4399 = vunpack.c.l.b16 %v4303
        %v4400 = vunpack.c.l.b16 %v4304
        %v4401 = vunpack.c.l.b16 %v4305
        %v4402 = vunpack.c.l.b16 %v4306
        %v4403 = vunpack.c.l.b16 %v4307
        %v4404 = vunpack.c.l.b16 %v4308
        %v4405 = vunpack.c.l.b16 %v4309
        %v4406 = vunpack.c.l.b16 %v4310
        %v4407 = vunpack.c.l.b16 %v4311
        %v4408 = vunpack.c.l.b16 %v4312
        %v4409 = vunpack.c.l.b16 %v4313
        %v4410 = vunpack.c.l.b16 %v4314
        %v4411 = vunpack.c.l.b16 %v4315
        %v4412 = vunpack.c.l.b16 %v4316
        %v4413 = vunpack.c.l.b16 %v4317
        %v4414 = vunpack.c.l.b16 %v4318
        %v4415 = vunpack.c.l.b16 %v4319
        %v4416 = vunpack.c.l.b16 %v4320
        %v4417 = vunpack.c.l.b16 %v4321
        %v4418 = vunpack.c.l.b16 %v4322
        %v4419 = vunpack.c.l.b16 %v4323
        %v4420 = vunpack.c.l.b16 %v4324
        %v4421 = vunpack.c.l.b16 %v4325
        %v4422 = vunpack.c.l.b16 %v4326
        %v4423 = vunpack.c.l.b16 %v4327
        %v4424 = vunpack.c.l.b16 %v4328
        %v4425 = vunpack.c.l.b16 %v4329
        %v4426 = vunpack.c.l.b16 %v4330
        %v4427 = vunpack.c.l.b16 %v4331
        %v4428 = vunpack.c.l.b16 %v4332
        %v4429 = vunpack.c.l.b16 %v4333
        %v4430 = vunpack.c.l.b16 %v4334
        %v4431 = vunpack.c.l.b16 %v4335
        %v4432 = vunpack.c.l.b16 %v4336
        %v4433 = vunpack.c.l.b16 %v4337
        %v4434 = vpack.c.b16 %v4387, %v4386
        %v4435 = vpack.c.b16 %v4389, %v4388
        %v4436 = vpack.c.b16 %v4391, %v4390
        %v4437 = vpack.c.b16 %v4393, %v4392
        %v4438 = vpack.c.b16 %v4395, %v4394
        %v4439 = vpack.c.b16 %v4397, %v4396
        %v4440 = vpack.c.b16 %v4399, %v4398
        %v4441 = vpack.c.b16 %v4401, %v4400
        %v4442 = vpack.c.b16 %v4403, %v4402
        %v4443 = vpack.c.b16 %v4405, %v4404
        %v4444 = vpack.c.b16 %v4407, %v4406
        %v4445 = vpack.c.b16 %v4409, %v4408
        %v4446 = vpack.c.b16 %v4411, %v4410
        %v4447 = vpack.c.b16 %v4413, %v4412
        %v4448 = vpack.c.b16 %v4415, %v4414
        %v4449 = vpack.c.b16 %v4417, %v4416
        %v4450 = vpack.c.b16 %v4419, %v4418
        %v4451 = vpack.c.b16 %v4421, %v4420
        %v4452 = vpack.c.b16 %v4423, %v4422
        %v4453 = vpack.c.b16 %v4425, %v4424
        %v4454 = vpack.c.b16 %v4427, %v4426
        %v4455 = vpack.c.b16 %v4429, %v4428
        %v4456 = vpack.c.b16 %v4431, %v4430
        %v4457 = vpack.c.b16 %v4433, %v4432
        %4482 = vmatprep.subr.bf16.mxu0 0
        %4483 = vmatpush1.bf16.msra.mxu0 %v4434
        %4484 = vmatprep.subr.bf16.mxu0 0
        %4485 = vmatpush1.bf16.msra.mxu0 %v4435
        %4486 = vmatprep.subr.bf16.mxu0 0
        %4487 = vmatpush1.bf16.msra.mxu0 %v4436
        %4488 = vmatprep.subr.bf16.mxu0 0
        %4489 = vmatpush1.bf16.msra.mxu0 %v4437
        %4490 = vmatprep.subr.bf16.mxu0 0
        %4491 = vmatpush1.bf16.msra.mxu0 %v4438
        %4492 = vmatprep.subr.bf16.mxu0 0
        %4493 = vmatpush1.bf16.msra.mxu0 %v4439
        %4494 = vmatprep.subr.bf16.mxu0 0
        %4495 = vmatpush1.bf16.msra.mxu0 %v4440
        %4496 = vmatprep.subr.bf16.mxu0 0
        %4497 = vmatpush1.bf16.msra.mxu0 %v4441
        %4498 = vmatprep.subr.bf16.mxu0 0
        %4499 = vmatpush1.bf16.msra.mxu0 %v4442
        %4500 = vmatprep.subr.bf16.mxu0 0
        %4501 = vmatpush1.bf16.msra.mxu0 %v4443
        %4502 = vmatprep.subr.bf16.mxu0 0
        %4503 = vmatpush1.bf16.msra.mxu0 %v4444
        %4504 = vmatprep.subr.bf16.mxu0 0
        %4505 = vmatpush1.bf16.msra.mxu0 %v4445
        %4506 = vmatprep.subr.bf16.mxu0 0
        %4507 = vmatpush1.bf16.msra.mxu0 %v4446
        %4508 = vmatprep.subr.bf16.mxu0 0
        %4509 = vmatpush1.bf16.msra.mxu0 %v4447
        %4510 = vmatprep.subr.bf16.mxu0 0
        %4511 = vmatpush1.bf16.msra.mxu0 %v4448
        %4512 = vmatprep.subr.bf16.mxu0 0
        %4513 = vmatpush1.bf16.msra.mxu0 %v4449
        %4514 = vmatprep.mubr.bf16.mxu0 %v3248
        %4515 = vmatmul.mubr.bf16.gmra.mrb[0].mxu0 %v2660
        %v4516 = vpop.f32.mrb[0].mxu0
        %v4517 = vadd.f32 0.0, %v4516
        %v4518 = vpop.f32.mrb[0].mxu0
        %v4519 = vpop.f32.mrb[0].mxu0
        %v4520 = vadd.f32 0.0, %v4519
        %v4521 = vpop.f32.mrb[0].mxu0
        %4522 = vmatprep.mubr.bf16.mxu0 %v3260
        %4523 = vmatmul.mubr.bf16.gmra.mrb[0].mxu0 %v2662
        %v4524 = vpop.f32.mrb[0].mxu0
        %v4525 = vadd.f32 0.0, %v4524
        %v4526 = vpop.f32.mrb[0].mxu0
        %v4527 = vpop.f32.mrb[0].mxu0
        %v4528 = vadd.f32 0.0, %v4527
        %v4529 = vpop.f32.mrb[0].mxu0
        %4530 = vmatprep.mubr.bf16.mxu0 %v3272
        %4531 = vmatmul.mubr.bf16.gmra.mrb[0].mxu0 %v2664
        %v4532 = vpop.f32.mrb[0].mxu0
        %v4533 = vadd.f32 0.0, %v4532
        %v4534 = vpop.f32.mrb[0].mxu0
        %v4535 = vpop.f32.mrb[0].mxu0
        %v4536 = vadd.f32 0.0, %v4535
        %v4537 = vpop.f32.mrb[0].mxu0
        %4538 = vmatprep.mubr.bf16.mxu0 %v3284
        %4539 = vmatmul.mubr.bf16.gmra.mrb[0].mxu0 %v2666
        %v4540 = vpop.f32.mrb[0].mxu0
        %v4541 = vadd.f32 0.0, %v4540
        %v4542 = vpop.f32.mrb[0].mxu0
        %v4543 = vpop.f32.mrb[0].mxu0
        %v4544 = vadd.f32 0.0, %v4543
        %v4545 = vpop.f32.mrb[0].mxu0
        %4546 = vmatprep.mubr.bf16.mxu0 %v3296
        %4547 = vmatmul.mubr.bf16.gmra.mrb[0].mxu0 %v2668
        %v4548 = vpop.f32.mrb[0].mxu0
        %v4549 = vadd.f32 0.0, %v4548
        %v4550 = vpop.f32.mrb[0].mxu0
        %v4551 = vpop.f32.mrb[0].mxu0
        %v4552 = vadd.f32 0.0, %v4551
        %v4553 = vpop.f32.mrb[0].mxu0
        %4554 = vmatprep.mubr.bf16.mxu0 %v3308
        %4555 = vmatmul.mubr.bf16.gmra.mrb[0].mxu0 %v2670
        %v4556 = vpop.f32.mrb[0].mxu0
        %v4557 = vadd.f32 0.0, %v4556
        %v4558 = vpop.f32.mrb[0].mxu0
        %v4559 = vpop.f32.mrb[0].mxu0
        %v4560 = vadd.f32 0.0, %v4559
        %v4561 = vpop.f32.mrb[0].mxu0
        %4562 = vmatprep.mubr.bf16.mxu0 %v3811
        %4563 = vmatmul.mubr.bf16.gmra.mrb[0].mxu0 %v2672
        %v4564 = vpop.f32.mrb[0].mxu0
        %v4565 = vadd.f32 0.0, %v4564
        %v4566 = vpop.f32.mrb[0].mxu0
        %v4567 = vpop.f32.mrb[0].mxu0
        %v4568 = vadd.f32 0.0, %v4567
        %v4569 = vpop.f32.mrb[0].mxu0
        %4570 = vmatprep.mubr.bf16.mxu0 %v4265
        %4571 = vmatmul.mubr.bf16.gmra.mrb[0].mxu0 %v2674
        %v4572 = vpop.f32.mrb[0].mxu0
        %v4573 = vadd.f32 0.0, %v4572
        %v4574 = vpop.f32.mrb[0].mxu0
        %v4575 = vpop.f32.mrb[0].mxu0
        %v4576 = vadd.f32 0.0, %v4575
        %v4577 = vpop.f32.mrb[0].mxu0
        %4578 = vdwg.mxu0
        %4579 = vmatprep.subr.bf16.mxu0 0
        %4580 = vmatpush1.bf16.msra.mxu0 %v4450
        %4581 = vmatprep.subr.bf16.mxu0 0
        %4582 = vmatpush1.bf16.msra.mxu0 %v4451
        %4583 = vmatprep.subr.bf16.mxu0 0
        %4584 = vmatpush1.bf16.msra.mxu0 %v4452
        %4585 = vmatprep.subr.bf16.mxu0 0
        %4586 = vmatpush1.bf16.msra.mxu0 %v4453
        %4587 = vmatprep.subr.bf16.mxu0 0
        %4588 = vmatpush1.bf16.msra.mxu0 %v4454
        %4589 = vmatprep.subr.bf16.mxu0 0
        %4590 = vmatpush1.bf16.msra.mxu0 %v4455
        %4591 = vmatprep.subr.bf16.mxu0 0
        %4592 = vmatpush1.bf16.msra.mxu0 %v4456
        %4593 = vmatprep.subr.bf16.mxu0 0
        %4594 = vmatpush1.bf16.msra.mxu0 %v4457
        %4595 = vmatprep.subr.bf16.mxu0 0
        %4596 = vmatpush1.bf16.msra.mxu0 0
        %4597 = vmatprep.subr.bf16.mxu0 0
        %4598 = vmatpush1.bf16.msra.mxu0 0
        %4599 = vmatprep.subr.bf16.mxu0 0
        %4600 = vmatpush1.bf16.msra.mxu0 0
        %4601 = vmatprep.subr.bf16.mxu0 0
        %4602 = vmatpush1.bf16.msra.mxu0 0
        %4603 = vmatprep.subr.bf16.mxu0 0
        %4604 = vmatpush1.bf16.msra.mxu0 0
        %4605 = vmatprep.subr.bf16.mxu0 0
        %4606 = vmatpush1.bf16.msra.mxu0 0
        %4607 = vmatprep.subr.bf16.mxu0 0
        %4608 = vmatpush1.bf16.msra.mxu0 0
        %4609 = vmatprep.subr.bf16.mxu0 0
        %4610 = vmatpush1.bf16.msra.mxu0 0
        %4611 = vmatprep.mubr.bf16.mxu0 0
        %4612 = vmatmul.mubr.bf16.gmra.mrb[0].mxu0 %v3342
        %v4613 = vpop.f32.mrb[0].mxu0
        %v4614 = vadd.f32 %v4517, %v4613
        %v4615 = vpop.f32.mrb[0].mxu0
        %v4616 = vpop.f32.mrb[0].mxu0
        %v4617 = vadd.f32 %v4520, %v4616
        %v4618 = vpop.f32.mrb[0].mxu0
        %4619 = vmatprep.mubr.bf16.mxu0 0
        %4620 = vmatmul.mubr.bf16.gmra.mrb[0].mxu0 %v3345
        %v4621 = vpop.f32.mrb[0].mxu0
        %v4622 = vadd.f32 %v4525, %v4621
        %v4623 = vpop.f32.mrb[0].mxu0
        %v4624 = vpop.f32.mrb[0].mxu0
        %v4625 = vadd.f32 %v4528, %v4624
        %v4626 = vpop.f32.mrb[0].mxu0
        %4627 = vmatprep.mubr.bf16.mxu0 0
        %4628 = vmatmul.mubr.bf16.gmra.mrb[0].mxu0 %v3348
        %v4629 = vpop.f32.mrb[0].mxu0
        %v4630 = vadd.f32 %v4533, %v4629
        %v4631 = vpop.f32.mrb[0].mxu0
        %v4632 = vpop.f32.mrb[0].mxu0
        %v4633 = vadd.f32 %v4536, %v4632
        %v4634 = vpop.f32.mrb[0].mxu0
        %4635 = vmatprep.mubr.bf16.mxu0 0
        %4636 = vmatmul.mubr.bf16.gmra.mrb[0].mxu0 %v3351
        %v4637 = vpop.f32.mrb[0].mxu0
        %v4638 = vadd.f32 %v4541, %v4637
        %v4639 = vpop.f32.mrb[0].mxu0
        %v4640 = vpop.f32.mrb[0].mxu0
        %v4641 = vadd.f32 %v4544, %v4640
        %v4642 = vpop.f32.mrb[0].mxu0
        %4643 = vmatprep.mubr.bf16.mxu0 0
        %4644 = vmatmul.mubr.bf16.gmra.mrb[0].mxu0 %v3354
        %v4645 = vpop.f32.mrb[0].mxu0
        %v4646 = vadd.f32 %v4549, %v4645
        %v4647 = vpop.f32.mrb[0].mxu0
        %v4648 = vpop.f32.mrb[0].mxu0
        %v4649 = vadd.f32 %v4552, %v4648
        %v4650 = vpop.f32.mrb[0].mxu0
        %4651 = vmatprep.mubr.bf16.mxu0 0
        %4652 = vmatmul.mubr.bf16.gmra.mrb[0].mxu0 %v3357
        %v4653 = vpop.f32.mrb[0].mxu0
        %v4654 = vadd.f32 %v4557, %v4653
        %v4655 = vpop.f32.mrb[0].mxu0
        %v4656 = vpop.f32.mrb[0].mxu0
        %v4657 = vadd.f32 %v4560, %v4656
        %v4658 = vpop.f32.mrb[0].mxu0
        %4659 = vmatprep.mubr.bf16.mxu0 0
        %4660 = vmatmul.mubr.bf16.gmra.mrb[0].mxu0 %v3817
        %v4661 = vpop.f32.mrb[0].mxu0
        %v4662 = vadd.f32 %v4565, %v4661
        %v4663 = vpop.f32.mrb[0].mxu0
        %v4664 = vpop.f32.mrb[0].mxu0
        %v4665 = vadd.f32 %v4568, %v4664
        %v4666 = vpop.f32.mrb[0].mxu0
        %4667 = vmatprep.mubr.bf16.mxu0 0
        %4668 = vmatmul.mubr.bf16.gmra.mrb[0].mxu0 %v4271
        %v4669 = vpop.f32.mrb[0].mxu0
        %v4670 = vadd.f32 %v4573, %v4669
        %v4671 = vpop.f32.mrb[0].mxu0
        %v4672 = vpop.f32.mrb[0].mxu0
        %v4673 = vadd.f32 %v4576, %v4672
        %v4674 = vpop.f32.mrb[0].mxu0
        %4675 = vdwg.mxu0
        %v4676 = vadd.f32 %v4273, %v4614
        %v4677 = vadd.f32 %v4274, %v4617
        %v4678 = vadd.f32 %v4275, %v4622
        %v4679 = vadd.f32 %v4276, %v4625
        %v4680 = vadd.f32 %v4277, %v4630
        %v4681 = vadd.f32 %v4278, %v4633
        %v4682 = vadd.f32 %v4279, %v4638
        %v4683 = vadd.f32 %v4280, %v4641
        %v4684 = vadd.f32 %v4281, %v4646
        %v4685 = vadd.f32 %v4282, %v4649
        %v4686 = vadd.f32 %v4283, %v4654
        %v4687 = vadd.f32 %v4284, %v4657
        %v4688 = vadd.f32 %v4285, %v4662
        %v4689 = vadd.f32 %v4286, %v4665
        %v4690 = vadd.f32 %v4287, %v4670
        %v4691 = vadd.f32 %v4288, %v4673
        %4692 = vst [vmem:[#allocation2] sm:$0xff] %v4676
        %4693 = vst [vmem:[#allocation2 + $0x8] sm:$0xff] %v4677
        %4694 = vst [vmem:[#allocation2 + $0x10] sm:$0xff] %v4678
        %4695 = vst [vmem:[#allocation2 + $0x18] sm:$0xff] %v4679
        %4696 = vst [vmem:[#allocation2 + $0x20] sm:$0xff] %v4680
        %4697 = vst [vmem:[#allocation2 + $0x28] sm:$0xff] %v4681
        %4698 = vst [vmem:[#allocation2 + $0x30] sm:$0xff] %v4682
        %4699 = vst [vmem:[#allocation2 + $0x38] sm:$0xff] %v4683
        %4700 = vst [vmem:[#allocation2 + $0x40] sm:$0xff] %v4684
        %4701 = vst [vmem:[#allocation2 + $0x48] sm:$0xff] %v4685
        %4702 = vst [vmem:[#allocation2 + $0x50] sm:$0xff] %v4686
        %4703 = vst [vmem:[#allocation2 + $0x58] sm:$0xff] %v4687
        %4704 = vst [vmem:[#allocation2 + $0x60] sm:$0xff] %v4688
        %4705 = vst [vmem:[#allocation2 + $0x68] sm:$0xff] %v4689
        %4706 = vst [vmem:[#allocation2 + $0x70] sm:$0xff] %v4690
        %4707 = vst [vmem:[#allocation2 + $0x78] sm:$0xff] %v4691
        %v4709 = vshrl.u32 %v3176, 16
        %v4711 = vshll.u32 %v3176, 16
        %v4713 = vrot.slane %v4711, 1
        %v4714 = vor.u32 %v4709, %v4713
        %v4716 = vshll.u32 %v3177, 16
        %v4718 = vrot.slane %v4716, 1
        %v4719 = vsel %vm3212, %v4714, %v4718
        %v4721 = vshrl.u32 %v3178, 16
        %v4723 = vshll.u32 %v3178, 16
        %v4725 = vrot.slane %v4723, 1
        %v4726 = vor.u32 %v4721, %v4725
        %v4728 = vshll.u32 %v3179, 16
        %v4730 = vrot.slane %v4728, 1
        %v4731 = vsel %vm3212, %v4726, %v4730
        %v4733 = vshrl.u32 %v3180, 16
        %v4735 = vshll.u32 %v3180, 16
        %v4737 = vrot.slane %v4735, 1
        %v4738 = vor.u32 %v4733, %v4737
        %v4740 = vshll.u32 %v3181, 16
        %v4742 = vrot.slane %v4740, 1
        %v4743 = vsel %vm3212, %v4738, %v4742
        %v4745 = vshrl.u32 %v3182, 16
        %v4747 = vshll.u32 %v3182, 16
        %v4749 = vrot.slane %v4747, 1
        %v4750 = vor.u32 %v4745, %v4749
        %v4752 = vshll.u32 %v3183, 16
        %v4754 = vrot.slane %v4752, 1
        %v4755 = vsel %vm3212, %v4750, %v4754
        %v4757 = vshrl.u32 %v3184, 16
        %v4759 = vshll.u32 %v3184, 16
        %v4761 = vrot.slane %v4759, 1
        %v4762 = vor.u32 %v4757, %v4761
        %v4764 = vshll.u32 %v3185, 16
        %v4766 = vrot.slane %v4764, 1
        %v4767 = vsel %vm3212, %v4762, %v4766
        %v4769 = vshrl.u32 %v3186, 16
        %v4771 = vshll.u32 %v3186, 16
        %v4773 = vrot.slane %v4771, 1
        %v4774 = vor.u32 %v4769, %v4773
        %v4776 = vshll.u32 %v3187, 16
        %v4778 = vrot.slane %v4776, 1
        %v4779 = vsel %vm3212, %v4774, %v4778
        %v4781 = vshrl.u32 %v3188, 16
        %v4783 = vshll.u32 %v3188, 16
        %v4785 = vrot.slane %v4783, 1
        %v4786 = vor.u32 %v4781, %v4785
        %v4788 = vshll.u32 %v3189, 16
        %v4790 = vrot.slane %v4788, 1
        %v4791 = vsel %vm3212, %v4786, %v4790
        %v4793 = vshrl.u32 %v3190, 16
        %v4795 = vshll.u32 %v3190, 16
        %v4797 = vrot.slane %v4795, 1
        %v4798 = vor.u32 %v4793, %v4797
        %v4800 = vshll.u32 %v3191, 16
        %v4802 = vrot.slane %v4800, 1
        %v4803 = vsel %vm3212, %v4798, %v4802
        %v4828 = vrot.slane %v3176, 1
        %v4829 = vrot.slane %v3177, 1
        %v4830 = vsel %vm3333, %v4828, %v4829
        %v4831 = vrot.slane %v3178, 1
        %v4832 = vrot.slane %v3179, 1
        %v4833 = vsel %vm3333, %v4831, %v4832
        %v4834 = vrot.slane %v3180, 1
        %v4835 = vrot.slane %v3181, 1
        %v4836 = vsel %vm3333, %v4834, %v4835
        %v4837 = vrot.slane %v3182, 1
        %v4838 = vrot.slane %v3183, 1
        %v4839 = vsel %vm3333, %v4837, %v4838
        %v4840 = vrot.slane %v3184, 1
        %v4841 = vrot.slane %v3185, 1
        %v4842 = vsel %vm3333, %v4840, %v4841
        %v4843 = vrot.slane %v3186, 1
        %v4844 = vrot.slane %v3187, 1
        %v4845 = vsel %vm3333, %v4843, %v4844
        %v4846 = vrot.slane %v3188, 1
        %v4847 = vrot.slane %v3189, 1
        %v4848 = vsel %vm3333, %v4846, %v4847
        %v4849 = vrot.slane %v3190, 1
        %v4850 = vrot.slane %v3191, 1
        %v4851 = vsel %vm3333, %v4849, %v4850
        %v4860 = vld [vmem:[#allocation2] sm:$0xff]
        %v4861 = vld [vmem:[#allocation2 + $0x8] sm:$0xff]
        %v4862 = vld [vmem:[#allocation2 + $0x10] sm:$0xff]
        %v4863 = vld [vmem:[#allocation2 + $0x18] sm:$0xff]
        %v4864 = vld [vmem:[#allocation2 + $0x20] sm:$0xff]
        %v4865 = vld [vmem:[#allocation2 + $0x28] sm:$0xff]
        %v4866 = vld [vmem:[#allocation2 + $0x30] sm:$0xff]
        %v4867 = vld [vmem:[#allocation2 + $0x38] sm:$0xff]
        %v4868 = vld [vmem:[#allocation2 + $0x40] sm:$0xff]
        %v4869 = vld [vmem:[#allocation2 + $0x48] sm:$0xff]
        %v4870 = vld [vmem:[#allocation2 + $0x50] sm:$0xff]
        %v4871 = vld [vmem:[#allocation2 + $0x58] sm:$0xff]
        %v4872 = vld [vmem:[#allocation2 + $0x60] sm:$0xff]
        %v4873 = vld [vmem:[#allocation2 + $0x68] sm:$0xff]
        %v4874 = vld [vmem:[#allocation2 + $0x70] sm:$0xff]
        %v4875 = vld [vmem:[#allocation2 + $0x78] sm:$0xff]
        %v4876 = vld [vmem:[#allocation14] sm:$0xf]
        %v4877 = vld [vmem:[#allocation14 + $0x4] sm:$0xf]
        %v4878 = vld [vmem:[#allocation14 + $0x8] sm:$0xf]
        %v4879 = vld [vmem:[#allocation14 + $0xc] sm:$0xf]
        %v4880 = vld [vmem:[#allocation14 + $0x10] sm:$0xf]
        %v4881 = vld [vmem:[#allocation14 + $0x14] sm:$0xf]
        %v4882 = vld [vmem:[#allocation14 + $0x18] sm:$0xf]
        %v4883 = vld [vmem:[#allocation14 + $0x1c] sm:$0xf]
        %v4884 = vld [vmem:[#allocation14 + $0x20] sm:$0xf]
        %v4885 = vld [vmem:[#allocation14 + $0x24] sm:$0xf]
        %v4886 = vld [vmem:[#allocation14 + $0x28] sm:$0xf]
        %v4887 = vld [vmem:[#allocation14 + $0x2c] sm:$0xf]
        %v4888 = vld [vmem:[#allocation14 + $0x30] sm:$0xf]
        %v4889 = vld [vmem:[#allocation14 + $0x34] sm:$0xf]
        %v4890 = vld [vmem:[#allocation14 + $0x38] sm:$0xf]
        %v4891 = vld [vmem:[#allocation14 + $0x3c] sm:$0xf]
        %v4892 = vld [vmem:[#allocation14 + $0x40] sm:$0xf]
        %v4893 = vld [vmem:[#allocation14 + $0x44] sm:$0xf]
        %v4894 = vld [vmem:[#allocation14 + $0x48] sm:$0xf]
        %v4895 = vld [vmem:[#allocation14 + $0x4c] sm:$0xf]
        %v4896 = vld [vmem:[#allocation14 + $0x50] sm:$0xf]
        %v4897 = vld [vmem:[#allocation14 + $0x54] sm:$0xf]
        %v4898 = vld [vmem:[#allocation14 + $0x58] sm:$0xf]
        %v4899 = vld [vmem:[#allocation14 + $0x5c] sm:$0xf]
        %v4900 = vld [vmem:[#allocation14 + $0x60] sm:$0xf]
        %v4901 = vld [vmem:[#allocation14 + $0x64] sm:$0xf]
        %v4902 = vld [vmem:[#allocation14 + $0x68] sm:$0xf]
        %v4903 = vld [vmem:[#allocation14 + $0x6c] sm:$0xf]
        %v4904 = vld [vmem:[#allocation14 + $0x70] sm:$0xf]
        %v4905 = vld [vmem:[#allocation14 + $0x74] sm:$0xf]
        %v4906 = vld [vmem:[#allocation14 + $0x78] sm:$0xf]
        %v4907 = vld [vmem:[#allocation14 + $0x7c] sm:$0xf]
        %v4908 = vld [vmem:[#allocation14 + $0x80] sm:$0xf]
        %v4909 = vld [vmem:[#allocation14 + $0x84] sm:$0xf]
        %v4910 = vld [vmem:[#allocation14 + $0x88] sm:$0xf]
        %v4911 = vld [vmem:[#allocation14 + $0x8c] sm:$0xf]
        %v4912 = vld [vmem:[#allocation14 + $0x90] sm:$0xf]
        %v4913 = vld [vmem:[#allocation14 + $0x94] sm:$0xf]
        %v4914 = vld [vmem:[#allocation14 + $0x98] sm:$0xf]
        %v4915 = vld [vmem:[#allocation14 + $0x9c] sm:$0xf]
        %v4916 = vld [vmem:[#allocation14 + $0xa0] sm:$0xf]
        %v4917 = vld [vmem:[#allocation14 + $0xa4] sm:$0xf]
        %v4918 = vld [vmem:[#allocation14 + $0xa8] sm:$0xf]
        %v4919 = vld [vmem:[#allocation14 + $0xac] sm:$0xf]
        %v4920 = vld [vmem:[#allocation14 + $0xb0] sm:$0xf]
        %v4921 = vld [vmem:[#allocation14 + $0xb4] sm:$0xf]
        %v4922 = vld [vmem:[#allocation14 + $0xb8] sm:$0xf]
        %v4923 = vld [vmem:[#allocation14 + $0xbc] sm:$0xf]
        %v4972 = vunpack.c.l.b16 %v4876
        %v4973 = vunpack.c.l.b16 %v4877
        %v4974 = vunpack.c.l.b16 %v4878
        %v4975 = vunpack.c.l.b16 %v4879
        %v4976 = vunpack.c.l.b16 %v4880
        %v4977 = vunpack.c.l.b16 %v4881
        %v4978 = vunpack.c.l.b16 %v4882
        %v4979 = vunpack.c.l.b16 %v4883
        %v4980 = vunpack.c.l.b16 %v4884
        %v4981 = vunpack.c.l.b16 %v4885
        %v4982 = vunpack.c.l.b16 %v4886
        %v4983 = vunpack.c.l.b16 %v4887
        %v4984 = vunpack.c.l.b16 %v4888
        %v4985 = vunpack.c.l.b16 %v4889
        %v4986 = vunpack.c.l.b16 %v4890
        %v4987 = vunpack.c.l.b16 %v4891
        %v4988 = vunpack.c.l.b16 %v4892
        %v4989 = vunpack.c.l.b16 %v4893
        %v4990 = vunpack.c.l.b16 %v4894
        %v4991 = vunpack.c.l.b16 %v4895
        %v4992 = vunpack.c.l.b16 %v4896
        %v4993 = vunpack.c.l.b16 %v4897
        %v4994 = vunpack.c.l.b16 %v4898
        %v4995 = vunpack.c.l.b16 %v4899
        %v4996 = vunpack.c.l.b16 %v4900
        %v4997 = vunpack.c.l.b16 %v4901
        %v4998 = vunpack.c.l.b16 %v4902
        %v4999 = vunpack.c.l.b16 %v4903
        %v5000 = vunpack.c.l.b16 %v4904
        %v5001 = vunpack.c.l.b16 %v4905
        %v5002 = vunpack.c.l.b16 %v4906
        %v5003 = vunpack.c.l.b16 %v4907
        %v5004 = vunpack.c.l.b16 %v4908
        %v5005 = vunpack.c.l.b16 %v4909
        %v5006 = vunpack.c.l.b16 %v4910
        %v5007 = vunpack.c.l.b16 %v4911
        %v5008 = vunpack.c.l.b16 %v4912
        %v5009 = vunpack.c.l.b16 %v4913
        %v5010 = vunpack.c.l.b16 %v4914
        %v5011 = vunpack.c.l.b16 %v4915
        %v5012 = vunpack.c.l.b16 %v4916
        %v5013 = vunpack.c.l.b16 %v4917
        %v5014 = vunpack.c.l.b16 %v4918
        %v5015 = vunpack.c.l.b16 %v4919
        %v5016 = vunpack.c.l.b16 %v4920
        %v5017 = vunpack.c.l.b16 %v4921
        %v5018 = vunpack.c.l.b16 %v4922
        %v5019 = vunpack.c.l.b16 %v4923
        %v5020 = vpack.c.b16 %v4973, %v4972
        %v5021 = vpack.c.b16 %v4975, %v4974
        %v5022 = vpack.c.b16 %v4977, %v4976
        %v5023 = vpack.c.b16 %v4979, %v4978
        %v5024 = vpack.c.b16 %v4981, %v4980
        %v5025 = vpack.c.b16 %v4983, %v4982
        %v5026 = vpack.c.b16 %v4985, %v4984
        %v5027 = vpack.c.b16 %v4987, %v4986
        %v5028 = vpack.c.b16 %v4989, %v4988
        %v5029 = vpack.c.b16 %v4991, %v4990
        %v5030 = vpack.c.b16 %v4993, %v4992
        %v5031 = vpack.c.b16 %v4995, %v4994
        %v5032 = vpack.c.b16 %v4997, %v4996
        %v5033 = vpack.c.b16 %v4999, %v4998
        %v5034 = vpack.c.b16 %v5001, %v5000
        %v5035 = vpack.c.b16 %v5003, %v5002
        %v5036 = vpack.c.b16 %v5005, %v5004
        %v5037 = vpack.c.b16 %v5007, %v5006
        %v5038 = vpack.c.b16 %v5009, %v5008
        %v5039 = vpack.c.b16 %v5011, %v5010
        %v5040 = vpack.c.b16 %v5013, %v5012
        %v5041 = vpack.c.b16 %v5015, %v5014
        %v5042 = vpack.c.b16 %v5017, %v5016
        %v5043 = vpack.c.b16 %v5019, %v5018
        %5068 = vmatprep.subr.bf16.mxu0 0
        %5069 = vmatpush1.bf16.msra.mxu0 %v5020
        %5070 = vmatprep.subr.bf16.mxu0 0
        %5071 = vmatpush1.bf16.msra.mxu0 %v5021
        %5072 = vmatprep.subr.bf16.mxu0 0
        %5073 = vmatpush1.bf16.msra.mxu0 %v5022
        %5074 = vmatprep.subr.bf16.mxu0 0
        %5075 = vmatpush1.bf16.msra.mxu0 %v5023
        %5076 = vmatprep.subr.bf16.mxu0 0
        %5077 = vmatpush1.bf16.msra.mxu0 %v5024
        %5078 = vmatprep.subr.bf16.mxu0 0
        %5079 = vmatpush1.bf16.msra.mxu0 %v5025
        %5080 = vmatprep.subr.bf16.mxu0 0
        %5081 = vmatpush1.bf16.msra.mxu0 %v5026
        %5082 = vmatprep.subr.bf16.mxu0 0
        %5083 = vmatpush1.bf16.msra.mxu0 %v5027
        %5084 = vmatprep.subr.bf16.mxu0 0
        %5085 = vmatpush1.bf16.msra.mxu0 %v5028
        %5086 = vmatprep.subr.bf16.mxu0 0
        %5087 = vmatpush1.bf16.msra.mxu0 %v5029
        %5088 = vmatprep.subr.bf16.mxu0 0
        %5089 = vmatpush1.bf16.msra.mxu0 %v5030
        %5090 = vmatprep.subr.bf16.mxu0 0
        %5091 = vmatpush1.bf16.msra.mxu0 %v5031
        %5092 = vmatprep.subr.bf16.mxu0 0
        %5093 = vmatpush1.bf16.msra.mxu0 %v5032
        %5094 = vmatprep.subr.bf16.mxu0 0
        %5095 = vmatpush1.bf16.msra.mxu0 %v5033
        %5096 = vmatprep.subr.bf16.mxu0 0
        %5097 = vmatpush1.bf16.msra.mxu0 %v5034
        %5098 = vmatprep.subr.bf16.mxu0 0
        %5099 = vmatpush1.bf16.msra.mxu0 %v5035
        %5100 = vmatprep.mubr.bf16.mxu0 %v4719
        %5101 = vmatmul.mubr.bf16.gmra.mrb[0].mxu0 %v3176
        %v5102 = vpop.f32.mrb[0].mxu0
        %v5103 = vadd.f32 0.0, %v5102
        %v5104 = vpop.f32.mrb[0].mxu0
        %v5105 = vpop.f32.mrb[0].mxu0
        %v5106 = vadd.f32 0.0, %v5105
        %v5107 = vpop.f32.mrb[0].mxu0
        %5108 = vmatprep.mubr.bf16.mxu0 %v4731
        %5109 = vmatmul.mubr.bf16.gmra.mrb[0].mxu0 %v3178
        %v5110 = vpop.f32.mrb[0].mxu0
        %v5111 = vadd.f32 0.0, %v5110
        %v5112 = vpop.f32.mrb[0].mxu0
        %v5113 = vpop.f32.mrb[0].mxu0
        %v5114 = vadd.f32 0.0, %v5113
        %v5115 = vpop.f32.mrb[0].mxu0
        %5116 = vmatprep.mubr.bf16.mxu0 %v4743
        %5117 = vmatmul.mubr.bf16.gmra.mrb[0].mxu0 %v3180
        %v5118 = vpop.f32.mrb[0].mxu0
        %v5119 = vadd.f32 0.0, %v5118
        %v5120 = vpop.f32.mrb[0].mxu0
        %v5121 = vpop.f32.mrb[0].mxu0
        %v5122 = vadd.f32 0.0, %v5121
        %v5123 = vpop.f32.mrb[0].mxu0
        %5124 = vmatprep.mubr.bf16.mxu0 %v4755
        %5125 = vmatmul.mubr.bf16.gmra.mrb[0].mxu0 %v3182
        %v5126 = vpop.f32.mrb[0].mxu0
        %v5127 = vadd.f32 0.0, %v5126
        %v5128 = vpop.f32.mrb[0].mxu0
        %v5129 = vpop.f32.mrb[0].mxu0
        %v5130 = vadd.f32 0.0, %v5129
        %v5131 = vpop.f32.mrb[0].mxu0
        %5132 = vmatprep.mubr.bf16.mxu0 %v4767
        %5133 = vmatmul.mubr.bf16.gmra.mrb[0].mxu0 %v3184
        %v5134 = vpop.f32.mrb[0].mxu0
        %v5135 = vadd.f32 0.0, %v5134
        %v5136 = vpop.f32.mrb[0].mxu0
        %v5137 = vpop.f32.mrb[0].mxu0
        %v5138 = vadd.f32 0.0, %v5137
        %v5139 = vpop.f32.mrb[0].mxu0
        %5140 = vmatprep.mubr.bf16.mxu0 %v4779
        %5141 = vmatmul.mubr.bf16.gmra.mrb[0].mxu0 %v3186
        %v5142 = vpop.f32.mrb[0].mxu0
        %v5143 = vadd.f32 0.0, %v5142
        %v5144 = vpop.f32.mrb[0].mxu0
        %v5145 = vpop.f32.mrb[0].mxu0
        %v5146 = vadd.f32 0.0, %v5145
        %v5147 = vpop.f32.mrb[0].mxu0
        %5148 = vmatprep.mubr.bf16.mxu0 %v4791
        %5149 = vmatmul.mubr.bf16.gmra.mrb[0].mxu0 %v3188
        %v5150 = vpop.f32.mrb[0].mxu0
        %v5151 = vadd.f32 0.0, %v5150
        %v5152 = vpop.f32.mrb[0].mxu0
        %v5153 = vpop.f32.mrb[0].mxu0
        %v5154 = vadd.f32 0.0, %v5153
        %v5155 = vpop.f32.mrb[0].mxu0
        %5156 = vmatprep.mubr.bf16.mxu0 %v4803
        %5157 = vmatmul.mubr.bf16.gmra.mrb[0].mxu0 %v3190
        %v5158 = vpop.f32.mrb[0].mxu0
        %v5159 = vadd.f32 0.0, %v5158
        %v5160 = vpop.f32.mrb[0].mxu0
        %v5161 = vpop.f32.mrb[0].mxu0
        %v5162 = vadd.f32 0.0, %v5161
        %v5163 = vpop.f32.mrb[0].mxu0
        %5164 = vdwg.mxu0
        %5165 = vmatprep.subr.bf16.mxu0 0
        %5166 = vmatpush1.bf16.msra.mxu0 %v5036
        %5167 = vmatprep.subr.bf16.mxu0 0
        %5168 = vmatpush1.bf16.msra.mxu0 %v5037
        %5169 = vmatprep.subr.bf16.mxu0 0
        %5170 = vmatpush1.bf16.msra.mxu0 %v5038
        %5171 = vmatprep.subr.bf16.mxu0 0
        %5172 = vmatpush1.bf16.msra.mxu0 %v5039
        %5173 = vmatprep.subr.bf16.mxu0 0
        %5174 = vmatpush1.bf16.msra.mxu0 %v5040
        %5175 = vmatprep.subr.bf16.mxu0 0
        %5176 = vmatpush1.bf16.msra.mxu0 %v5041
        %5177 = vmatprep.subr.bf16.mxu0 0
        %5178 = vmatpush1.bf16.msra.mxu0 %v5042
        %5179 = vmatprep.subr.bf16.mxu0 0
        %5180 = vmatpush1.bf16.msra.mxu0 %v5043
        %5181 = vmatprep.subr.bf16.mxu0 0
        %5182 = vmatpush1.bf16.msra.mxu0 0
        %5183 = vmatprep.subr.bf16.mxu0 0
        %5184 = vmatpush1.bf16.msra.mxu0 0
        %5185 = vmatprep.subr.bf16.mxu0 0
        %5186 = vmatpush1.bf16.msra.mxu0 0
        %5187 = vmatprep.subr.bf16.mxu0 0
        %5188 = vmatpush1.bf16.msra.mxu0 0
        %5189 = vmatprep.subr.bf16.mxu0 0
        %5190 = vmatpush1.bf16.msra.mxu0 0
        %5191 = vmatprep.subr.bf16.mxu0 0
        %5192 = vmatpush1.bf16.msra.mxu0 0
        %5193 = vmatprep.subr.bf16.mxu0 0
        %5194 = vmatpush1.bf16.msra.mxu0 0
        %5195 = vmatprep.subr.bf16.mxu0 0
        %5196 = vmatpush1.bf16.msra.mxu0 0
        %5197 = vmatprep.mubr.bf16.mxu0 0
        %5198 = vmatmul.mubr.bf16.gmra.mrb[0].mxu0 %v4830
        %v5199 = vpop.f32.mrb[0].mxu0
        %v5200 = vadd.f32 %v5103, %v5199
        %v5201 = vpop.f32.mrb[0].mxu0
        %v5202 = vpop.f32.mrb[0].mxu0
        %v5203 = vadd.f32 %v5106, %v5202
        %v5204 = vpop.f32.mrb[0].mxu0
        %5205 = vmatprep.mubr.bf16.mxu0 0
        %5206 = vmatmul.mubr.bf16.gmra.mrb[0].mxu0 %v4833
        %v5207 = vpop.f32.mrb[0].mxu0
        %v5208 = vadd.f32 %v5111, %v5207
        %v5209 = vpop.f32.mrb[0].mxu0
        %v5210 = vpop.f32.mrb[0].mxu0
        %v5211 = vadd.f32 %v5114, %v5210
        %v5212 = vpop.f32.mrb[0].mxu0
        %5213 = vmatprep.mubr.bf16.mxu0 0
        %5214 = vmatmul.mubr.bf16.gmra.mrb[0].mxu0 %v4836
        %v5215 = vpop.f32.mrb[0].mxu0
        %v5216 = vadd.f32 %v5119, %v5215
        %v5217 = vpop.f32.mrb[0].mxu0
        %v5218 = vpop.f32.mrb[0].mxu0
        %v5219 = vadd.f32 %v5122, %v5218
        %v5220 = vpop.f32.mrb[0].mxu0
        %5221 = vmatprep.mubr.bf16.mxu0 0
        %5222 = vmatmul.mubr.bf16.gmra.mrb[0].mxu0 %v4839
        %v5223 = vpop.f32.mrb[0].mxu0
        %v5224 = vadd.f32 %v5127, %v5223
        %v5225 = vpop.f32.mrb[0].mxu0
        %v5226 = vpop.f32.mrb[0].mxu0
        %v5227 = vadd.f32 %v5130, %v5226
        %v5228 = vpop.f32.mrb[0].mxu0
        %5229 = vmatprep.mubr.bf16.mxu0 0
        %5230 = vmatmul.mubr.bf16.gmra.mrb[0].mxu0 %v4842
        %v5231 = vpop.f32.mrb[0].mxu0
        %v5232 = vadd.f32 %v5135, %v5231
        %v5233 = vpop.f32.mrb[0].mxu0
        %v5234 = vpop.f32.mrb[0].mxu0
        %v5235 = vadd.f32 %v5138, %v5234
        %v5236 = vpop.f32.mrb[0].mxu0
        %5237 = vmatprep.mubr.bf16.mxu0 0
        %5238 = vmatmul.mubr.bf16.gmra.mrb[0].mxu0 %v4845
        %v5239 = vpop.f32.mrb[0].mxu0
        %v5240 = vadd.f32 %v5143, %v5239
        %v5241 = vpop.f32.mrb[0].mxu0
        %v5242 = vpop.f32.mrb[0].mxu0
        %v5243 = vadd.f32 %v5146, %v5242
        %v5244 = vpop.f32.mrb[0].mxu0
        %5245 = vmatprep.mubr.bf16.mxu0 0
        %5246 = vmatmul.mubr.bf16.gmra.mrb[0].mxu0 %v4848
        %v5247 = vpop.f32.mrb[0].mxu0
        %v5248 = vadd.f32 %v5151, %v5247
        %v5249 = vpop.f32.mrb[0].mxu0
        %v5250 = vpop.f32.mrb[0].mxu0
        %v5251 = vadd.f32 %v5154, %v5250
        %v5252 = vpop.f32.mrb[0].mxu0
        %5253 = vmatprep.mubr.bf16.mxu0 0
        %5254 = vmatmul.mubr.bf16.gmra.mrb[0].mxu0 %v4851
        %v5255 = vpop.f32.mrb[0].mxu0
        %v5256 = vadd.f32 %v5159, %v5255
        %v5257 = vpop.f32.mrb[0].mxu0
        %v5258 = vpop.f32.mrb[0].mxu0
        %v5259 = vadd.f32 %v5162, %v5258
        %v5260 = vpop.f32.mrb[0].mxu0
        %5261 = vdwg.mxu0
        %v5262 = vadd.f32 %v4860, %v5200
        %v5263 = vadd.f32 %v4861, %v5203
        %v5264 = vadd.f32 %v4862, %v5208
        %v5265 = vadd.f32 %v4863, %v5211
        %v5266 = vadd.f32 %v4864, %v5216
        %v5267 = vadd.f32 %v4865, %v5219
        %v5268 = vadd.f32 %v4866, %v5224
        %v5269 = vadd.f32 %v4867, %v5227
        %v5270 = vadd.f32 %v4868, %v5232
        %v5271 = vadd.f32 %v4869, %v5235
        %v5272 = vadd.f32 %v4870, %v5240
        %v5273 = vadd.f32 %v4871, %v5243
        %v5274 = vadd.f32 %v4872, %v5248
        %v5275 = vadd.f32 %v4873, %v5251
        %v5276 = vadd.f32 %v4874, %v5256
        %v5277 = vadd.f32 %v4875, %v5259
        %5278 = vst [vmem:[#allocation2] sm:$0xff] %v5262
        %5279 = vst [vmem:[#allocation2 + $0x8] sm:$0xff] %v5263
        %5280 = vst [vmem:[#allocation2 + $0x10] sm:$0xff] %v5264
        %5281 = vst [vmem:[#allocation2 + $0x18] sm:$0xff] %v5265
        %5282 = vst [vmem:[#allocation2 + $0x20] sm:$0xff] %v5266
        %5283 = vst [vmem:[#allocation2 + $0x28] sm:$0xff] %v5267
        %5284 = vst [vmem:[#allocation2 + $0x30] sm:$0xff] %v5268
        %5285 = vst [vmem:[#allocation2 + $0x38] sm:$0xff] %v5269
        %5286 = vst [vmem:[#allocation2 + $0x40] sm:$0xff] %v5270
        %5287 = vst [vmem:[#allocation2 + $0x48] sm:$0xff] %v5271
        %5288 = vst [vmem:[#allocation2 + $0x50] sm:$0xff] %v5272
        %5289 = vst [vmem:[#allocation2 + $0x58] sm:$0xff] %v5273
        %5290 = vst [vmem:[#allocation2 + $0x60] sm:$0xff] %v5274
        %5291 = vst [vmem:[#allocation2 + $0x68] sm:$0xff] %v5275
        %5292 = vst [vmem:[#allocation2 + $0x70] sm:$0xff] %v5276
        %5293 = vst [vmem:[#allocation2 + $0x78] sm:$0xff] %v5277
        %v5295 = vshrl.u32 %v3192, 16
        %v5297 = vshll.u32 %v3192, 16
        %v5299 = vrot.slane %v5297, 1
        %v5300 = vor.u32 %v5295, %v5299
        %v5302 = vshll.u32 %v3193, 16
        %v5304 = vrot.slane %v5302, 1
        %v5305 = vsel %vm3212, %v5300, %v5304
        %v5309 = vrot.slane %v3192, 1
        %v5310 = vrot.slane %v3193, 1
        %v5311 = vsel %vm3333, %v5309, %v5310
        %v5313 = vld [vmem:[#allocation2] sm:$0xff]
        %v5314 = vld [vmem:[#allocation2 + $0x8] sm:$0xff]
        %v5315 = vld [vmem:[#allocation2 + $0x10] sm:$0xff]
        %v5316 = vld [vmem:[#allocation2 + $0x18] sm:$0xff]
        %v5317 = vld [vmem:[#allocation2 + $0x20] sm:$0xff]
        %v5318 = vld [vmem:[#allocation2 + $0x28] sm:$0xff]
        %v5319 = vld [vmem:[#allocation2 + $0x30] sm:$0xff]
        %v5320 = vld [vmem:[#allocation2 + $0x38] sm:$0xff]
        %v5321 = vld [vmem:[#allocation2 + $0x40] sm:$0xff]
        %v5322 = vld [vmem:[#allocation2 + $0x48] sm:$0xff]
        %v5323 = vld [vmem:[#allocation2 + $0x50] sm:$0xff]
        %v5324 = vld [vmem:[#allocation2 + $0x58] sm:$0xff]
        %v5325 = vld [vmem:[#allocation2 + $0x60] sm:$0xff]
        %v5326 = vld [vmem:[#allocation2 + $0x68] sm:$0xff]
        %v5327 = vld [vmem:[#allocation2 + $0x70] sm:$0xff]
        %v5328 = vld [vmem:[#allocation2 + $0x78] sm:$0xff]
        %s5329 = scalar_lea.vmem [#allocation14], 192
        %v5330 = vld [vmem:[%s5329] sm:$0xf]
        %v5331 = vld [vmem:[%s5329 + $0x4] sm:$0xf]
        %v5332 = vld [vmem:[%s5329 + $0x8] sm:$0xf]
        %v5333 = vld [vmem:[%s5329 + $0xc] sm:$0xf]
        %v5334 = vld [vmem:[%s5329 + $0x10] sm:$0xf]
        %v5335 = vld [vmem:[%s5329 + $0x14] sm:$0xf]
        %v5336 = vld [vmem:[%s5329 + $0x18] sm:$0xf]
        %v5337 = vld [vmem:[%s5329 + $0x1c] sm:$0xf]
        %v5338 = vld [vmem:[%s5329 + $0x20] sm:$0xf]
        %v5339 = vld [vmem:[%s5329 + $0x24] sm:$0xf]
        %v5340 = vld [vmem:[%s5329 + $0x28] sm:$0xf]
        %v5341 = vld [vmem:[%s5329 + $0x2c] sm:$0xf]
        %v5342 = vld [vmem:[%s5329 + $0x30] sm:$0xf]
        %v5343 = vld [vmem:[%s5329 + $0x34] sm:$0xf]
        %v5344 = vld [vmem:[%s5329 + $0x38] sm:$0xf]
        %v5345 = vld [vmem:[%s5329 + $0x3c] sm:$0xf]
        %v5346 = vld [vmem:[%s5329 + $0x40] sm:$0xf]
        %v5347 = vld [vmem:[%s5329 + $0x44] sm:$0xf]
        %v5348 = vld [vmem:[%s5329 + $0x48] sm:$0xf]
        %v5349 = vld [vmem:[%s5329 + $0x4c] sm:$0xf]
        %v5350 = vld [vmem:[%s5329 + $0x50] sm:$0xf]
        %v5351 = vld [vmem:[%s5329 + $0x54] sm:$0xf]
        %v5352 = vld [vmem:[%s5329 + $0x58] sm:$0xf]
        %v5353 = vld [vmem:[%s5329 + $0x5c] sm:$0xf]
        %v5354 = vld [vmem:[%s5329 + $0x60] sm:$0xf]
        %v5355 = vld [vmem:[%s5329 + $0x64] sm:$0xf]
        %v5356 = vld [vmem:[%s5329 + $0x68] sm:$0xf]
        %v5357 = vld [vmem:[%s5329 + $0x6c] sm:$0xf]
        %v5358 = vld [vmem:[%s5329 + $0x70] sm:$0xf]
        %v5359 = vld [vmem:[%s5329 + $0x74] sm:$0xf]
        %v5360 = vld [vmem:[%s5329 + $0x78] sm:$0xf]
        %v5361 = vld [vmem:[%s5329 + $0x7c] sm:$0xf]
        %v5362 = vld [vmem:[%s5329 + $0x80] sm:$0xf]
        %v5363 = vld [vmem:[%s5329 + $0x84] sm:$0xf]
        %v5364 = vld [vmem:[%s5329 + $0x88] sm:$0xf]
        %v5365 = vld [vmem:[%s5329 + $0x8c] sm:$0xf]
        %v5366 = vld [vmem:[%s5329 + $0x90] sm:$0xf]
        %v5367 = vld [vmem:[%s5329 + $0x94] sm:$0xf]
        %v5368 = vld [vmem:[%s5329 + $0x98] sm:$0xf]
        %v5369 = vld [vmem:[%s5329 + $0x9c] sm:$0xf]
        %v5370 = vld [vmem:[%s5329 + $0xa0] sm:$0xf]
        %v5371 = vld [vmem:[%s5329 + $0xa4] sm:$0xf]
        %v5372 = vld [vmem:[%s5329 + $0xa8] sm:$0xf]
        %v5373 = vld [vmem:[%s5329 + $0xac] sm:$0xf]
        %v5374 = vld [vmem:[%s5329 + $0xb0] sm:$0xf]
        %v5375 = vld [vmem:[%s5329 + $0xb4] sm:$0xf]
        %v5376 = vld [vmem:[%s5329 + $0xb8] sm:$0xf]
        %v5377 = vld [vmem:[%s5329 + $0xbc] sm:$0xf]
        %v5426 = vunpack.c.l.b16 %v5330
        %v5427 = vunpack.c.l.b16 %v5331
        %v5428 = vunpack.c.l.b16 %v5332
        %v5429 = vunpack.c.l.b16 %v5333
        %v5430 = vunpack.c.l.b16 %v5334
        %v5431 = vunpack.c.l.b16 %v5335
        %v5432 = vunpack.c.l.b16 %v5336
        %v5433 = vunpack.c.l.b16 %v5337
        %v5434 = vunpack.c.l.b16 %v5338
        %v5435 = vunpack.c.l.b16 %v5339
        %v5436 = vunpack.c.l.b16 %v5340
        %v5437 = vunpack.c.l.b16 %v5341
        %v5438 = vunpack.c.l.b16 %v5342
        %v5439 = vunpack.c.l.b16 %v5343
        %v5440 = vunpack.c.l.b16 %v5344
        %v5441 = vunpack.c.l.b16 %v5345
        %v5442 = vunpack.c.l.b16 %v5346
        %v5443 = vunpack.c.l.b16 %v5347
        %v5444 = vunpack.c.l.b16 %v5348
        %v5445 = vunpack.c.l.b16 %v5349
        %v5446 = vunpack.c.l.b16 %v5350
        %v5447 = vunpack.c.l.b16 %v5351
        %v5448 = vunpack.c.l.b16 %v5352
        %v5449 = vunpack.c.l.b16 %v5353
        %v5450 = vunpack.c.l.b16 %v5354
        %v5451 = vunpack.c.l.b16 %v5355
        %v5452 = vunpack.c.l.b16 %v5356
        %v5453 = vunpack.c.l.b16 %v5357
        %v5454 = vunpack.c.l.b16 %v5358
        %v5455 = vunpack.c.l.b16 %v5359
        %v5456 = vunpack.c.l.b16 %v5360
        %v5457 = vunpack.c.l.b16 %v5361
        %v5458 = vunpack.c.l.b16 %v5362
        %v5459 = vunpack.c.l.b16 %v5363
        %v5460 = vunpack.c.l.b16 %v5364
        %v5461 = vunpack.c.l.b16 %v5365
        %v5462 = vunpack.c.l.b16 %v5366
        %v5463 = vunpack.c.l.b16 %v5367
        %v5464 = vunpack.c.l.b16 %v5368
        %v5465 = vunpack.c.l.b16 %v5369
        %v5466 = vunpack.c.l.b16 %v5370
        %v5467 = vunpack.c.l.b16 %v5371
        %v5468 = vunpack.c.l.b16 %v5372
        %v5469 = vunpack.c.l.b16 %v5373
        %v5470 = vunpack.c.l.b16 %v5374
        %v5471 = vunpack.c.l.b16 %v5375
        %v5472 = vunpack.c.l.b16 %v5376
        %v5473 = vunpack.c.l.b16 %v5377
        %v5474 = vpack.c.b16 %v5427, %v5426
        %v5475 = vpack.c.b16 %v5429, %v5428
        %v5476 = vpack.c.b16 %v5431, %v5430
        %v5477 = vpack.c.b16 %v5433, %v5432
        %v5478 = vpack.c.b16 %v5435, %v5434
        %v5479 = vpack.c.b16 %v5437, %v5436
        %v5480 = vpack.c.b16 %v5439, %v5438
        %v5481 = vpack.c.b16 %v5441, %v5440
        %v5482 = vpack.c.b16 %v5443, %v5442
        %v5483 = vpack.c.b16 %v5445, %v5444
        %v5484 = vpack.c.b16 %v5447, %v5446
        %v5485 = vpack.c.b16 %v5449, %v5448
        %v5486 = vpack.c.b16 %v5451, %v5450
        %v5487 = vpack.c.b16 %v5453, %v5452
        %v5488 = vpack.c.b16 %v5455, %v5454
        %v5489 = vpack.c.b16 %v5457, %v5456
        %v5490 = vpack.c.b16 %v5459, %v5458
        %v5491 = vpack.c.b16 %v5461, %v5460
        %v5492 = vpack.c.b16 %v5463, %v5462
        %v5493 = vpack.c.b16 %v5465, %v5464
        %v5494 = vpack.c.b16 %v5467, %v5466
        %v5495 = vpack.c.b16 %v5469, %v5468
        %v5496 = vpack.c.b16 %v5471, %v5470
        %v5497 = vpack.c.b16 %v5473, %v5472
        %5522 = vmatprep.subr.bf16.mxu0 0
        %5523 = vmatpush1.bf16.msra.mxu0 %v5474
        %5524 = vmatprep.subr.bf16.mxu0 0
        %5525 = vmatpush1.bf16.msra.mxu0 %v5475
        %5526 = vmatprep.subr.bf16.mxu0 0
        %5527 = vmatpush1.bf16.msra.mxu0 %v5476
        %5528 = vmatprep.subr.bf16.mxu0 0
        %5529 = vmatpush1.bf16.msra.mxu0 %v5477
        %5530 = vmatprep.subr.bf16.mxu0 0
        %5531 = vmatpush1.bf16.msra.mxu0 %v5478
        %5532 = vmatprep.subr.bf16.mxu0 0
        %5533 = vmatpush1.bf16.msra.mxu0 %v5479
        %5534 = vmatprep.subr.bf16.mxu0 0
        %5535 = vmatpush1.bf16.msra.mxu0 %v5480
        %5536 = vmatprep.subr.bf16.mxu0 0
        %5537 = vmatpush1.bf16.msra.mxu0 %v5481
        %5538 = vmatprep.subr.bf16.mxu0 0
        %5539 = vmatpush1.bf16.msra.mxu0 %v5482
        %5540 = vmatprep.subr.bf16.mxu0 0
        %5541 = vmatpush1.bf16.msra.mxu0 %v5483
        %5542 = vmatprep.subr.bf16.mxu0 0
        %5543 = vmatpush1.bf16.msra.mxu0 %v5484
        %5544 = vmatprep.subr.bf16.mxu0 0
        %5545 = vmatpush1.bf16.msra.mxu0 %v5485
        %5546 = vmatprep.subr.bf16.mxu0 0
        %5547 = vmatpush1.bf16.msra.mxu0 %v5486
        %5548 = vmatprep.subr.bf16.mxu0 0
        %5549 = vmatpush1.bf16.msra.mxu0 %v5487
        %5550 = vmatprep.subr.bf16.mxu0 0
        %5551 = vmatpush1.bf16.msra.mxu0 %v5488
        %5552 = vmatprep.subr.bf16.mxu0 0
        %5553 = vmatpush1.bf16.msra.mxu0 %v5489
        %5554 = vmatprep.mubr.bf16.mxu0 %v4731
        %5555 = vmatmul.mubr.bf16.gmra.mrb[0].mxu0 %v3178
        %v5556 = vpop.f32.mrb[0].mxu0
        %v5557 = vadd.f32 0.0, %v5556
        %v5558 = vpop.f32.mrb[0].mxu0
        %v5559 = vpop.f32.mrb[0].mxu0
        %v5560 = vadd.f32 0.0, %v5559
        %v5561 = vpop.f32.mrb[0].mxu0
        %5562 = vmatprep.mubr.bf16.mxu0 %v4743
        %5563 = vmatmul.mubr.bf16.gmra.mrb[0].mxu0 %v3180
        %v5564 = vpop.f32.mrb[0].mxu0
        %v5565 = vadd.f32 0.0, %v5564
        %v5566 = vpop.f32.mrb[0].mxu0
        %v5567 = vpop.f32.mrb[0].mxu0
        %v5568 = vadd.f32 0.0, %v5567
        %v5569 = vpop.f32.mrb[0].mxu0
        %5570 = vmatprep.mubr.bf16.mxu0 %v4755
        %5571 = vmatmul.mubr.bf16.gmra.mrb[0].mxu0 %v3182
        %v5572 = vpop.f32.mrb[0].mxu0
        %v5573 = vadd.f32 0.0, %v5572
        %v5574 = vpop.f32.mrb[0].mxu0
        %v5575 = vpop.f32.mrb[0].mxu0
        %v5576 = vadd.f32 0.0, %v5575
        %v5577 = vpop.f32.mrb[0].mxu0
        %5578 = vmatprep.mubr.bf16.mxu0 %v4767
        %5579 = vmatmul.mubr.bf16.gmra.mrb[0].mxu0 %v3184
        %v5580 = vpop.f32.mrb[0].mxu0
        %v5581 = vadd.f32 0.0, %v5580
        %v5582 = vpop.f32.mrb[0].mxu0
        %v5583 = vpop.f32.mrb[0].mxu0
        %v5584 = vadd.f32 0.0, %v5583
        %v5585 = vpop.f32.mrb[0].mxu0
        %5586 = vmatprep.mubr.bf16.mxu0 %v4779
        %5587 = vmatmul.mubr.bf16.gmra.mrb[0].mxu0 %v3186
        %v5588 = vpop.f32.mrb[0].mxu0
        %v5589 = vadd.f32 0.0, %v5588
        %v5590 = vpop.f32.mrb[0].mxu0
        %v5591 = vpop.f32.mrb[0].mxu0
        %v5592 = vadd.f32 0.0, %v5591
        %v5593 = vpop.f32.mrb[0].mxu0
        %5594 = vmatprep.mubr.bf16.mxu0 %v4791
        %5595 = vmatmul.mubr.bf16.gmra.mrb[0].mxu0 %v3188
        %v5596 = vpop.f32.mrb[0].mxu0
        %v5597 = vadd.f32 0.0, %v5596
        %v5598 = vpop.f32.mrb[0].mxu0
        %v5599 = vpop.f32.mrb[0].mxu0
        %v5600 = vadd.f32 0.0, %v5599
        %v5601 = vpop.f32.mrb[0].mxu0
        %5602 = vmatprep.mubr.bf16.mxu0 %v4803
        %5603 = vmatmul.mubr.bf16.gmra.mrb[0].mxu0 %v3190
        %v5604 = vpop.f32.mrb[0].mxu0
        %v5605 = vadd.f32 0.0, %v5604
        %v5606 = vpop.f32.mrb[0].mxu0
        %v5607 = vpop.f32.mrb[0].mxu0
        %v5608 = vadd.f32 0.0, %v5607
        %v5609 = vpop.f32.mrb[0].mxu0
        %5610 = vmatprep.mubr.bf16.mxu0 %v5305
        %5611 = vmatmul.mubr.bf16.gmra.mrb[0].mxu0 %v3192
        %v5612 = vpop.f32.mrb[0].mxu0
        %v5613 = vadd.f32 0.0, %v5612
        %v5614 = vpop.f32.mrb[0].mxu0
        %v5615 = vpop.f32.mrb[0].mxu0
        %v5616 = vadd.f32 0.0, %v5615
        %v5617 = vpop.f32.mrb[0].mxu0
        %5618 = vdwg.mxu0
        %5619 = vmatprep.subr.bf16.mxu0 0
        %5620 = vmatpush1.bf16.msra.mxu0 %v5490
        %5621 = vmatprep.subr.bf16.mxu0 0
        %5622 = vmatpush1.bf16.msra.mxu0 %v5491
        %5623 = vmatprep.subr.bf16.mxu0 0
        %5624 = vmatpush1.bf16.msra.mxu0 %v5492
        %5625 = vmatprep.subr.bf16.mxu0 0
        %5626 = vmatpush1.bf16.msra.mxu0 %v5493
        %5627 = vmatprep.subr.bf16.mxu0 0
        %5628 = vmatpush1.bf16.msra.mxu0 %v5494
        %5629 = vmatprep.subr.bf16.mxu0 0
        %5630 = vmatpush1.bf16.msra.mxu0 %v5495
        %5631 = vmatprep.subr.bf16.mxu0 0
        %5632 = vmatpush1.bf16.msra.mxu0 %v5496
        %5633 = vmatprep.subr.bf16.mxu0 0
        %5634 = vmatpush1.bf16.msra.mxu0 %v5497
        %5635 = vmatprep.subr.bf16.mxu0 0
        %5636 = vmatpush1.bf16.msra.mxu0 0
        %5637 = vmatprep.subr.bf16.mxu0 0
        %5638 = vmatpush1.bf16.msra.mxu0 0
        %5639 = vmatprep.subr.bf16.mxu0 0
        %5640 = vmatpush1.bf16.msra.mxu0 0
        %5641 = vmatprep.subr.bf16.mxu0 0
        %5642 = vmatpush1.bf16.msra.mxu0 0
        %5643 = vmatprep.subr.bf16.mxu0 0
        %5644 = vmatpush1.bf16.msra.mxu0 0
        %5645 = vmatprep.subr.bf16.mxu0 0
        %5646 = vmatpush1.bf16.msra.mxu0 0
        %5647 = vmatprep.subr.bf16.mxu0 0
        %5648 = vmatpush1.bf16.msra.mxu0 0
        %5649 = vmatprep.subr.bf16.mxu0 0
        %5650 = vmatpush1.bf16.msra.mxu0 0
        %5651 = vmatprep.mubr.bf16.mxu0 0
        %5652 = vmatmul.mubr.bf16.gmra.mrb[0].mxu0 %v4833
        %v5653 = vpop.f32.mrb[0].mxu0
        %v5654 = vadd.f32 %v5557, %v5653
        %v5655 = vpop.f32.mrb[0].mxu0
        %v5656 = vpop.f32.mrb[0].mxu0
        %v5657 = vadd.f32 %v5560, %v5656
        %v5658 = vpop.f32.mrb[0].mxu0
        %5659 = vmatprep.mubr.bf16.mxu0 0
        %5660 = vmatmul.mubr.bf16.gmra.mrb[0].mxu0 %v4836
        %v5661 = vpop.f32.mrb[0].mxu0
        %v5662 = vadd.f32 %v5565, %v5661
        %v5663 = vpop.f32.mrb[0].mxu0
        %v5664 = vpop.f32.mrb[0].mxu0
        %v5665 = vadd.f32 %v5568, %v5664
        %v5666 = vpop.f32.mrb[0].mxu0
        %5667 = vmatprep.mubr.bf16.mxu0 0
        %5668 = vmatmul.mubr.bf16.gmra.mrb[0].mxu0 %v4839
        %v5669 = vpop.f32.mrb[0].mxu0
        %v5670 = vadd.f32 %v5573, %v5669
        %v5671 = vpop.f32.mrb[0].mxu0
        %v5672 = vpop.f32.mrb[0].mxu0
        %v5673 = vadd.f32 %v5576, %v5672
        %v5674 = vpop.f32.mrb[0].mxu0
        %5675 = vmatprep.mubr.bf16.mxu0 0
        %5676 = vmatmul.mubr.bf16.gmra.mrb[0].mxu0 %v4842
        %v5677 = vpop.f32.mrb[0].mxu0
        %v5678 = vadd.f32 %v5581, %v5677
        %v5679 = vpop.f32.mrb[0].mxu0
        %v5680 = vpop.f32.mrb[0].mxu0
        %v5681 = vadd.f32 %v5584, %v5680
        %v5682 = vpop.f32.mrb[0].mxu0
        %5683 = vmatprep.mubr.bf16.mxu0 0
        %5684 = vmatmul.mubr.bf16.gmra.mrb[0].mxu0 %v4845
        %v5685 = vpop.f32.mrb[0].mxu0
        %v5686 = vadd.f32 %v5589, %v5685
        %v5687 = vpop.f32.mrb[0].mxu0
        %v5688 = vpop.f32.mrb[0].mxu0
        %v5689 = vadd.f32 %v5592, %v5688
        %v5690 = vpop.f32.mrb[0].mxu0
        %5691 = vmatprep.mubr.bf16.mxu0 0
        %5692 = vmatmul.mubr.bf16.gmra.mrb[0].mxu0 %v4848
        %v5693 = vpop.f32.mrb[0].mxu0
        %v5694 = vadd.f32 %v5597, %v5693
        %v5695 = vpop.f32.mrb[0].mxu0
        %v5696 = vpop.f32.mrb[0].mxu0
        %v5697 = vadd.f32 %v5600, %v5696
        %v5698 = vpop.f32.mrb[0].mxu0
        %5699 = vmatprep.mubr.bf16.mxu0 0
        %5700 = vmatmul.mubr.bf16.gmra.mrb[0].mxu0 %v4851
        %v5701 = vpop.f32.mrb[0].mxu0
        %v5702 = vadd.f32 %v5605, %v5701
        %v5703 = vpop.f32.mrb[0].mxu0
        %v5704 = vpop.f32.mrb[0].mxu0
        %v5705 = vadd.f32 %v5608, %v5704
        %v5706 = vpop.f32.mrb[0].mxu0
        %5707 = vmatprep.mubr.bf16.mxu0 0
        %5708 = vmatmul.mubr.bf16.gmra.mrb[0].mxu0 %v5311
        %v5709 = vpop.f32.mrb[0].mxu0
        %v5710 = vadd.f32 %v5613, %v5709
        %v5711 = vpop.f32.mrb[0].mxu0
        %v5712 = vpop.f32.mrb[0].mxu0
        %v5713 = vadd.f32 %v5616, %v5712
        %v5714 = vpop.f32.mrb[0].mxu0
        %5715 = vdwg.mxu0
        %v5716 = vadd.f32 %v5313, %v5654
        %v5717 = vadd.f32 %v5314, %v5657
        %v5718 = vadd.f32 %v5315, %v5662
        %v5719 = vadd.f32 %v5316, %v5665
        %v5720 = vadd.f32 %v5317, %v5670
        %v5721 = vadd.f32 %v5318, %v5673
        %v5722 = vadd.f32 %v5319, %v5678
        %v5723 = vadd.f32 %v5320, %v5681
        %v5724 = vadd.f32 %v5321, %v5686
        %v5725 = vadd.f32 %v5322, %v5689
        %v5726 = vadd.f32 %v5323, %v5694
        %v5727 = vadd.f32 %v5324, %v5697
        %v5728 = vadd.f32 %v5325, %v5702
        %v5729 = vadd.f32 %v5326, %v5705
        %v5730 = vadd.f32 %v5327, %v5710
        %v5731 = vadd.f32 %v5328, %v5713
        %5732 = vst [vmem:[#allocation2] sm:$0xff] %v5716
        %5733 = vst [vmem:[#allocation2 + $0x8] sm:$0xff] %v5717
        %5734 = vst [vmem:[#allocation2 + $0x10] sm:$0xff] %v5718
        %5735 = vst [vmem:[#allocation2 + $0x18] sm:$0xff] %v5719
        %5736 = vst [vmem:[#allocation2 + $0x20] sm:$0xff] %v5720
        %5737 = vst [vmem:[#allocation2 + $0x28] sm:$0xff] %v5721
        %5738 = vst [vmem:[#allocation2 + $0x30] sm:$0xff] %v5722
        %5739 = vst [vmem:[#allocation2 + $0x38] sm:$0xff] %v5723
        %5740 = vst [vmem:[#allocation2 + $0x40] sm:$0xff] %v5724
        %5741 = vst [vmem:[#allocation2 + $0x48] sm:$0xff] %v5725
        %5742 = vst [vmem:[#allocation2 + $0x50] sm:$0xff] %v5726
        %5743 = vst [vmem:[#allocation2 + $0x58] sm:$0xff] %v5727
        %5744 = vst [vmem:[#allocation2 + $0x60] sm:$0xff] %v5728
        %5745 = vst [vmem:[#allocation2 + $0x68] sm:$0xff] %v5729
        %5746 = vst [vmem:[#allocation2 + $0x70] sm:$0xff] %v5730
        %5747 = vst [vmem:[#allocation2 + $0x78] sm:$0xff] %v5731
        %v5749 = vshrl.u32 %v3194, 16
        %v5751 = vshll.u32 %v3194, 16
        %v5753 = vrot.slane %v5751, 1
        %v5754 = vor.u32 %v5749, %v5753
        %v5756 = vshll.u32 %v3195, 16
        %v5758 = vrot.slane %v5756, 1
        %v5759 = vsel %vm3212, %v5754, %v5758
        %v5763 = vrot.slane %v3194, 1
        %v5764 = vrot.slane %v3195, 1
        %v5765 = vsel %vm3333, %v5763, %v5764
        %v5767 = vld [vmem:[#allocation2] sm:$0xff]
        %v5768 = vld [vmem:[#allocation2 + $0x8] sm:$0xff]
        %v5769 = vld [vmem:[#allocation2 + $0x10] sm:$0xff]
        %v5770 = vld [vmem:[#allocation2 + $0x18] sm:$0xff]
        %v5771 = vld [vmem:[#allocation2 + $0x20] sm:$0xff]
        %v5772 = vld [vmem:[#allocation2 + $0x28] sm:$0xff]
        %v5773 = vld [vmem:[#allocation2 + $0x30] sm:$0xff]
        %v5774 = vld [vmem:[#allocation2 + $0x38] sm:$0xff]
        %v5775 = vld [vmem:[#allocation2 + $0x40] sm:$0xff]
        %v5776 = vld [vmem:[#allocation2 + $0x48] sm:$0xff]
        %v5777 = vld [vmem:[#allocation2 + $0x50] sm:$0xff]
        %v5778 = vld [vmem:[#allocation2 + $0x58] sm:$0xff]
        %v5779 = vld [vmem:[#allocation2 + $0x60] sm:$0xff]
        %v5780 = vld [vmem:[#allocation2 + $0x68] sm:$0xff]
        %v5781 = vld [vmem:[#allocation2 + $0x70] sm:$0xff]
        %v5782 = vld [vmem:[#allocation2 + $0x78] sm:$0xff]
        %s5783 = scalar_lea.vmem [#allocation14], 384
        %v5784 = vld [vmem:[%s5783] sm:$0xf]
        %v5785 = vld [vmem:[%s5783 + $0x4] sm:$0xf]
        %v5786 = vld [vmem:[%s5783 + $0x8] sm:$0xf]
        %v5787 = vld [vmem:[%s5783 + $0xc] sm:$0xf]
        %v5788 = vld [vmem:[%s5783 + $0x10] sm:$0xf]
        %v5789 = vld [vmem:[%s5783 + $0x14] sm:$0xf]
        %v5790 = vld [vmem:[%s5783 + $0x18] sm:$0xf]
        %v5791 = vld [vmem:[%s5783 + $0x1c] sm:$0xf]
        %v5792 = vld [vmem:[%s5783 + $0x20] sm:$0xf]
        %v5793 = vld [vmem:[%s5783 + $0x24] sm:$0xf]
        %v5794 = vld [vmem:[%s5783 + $0x28] sm:$0xf]
        %v5795 = vld [vmem:[%s5783 + $0x2c] sm:$0xf]
        %v5796 = vld [vmem:[%s5783 + $0x30] sm:$0xf]
        %v5797 = vld [vmem:[%s5783 + $0x34] sm:$0xf]
        %v5798 = vld [vmem:[%s5783 + $0x38] sm:$0xf]
        %v5799 = vld [vmem:[%s5783 + $0x3c] sm:$0xf]
        %v5800 = vld [vmem:[%s5783 + $0x40] sm:$0xf]
        %v5801 = vld [vmem:[%s5783 + $0x44] sm:$0xf]
        %v5802 = vld [vmem:[%s5783 + $0x48] sm:$0xf]
        %v5803 = vld [vmem:[%s5783 + $0x4c] sm:$0xf]
        %v5804 = vld [vmem:[%s5783 + $0x50] sm:$0xf]
        %v5805 = vld [vmem:[%s5783 + $0x54] sm:$0xf]
        %v5806 = vld [vmem:[%s5783 + $0x58] sm:$0xf]
        %v5807 = vld [vmem:[%s5783 + $0x5c] sm:$0xf]
        %v5808 = vld [vmem:[%s5783 + $0x60] sm:$0xf]
        %v5809 = vld [vmem:[%s5783 + $0x64] sm:$0xf]
        %v5810 = vld [vmem:[%s5783 + $0x68] sm:$0xf]
        %v5811 = vld [vmem:[%s5783 + $0x6c] sm:$0xf]
        %v5812 = vld [vmem:[%s5783 + $0x70] sm:$0xf]
        %v5813 = vld [vmem:[%s5783 + $0x74] sm:$0xf]
        %v5814 = vld [vmem:[%s5783 + $0x78] sm:$0xf]
        %v5815 = vld [vmem:[%s5783 + $0x7c] sm:$0xf]
        %v5816 = vld [vmem:[%s5783 + $0x80] sm:$0xf]
        %v5817 = vld [vmem:[%s5783 + $0x84] sm:$0xf]
        %v5818 = vld [vmem:[%s5783 + $0x88] sm:$0xf]
        %v5819 = vld [vmem:[%s5783 + $0x8c] sm:$0xf]
        %v5820 = vld [vmem:[%s5783 + $0x90] sm:$0xf]
        %v5821 = vld [vmem:[%s5783 + $0x94] sm:$0xf]
        %v5822 = vld [vmem:[%s5783 + $0x98] sm:$0xf]
        %v5823 = vld [vmem:[%s5783 + $0x9c] sm:$0xf]
        %v5824 = vld [vmem:[%s5783 + $0xa0] sm:$0xf]
        %v5825 = vld [vmem:[%s5783 + $0xa4] sm:$0xf]
        %v5826 = vld [vmem:[%s5783 + $0xa8] sm:$0xf]
        %v5827 = vld [vmem:[%s5783 + $0xac] sm:$0xf]
        %v5828 = vld [vmem:[%s5783 + $0xb0] sm:$0xf]
        %v5829 = vld [vmem:[%s5783 + $0xb4] sm:$0xf]
        %v5830 = vld [vmem:[%s5783 + $0xb8] sm:$0xf]
        %v5831 = vld [vmem:[%s5783 + $0xbc] sm:$0xf]
        %v5880 = vunpack.c.l.b16 %v5784
        %v5881 = vunpack.c.l.b16 %v5785
        %v5882 = vunpack.c.l.b16 %v5786
        %v5883 = vunpack.c.l.b16 %v5787
        %v5884 = vunpack.c.l.b16 %v5788
        %v5885 = vunpack.c.l.b16 %v5789
        %v5886 = vunpack.c.l.b16 %v5790
        %v5887 = vunpack.c.l.b16 %v5791
        %v5888 = vunpack.c.l.b16 %v5792
        %v5889 = vunpack.c.l.b16 %v5793
        %v5890 = vunpack.c.l.b16 %v5794
        %v5891 = vunpack.c.l.b16 %v5795
        %v5892 = vunpack.c.l.b16 %v5796
        %v5893 = vunpack.c.l.b16 %v5797
        %v5894 = vunpack.c.l.b16 %v5798
        %v5895 = vunpack.c.l.b16 %v5799
        %v5896 = vunpack.c.l.b16 %v5800
        %v5897 = vunpack.c.l.b16 %v5801
        %v5898 = vunpack.c.l.b16 %v5802
        %v5899 = vunpack.c.l.b16 %v5803
        %v5900 = vunpack.c.l.b16 %v5804
        %v5901 = vunpack.c.l.b16 %v5805
        %v5902 = vunpack.c.l.b16 %v5806
        %v5903 = vunpack.c.l.b16 %v5807
        %v5904 = vunpack.c.l.b16 %v5808
        %v5905 = vunpack.c.l.b16 %v5809
        %v5906 = vunpack.c.l.b16 %v5810
        %v5907 = vunpack.c.l.b16 %v5811
        %v5908 = vunpack.c.l.b16 %v5812
        %v5909 = vunpack.c.l.b16 %v5813
        %v5910 = vunpack.c.l.b16 %v5814
        %v5911 = vunpack.c.l.b16 %v5815
        %v5912 = vunpack.c.l.b16 %v5816
        %v5913 = vunpack.c.l.b16 %v5817
        %v5914 = vunpack.c.l.b16 %v5818
        %v5915 = vunpack.c.l.b16 %v5819
        %v5916 = vunpack.c.l.b16 %v5820
        %v5917 = vunpack.c.l.b16 %v5821
        %v5918 = vunpack.c.l.b16 %v5822
        %v5919 = vunpack.c.l.b16 %v5823
        %v5920 = vunpack.c.l.b16 %v5824
        %v5921 = vunpack.c.l.b16 %v5825
        %v5922 = vunpack.c.l.b16 %v5826
        %v5923 = vunpack.c.l.b16 %v5827
        %v5924 = vunpack.c.l.b16 %v5828
        %v5925 = vunpack.c.l.b16 %v5829
        %v5926 = vunpack.c.l.b16 %v5830
        %v5927 = vunpack.c.l.b16 %v5831
        %v5928 = vpack.c.b16 %v5881, %v5880
        %v5929 = vpack.c.b16 %v5883, %v5882
        %v5930 = vpack.c.b16 %v5885, %v5884
        %v5931 = vpack.c.b16 %v5887, %v5886
        %v5932 = vpack.c.b16 %v5889, %v5888
        %v5933 = vpack.c.b16 %v5891, %v5890
        %v5934 = vpack.c.b16 %v5893, %v5892
        %v5935 = vpack.c.b16 %v5895, %v5894
        %v5936 = vpack.c.b16 %v5897, %v5896
        %v5937 = vpack.c.b16 %v5899, %v5898
        %v5938 = vpack.c.b16 %v5901, %v5900
        %v5939 = vpack.c.b16 %v5903, %v5902
        %v5940 = vpack.c.b16 %v5905, %v5904
        %v5941 = vpack.c.b16 %v5907, %v5906
        %v5942 = vpack.c.b16 %v5909, %v5908
        %v5943 = vpack.c.b16 %v5911, %v5910
        %v5944 = vpack.c.b16 %v5913, %v5912
        %v5945 = vpack.c.b16 %v5915, %v5914
        %v5946 = vpack.c.b16 %v5917, %v5916
        %v5947 = vpack.c.b16 %v5919, %v5918
        %v5948 = vpack.c.b16 %v5921, %v5920
        %v5949 = vpack.c.b16 %v5923, %v5922
        %v5950 = vpack.c.b16 %v5925, %v5924
        %v5951 = vpack.c.b16 %v5927, %v5926
        %5976 = vmatprep.subr.bf16.mxu0 0
        %5977 = vmatpush1.bf16.msra.mxu0 %v5928
        %5978 = vmatprep.subr.bf16.mxu0 0
        %5979 = vmatpush1.bf16.msra.mxu0 %v5929
        %5980 = vmatprep.subr.bf16.mxu0 0
        %5981 = vmatpush1.bf16.msra.mxu0 %v5930
        %5982 = vmatprep.subr.bf16.mxu0 0
        %5983 = vmatpush1.bf16.msra.mxu0 %v5931
        %5984 = vmatprep.subr.bf16.mxu0 0
        %5985 = vmatpush1.bf16.msra.mxu0 %v5932
        %5986 = vmatprep.subr.bf16.mxu0 0
        %5987 = vmatpush1.bf16.msra.mxu0 %v5933
        %5988 = vmatprep.subr.bf16.mxu0 0
        %5989 = vmatpush1.bf16.msra.mxu0 %v5934
        %5990 = vmatprep.subr.bf16.mxu0 0
        %5991 = vmatpush1.bf16.msra.mxu0 %v5935
        %5992 = vmatprep.subr.bf16.mxu0 0
        %5993 = vmatpush1.bf16.msra.mxu0 %v5936
        %5994 = vmatprep.subr.bf16.mxu0 0
        %5995 = vmatpush1.bf16.msra.mxu0 %v5937
        %5996 = vmatprep.subr.bf16.mxu0 0
        %5997 = vmatpush1.bf16.msra.mxu0 %v5938
        %5998 = vmatprep.subr.bf16.mxu0 0
        %5999 = vmatpush1.bf16.msra.mxu0 %v5939
        %6000 = vmatprep.subr.bf16.mxu0 0
        %6001 = vmatpush1.bf16.msra.mxu0 %v5940
        %6002 = vmatprep.subr.bf16.mxu0 0
        %6003 = vmatpush1.bf16.msra.mxu0 %v5941
        %6004 = vmatprep.subr.bf16.mxu0 0
        %6005 = vmatpush1.bf16.msra.mxu0 %v5942
        %6006 = vmatprep.subr.bf16.mxu0 0
        %6007 = vmatpush1.bf16.msra.mxu0 %v5943
        %6008 = vmatprep.mubr.bf16.mxu0 %v4743
        %6009 = vmatmul.mubr.bf16.gmra.mrb[0].mxu0 %v3180
        %v6010 = vpop.f32.mrb[0].mxu0
        %v6011 = vadd.f32 0.0, %v6010
        %v6012 = vpop.f32.mrb[0].mxu0
        %v6013 = vpop.f32.mrb[0].mxu0
        %v6014 = vadd.f32 0.0, %v6013
        %v6015 = vpop.f32.mrb[0].mxu0
        %6016 = vmatprep.mubr.bf16.mxu0 %v4755
        %6017 = vmatmul.mubr.bf16.gmra.mrb[0].mxu0 %v3182
        %v6018 = vpop.f32.mrb[0].mxu0
        %v6019 = vadd.f32 0.0, %v6018
        %v6020 = vpop.f32.mrb[0].mxu0
        %v6021 = vpop.f32.mrb[0].mxu0
        %v6022 = vadd.f32 0.0, %v6021
        %v6023 = vpop.f32.mrb[0].mxu0
        %6024 = vmatprep.mubr.bf16.mxu0 %v4767
        %6025 = vmatmul.mubr.bf16.gmra.mrb[0].mxu0 %v3184
        %v6026 = vpop.f32.mrb[0].mxu0
        %v6027 = vadd.f32 0.0, %v6026
        %v6028 = vpop.f32.mrb[0].mxu0
        %v6029 = vpop.f32.mrb[0].mxu0
        %v6030 = vadd.f32 0.0, %v6029
        %v6031 = vpop.f32.mrb[0].mxu0
        %6032 = vmatprep.mubr.bf16.mxu0 %v4779
        %6033 = vmatmul.mubr.bf16.gmra.mrb[0].mxu0 %v3186
        %v6034 = vpop.f32.mrb[0].mxu0
        %v6035 = vadd.f32 0.0, %v6034
        %v6036 = vpop.f32.mrb[0].mxu0
        %v6037 = vpop.f32.mrb[0].mxu0
        %v6038 = vadd.f32 0.0, %v6037
        %v6039 = vpop.f32.mrb[0].mxu0
        %6040 = vmatprep.mubr.bf16.mxu0 %v4791
        %6041 = vmatmul.mubr.bf16.gmra.mrb[0].mxu0 %v3188
        %v6042 = vpop.f32.mrb[0].mxu0
        %v6043 = vadd.f32 0.0, %v6042
        %v6044 = vpop.f32.mrb[0].mxu0
        %v6045 = vpop.f32.mrb[0].mxu0
        %v6046 = vadd.f32 0.0, %v6045
        %v6047 = vpop.f32.mrb[0].mxu0
        %6048 = vmatprep.mubr.bf16.mxu0 %v4803
        %6049 = vmatmul.mubr.bf16.gmra.mrb[0].mxu0 %v3190
        %v6050 = vpop.f32.mrb[0].mxu0
        %v6051 = vadd.f32 0.0, %v6050
        %v6052 = vpop.f32.mrb[0].mxu0
        %v6053 = vpop.f32.mrb[0].mxu0
        %v6054 = vadd.f32 0.0, %v6053
        %v6055 = vpop.f32.mrb[0].mxu0
        %6056 = vmatprep.mubr.bf16.mxu0 %v5305
        %6057 = vmatmul.mubr.bf16.gmra.mrb[0].mxu0 %v3192
        %v6058 = vpop.f32.mrb[0].mxu0
        %v6059 = vadd.f32 0.0, %v6058
        %v6060 = vpop.f32.mrb[0].mxu0
        %v6061 = vpop.f32.mrb[0].mxu0
        %v6062 = vadd.f32 0.0, %v6061
        %v6063 = vpop.f32.mrb[0].mxu0
        %6064 = vmatprep.mubr.bf16.mxu0 %v5759
        %6065 = vmatmul.mubr.bf16.gmra.mrb[0].mxu0 %v3194
        %v6066 = vpop.f32.mrb[0].mxu0
        %v6067 = vadd.f32 0.0, %v6066
        %v6068 = vpop.f32.mrb[0].mxu0
        %v6069 = vpop.f32.mrb[0].mxu0
        %v6070 = vadd.f32 0.0, %v6069
        %v6071 = vpop.f32.mrb[0].mxu0
        %6072 = vdwg.mxu0
        %6073 = vmatprep.subr.bf16.mxu0 0
        %6074 = vmatpush1.bf16.msra.mxu0 %v5944
        %6075 = vmatprep.subr.bf16.mxu0 0
        %6076 = vmatpush1.bf16.msra.mxu0 %v5945
        %6077 = vmatprep.subr.bf16.mxu0 0
        %6078 = vmatpush1.bf16.msra.mxu0 %v5946
        %6079 = vmatprep.subr.bf16.mxu0 0
        %6080 = vmatpush1.bf16.msra.mxu0 %v5947
        %6081 = vmatprep.subr.bf16.mxu0 0
        %6082 = vmatpush1.bf16.msra.mxu0 %v5948
        %6083 = vmatprep.subr.bf16.mxu0 0
        %6084 = vmatpush1.bf16.msra.mxu0 %v5949
        %6085 = vmatprep.subr.bf16.mxu0 0
        %6086 = vmatpush1.bf16.msra.mxu0 %v5950
        %6087 = vmatprep.subr.bf16.mxu0 0
        %6088 = vmatpush1.bf16.msra.mxu0 %v5951
        %6089 = vmatprep.subr.bf16.mxu0 0
        %6090 = vmatpush1.bf16.msra.mxu0 0
        %6091 = vmatprep.subr.bf16.mxu0 0
        %6092 = vmatpush1.bf16.msra.mxu0 0
        %6093 = vmatprep.subr.bf16.mxu0 0
        %6094 = vmatpush1.bf16.msra.mxu0 0
        %6095 = vmatprep.subr.bf16.mxu0 0
        %6096 = vmatpush1.bf16.msra.mxu0 0
        %6097 = vmatprep.subr.bf16.mxu0 0
        %6098 = vmatpush1.bf16.msra.mxu0 0
        %6099 = vmatprep.subr.bf16.mxu0 0
        %6100 = vmatpush1.bf16.msra.mxu0 0
        %6101 = vmatprep.subr.bf16.mxu0 0
        %6102 = vmatpush1.bf16.msra.mxu0 0
        %6103 = vmatprep.subr.bf16.mxu0 0
        %6104 = vmatpush1.bf16.msra.mxu0 0
        %6105 = vmatprep.mubr.bf16.mxu0 0
        %6106 = vmatmul.mubr.bf16.gmra.mrb[0].mxu0 %v4836
        %v6107 = vpop.f32.mrb[0].mxu0
        %v6108 = vadd.f32 %v6011, %v6107
        %v6109 = vpop.f32.mrb[0].mxu0
        %v6110 = vpop.f32.mrb[0].mxu0
        %v6111 = vadd.f32 %v6014, %v6110
        %v6112 = vpop.f32.mrb[0].mxu0
        %6113 = vmatprep.mubr.bf16.mxu0 0
        %6114 = vmatmul.mubr.bf16.gmra.mrb[0].mxu0 %v4839
        %v6115 = vpop.f32.mrb[0].mxu0
        %v6116 = vadd.f32 %v6019, %v6115
        %v6117 = vpop.f32.mrb[0].mxu0
        %v6118 = vpop.f32.mrb[0].mxu0
        %v6119 = vadd.f32 %v6022, %v6118
        %v6120 = vpop.f32.mrb[0].mxu0
        %6121 = vmatprep.mubr.bf16.mxu0 0
        %6122 = vmatmul.mubr.bf16.gmra.mrb[0].mxu0 %v4842
        %v6123 = vpop.f32.mrb[0].mxu0
        %v6124 = vadd.f32 %v6027, %v6123
        %v6125 = vpop.f32.mrb[0].mxu0
        %v6126 = vpop.f32.mrb[0].mxu0
        %v6127 = vadd.f32 %v6030, %v6126
        %v6128 = vpop.f32.mrb[0].mxu0
        %6129 = vmatprep.mubr.bf16.mxu0 0
        %6130 = vmatmul.mubr.bf16.gmra.mrb[0].mxu0 %v4845
        %v6131 = vpop.f32.mrb[0].mxu0
        %v6132 = vadd.f32 %v6035, %v6131
        %v6133 = vpop.f32.mrb[0].mxu0
        %v6134 = vpop.f32.mrb[0].mxu0
        %v6135 = vadd.f32 %v6038, %v6134
        %v6136 = vpop.f32.mrb[0].mxu0
        %6137 = vmatprep.mubr.bf16.mxu0 0
        %6138 = vmatmul.mubr.bf16.gmra.mrb[0].mxu0 %v4848
        %v6139 = vpop.f32.mrb[0].mxu0
        %v6140 = vadd.f32 %v6043, %v6139
        %v6141 = vpop.f32.mrb[0].mxu0
        %v6142 = vpop.f32.mrb[0].mxu0
        %v6143 = vadd.f32 %v6046, %v6142
        %v6144 = vpop.f32.mrb[0].mxu0
        %6145 = vmatprep.mubr.bf16.mxu0 0
        %6146 = vmatmul.mubr.bf16.gmra.mrb[0].mxu0 %v4851
        %v6147 = vpop.f32.mrb[0].mxu0
        %v6148 = vadd.f32 %v6051, %v6147
        %v6149 = vpop.f32.mrb[0].mxu0
        %v6150 = vpop.f32.mrb[0].mxu0
        %v6151 = vadd.f32 %v6054, %v6150
        %v6152 = vpop.f32.mrb[0].mxu0
        %6153 = vmatprep.mubr.bf16.mxu0 0
        %6154 = vmatmul.mubr.bf16.gmra.mrb[0].mxu0 %v5311
        %v6155 = vpop.f32.mrb[0].mxu0
        %v6156 = vadd.f32 %v6059, %v6155
        %v6157 = vpop.f32.mrb[0].mxu0
        %v6158 = vpop.f32.mrb[0].mxu0
        %v6159 = vadd.f32 %v6062, %v6158
        %v6160 = vpop.f32.mrb[0].mxu0
        %6161 = vmatprep.mubr.bf16.mxu0 0
        %6162 = vmatmul.mubr.bf16.gmra.mrb[0].mxu0 %v5765
        %v6163 = vpop.f32.mrb[0].mxu0
        %v6164 = vadd.f32 %v6067, %v6163
        %v6165 = vpop.f32.mrb[0].mxu0
        %v6166 = vpop.f32.mrb[0].mxu0
        %v6167 = vadd.f32 %v6070, %v6166
        %v6168 = vpop.f32.mrb[0].mxu0
        %6169 = vdwg.mxu0
        %v6170 = vadd.f32 %v5767, %v6108
        %v6171 = vadd.f32 %v5768, %v6111
        %v6172 = vadd.f32 %v5769, %v6116
        %v6173 = vadd.f32 %v5770, %v6119
        %v6174 = vadd.f32 %v5771, %v6124
        %v6175 = vadd.f32 %v5772, %v6127
        %v6176 = vadd.f32 %v5773, %v6132
        %v6177 = vadd.f32 %v5774, %v6135
        %v6178 = vadd.f32 %v5775, %v6140
        %v6179 = vadd.f32 %v5776, %v6143
        %v6180 = vadd.f32 %v5777, %v6148
        %v6181 = vadd.f32 %v5778, %v6151
        %v6182 = vadd.f32 %v5779, %v6156
        %v6183 = vadd.f32 %v5780, %v6159
        %v6184 = vadd.f32 %v5781, %v6164
        %v6185 = vadd.f32 %v5782, %v6167
        %6186 = vst [vmem:[#allocation2] sm:$0xff] %v6170
        %6187 = vst [vmem:[#allocation2 + $0x8] sm:$0xff] %v6171
        %6188 = vst [vmem:[#allocation2 + $0x10] sm:$0xff] %v6172
        %6189 = vst [vmem:[#allocation2 + $0x18] sm:$0xff] %v6173
        %6190 = vst [vmem:[#allocation2 + $0x20] sm:$0xff] %v6174
        %6191 = vst [vmem:[#allocation2 + $0x28] sm:$0xff] %v6175
        %6192 = vst [vmem:[#allocation2 + $0x30] sm:$0xff] %v6176
        %6193 = vst [vmem:[#allocation2 + $0x38] sm:$0xff] %v6177
        %6194 = vst [vmem:[#allocation2 + $0x40] sm:$0xff] %v6178
        %6195 = vst [vmem:[#allocation2 + $0x48] sm:$0xff] %v6179
        %6196 = vst [vmem:[#allocation2 + $0x50] sm:$0xff] %v6180
        %6197 = vst [vmem:[#allocation2 + $0x58] sm:$0xff] %v6181
        %6198 = vst [vmem:[#allocation2 + $0x60] sm:$0xff] %v6182
        %6199 = vst [vmem:[#allocation2 + $0x68] sm:$0xff] %v6183
        %6200 = vst [vmem:[#allocation2 + $0x70] sm:$0xff] %v6184
        %6201 = vst [vmem:[#allocation2 + $0x78] sm:$0xff] %v6185
        %v6202 = vld [vmem:[#allocation2] sm:$0xff]
        %v6203 = vld [vmem:[#allocation2 + $0x8] sm:$0xff]
        %v6204 = vld [vmem:[#allocation2 + $0x10] sm:$0xff]
        %v6205 = vld [vmem:[#allocation2 + $0x18] sm:$0xff]
        %v6206 = vld [vmem:[#allocation2 + $0x20] sm:$0xff]
        %v6207 = vld [vmem:[#allocation2 + $0x28] sm:$0xff]
        %v6208 = vld [vmem:[#allocation2 + $0x30] sm:$0xff]
        %v6209 = vld [vmem:[#allocation2 + $0x38] sm:$0xff]
        %v6210 = vld [vmem:[#allocation2 + $0x40] sm:$0xff]
        %v6211 = vld [vmem:[#allocation2 + $0x48] sm:$0xff]
        %v6212 = vld [vmem:[#allocation2 + $0x50] sm:$0xff]
        %v6213 = vld [vmem:[#allocation2 + $0x58] sm:$0xff]
        %v6214 = vld [vmem:[#allocation2 + $0x60] sm:$0xff]
        %v6215 = vld [vmem:[#allocation2 + $0x68] sm:$0xff]
        %v6216 = vld [vmem:[#allocation2 + $0x70] sm:$0xff]
        %v6217 = vld [vmem:[#allocation2 + $0x78] sm:$0xff]
        %v6218 = vld [vmem:[%s8] sm:$0x1]
        %v6220 = vlaneseq
        %v6221 = vshrl.u32 %v6220, 7
        %v6222 = vsub.s32 0, %v6221
        %v6223 = vrot.slane %v6218, %v6222
        %v6225 = vmul.f32 %v6202, %v6223
        %v6226 = vmul.f32 %v6203, %v6223
        %v6227 = vmul.f32 %v6204, %v6223
        %v6228 = vmul.f32 %v6205, %v6223
        %v6229 = vmul.f32 %v6206, %v6223
        %v6230 = vmul.f32 %v6207, %v6223
        %v6231 = vmul.f32 %v6208, %v6223
        %v6232 = vmul.f32 %v6209, %v6223
        %v6233 = vmul.f32 %v6210, %v6223
        %v6234 = vmul.f32 %v6211, %v6223
        %v6235 = vmul.f32 %v6212, %v6223
        %v6236 = vmul.f32 %v6213, %v6223
        %v6237 = vmul.f32 %v6214, %v6223
        %v6238 = vmul.f32 %v6215, %v6223
        %v6239 = vmul.f32 %v6216, %v6223
        %v6240 = vmul.f32 %v6217, %v6223
        %v6241 = vld [vmem:[%s9] sm:$0x1]
        %v6243 = vlaneseq
        %v6244 = vshrl.u32 %v6243, 7
        %v6245 = vsub.s32 0, %v6244
        %v6246 = vrot.slane %v6241, %v6245
        %v6248 = vadd.f32 %v6225, %v6246
        %v6249 = vadd.f32 %v6226, %v6246
        %v6250 = vadd.f32 %v6227, %v6246
        %v6251 = vadd.f32 %v6228, %v6246
        %v6252 = vadd.f32 %v6229, %v6246
        %v6253 = vadd.f32 %v6230, %v6246
        %v6254 = vadd.f32 %v6231, %v6246
        %v6255 = vadd.f32 %v6232, %v6246
        %v6256 = vadd.f32 %v6233, %v6246
        %v6257 = vadd.f32 %v6234, %v6246
        %v6258 = vadd.f32 %v6235, %v6246
        %v6259 = vadd.f32 %v6236, %v6246
        %v6260 = vadd.f32 %v6237, %v6246
        %v6261 = vadd.f32 %v6238, %v6246
        %v6262 = vadd.f32 %v6239, %v6246
        %v6263 = vadd.f32 %v6240, %v6246
        %v6264 = vmax.f32 %v6248, 0.0
        %v6265 = vmax.f32 %v6249, 0.0
        %v6266 = vmax.f32 %v6250, 0.0
        %v6267 = vmax.f32 %v6251, 0.0
        %v6268 = vmax.f32 %v6252, 0.0
        %v6269 = vmax.f32 %v6253, 0.0
        %v6270 = vmax.f32 %v6254, 0.0
        %v6271 = vmax.f32 %v6255, 0.0
        %v6272 = vmax.f32 %v6256, 0.0
        %v6273 = vmax.f32 %v6257, 0.0
        %v6274 = vmax.f32 %v6258, 0.0
        %v6275 = vmax.f32 %v6259, 0.0
        %v6276 = vmax.f32 %v6260, 0.0
        %v6277 = vmax.f32 %v6261, 0.0
        %v6278 = vmax.f32 %v6262, 0.0
        %v6279 = vmax.f32 %v6263, 0.0
        %v6280 = vpack.c.bf16 %v6265, %v6264
        %v6281 = vpack.c.bf16 %v6267, %v6266
        %v6282 = vpack.c.bf16 %v6269, %v6268
        %v6283 = vpack.c.bf16 %v6271, %v6270
        %v6284 = vpack.c.bf16 %v6273, %v6272
        %v6285 = vpack.c.bf16 %v6275, %v6274
        %v6286 = vpack.c.bf16 %v6277, %v6276
        %v6287 = vpack.c.bf16 %v6279, %v6278
        %v6296 = vunpack.c.l.b16 %v6280
        %v6297 = vunpack.c.h.b16 %v6280
        %v6298 = vunpack.c.l.b16 %v6281
        %v6299 = vunpack.c.h.b16 %v6281
        %v6300 = vunpack.c.l.b16 %v6282
        %v6301 = vunpack.c.h.b16 %v6282
        %v6302 = vunpack.c.l.b16 %v6283
        %v6303 = vunpack.c.h.b16 %v6283
        %v6304 = vunpack.c.l.b16 %v6284
        %v6305 = vunpack.c.h.b16 %v6284
        %v6306 = vunpack.c.l.b16 %v6285
        %v6307 = vunpack.c.h.b16 %v6285
        %v6308 = vunpack.c.l.b16 %v6286
        %v6309 = vunpack.c.h.b16 %v6286
        %v6310 = vunpack.c.l.b16 %v6287
        %v6311 = vunpack.c.h.b16 %v6287
        %v6312 = vpack.c.b16 %v6296, %v6296
        %v6313 = vpack.c.b16 %v6297, %v6297
        %v6314 = vpack.c.b16 %v6298, %v6298
        %v6315 = vpack.c.b16 %v6299, %v6299
        %v6316 = vpack.c.b16 %v6300, %v6300
        %v6317 = vpack.c.b16 %v6301, %v6301
        %v6318 = vpack.c.b16 %v6302, %v6302
        %v6319 = vpack.c.b16 %v6303, %v6303
        %v6320 = vpack.c.b16 %v6304, %v6304
        %v6321 = vpack.c.b16 %v6305, %v6305
        %v6322 = vpack.c.b16 %v6306, %v6306
        %v6323 = vpack.c.b16 %v6307, %v6307
        %v6324 = vpack.c.b16 %v6308, %v6308
        %v6325 = vpack.c.b16 %v6309, %v6309
        %v6326 = vpack.c.b16 %v6310, %v6310
        %v6327 = vpack.c.b16 %v6311, %v6311
        %6344 = vst [vmem:[%s711] sm:$0xf] %v6312
        %6345 = vst [vmem:[%s711 + $0x4] sm:$0xf] %v6313
        %6346 = vst [vmem:[%s711 + $0x8] sm:$0xf] %v6314
        %6347 = vst [vmem:[%s711 + $0xc] sm:$0xf] %v6315
        %6348 = vst [vmem:[%s711 + $0x10] sm:$0xf] %v6316
        %6349 = vst [vmem:[%s711 + $0x14] sm:$0xf] %v6317
        %6350 = vst [vmem:[%s711 + $0x18] sm:$0xf] %v6318
        %6351 = vst [vmem:[%s711 + $0x1c] sm:$0xf] %v6319
        %6352 = vst [vmem:[%s711 + $0x20] sm:$0xf] %v6320
        %6353 = vst [vmem:[%s711 + $0x24] sm:$0xf] %v6321
        %6354 = vst [vmem:[%s711 + $0x28] sm:$0xf] %v6322
        %6355 = vst [vmem:[%s711 + $0x2c] sm:$0xf] %v6323
        %6356 = vst [vmem:[%s711 + $0x30] sm:$0xf] %v6324
        %6357 = vst [vmem:[%s711 + $0x34] sm:$0xf] %v6325
        %6358 = vst [vmem:[%s711 + $0x38] sm:$0xf] %v6326
        %6359 = vst [vmem:[%s711 + $0x3c] sm:$0xf] %v6327
        %s6360 = smul.u32 8, %s39
        %p6361 = scmp.lt.s32.totalorder %s38, 1
        %s6362 = scalar_select %p6361, %s38, 1
        %p6363 = scmp.lt.s32.totalorder %s6360, 15
        %s6364 = scalar_select %p6363, %s6360, 15
        %s6365 = smul.addr %s6364, 2
        %s6366 = smul.addr %s6362, 32
        %s6367 = sadd.s32 %s6365, %s6366
        %s6368 = smul.addr %s6367, 4
        %s6369 = scalar_lea.vmem %s10, %s6368
        // Predicated region
        $region93: #{unet_up_conv2d_ct.2} parent=59 // pred_check
          %p6370 = pneg %p350
        $region94: #{unet_up_conv2d_ct.2} parent=59 // pred_check_branch
          %6372 = sbr.rel (%p6370) target = $region96
        $region95: #{unet_up_conv2d_ct.2} parent=59 // pred_region
          %s6373 = smul.u32 8, %s39
        $region96: #{unet_up_conv2d_ct.2} parent=59 // pred_fallthru
          _
      $region60: #{unet_up_conv2d_ct.2} parent=5 // pred_fallthru
        _
      %p6374 = scmp.le.s32.totalorder 2, %s29
      // Predicated region
      $region97: #{unet_up_conv2d_ct.2} parent=5 // pred_check
        %p6375 = pneg %p6374
      $region98: #{unet_up_conv2d_ct.2} parent=5 // pred_check_branch
        %6377 = sbr.rel (%p6375) target = $region100
      $region99: #{unet_up_conv2d_ct.2} parent=5 // pred_region
        %s6378 = ssub.s32 %s29, 2
        // Predicated region
        $region101: #{unet_up_conv2d_ct.2} parent=99 // pred_check
          %p6379 = pneg %p356
        $region102: #{unet_up_conv2d_ct.2} parent=99 // pred_check_branch
          %6381 = sbr.rel (%p6379) target = $region104
        $region103: #{unet_up_conv2d_ct.2} parent=99 // pred_region
          %s6382 = smul.u32 8, %s41
          %p6383 = scmp.lt.s32.totalorder %s40, 1
          %s6384 = scalar_select %p6383, %s40, 1
          %p6385 = scmp.lt.s32.totalorder %s6382, 15
          %s6386 = scalar_select %p6385, %s6382, 15
          %s6387 = smul.addr %s6386, 2
          %s6388 = smul.addr %s6384, 32
          %s6389 = sadd.s32 %s6387, %s6388
          %s6390 = smul.addr %s6389, 4
          %s6391 = scalar_lea.vmem %s10, %s6390
        $region104: #{unet_up_conv2d_ct.2} parent=99 // pred_fallthru
          _
      $region100: #{unet_up_conv2d_ct.2} parent=5 // pred_fallthru
        _
    $region6: #{unet_up_conv2d_ct.2} parent=1 // loop_footer
      %s33 = sadd.s32 1, %s29
    $region7: #{unet_up_conv2d_ct.2} parent=1 // loop_footer_branch
      %28 = sbr.rel target = $region3
    $region8: #{unet_up_conv2d_ct.2} parent=1 // loop_exit
      _
    %6392 = vsyncpa [#allocation4], 1
    %s6393 = scalar_lea.sflag [#allocation4], 1
    %6394 = vsyncpa %s6393, 1
    %6395 = vsyncpa [#allocation6], 1
    %s6396 = scalar_lea.sflag [#allocation6], 1
    %6397 = vsyncpa %s6396, 1
    %6398 = vsyncpa [#allocation9], 1
    %s6399 = scalar_lea.sflag [#allocation9], 1
    %6400 = vsyncpa %s6399, 1
    %6401 = vsyncpa [#allocation12], 1
    %s6402 = scalar_lea.sflag [#allocation12], 1
    %6403 = vsyncpa %s6402, 1
    %6404 = vsyncpa [#allocation15], 1

</llo_original>
